<compile_context>
chip_gen: v7x
topology: tpu7x:2x2x1
jax: 0.10.0
libtpu: 0.0.40
codegen_flags: <defaults>
</compile_context>

<pallas_src>
import math
import functools

import jax
import jax.numpy as jnp
from jax.experimental import pallas as pl
from jax.experimental.pallas import tpu as pltpu

_F32 = jnp.float32
_BF16 = jnp.bfloat16


def _bf16(x):
    return x.astype(_BF16)


# -----------------------------------------------------------------------------
# In-kernel helpers (traced inside the Pallas kernels, all values VMEM-resident)
# -----------------------------------------------------------------------------
def _ln(x, g, b, eps):
    mean = jnp.mean(x, axis=-1, keepdims=True)
    var = jnp.mean(jnp.square(x - mean), axis=-1, keepdims=True)
    return (x - mean) * jax.lax.rsqrt(var + eps) * g + b


def _mha_residual_ln(xq, xkv, wq, bq, wkv, bkv, wo, bo, g, be, *, n_head, eps):
    """MultiheadAttention(q=xq, k=v=xkv) + residual(xq) + LayerNorm, one batch."""
    L, E = xq.shape
    dh = E // n_head
    scale = 1.0 / math.sqrt(dh)

    # Fused K/V projection (lane-dense 2E output). bf16 operands, f32 accumulate.
    q = jnp.dot(_bf16(xq), _bf16(wq), preferred_element_type=_F32) + bq
    kv = jnp.dot(_bf16(xkv), _bf16(wkv), preferred_element_type=_F32) + bkv
    k = kv[:, :E]
    v = kv[:, E:]

    # Heads processed fully in VMEM (no HBM head transposes, no grid micro-steps).
    acc = jnp.zeros((L, E), _F32)
    for h in range(n_head):
        sl = slice(h * dh, (h + 1) * dh)
        # "trans_b" style: contract last dims of q_h and k_h (no k.T relayout).
        s = jax.lax.dot_general(q[:, sl] * scale, k[:, sl],
                                (((1,), (1,)), ((), ())),
                                preferred_element_type=_F32)
        s = s - jnp.max(s, axis=-1, keepdims=True)
        p = jnp.exp(s)
        p = p * pl.reciprocal(jnp.sum(p, axis=-1, keepdims=True), approx=True)
        oh = jnp.dot(p, v[:, sl], preferred_element_type=_F32)
        # Fold the output projection into the head loop (no concatenate needed).
        acc = acc + jnp.dot(oh, wo[sl, :], preferred_element_type=_F32)
    attn = acc + bo
    return _ln(xq + attn, g, be, eps)


# -----------------------------------------------------------------------------
# Pallas kernels
# -----------------------------------------------------------------------------
def _cross_block_kernel(xq_ref, xkv_ref, wq_ref, bq_ref, wkv_ref, bkv_ref,
                        wo_ref, bo_ref, g1_ref, be1_ref,
                        w1_ref, c1_ref, w2_ref, c2_ref, g2_ref, be2_ref,
                        o_ref, *, n_head, eps):
    """Full CrossAttention block (MHA+LN1+FFN+LN2) for one batch element."""
    xq = xq_ref[0].astype(_F32)
    xkv = xkv_ref[0].astype(_F32)
    out1 = _mha_residual_ln(xq, xkv,
                            wq_ref[...], bq_ref[...], wkv_ref[...], bkv_ref[...],
                            wo_ref[...], bo_ref[...], g1_ref[...], be1_ref[...],
                            n_head=n_head, eps=eps)
    # FFN: hidden (L, 2E) stays in VMEM/vregs, never hits HBM.
    hid = jnp.dot(_bf16(out1), _bf16(w1_ref[...]),
                  preferred_element_type=_F32) + c1_ref[...]
    hid = jnp.maximum(hid, 0.0)
    y = jnp.dot(_bf16(hid), _bf16(w2_ref[...]),
                preferred_element_type=_F32) + c2_ref[...]
    o_ref[0] = _ln(out1 + y, g2_ref[...], be2_ref[...], eps).astype(o_ref.dtype)


def _cagd_self_kernel(bef_ref, aft_ref, res_ref, wq_ref, bq_ref, wkv_ref,
                      bkv_ref, wo_ref, bo_ref, g_ref, be_ref, o_ref,
                      *, n_head, eps):
    """diff = after - before; LN(diff + attn(diff)); + residual feature."""
    diff = aft_ref[0].astype(_F32) - bef_ref[0].astype(_F32)
    d = _mha_residual_ln(diff, diff,
                         wq_ref[...], bq_ref[...], wkv_ref[...], bkv_ref[...],
                         wo_ref[...], bo_ref[...], g_ref[...], be_ref[...],
                         n_head=n_head, eps=eps)
    o_ref[0] = (d + res_ref[0].astype(_F32)).astype(o_ref.dtype)


def _sfe_kernel(img_ref, feat_ref, pe_ref, we_ref, be_ref, w1_ref, w2_ref, o_ref):
    """Embed (1x1 conv, 3->C) + channel-attention gate on feature + pos. enc."""
    img = img_ref[0].astype(_F32)          # (HW, 3)
    we = we_ref[...].astype(_F32)          # (3, C)
    # 3-tap projection as VPU broadcast-MACs (avoids a K=3 MXU matmul).
    emb = (img[:, 0:1] * we[0:1, :] + img[:, 1:2] * we[1:2, :]
           + img[:, 2:3] * we[2:3, :] + be_ref[...])          # (HW, C)
    avg = jnp.mean(emb, axis=0, keepdims=True)                 # AdaptiveAvgPool2d(1)
    mx = jnp.max(emb, axis=0, keepdims=True)                   # AdaptiveMaxPool2d(1)
    w1 = w1_ref[...]
    w2 = w2_ref[...]
    g_avg = jnp.dot(jnp.maximum(jnp.dot(avg, w1, preferred_element_type=_F32), 0.0),
                    w2, preferred_element_type=_F32)
    g_max = jnp.dot(jnp.maximum(jnp.dot(mx, w1, preferred_element_type=_F32), 0.0),
                    w2, preferred_element_type=_F32)
    gate = jax.nn.sigmoid(g_avg + g_max)                        # (1, C)
    o_ref[0] = (feat_ref[0].astype(_F32) * gate + pe_ref[...]).astype(o_ref.dtype)


# -----------------------------------------------------------------------------
# pallas_call wrappers (grid over batch, dimension_semantics=("parallel",))
# -----------------------------------------------------------------------------
def _wspec(shape):
    return pl.BlockSpec(shape, lambda b: (0, 0))


def cross_attention_block(xq, xkv, p, n_head, eps=1e-5):
    N, L, E = xq.shape
    Lk = xkv.shape[1]
    F = p["lin1_w"].shape[1]
    kern = functools.partial(_cross_block_kernel, n_head=n_head, eps=eps)
    act_q = pl.BlockSpec((1, L, E), lambda b: (b, 0, 0))
    act_kv = pl.BlockSpec((1, Lk, E), lambda b: (b, 0, 0))
    return pl.pallas_call(
        kern,
        out_shape=jax.ShapeDtypeStruct((N, L, E), xq.dtype),
        grid=(N,),
        in_specs=[
            act_q, act_kv,
            _wspec((E, E)), _wspec((1, E)),            # wq, bq
            _wspec((E, 2 * E)), _wspec((1, 2 * E)),    # wkv, bkv (fused K/V)
            _wspec((E, E)), _wspec((1, E)),            # wo, bo
            _wspec((1, E)), _wspec((1, E)),            # norm1 w/b
            _wspec((E, F)), _wspec((1, F)),            # lin1
            _wspec((F, E)), _wspec((1, E)),            # lin2
            _wspec((1, E)), _wspec((1, E)),            # norm2 w/b
        ],
        out_specs=pl.BlockSpec((1, L, E), lambda b: (b, 0, 0)),
        compiler_params=pltpu.CompilerParams(dimension_semantics=("parallel",)),
    )(xq, xkv,
      p["attn"]["wq"], p["attn"]["bq"],
      p["attn"]["wkv"], p["attn"]["bkv"],
      p["attn"]["wo"], p["attn"]["bo"],
      p["norm1_w"], p["norm1_b"],
      p["lin1_w"], p["lin1_b"], p["lin2_w"], p["lin2_b"],
      p["norm2_w"], p["norm2_b"])


def cagd_self_block(before, after, residual, mha, norm_w, norm_b, n_head, eps=1e-5):
    N, L, E = before.shape
    kern = functools.partial(_cagd_self_kernel, n_head=n_head, eps=eps)
    act = pl.BlockSpec((1, L, E), lambda b: (b, 0, 0))
    return pl.pallas_call(
        kern,
        out_shape=jax.ShapeDtypeStruct((N, L, E), residual.dtype),
        grid=(N,),
        in_specs=[
            act, act, act,
            _wspec((E, E)), _wspec((1, E)),
            _wspec((E, 2 * E)), _wspec((1, 2 * E)),
            _wspec((E, E)), _wspec((1, E)),
            _wspec((1, E)), _wspec((1, E)),
        ],
        out_specs=pl.BlockSpec((1, L, E), lambda b: (b, 0, 0)),
        compiler_params=pltpu.CompilerParams(dimension_semantics=("parallel",)),
    )(before, after, residual,
      mha["wq"], mha["bq"], mha["wkv"], mha["bkv"], mha["wo"], mha["bo"],
      norm_w, norm_b)


def sfe_block(img, feat, pe, embed_w, embed_b, w1, w2):
    n, hw, _ = img.shape
    c = feat.shape[-1]
    cr = w1.shape[-1]
    return pl.pallas_call(
        _sfe_kernel,
        out_shape=jax.ShapeDtypeStruct((n, hw, c), feat.dtype),
        grid=(n,),
        in_specs=[
            pl.BlockSpec((1, hw, 3), lambda b: (b, 0, 0)),
            pl.BlockSpec((1, hw, c), lambda b: (b, 0, 0)),
            _wspec((hw, c)),      # positional encoding slice
            _wspec((3, c)), _wspec((1, c)),
            _wspec((c, cr)), _wspec((cr, c)),
        ],
        out_specs=pl.BlockSpec((1, hw, c), lambda b: (b, 0, 0)),
        compiler_params=pltpu.CompilerParams(dimension_semantics=("parallel",)),
    )(img, feat, pe, embed_w, embed_b, w1, w2)


# -----------------------------------------------------------------------------
# Forward pass (thin XLA glue around the fused kernels)
# -----------------------------------------------------------------------------
def diff_encoder_fwd(params, images, feature, *, n_head, stride):
    # images: (n, 6, H, W) NCHW ; feature: (n, d_model, h, w) NCHW
    n, c, h, w = feature.shape
    hw = h * w
    pe = params["pe"][:hw]                                        # (hw, c)

    # 1x1 conv with stride == strided pixel gather; channels-last for kernels.
    bef_img = images[:, 0:3, ::stride, ::stride].transpose(0, 2, 3, 1).reshape(n, hw, 3)
    aft_img = images[:, 3:6, ::stride, ::stride].transpose(0, 2, 3, 1).reshape(n, hw, 3)
    feat = feature.reshape(n, c, hw).transpose(0, 2, 1)           # (n, hw, c)

    before = sfe_block(bef_img, feat, pe, params["embed_w"], params["embed_b"],
                       params["ca_bef_w1"], params["ca_bef_w2"])
    after = sfe_block(aft_img, feat, pe, params["embed_w"], params["embed_b"],
                      params["ca_aft_w1"], params["ca_aft_w2"])
    feat = feat + pe[None, :, :]

    for blk in params["blocks"]:
        before_n = cross_attention_block(before, feat, blk["cab"], n_head)
        after_n = cross_attention_block(after, feat, blk["caa"], n_head)
        feat = cagd_self_block(before_n, after_n, feat,
                               blk["attn"], blk["norm_w"], blk["norm_b"], n_head)
        before, after = before_n, after_n

    return feat.transpose(1, 0, 2)   # seq-first (hw, n, d_model), as in the module


# -----------------------------------------------------------------------------
# Deterministic parameter init (synthetic, not a checkpoint).
# Weights stored pre-transposed as (in, out); biases as (1, out).
# -----------------------------------------------------------------------------
def make_pe(max_len, d_model):
    position = jnp.arange(max_len, dtype=_F32)[:, None]
    div_term = jnp.exp(jnp.arange(0, d_model, 2, dtype=_F32)
                       * (-math.log(10000.0) / d_model))
    pe = jnp.zeros((max_len, d_model), _F32)
    pe = pe.at[:, 0::2].set(jnp.sin(position * div_term))
    pe = pe.at[:, 1::2].set(jnp.cos(position * div_term))
    return pe                                   # (max_len, d_model)


def init_mha(key, d):
    k1, k2, k3 = jax.random.split(key, 3)
    s = 1.0 / math.sqrt(d)
    return {
        "wq": jax.random.normal(k1, (d, d), _F32) * s,
        "bq": jnp.zeros((1, d), _F32),
        "wkv": jax.random.normal(k2, (d, 2 * d), _F32) * s,   # fused K/V
        "bkv": jnp.zeros((1, 2 * d), _F32),
        "wo": jax.random.normal(k3, (d, d), _F32) * s,
        "bo": jnp.zeros((1, d), _F32),
    }


def init_cross_attn(key, d, ff):
    k = jax.random.split(key, 3)
    return {
        "attn": init_mha(k[0], d),
        "norm1_w": jnp.ones((1, d), _F32),
        "norm1_b": jnp.zeros((1, d), _F32),
        "lin1_w": jax.random.normal(k[1], (d, ff), _F32) / math.sqrt(d),
        "lin1_b": jnp.zeros((1, ff), _F32),
        "lin2_w": jax.random.normal(k[2], (ff, d), _F32) / math.sqrt(ff),
        "lin2_b": jnp.zeros((1, d), _F32),
        "norm2_w": jnp.ones((1, d), _F32),
        "norm2_b": jnp.zeros((1, d), _F32),
    }


def init_cagd(key, d):
    k = jax.random.split(key, 3)
    return {
        "cab": init_cross_attn(k[0], d, 2 * d),
        "caa": init_cross_attn(k[1], d, 2 * d),
        "attn": init_mha(k[2], d),
        "norm_w": jnp.ones((1, d), _F32),
        "norm_b": jnp.zeros((1, d), _F32),
    }


def init_params(key, d, num_layers, reduction=16, max_len=16 * 16):
    keys = jax.random.split(key, 6 + num_layers)
    cr = d // reduction
    return {
        "embed_w": jax.random.normal(keys[0], (3, d), _F32) * 0.1,
        "embed_b": jnp.zeros((1, d), _F32),
        "ca_bef_w1": jax.random.normal(keys[1], (d, cr), _F32) / math.sqrt(d),
        "ca_bef_w2": jax.random.normal(keys[2], (cr, d), _F32) / math.sqrt(cr),
        "ca_aft_w1": jax.random.normal(keys[3], (d, cr), _F32) / math.sqrt(d),
        "ca_aft_w2": jax.random.normal(keys[4], (cr, d), _F32) / math.sqrt(cr),
        "pe": make_pe(max_len, d),
        "blocks": [init_cagd(keys[5 + i], d) for i in range(num_layers)],
    }


# -----------------------------------------------------------------------------
if __name__ == "__main__":
    # Small shapes consistent with the module: d_model divisible by nhead and
    # reduction_ratio=16; stride=32 (model_stage default 4) => image H=W=h*32.
    d_model = 64
    n_head = 8
    num_layers = 2
    n = 2
    h = w = 4
    stride = 32
    H, W = h * stride, w * stride

    key = jax.random.PRNGKey(0)
    k_img, k_feat, k_par = jax.random.split(key, 3)
    images = jax.random.normal(k_img, (n, 6, H, W), _F32)
    feature = jax.random.normal(k_feat, (n, d_model, h, w), _F32)
    params = init_params(k_par, d_model, num_layers)

    # TODO(synk): dropout layers are treated as identity (inference mode).
    fwd = jax.jit(functools.partial(diff_encoder_fwd, n_head=n_head, stride=stride))
    out = fwd(params, images, feature)
    jax.block_until_ready(out)
    assert out.shape == (h * w, n, d_model)
    print("KERNEL_OK")
</pallas_src>

<mosaic_0001>
module attributes {stable_mosaic.version = 11 : i64} {
  func.func @_sfe_kernel(%arg0: i32, %arg1: memref<1x16x3xf32, #tpu.memory_space<vmem>>, %arg2: memref<1x16x64xf32, #tpu.memory_space<vmem>>, %arg3: memref<16x64xf32, #tpu.memory_space<vmem>>, %arg4: memref<3x64xf32, #tpu.memory_space<vmem>>, %arg5: memref<1x64xf32, #tpu.memory_space<vmem>>, %arg6: memref<64x4xf32, #tpu.memory_space<vmem>>, %arg7: memref<4x64xf32, #tpu.memory_space<vmem>>, %arg8: memref<1x16x64xf32, #tpu.memory_space<vmem>>) attributes {dimension_semantics = [#tpu.dimension_semantics<parallel>], iteration_bounds = array<i64: 2>, scalar_prefetch = 0 : i64, scratch_operands = 0 : i64, tpu.core_type = #tpu.core_type<tc>, window_params = [{transform_indices = @transform_0, window_bounds = array<i64: 1, 16, 3>}, {transform_indices = @transform_1, window_bounds = array<i64: 1, 16, 64>}, {pipeline_mode = #tpu.pipeline_mode<synchronous>, transform_indices = @transform_2, window_bounds = array<i64: 16, 64>}, {pipeline_mode = #tpu.pipeline_mode<synchronous>, transform_indices = @transform_3, window_bounds = array<i64: 3, 64>}, {pipeline_mode = #tpu.pipeline_mode<synchronous>, transform_indices = @transform_4, window_bounds = array<i64: 1, 64>}, {pipeline_mode = #tpu.pipeline_mode<synchronous>, transform_indices = @transform_5, window_bounds = array<i64: 64, 4>}, {pipeline_mode = #tpu.pipeline_mode<synchronous>, transform_indices = @transform_6, window_bounds = array<i64: 4, 64>}, {transform_indices = @transform_7, window_bounds = array<i64: 1, 16, 64>}]} {
    %c0 = arith.constant 0 : index
    %c0_0 = arith.constant 0 : index
    %c0_1 = arith.constant 0 : index
    %0 = vector.load %arg1[%c0, %c0_0, %c0_1] : memref<1x16x3xf32, #tpu.memory_space<vmem>>, vector<1x16x3xf32>
    %1 = vector.shape_cast %0 : vector<1x16x3xf32> to vector<16x3xf32>
    %c0_2 = arith.constant 0 : index
    %c0_3 = arith.constant 0 : index
    %2 = vector.load %arg4[%c0_2, %c0_3] : memref<3x64xf32, #tpu.memory_space<vmem>>, vector<3x64xf32>
    %3 = vector.extract_strided_slice %1 {offsets = [0, 0], sizes = [16, 1], strides = [1, 1]} : vector<16x3xf32> to vector<16x1xf32>
    %4 = vector.extract_strided_slice %2 {offsets = [0, 0], sizes = [1, 64], strides = [1, 1]} : vector<3x64xf32> to vector<1x64xf32>
    %5 = vector.broadcast %3 : vector<16x1xf32> to vector<16x64xf32>
    %6 = vector.broadcast %4 : vector<1x64xf32> to vector<16x64xf32>
    %7 = arith.mulf %5, %6 : vector<16x64xf32>
    %8 = vector.extract_strided_slice %1 {offsets = [0, 1], sizes = [16, 1], strides = [1, 1]} : vector<16x3xf32> to vector<16x1xf32>
    %9 = vector.extract_strided_slice %2 {offsets = [1, 0], sizes = [1, 64], strides = [1, 1]} : vector<3x64xf32> to vector<1x64xf32>
    %10 = vector.broadcast %8 : vector<16x1xf32> to vector<16x64xf32>
    %11 = vector.broadcast %9 : vector<1x64xf32> to vector<16x64xf32>
    %12 = arith.mulf %10, %11 : vector<16x64xf32>
    %13 = arith.addf %7, %12 : vector<16x64xf32>
    %14 = vector.extract_strided_slice %1 {offsets = [0, 2], sizes = [16, 1], strides = [1, 1]} : vector<16x3xf32> to vector<16x1xf32>
    %15 = vector.extract_strided_slice %2 {offsets = [2, 0], sizes = [1, 64], strides = [1, 1]} : vector<3x64xf32> to vector<1x64xf32>
    %16 = vector.broadcast %14 : vector<16x1xf32> to vector<16x64xf32>
    %17 = vector.broadcast %15 : vector<1x64xf32> to vector<16x64xf32>
    %18 = arith.mulf %16, %17 : vector<16x64xf32>
    %19 = arith.addf %13, %18 : vector<16x64xf32>
    %c0_4 = arith.constant 0 : index
    %c0_5 = arith.constant 0 : index
    %20 = vector.load %arg5[%c0_4, %c0_5] : memref<1x64xf32, #tpu.memory_space<vmem>>, vector<1x64xf32>
    %21 = vector.broadcast %20 : vector<1x64xf32> to vector<16x64xf32>
    %22 = arith.addf %19, %21 : vector<16x64xf32>
    %cst = arith.constant dense<0.000000e+00> : vector<64xf32>
    %23 = vector.multi_reduction <add>, %22, %cst [0] : vector<16x64xf32> to vector<64xf32>
    %24 = vector.shape_cast %23 : vector<64xf32> to vector<1x64xf32>
    %cst_6 = arith.constant 1.600000e+01 : f32
    %25 = vector.broadcast %cst_6 : f32 to vector<1x64xf32>
    %26 = arith.divf %24, %25 : vector<1x64xf32>
    %cst_7 = arith.constant dense<0xFF800000> : vector<64xf32>
    %27 = vector.multi_reduction <maximumf>, %22, %cst_7 [0] : vector<16x64xf32> to vector<64xf32>
    %28 = vector.shape_cast %27 : vector<64xf32> to vector<1x64xf32>
    %c0_8 = arith.constant 0 : index
    %c0_9 = arith.constant 0 : index
    %29 = vector.load %arg6[%c0_8, %c0_9] : memref<64x4xf32, #tpu.memory_space<vmem>>, vector<64x4xf32>
    %c0_10 = arith.constant 0 : index
    %c0_11 = arith.constant 0 : index
    %30 = vector.load %arg7[%c0_10, %c0_11] : memref<4x64xf32, #tpu.memory_space<vmem>>, vector<4x64xf32>
    %cst_12 = arith.constant dense<0.000000e+00> : vector<1x4xf32>
    %31 = tpu.matmul %26, %29, %cst_12 {dimension_numbers = #tpu.dot_dimension_numbers<[1], [0], [0], [1], [0, 0, 1, 1], [], []>} : vector<1x64xf32>, vector<64x4xf32>, vector<1x4xf32> -> vector<1x4xf32>
    %cst_13 = arith.constant 0.000000e+00 : f32
    %32 = vector.broadcast %cst_13 : f32 to vector<1x4xf32>
    %33 = arith.maximumf %31, %32 : vector<1x4xf32>
    %cst_14 = arith.constant dense<0.000000e+00> : vector<1x64xf32>
    %34 = tpu.matmul %33, %30, %cst_14 {dimension_numbers = #tpu.dot_dimension_numbers<[1], [0], [0], [1], [0, 0, 1, 1], [], []>} : vector<1x4xf32>, vector<4x64xf32>, vector<1x64xf32> -> vector<1x64xf32>
    %cst_15 = arith.constant dense<0.000000e+00> : vector<1x4xf32>
    %35 = tpu.matmul %28, %29, %cst_15 {dimension_numbers = #tpu.dot_dimension_numbers<[1], [0], [0], [1], [0, 0, 1, 1], [], []>} : vector<1x64xf32>, vector<64x4xf32>, vector<1x4xf32> -> vector<1x4xf32>
    %cst_16 = arith.constant 0.000000e+00 : f32
    %36 = vector.broadcast %cst_16 : f32 to vector<1x4xf32>
    %37 = arith.maximumf %35, %36 : vector<1x4xf32>
    %cst_17 = arith.constant dense<0.000000e+00> : vector<1x64xf32>
    %38 = tpu.matmul %37, %30, %cst_17 {dimension_numbers = #tpu.dot_dimension_numbers<[1], [0], [0], [1], [0, 0, 1, 1], [], []>} : vector<1x4xf32>, vector<4x64xf32>, vector<1x64xf32> -> vector<1x64xf32>
    %39 = arith.addf %34, %38 : vector<1x64xf32>
    %40 = arith.negf %39 : vector<1x64xf32>
    %41 = math.exp %40 : vector<1x64xf32>
    %cst_18 = arith.constant 1.000000e+00 : f32
    %42 = vector.broadcast %cst_18 : f32 to vector<1x64xf32>
    %43 = arith.addf %42, %41 : vector<1x64xf32>
    %44 = arith.divf %42, %43 : vector<1x64xf32>
    %c0_19 = arith.constant 0 : index
    %c0_20 = arith.constant 0 : index
    %c0_21 = arith.constant 0 : index
    %45 = vector.load %arg2[%c0_19, %c0_20, %c0_21] : memref<1x16x64xf32, #tpu.memory_space<vmem>>, vector<1x16x64xf32>
    %46 = vector.shape_cast %45 : vector<1x16x64xf32> to vector<16x64xf32>
    %47 = vector.broadcast %44 : vector<1x64xf32> to vector<16x64xf32>
    %48 = arith.mulf %46, %47 : vector<16x64xf32>
    %c0_22 = arith.constant 0 : index
    %c0_23 = arith.constant 0 : index
    %49 = vector.load %arg3[%c0_22, %c0_23] : memref<16x64xf32, #tpu.memory_space<vmem>>, vector<16x64xf32>
    %50 = arith.addf %48, %49 : vector<16x64xf32>
    %c0_24 = arith.constant 0 : index
    %c0_25 = arith.constant 0 : index
    %c0_26 = arith.constant 0 : index
    %51 = vector.load %arg8[%c0_24, %c0_25, %c0_26] : memref<1x16x64xf32, #tpu.memory_space<vmem>>, vector<1x16x64xf32>
    %52 = vector.shape_cast %51 : vector<1x16x64xf32> to vector<16x64xf32>
    %53 = vector.shape_cast %50 : vector<16x64xf32> to vector<1x16x64xf32>
    tpu.vector_store %arg8[%c0_24, %c0_25, %c0_26], %53 {strides = array<i32>} : memref<1x16x64xf32, #tpu.memory_space<vmem>>, vector<1x16x64xf32>,
    return
  }
  func.func @transform_0(%arg0: i32) -> (i32, i32, i32) {
    %c0_i32 = arith.constant 0 : i32
    %c0_i32_0 = arith.constant 0 : i32
    %c0_i32_1 = arith.constant 0 : i32
    return %arg0, %c0_i32, %c0_i32_0 : i32, i32, i32
  }
  func.func @transform_1(%arg0: i32) -> (i32, i32, i32) {
    %c0_i32 = arith.constant 0 : i32
    %c0_i32_0 = arith.constant 0 : i32
    %c0_i32_1 = arith.constant 0 : i32
    return %arg0, %c0_i32, %c0_i32_0 : i32, i32, i32
  }
  func.func @transform_2(%arg0: i32) -> (i32, i32) {
    %c0_i32 = arith.constant 0 : i32
    %c0_i32_0 = arith.constant 0 : i32
    %c0_i32_1 = arith.constant 0 : i32
    return %c0_i32, %c0_i32_0 : i32, i32
  }
  func.func @transform_3(%arg0: i32) -> (i32, i32) {
    %c0_i32 = arith.constant 0 : i32
    %c0_i32_0 = arith.constant 0 : i32
    %c0_i32_1 = arith.constant 0 : i32
    return %c0_i32, %c0_i32_0 : i32, i32
  }
  func.func @transform_4(%arg0: i32) -> (i32, i32) {
    %c0_i32 = arith.constant 0 : i32
    %c0_i32_0 = arith.constant 0 : i32
    %c0_i32_1 = arith.constant 0 : i32
    return %c0_i32, %c0_i32_0 : i32, i32
  }
  func.func @transform_5(%arg0: i32) -> (i32, i32) {
    %c0_i32 = arith.constant 0 : i32
    %c0_i32_0 = arith.constant 0 : i32
    %c0_i32_1 = arith.constant 0 : i32
    return %c0_i32, %c0_i32_0 : i32, i32
  }
  func.func @transform_6(%arg0: i32) -> (i32, i32) {
    %c0_i32 = arith.constant 0 : i32
    %c0_i32_0 = arith.constant 0 : i32
    %c0_i32_1 = arith.constant 0 : i32
    return %c0_i32, %c0_i32_0 : i32, i32
  }
  func.func @transform_7(%arg0: i32) -> (i32, i32, i32) {
    %c0_i32 = arith.constant 0 : i32
    %c0_i32_0 = arith.constant 0 : i32
    %c0_i32_1 = arith.constant 0 : i32
    return %arg0, %c0_i32, %c0_i32_0 : i32, i32, i32
  }
}

module attributes {stable_mosaic.version = 11 : i64} {
  func.func @_cross_block_kernel(%arg0: i32, %arg1: memref<1x16x64xf32, #tpu.memory_space<vmem>>, %arg2: memref<1x16x64xf32, #tpu.memory_space<vmem>>, %arg3: memref<64x64xf32, #tpu.memory_space<vmem>>, %arg4: memref<1x64xf32, #tpu.memory_space<vmem>>, %arg5: memref<64x128xf32, #tpu.memory_space<vmem>>, %arg6: memref<1x128xf32, #tpu.memory_space<vmem>>, %arg7: memref<64x64xf32, #tpu.memory_space<vmem>>, %arg8: memref<1x64xf32, #tpu.memory_space<vmem>>, %arg9: memref<1x64xf32, #tpu.memory_space<vmem>>, %arg10: memref<1x64xf32, #tpu.memory_space<vmem>>, %arg11: memref<64x128xf32, #tpu.memory_space<vmem>>, %arg12: memref<1x128xf32, #tpu.memory_space<vmem>>, %arg13: memref<128x64xf32, #tpu.memory_space<vmem>>, %arg14: memref<1x64xf32, #tpu.memory_space<vmem>>, %arg15: memref<1x64xf32, #tpu.memory_space<vmem>>, %arg16: memref<1x64xf32, #tpu.memory_space<vmem>>, %arg17: memref<1x16x64xf32, #tpu.memory_space<vmem>>) attributes {dimension_semantics = [#tpu.dimension_semantics<parallel>], iteration_bounds = array<i64: 2>, scalar_prefetch = 0 : i64, scratch_operands = 0 : i64, tpu.core_type = #tpu.core_type<tc>, window_params = [{transform_indices = @transform_0, window_bounds = array<i64: 1, 16, 64>}, {transform_indices = @transform_1, window_bounds = array<i64: 1, 16, 64>}, {pipeline_mode = #tpu.pipeline_mode<synchronous>, transform_indices = @transform_2, window_bounds = array<i64: 64, 64>}, {pipeline_mode = #tpu.pipeline_mode<synchronous>, transform_indices = @transform_3, window_bounds = array<i64: 1, 64>}, {pipeline_mode = #tpu.pipeline_mode<synchronous>, transform_indices = @transform_4, window_bounds = array<i64: 64, 128>}, {pipeline_mode = #tpu.pipeline_mode<synchronous>, transform_indices = @transform_5, window_bounds = array<i64: 1, 128>}, {pipeline_mode = #tpu.pipeline_mode<synchronous>, transform_indices = @transform_6, window_bounds = array<i64: 64, 64>}, {pipeline_mode = #tpu.pipeline_mode<synchronous>, transform_indices = @transform_7, window_bounds = array<i64: 1, 64>}, {pipeline_mode = #tpu.pipeline_mode<synchronous>, transform_indices = @transform_8, window_bounds = array<i64: 1, 64>}, {pipeline_mode = #tpu.pipeline_mode<synchronous>, transform_indices = @transform_9, window_bounds = array<i64: 1, 64>}, {pipeline_mode = #tpu.pipeline_mode<synchronous>, transform_indices = @transform_10, window_bounds = array<i64: 64, 128>}, {pipeline_mode = #tpu.pipeline_mode<synchronous>, transform_indices = @transform_11, window_bounds = array<i64: 1, 128>}, {pipeline_mode = #tpu.pipeline_mode<synchronous>, transform_indices = @transform_12, window_bounds = array<i64: 128, 64>}, {pipeline_mode = #tpu.pipeline_mode<synchronous>, transform_indices = @transform_13, window_bounds = array<i64: 1, 64>}, {pipeline_mode = #tpu.pipeline_mode<synchronous>, transform_indices = @transform_14, window_bounds = array<i64: 1, 64>}, {pipeline_mode = #tpu.pipeline_mode<synchronous>, transform_indices = @transform_15, window_bounds = array<i64: 1, 64>}, {transform_indices = @transform_16, window_bounds = array<i64: 1, 16, 64>}]} {
    %c0 = arith.constant 0 : index
    %c0_0 = arith.constant 0 : index
    %c0_1 = arith.constant 0 : index
    %0 = vector.load %arg1[%c0, %c0_0, %c0_1] : memref<1x16x64xf32, #tpu.memory_space<vmem>>, vector<1x16x64xf32>
    %1 = vector.shape_cast %0 : vector<1x16x64xf32> to vector<16x64xf32>
    %c0_2 = arith.constant 0 : index
    %c0_3 = arith.constant 0 : index
    %c0_4 = arith.constant 0 : index
    %2 = vector.load %arg2[%c0_2, %c0_3, %c0_4] : memref<1x16x64xf32, #tpu.memory_space<vmem>>, vector<1x16x64xf32>
    %3 = vector.shape_cast %2 : vector<1x16x64xf32> to vector<16x64xf32>
    %c0_5 = arith.constant 0 : index
    %c0_6 = arith.constant 0 : index
    %4 = vector.load %arg3[%c0_5, %c0_6] : memref<64x64xf32, #tpu.memory_space<vmem>>, vector<64x64xf32>
    %c0_7 = arith.constant 0 : index
    %c0_8 = arith.constant 0 : index
    %5 = vector.load %arg4[%c0_7, %c0_8] : memref<1x64xf32, #tpu.memory_space<vmem>>, vector<1x64xf32>
    %c0_9 = arith.constant 0 : index
    %c0_10 = arith.constant 0 : index
    %6 = vector.load %arg5[%c0_9, %c0_10] : memref<64x128xf32, #tpu.memory_space<vmem>>, vector<64x128xf32>
    %c0_11 = arith.constant 0 : index
    %c0_12 = arith.constant 0 : index
    %7 = vector.load %arg6[%c0_11, %c0_12] : memref<1x128xf32, #tpu.memory_space<vmem>>, vector<1x128xf32>
    %c0_13 = arith.constant 0 : index
    %c0_14 = arith.constant 0 : index
    %8 = vector.load %arg7[%c0_13, %c0_14] : memref<64x64xf32, #tpu.memory_space<vmem>>, vector<64x64xf32>
    %c0_15 = arith.constant 0 : index
    %c0_16 = arith.constant 0 : index
    %9 = vector.load %arg8[%c0_15, %c0_16] : memref<1x64xf32, #tpu.memory_space<vmem>>, vector<1x64xf32>
    %c0_17 = arith.constant 0 : index
    %c0_18 = arith.constant 0 : index
    %10 = vector.load %arg9[%c0_17, %c0_18] : memref<1x64xf32, #tpu.memory_space<vmem>>, vector<1x64xf32>
    %c0_19 = arith.constant 0 : index
    %c0_20 = arith.constant 0 : index
    %11 = vector.load %arg10[%c0_19, %c0_20] : memref<1x64xf32, #tpu.memory_space<vmem>>, vector<1x64xf32>
    %12 = arith.truncf %1 : vector<16x64xf32> to vector<16x64xbf16>
    %13 = arith.truncf %4 : vector<64x64xf32> to vector<64x64xbf16>
    %cst = arith.constant dense<0.000000e+00> : vector<16x64xf32>
    %14 = tpu.matmul %12, %13, %cst {dimension_numbers = #tpu.dot_dimension_numbers<[1], [0], [0], [1], [0, 0, 1, 1], [], []>} : vector<16x64xbf16>, vector<64x64xbf16>, vector<16x64xf32> -> vector<16x64xf32>
    %15 = vector.broadcast %5 : vector<1x64xf32> to vector<16x64xf32>
    %16 = arith.addf %14, %15 : vector<16x64xf32>
    %17 = arith.truncf %3 : vector<16x64xf32> to vector<16x64xbf16>
    %18 = arith.truncf %6 : vector<64x128xf32> to vector<64x128xbf16>
    %cst_21 = arith.constant dense<0.000000e+00> : vector<16x128xf32>
    %19 = tpu.matmul %17, %18, %cst_21 {dimension_numbers = #tpu.dot_dimension_numbers<[1], [0], [0], [1], [0, 0, 1, 1], [], []>} : vector<16x64xbf16>, vector<64x128xbf16>, vector<16x128xf32> -> vector<16x128xf32>
    %20 = vector.broadcast %7 : vector<1x128xf32> to vector<16x128xf32>
    %21 = arith.addf %19, %20 : vector<16x128xf32>
    %22 = vector.extract_strided_slice %21 {offsets = [0, 0], sizes = [16, 64], strides = [1, 1]} : vector<16x128xf32> to vector<16x64xf32>
    %23 = vector.extract_strided_slice %21 {offsets = [0, 64], sizes = [16, 64], strides = [1, 1]} : vector<16x128xf32> to vector<16x64xf32>
    %cst_22 = arith.constant 0.000000e+00 : f32
    %24 = vector.broadcast %cst_22 : f32 to vector<16x64xf32>
    %25 = vector.extract_strided_slice %16 {offsets = [0, 0], sizes = [16, 8], strides = [1, 1]} : vector<16x64xf32> to vector<16x8xf32>
    %cst_23 = arith.constant 0.353553385 : f32
    %26 = vector.broadcast %cst_23 : f32 to vector<16x8xf32>
    %27 = arith.mulf %25, %26 : vector<16x8xf32>
    %28 = vector.extract_strided_slice %22 {offsets = [0, 0], sizes = [16, 8], strides = [1, 1]} : vector<16x64xf32> to vector<16x8xf32>
    %cst_24 = arith.constant dense<0.000000e+00> : vector<16x16xf32>
    %29 = tpu.matmul %27, %28, %cst_24 {dimension_numbers = #tpu.dot_dimension_numbers<[1], [1], [0], [0], [0, 0, 1, 0], [], []>} : vector<16x8xf32>, vector<16x8xf32>, vector<16x16xf32> -> vector<16x16xf32>
    %cst_25 = arith.constant dense<0xFF800000> : vector<16xf32>
    %30 = vector.multi_reduction <maximumf>, %29, %cst_25 [1] : vector<16x16xf32> to vector<16xf32>
    %31 = vector.shape_cast %30 : vector<16xf32> to vector<16x1xf32>
    %32 = vector.broadcast %31 : vector<16x1xf32> to vector<16x16xf32>
    %33 = arith.subf %29, %32 : vector<16x16xf32>
    %34 = math.exp %33 : vector<16x16xf32>
    %cst_26 = arith.constant dense<0.000000e+00> : vector<16xf32>
    %35 = vector.multi_reduction <add>, %34, %cst_26 [1] : vector<16x16xf32> to vector<16xf32>
    %36 = vector.shape_cast %35 : vector<16xf32> to vector<16x1xf32>
    %37 = tpu.reciprocal %36 {approx = true} : vector<16x1xf32> -> vector<16x1xf32>
    %38 = vector.broadcast %37 : vector<16x1xf32> to vector<16x16xf32>
    %39 = arith.mulf %34, %38 : vector<16x16xf32>
    %40 = vector.extract_strided_slice %23 {offsets = [0, 0], sizes = [16, 8], strides = [1, 1]} : vector<16x64xf32> to vector<16x8xf32>
    %cst_27 = arith.constant dense<0.000000e+00> : vector<16x8xf32>
    %41 = tpu.matmul %39, %40, %cst_27 {dimension_numbers = #tpu.dot_dimension_numbers<[1], [0], [0], [1], [0, 0, 1, 1], [], []>} : vector<16x16xf32>, vector<16x8xf32>, vector<16x8xf32> -> vector<16x8xf32>
    %42 = vector.extract_strided_slice %8 {offsets = [0, 0], sizes = [8, 64], strides = [1, 1]} : vector<64x64xf32> to vector<8x64xf32>
    %cst_28 = arith.constant dense<0.000000e+00> : vector<16x64xf32>
    %43 = tpu.matmul %41, %42, %cst_28 {dimension_numbers = #tpu.dot_dimension_numbers<[1], [0], [0], [1], [0, 0, 1, 1], [], []>} : vector<16x8xf32>, vector<8x64xf32>, vector<16x64xf32> -> vector<16x64xf32>
    %44 = arith.addf %24, %43 : vector<16x64xf32>
    %45 = vector.extract_strided_slice %16 {offsets = [0, 8], sizes = [16, 8], strides = [1, 1]} : vector<16x64xf32> to vector<16x8xf32>
    %cst_29 = arith.constant 0.353553385 : f32
    %46 = vector.broadcast %cst_29 : f32 to vector<16x8xf32>
    %47 = arith.mulf %45, %46 : vector<16x8xf32>
    %48 = vector.extract_strided_slice %22 {offsets = [0, 8], sizes = [16, 8], strides = [1, 1]} : vector<16x64xf32> to vector<16x8xf32>
    %cst_30 = arith.constant dense<0.000000e+00> : vector<16x16xf32>
    %49 = tpu.matmul %47, %48, %cst_30 {dimension_numbers = #tpu.dot_dimension_numbers<[1], [1], [0], [0], [0, 0, 1, 0], [], []>} : vector<16x8xf32>, vector<16x8xf32>, vector<16x16xf32> -> vector<16x16xf32>
    %cst_31 = arith.constant dense<0xFF800000> : vector<16xf32>
    %50 = vector.multi_reduction <maximumf>, %49, %cst_31 [1] : vector<16x16xf32> to vector<16xf32>
    %51 = vector.shape_cast %50 : vector<16xf32> to vector<16x1xf32>
    %52 = vector.broadcast %51 : vector<16x1xf32> to vector<16x16xf32>
    %53 = arith.subf %49, %52 : vector<16x16xf32>
    %54 = math.exp %53 : vector<16x16xf32>
    %cst_32 = arith.constant dense<0.000000e+00> : vector<16xf32>
    %55 = vector.multi_reduction <add>, %54, %cst_32 [1] : vector<16x16xf32> to vector<16xf32>
    %56 = vector.shape_cast %55 : vector<16xf32> to vector<16x1xf32>
    %57 = tpu.reciprocal %56 {approx = true} : vector<16x1xf32> -> vector<16x1xf32>
    %58 = vector.broadcast %57 : vector<16x1xf32> to vector<16x16xf32>
    %59 = arith.mulf %54, %58 : vector<16x16xf32>
    %60 = vector.extract_strided_slice %23 {offsets = [0, 8], sizes = [16, 8], strides = [1, 1]} : vector<16x64xf32> to vector<16x8xf32>
    %cst_33 = arith.constant dense<0.000000e+00> : vector<16x8xf32>
    %61 = tpu.matmul %59, %60, %cst_33 {dimension_numbers = #tpu.dot_dimension_numbers<[1], [0], [0], [1], [0, 0, 1, 1], [], []>} : vector<16x16xf32>, vector<16x8xf32>, vector<16x8xf32> -> vector<16x8xf32>
    %62 = vector.extract_strided_slice %8 {offsets = [8, 0], sizes = [8, 64], strides = [1, 1]} : vector<64x64xf32> to vector<8x64xf32>
    %cst_34 = arith.constant dense<0.000000e+00> : vector<16x64xf32>
    %63 = tpu.matmul %61, %62, %cst_34 {dimension_numbers = #tpu.dot_dimension_numbers<[1], [0], [0], [1], [0, 0, 1, 1], [], []>} : vector<16x8xf32>, vector<8x64xf32>, vector<16x64xf32> -> vector<16x64xf32>
    %64 = arith.addf %44, %63 : vector<16x64xf32>
    %65 = vector.extract_strided_slice %16 {offsets = [0, 16], sizes = [16, 8], strides = [1, 1]} : vector<16x64xf32> to vector<16x8xf32>
    %cst_35 = arith.constant 0.353553385 : f32
    %66 = vector.broadcast %cst_35 : f32 to vector<16x8xf32>
    %67 = arith.mulf %65, %66 : vector<16x8xf32>
    %68 = vector.extract_strided_slice %22 {offsets = [0, 16], sizes = [16, 8], strides = [1, 1]} : vector<16x64xf32> to vector<16x8xf32>
    %cst_36 = arith.constant dense<0.000000e+00> : vector<16x16xf32>
    %69 = tpu.matmul %67, %68, %cst_36 {dimension_numbers = #tpu.dot_dimension_numbers<[1], [1], [0], [0], [0, 0, 1, 0], [], []>} : vector<16x8xf32>, vector<16x8xf32>, vector<16x16xf32> -> vector<16x16xf32>
    %cst_37 = arith.constant dense<0xFF800000> : vector<16xf32>
    %70 = vector.multi_reduction <maximumf>, %69, %cst_37 [1] : vector<16x16xf32> to vector<16xf32>
    %71 = vector.shape_cast %70 : vector<16xf32> to vector<16x1xf32>
    %72 = vector.broadcast %71 : vector<16x1xf32> to vector<16x16xf32>
    %73 = arith.subf %69, %72 : vector<16x16xf32>
    %74 = math.exp %73 : vector<16x16xf32>
    %cst_38 = arith.constant dense<0.000000e+00> : vector<16xf32>
    %75 = vector.multi_reduction <add>, %74, %cst_38 [1] : vector<16x16xf32> to vector<16xf32>
    %76 = vector.shape_cast %75 : vector<16xf32> to vector<16x1xf32>
    %77 = tpu.reciprocal %76 {approx = true} : vector<16x1xf32> -> vector<16x1xf32>
    %78 = vector.broadcast %77 : vector<16x1xf32> to vector<16x16xf32>
    %79 = arith.mulf %74, %78 : vector<16x16xf32>
    %80 = vector.extract_strided_slice %23 {offsets = [0, 16], sizes = [16, 8], strides = [1, 1]} : vector<16x64xf32> to vector<16x8xf32>
    %cst_39 = arith.constant dense<0.000000e+00> : vector<16x8xf32>
    %81 = tpu.matmul %79, %80, %cst_39 {dimension_numbers = #tpu.dot_dimension_numbers<[1], [0], [0], [1], [0, 0, 1, 1], [], []>} : vector<16x16xf32>, vector<16x8xf32>, vector<16x8xf32> -> vector<16x8xf32>
    %82 = vector.extract_strided_slice %8 {offsets = [16, 0], sizes = [8, 64], strides = [1, 1]} : vector<64x64xf32> to vector<8x64xf32>
    %cst_40 = arith.constant dense<0.000000e+00> : vector<16x64xf32>
    %83 = tpu.matmul %81, %82, %cst_40 {dimension_numbers = #tpu.dot_dimension_numbers<[1], [0], [0], [1], [0, 0, 1, 1], [], []>} : vector<16x8xf32>, vector<8x64xf32>, vector<16x64xf32> -> vector<16x64xf32>
    %84 = arith.addf %64, %83 : vector<16x64xf32>
    %85 = vector.extract_strided_slice %16 {offsets = [0, 24], sizes = [16, 8], strides = [1, 1]} : vector<16x64xf32> to vector<16x8xf32>
    %cst_41 = arith.constant 0.353553385 : f32
    %86 = vector.broadcast %cst_41 : f32 to vector<16x8xf32>
    %87 = arith.mulf %85, %86 : vector<16x8xf32>
    %88 = vector.extract_strided_slice %22 {offsets = [0, 24], sizes = [16, 8], strides = [1, 1]} : vector<16x64xf32> to vector<16x8xf32>
    %cst_42 = arith.constant dense<0.000000e+00> : vector<16x16xf32>
    %89 = tpu.matmul %87, %88, %cst_42 {dimension_numbers = #tpu.dot_dimension_numbers<[1], [1], [0], [0], [0, 0, 1, 0], [], []>} : vector<16x8xf32>, vector<16x8xf32>, vector<16x16xf32> -> vector<16x16xf32>
    %cst_43 = arith.constant dense<0xFF800000> : vector<16xf32>
    %90 = vector.multi_reduction <maximumf>, %89, %cst_43 [1] : vector<16x16xf32> to vector<16xf32>
    %91 = vector.shape_cast %90 : vector<16xf32> to vector<16x1xf32>
    %92 = vector.broadcast %91 : vector<16x1xf32> to vector<16x16xf32>
    %93 = arith.subf %89, %92 : vector<16x16xf32>
    %94 = math.exp %93 : vector<16x16xf32>
    %cst_44 = arith.constant dense<0.000000e+00> : vector<16xf32>
    %95 = vector.multi_reduction <add>, %94, %cst_44 [1] : vector<16x16xf32> to vector<16xf32>
    %96 = vector.shape_cast %95 : vector<16xf32> to vector<16x1xf32>
    %97 = tpu.reciprocal %96 {approx = true} : vector<16x1xf32> -> vector<16x1xf32>
    %98 = vector.broadcast %97 : vector<16x1xf32> to vector<16x16xf32>
    %99 = arith.mulf %94, %98 : vector<16x16xf32>
    %100 = vector.extract_strided_slice %23 {offsets = [0, 24], sizes = [16, 8], strides = [1, 1]} : vector<16x64xf32> to vector<16x8xf32>
    %cst_45 = arith.constant dense<0.000000e+00> : vector<16x8xf32>
    %101 = tpu.matmul %99, %100, %cst_45 {dimension_numbers = #tpu.dot_dimension_numbers<[1], [0], [0], [1], [0, 0, 1, 1], [], []>} : vector<16x16xf32>, vector<16x8xf32>, vector<16x8xf32> -> vector<16x8xf32>
    %102 = vector.extract_strided_slice %8 {offsets = [24, 0], sizes = [8, 64], strides = [1, 1]} : vector<64x64xf32> to vector<8x64xf32>
    %cst_46 = arith.constant dense<0.000000e+00> : vector<16x64xf32>
    %103 = tpu.matmul %101, %102, %cst_46 {dimension_numbers = #tpu.dot_dimension_numbers<[1], [0], [0], [1], [0, 0, 1, 1], [], []>} : vector<16x8xf32>, vector<8x64xf32>, vector<16x64xf32> -> vector<16x64xf32>
    %104 = arith.addf %84, %103 : vector<16x64xf32>
    %105 = vector.extract_strided_slice %16 {offsets = [0, 32], sizes = [16, 8], strides = [1, 1]} : vector<16x64xf32> to vector<16x8xf32>
    %cst_47 = arith.constant 0.353553385 : f32
    %106 = vector.broadcast %cst_47 : f32 to vector<16x8xf32>
    %107 = arith.mulf %105, %106 : vector<16x8xf32>
    %108 = vector.extract_strided_slice %22 {offsets = [0, 32], sizes = [16, 8], strides = [1, 1]} : vector<16x64xf32> to vector<16x8xf32>
    %cst_48 = arith.constant dense<0.000000e+00> : vector<16x16xf32>
    %109 = tpu.matmul %107, %108, %cst_48 {dimension_numbers = #tpu.dot_dimension_numbers<[1], [1], [0], [0], [0, 0, 1, 0], [], []>} : vector<16x8xf32>, vector<16x8xf32>, vector<16x16xf32> -> vector<16x16xf32>
    %cst_49 = arith.constant dense<0xFF800000> : vector<16xf32>
    %110 = vector.multi_reduction <maximumf>, %109, %cst_49 [1] : vector<16x16xf32> to vector<16xf32>
    %111 = vector.shape_cast %110 : vector<16xf32> to vector<16x1xf32>
    %112 = vector.broadcast %111 : vector<16x1xf32> to vector<16x16xf32>
    %113 = arith.subf %109, %112 : vector<16x16xf32>
    %114 = math.exp %113 : vector<16x16xf32>
    %cst_50 = arith.constant dense<0.000000e+00> : vector<16xf32>
    %115 = vector.multi_reduction <add>, %114, %cst_50 [1] : vector<16x16xf32> to vector<16xf32>
    %116 = vector.shape_cast %115 : vector<16xf32> to vector<16x1xf32>
    %117 = tpu.reciprocal %116 {approx = true} : vector<16x1xf32> -> vector<16x1xf32>
    %118 = vector.broadcast %117 : vector<16x1xf32> to vector<16x16xf32>
    %119 = arith.mulf %114, %118 : vector<16x16xf32>
    %120 = vector.extract_strided_slice %23 {offsets = [0, 32], sizes = [16, 8], strides = [1, 1]} : vector<16x64xf32> to vector<16x8xf32>
    %cst_51 = arith.constant dense<0.000000e+00> : vector<16x8xf32>
    %121 = tpu.matmul %119, %120, %cst_51 {dimension_numbers = #tpu.dot_dimension_numbers<[1], [0], [0], [1], [0, 0, 1, 1], [], []>} : vector<16x16xf32>, vector<16x8xf32>, vector<16x8xf32> -> vector<16x8xf32>
    %122 = vector.extract_strided_slice %8 {offsets = [32, 0], sizes = [8, 64], strides = [1, 1]} : vector<64x64xf32> to vector<8x64xf32>
    %cst_52 = arith.constant dense<0.000000e+00> : vector<16x64xf32>
    %123 = tpu.matmul %121, %122, %cst_52 {dimension_numbers = #tpu.dot_dimension_numbers<[1], [0], [0], [1], [0, 0, 1, 1], [], []>} : vector<16x8xf32>, vector<8x64xf32>, vector<16x64xf32> -> vector<16x64xf32>
    %124 = arith.addf %104, %123 : vector<16x64xf32>
    %125 = vector.extract_strided_slice %16 {offsets = [0, 40], sizes = [16, 8], strides = [1, 1]} : vector<16x64xf32> to vector<16x8xf32>
    %cst_53 = arith.constant 0.353553385 : f32
    %126 = vector.broadcast %cst_53 : f32 to vector<16x8xf32>
    %127 = arith.mulf %125, %126 : vector<16x8xf32>
    %128 = vector.extract_strided_slice %22 {offsets = [0, 40], sizes = [16, 8], strides = [1, 1]} : vector<16x64xf32> to vector<16x8xf32>
    %cst_54 = arith.constant dense<0.000000e+00> : vector<16x16xf32>
    %129 = tpu.matmul %127, %128, %cst_54 {dimension_numbers = #tpu.dot_dimension_numbers<[1], [1], [0], [0], [0, 0, 1, 0], [], []>} : vector<16x8xf32>, vector<16x8xf32>, vector<16x16xf32> -> vector<16x16xf32>
    %cst_55 = arith.constant dense<0xFF800000> : vector<16xf32>
    %130 = vector.multi_reduction <maximumf>, %129, %cst_55 [1] : vector<16x16xf32> to vector<16xf32>
    %131 = vector.shape_cast %130 : vector<16xf32> to vector<16x1xf32>
    %132 = vector.broadcast %131 : vector<16x1xf32> to vector<16x16xf32>
    %133 = arith.subf %129, %132 : vector<16x16xf32>
    %134 = math.exp %133 : vector<16x16xf32>
    %cst_56 = arith.constant dense<0.000000e+00> : vector<16xf32>
    %135 = vector.multi_reduction <add>, %134, %cst_56 [1] : vector<16x16xf32> to vector<16xf32>
    %136 = vector.shape_cast %135 : vector<16xf32> to vector<16x1xf32>
    %137 = tpu.reciprocal %136 {approx = true} : vector<16x1xf32> -> vector<16x1xf32>
    %138 = vector.broadcast %137 : vector<16x1xf32> to vector<16x16xf32>
    %139 = arith.mulf %134, %138 : vector<16x16xf32>
    %140 = vector.extract_strided_slice %23 {offsets = [0, 40], sizes = [16, 8], strides = [1, 1]} : vector<16x64xf32> to vector<16x8xf32>
    %cst_57 = arith.constant dense<0.000000e+00> : vector<16x8xf32>
    %141 = tpu.matmul %139, %140, %cst_57 {dimension_numbers = #tpu.dot_dimension_numbers<[1], [0], [0], [1], [0, 0, 1, 1], [], []>} : vector<16x16xf32>, vector<16x8xf32>, vector<16x8xf32> -> vector<16x8xf32>
    %142 = vector.extract_strided_slice %8 {offsets = [40, 0], sizes = [8, 64], strides = [1, 1]} : vector<64x64xf32> to vector<8x64xf32>
    %cst_58 = arith.constant dense<0.000000e+00> : vector<16x64xf32>
    %143 = tpu.matmul %141, %142, %cst_58 {dimension_numbers = #tpu.dot_dimension_numbers<[1], [0], [0], [1], [0, 0, 1, 1], [], []>} : vector<16x8xf32>, vector<8x64xf32>, vector<16x64xf32> -> vector<16x64xf32>
    %144 = arith.addf %124, %143 : vector<16x64xf32>
    %145 = vector.extract_strided_slice %16 {offsets = [0, 48], sizes = [16, 8], strides = [1, 1]} : vector<16x64xf32> to vector<16x8xf32>
    %cst_59 = arith.constant 0.353553385 : f32
    %146 = vector.broadcast %cst_59 : f32 to vector<16x8xf32>
    %147 = arith.mulf %145, %146 : vector<16x8xf32>
    %148 = vector.extract_strided_slice %22 {offsets = [0, 48], sizes = [16, 8], strides = [1, 1]} : vector<16x64xf32> to vector<16x8xf32>
    %cst_60 = arith.constant dense<0.000000e+00> : vector<16x16xf32>
    %149 = tpu.matmul %147, %148, %cst_60 {dimension_numbers = #tpu.dot_dimension_numbers<[1], [1], [0], [0], [0, 0, 1, 0], [], []>} : vector<16x8xf32>, vector<16x8xf32>, vector<16x16xf32> -> vector<16x16xf32>
    %cst_61 = arith.constant dense<0xFF800000> : vector<16xf32>
    %150 = vector.multi_reduction <maximumf>, %149, %cst_61 [1] : vector<16x16xf32> to vector<16xf32>
    %151 = vector.shape_cast %150 : vector<16xf32> to vector<16x1xf32>
    %152 = vector.broadcast %151 : vector<16x1xf32> to vector<16x16xf32>
    %153 = arith.subf %149, %152 : vector<16x16xf32>
    %154 = math.exp %153 : vector<16x16xf32>
    %cst_62 = arith.constant dense<0.000000e+00> : vector<16xf32>
    %155 = vector.multi_reduction <add>, %154, %cst_62 [1] : vector<16x16xf32> to vector<16xf32>
    %156 = vector.shape_cast %155 : vector<16xf32> to vector<16x1xf32>
    %157 = tpu.reciprocal %156 {approx = true} : vector<16x1xf32> -> vector<16x1xf32>
    %158 = vector.broadcast %157 : vector<16x1xf32> to vector<16x16xf32>
    %159 = arith.mulf %154, %158 : vector<16x16xf32>
    %160 = vector.extract_strided_slice %23 {offsets = [0, 48], sizes = [16, 8], strides = [1, 1]} : vector<16x64xf32> to vector<16x8xf32>
    %cst_63 = arith.constant dense<0.000000e+00> : vector<16x8xf32>
    %161 = tpu.matmul %159, %160, %cst_63 {dimension_numbers = #tpu.dot_dimension_numbers<[1], [0], [0], [1], [0, 0, 1, 1], [], []>} : vector<16x16xf32>, vector<16x8xf32>, vector<16x8xf32> -> vector<16x8xf32>
    %162 = vector.extract_strided_slice %8 {offsets = [48, 0], sizes = [8, 64], strides = [1, 1]} : vector<64x64xf32> to vector<8x64xf32>
    %cst_64 = arith.constant dense<0.000000e+00> : vector<16x64xf32>
    %163 = tpu.matmul %161, %162, %cst_64 {dimension_numbers = #tpu.dot_dimension_numbers<[1], [0], [0], [1], [0, 0, 1, 1], [], []>} : vector<16x8xf32>, vector<8x64xf32>, vector<16x64xf32> -> vector<16x64xf32>
    %164 = arith.addf %144, %163 : vector<16x64xf32>
    %165 = vector.extract_strided_slice %16 {offsets = [0, 56], sizes = [16, 8], strides = [1, 1]} : vector<16x64xf32> to vector<16x8xf32>
    %cst_65 = arith.constant 0.353553385 : f32
    %166 = vector.broadcast %cst_65 : f32 to vector<16x8xf32>
    %167 = arith.mulf %165, %166 : vector<16x8xf32>
    %168 = vector.extract_strided_slice %22 {offsets = [0, 56], sizes = [16, 8], strides = [1, 1]} : vector<16x64xf32> to vector<16x8xf32>
    %cst_66 = arith.constant dense<0.000000e+00> : vector<16x16xf32>
    %169 = tpu.matmul %167, %168, %cst_66 {dimension_numbers = #tpu.dot_dimension_numbers<[1], [1], [0], [0], [0, 0, 1, 0], [], []>} : vector<16x8xf32>, vector<16x8xf32>, vector<16x16xf32> -> vector<16x16xf32>
    %cst_67 = arith.constant dense<0xFF800000> : vector<16xf32>
    %170 = vector.multi_reduction <maximumf>, %169, %cst_67 [1] : vector<16x16xf32> to vector<16xf32>
    %171 = vector.shape_cast %170 : vector<16xf32> to vector<16x1xf32>
    %172 = vector.broadcast %171 : vector<16x1xf32> to vector<16x16xf32>
    %173 = arith.subf %169, %172 : vector<16x16xf32>
    %174 = math.exp %173 : vector<16x16xf32>
    %cst_68 = arith.constant dense<0.000000e+00> : vector<16xf32>
    %175 = vector.multi_reduction <add>, %174, %cst_68 [1] : vector<16x16xf32> to vector<16xf32>
    %176 = vector.shape_cast %175 : vector<16xf32> to vector<16x1xf32>
    %177 = tpu.reciprocal %176 {approx = true} : vector<16x1xf32> -> vector<16x1xf32>
    %178 = vector.broadcast %177 : vector<16x1xf32> to vector<16x16xf32>
    %179 = arith.mulf %174, %178 : vector<16x16xf32>
    %180 = vector.extract_strided_slice %23 {offsets = [0, 56], sizes = [16, 8], strides = [1, 1]} : vector<16x64xf32> to vector<16x8xf32>
    %cst_69 = arith.constant dense<0.000000e+00> : vector<16x8xf32>
    %181 = tpu.matmul %179, %180, %cst_69 {dimension_numbers = #tpu.dot_dimension_numbers<[1], [0], [0], [1], [0, 0, 1, 1], [], []>} : vector<16x16xf32>, vector<16x8xf32>, vector<16x8xf32> -> vector<16x8xf32>
    %182 = vector.extract_strided_slice %8 {offsets = [56, 0], sizes = [8, 64], strides = [1, 1]} : vector<64x64xf32> to vector<8x64xf32>
    %cst_70 = arith.constant dense<0.000000e+00> : vector<16x64xf32>
    %183 = tpu.matmul %181, %182, %cst_70 {dimension_numbers = #tpu.dot_dimension_numbers<[1], [0], [0], [1], [0, 0, 1, 1], [], []>} : vector<16x8xf32>, vector<8x64xf32>, vector<16x64xf32> -> vector<16x64xf32>
    %184 = arith.addf %164, %183 : vector<16x64xf32>
    %185 = vector.broadcast %9 : vector<1x64xf32> to vector<16x64xf32>
    %186 = arith.addf %184, %185 : vector<16x64xf32>
    %187 = arith.addf %1, %186 : vector<16x64xf32>
    %cst_71 = arith.constant dense<0.000000e+00> : vector<16xf32>
    %188 = vector.multi_reduction <add>, %187, %cst_71 [1] : vector<16x64xf32> to vector<16xf32>
    %189 = vector.shape_cast %188 : vector<16xf32> to vector<16x1xf32>
    %cst_72 = arith.constant 6.400000e+01 : f32
    %190 = vector.broadcast %cst_72 : f32 to vector<16x1xf32>
    %191 = arith.divf %189, %190 : vector<16x1xf32>
    %192 = vector.broadcast %191 : vector<16x1xf32> to vector<16x64xf32>
    %193 = arith.subf %187, %192 : vector<16x64xf32>
    %194 = arith.mulf %193, %193 : vector<16x64xf32>
    %cst_73 = arith.constant dense<0.000000e+00> : vector<16xf32>
    %195 = vector.multi_reduction <add>, %194, %cst_73 [1] : vector<16x64xf32> to vector<16xf32>
    %196 = vector.shape_cast %195 : vector<16xf32> to vector<16x1xf32>
    %cst_74 = arith.constant 6.400000e+01 : f32
    %197 = vector.broadcast %cst_74 : f32 to vector<16x1xf32>
    %198 = arith.divf %196, %197 : vector<16x1xf32>
    %199 = vector.broadcast %191 : vector<16x1xf32> to vector<16x64xf32>
    %200 = arith.subf %187, %199 : vector<16x64xf32>
    %cst_75 = arith.constant 9.99999974E-6 : f32
    %201 = vector.broadcast %cst_75 : f32 to vector<16x1xf32>
    %202 = arith.addf %198, %201 : vector<16x1xf32>
    %203 = math.rsqrt %202 : vector<16x1xf32>
    %204 = vector.broadcast %203 : vector<16x1xf32> to vector<16x64xf32>
    %205 = arith.mulf %200, %204 : vector<16x64xf32>
    %206 = vector.broadcast %10 : vector<1x64xf32> to vector<16x64xf32>
    %207 = arith.mulf %205, %206 : vector<16x64xf32>
    %208 = vector.broadcast %11 : vector<1x64xf32> to vector<16x64xf32>
    %209 = arith.addf %207, %208 : vector<16x64xf32>
    %210 = arith.truncf %209 : vector<16x64xf32> to vector<16x64xbf16>
    %c0_76 = arith.constant 0 : index
    %c0_77 = arith.constant 0 : index
    %211 = vector.load %arg11[%c0_76, %c0_77] : memref<64x128xf32, #tpu.memory_space<vmem>>, vector<64x128xf32>
    %212 = arith.truncf %211 : vector<64x128xf32> to vector<64x128xbf16>
    %cst_78 = arith.constant dense<0.000000e+00> : vector<16x128xf32>
    %213 = tpu.matmul %210, %212, %cst_78 {dimension_numbers = #tpu.dot_dimension_numbers<[1], [0], [0], [1], [0, 0, 1, 1], [], []>} : vector<16x64xbf16>, vector<64x128xbf16>, vector<16x128xf32> -> vector<16x128xf32>
    %c0_79 = arith.constant 0 : index
    %c0_80 = arith.constant 0 : index
    %214 = vector.load %arg12[%c0_79, %c0_80] : memref<1x128xf32, #tpu.memory_space<vmem>>, vector<1x128xf32>
    %215 = vector.broadcast %214 : vector<1x128xf32> to vector<16x128xf32>
    %216 = arith.addf %213, %215 : vector<16x128xf32>
    %cst_81 = arith.constant 0.000000e+00 : f32
    %217 = vector.broadcast %cst_81 : f32 to vector<16x128xf32>
    %218 = arith.maximumf %216, %217 : vector<16x128xf32>
    %219 = arith.truncf %218 : vector<16x128xf32> to vector<16x128xbf16>
    %c0_82 = arith.constant 0 : index
    %c0_83 = arith.constant 0 : index
    %220 = vector.load %arg13[%c0_82, %c0_83] : memref<128x64xf32, #tpu.memory_space<vmem>>, vector<128x64xf32>
    %221 = arith.truncf %220 : vector<128x64xf32> to vector<128x64xbf16>
    %cst_84 = arith.constant dense<0.000000e+00> : vector<16x64xf32>
    %222 = tpu.matmul %219, %221, %cst_84 {dimension_numbers = #tpu.dot_dimension_numbers<[1], [0], [0], [1], [0, 0, 1, 1], [], []>} : vector<16x128xbf16>, vector<128x64xbf16>, vector<16x64xf32> -> vector<16x64xf32>
    %c0_85 = arith.constant 0 : index
    %c0_86 = arith.constant 0 : index
    %223 = vector.load %arg14[%c0_85, %c0_86] : memref<1x64xf32, #tpu.memory_space<vmem>>, vector<1x64xf32>
    %224 = vector.broadcast %223 : vector<1x64xf32> to vector<16x64xf32>
    %225 = arith.addf %222, %224 : vector<16x64xf32>
    %226 = arith.addf %209, %225 : vector<16x64xf32>
    %c0_87 = arith.constant 0 : index
    %c0_88 = arith.constant 0 : index
    %227 = vector.load %arg15[%c0_87, %c0_88] : memref<1x64xf32, #tpu.memory_space<vmem>>, vector<1x64xf32>
    %c0_89 = arith.constant 0 : index
    %c0_90 = arith.constant 0 : index
    %228 = vector.load %arg16[%c0_89, %c0_90] : memref<1x64xf32, #tpu.memory_space<vmem>>, vector<1x64xf32>
    %cst_91 = arith.constant dense<0.000000e+00> : vector<16xf32>
    %229 = vector.multi_reduction <add>, %226, %cst_91 [1] : vector<16x64xf32> to vector<16xf32>
    %230 = vector.shape_cast %229 : vector<16xf32> to vector<16x1xf32>
    %cst_92 = arith.constant 6.400000e+01 : f32
    %231 = vector.broadcast %cst_92 : f32 to vector<16x1xf32>
    %232 = arith.divf %230, %231 : vector<16x1xf32>
    %233 = vector.broadcast %232 : vector<16x1xf32> to vector<16x64xf32>
    %234 = arith.subf %226, %233 : vector<16x64xf32>
    %235 = arith.mulf %234, %234 : vector<16x64xf32>
    %cst_93 = arith.constant dense<0.000000e+00> : vector<16xf32>
    %236 = vector.multi_reduction <add>, %235, %cst_93 [1] : vector<16x64xf32> to vector<16xf32>
    %237 = vector.shape_cast %236 : vector<16xf32> to vector<16x1xf32>
    %cst_94 = arith.constant 6.400000e+01 : f32
    %238 = vector.broadcast %cst_94 : f32 to vector<16x1xf32>
    %239 = arith.divf %237, %238 : vector<16x1xf32>
    %240 = vector.broadcast %232 : vector<16x1xf32> to vector<16x64xf32>
    %241 = arith.subf %226, %240 : vector<16x64xf32>
    %cst_95 = arith.constant 9.99999974E-6 : f32
    %242 = vector.broadcast %cst_95 : f32 to vector<16x1xf32>
    %243 = arith.addf %239, %242 : vector<16x1xf32>
    %244 = math.rsqrt %243 : vector<16x1xf32>
    %245 = vector.broadcast %244 : vector<16x1xf32> to vector<16x64xf32>
    %246 = arith.mulf %241, %245 : vector<16x64xf32>
    %247 = vector.broadcast %227 : vector<1x64xf32> to vector<16x64xf32>
    %248 = arith.mulf %246, %247 : vector<16x64xf32>
    %249 = vector.broadcast %228 : vector<1x64xf32> to vector<16x64xf32>
    %250 = arith.addf %248, %249 : vector<16x64xf32>
    %c0_96 = arith.constant 0 : index
    %c0_97 = arith.constant 0 : index
    %c0_98 = arith.constant 0 : index
    %251 = vector.load %arg17[%c0_96, %c0_97, %c0_98] : memref<1x16x64xf32, #tpu.memory_space<vmem>>, vector<1x16x64xf32>
    %252 = vector.shape_cast %251 : vector<1x16x64xf32> to vector<16x64xf32>
    %253 = vector.shape_cast %250 : vector<16x64xf32> to vector<1x16x64xf32>
    tpu.vector_store %arg17[%c0_96, %c0_97, %c0_98], %253 {strides = array<i32>} : memref<1x16x64xf32, #tpu.memory_space<vmem>>, vector<1x16x64xf32>,
    return
  }
  func.func @transform_0(%arg0: i32) -> (i32, i32, i32) {
    %c0_i32 = arith.constant 0 : i32
    %c0_i32_0 = arith.constant 0 : i32
    %c0_i32_1 = arith.constant 0 : i32
    return %arg0, %c0_i32, %c0_i32_0 : i32, i32, i32
  }
  func.func @transform_1(%arg0: i32) -> (i32, i32, i32) {
    %c0_i32 = arith.constant 0 : i32
    %c0_i32_0 = arith.constant 0 : i32
    %c0_i32_1 = arith.constant 0 : i32
    return %arg0, %c0_i32, %c0_i32_0 : i32, i32, i32
  }
  func.func @transform_2(%arg0: i32) -> (i32, i32) {
    %c0_i32 = arith.constant 0 : i32
    %c0_i32_0 = arith.constant 0 : i32
    %c0_i32_1 = arith.constant 0 : i32
    return %c0_i32, %c0_i32_0 : i32, i32
  }
  func.func @transform_3(%arg0: i32) -> (i32, i32) {
    %c0_i32 = arith.constant 0 : i32
    %c0_i32_0 = arith.constant 0 : i32
    %c0_i32_1 = arith.constant 0 : i32
    return %c0_i32, %c0_i32_0 : i32, i32
  }
  func.func @transform_4(%arg0: i32) -> (i32, i32) {
    %c0_i32 = arith.constant 0 : i32
    %c0_i32_0 = arith.constant 0 : i32
    %c0_i32_1 = arith.constant 0 : i32
    return %c0_i32, %c0_i32_0 : i32, i32
  }
  func.func @transform_5(%arg0: i32) -> (i32, i32) {
    %c0_i32 = arith.constant 0 : i32
    %c0_i32_0 = arith.constant 0 : i32
    %c0_i32_1 = arith.constant 0 : i32
    return %c0_i32, %c0_i32_0 : i32, i32
  }
  func.func @transform_6(%arg0: i32) -> (i32, i32) {
    %c0_i32 = arith.constant 0 : i32
    %c0_i32_0 = arith.constant 0 : i32
    %c0_i32_1 = arith.constant 0 : i32
    return %c0_i32, %c0_i32_0 : i32, i32
  }
  func.func @transform_7(%arg0: i32) -> (i32, i32) {
    %c0_i32 = arith.constant 0 : i32
    %c0_i32_0 = arith.constant 0 : i32
    %c0_i32_1 = arith.constant 0 : i32
    return %c0_i32, %c0_i32_0 : i32, i32
  }
  func.func @transform_8(%arg0: i32) -> (i32, i32) {
    %c0_i32 = arith.constant 0 : i32
    %c0_i32_0 = arith.constant 0 : i32
    %c0_i32_1 = arith.constant 0 : i32
    return %c0_i32, %c0_i32_0 : i32, i32
  }
  func.func @transform_9(%arg0: i32) -> (i32, i32) {
    %c0_i32 = arith.constant 0 : i32
    %c0_i32_0 = arith.constant 0 : i32
    %c0_i32_1 = arith.constant 0 : i32
    return %c0_i32, %c0_i32_0 : i32, i32
  }
  func.func @transform_10(%arg0: i32) -> (i32, i32) {
    %c0_i32 = arith.constant 0 : i32
    %c0_i32_0 = arith.constant 0 : i32
    %c0_i32_1 = arith.constant 0 : i32
    return %c0_i32, %c0_i32_0 : i32, i32
  }
  func.func @transform_11(%arg0: i32) -> (i32, i32) {
    %c0_i32 = arith.constant 0 : i32
    %c0_i32_0 = arith.constant 0 : i32
    %c0_i32_1 = arith.constant 0 : i32
    return %c0_i32, %c0_i32_0 : i32, i32
  }
  func.func @transform_12(%arg0: i32) -> (i32, i32) {
    %c0_i32 = arith.constant 0 : i32
    %c0_i32_0 = arith.constant 0 : i32
    %c0_i32_1 = arith.constant 0 : i32
    return %c0_i32, %c0_i32_0 : i32, i32
  }
  func.func @transform_13(%arg0: i32) -> (i32, i32) {
    %c0_i32 = arith.constant 0 : i32
    %c0_i32_0 = arith.constant 0 : i32
    %c0_i32_1 = arith.constant 0 : i32
    return %c0_i32, %c0_i32_0 : i32, i32
  }
  func.func @transform_14(%arg0: i32) -> (i32, i32) {
    %c0_i32 = arith.constant 0 : i32
    %c0_i32_0 = arith.constant 0 : i32
    %c0_i32_1 = arith.constant 0 : i32
    return %c0_i32, %c0_i32_0 : i32, i32
  }
  func.func @transform_15(%arg0: i32) -> (i32, i32) {
    %c0_i32 = arith.constant 0 : i32
    %c0_i32_0 = arith.constant 0 : i32
    %c0_i32_1 = arith.constant 0 : i32
    return %c0_i32, %c0_i32_0 : i32, i32
  }
  func.func @transform_16(%arg0: i32) -> (i32, i32, i32) {
    %c0_i32 = arith.constant 0 : i32
    %c0_i32_0 = arith.constant 0 : i32
    %c0_i32_1 = arith.constant 0 : i32
    return %arg0, %c0_i32, %c0_i32_0 : i32, i32, i32
  }
}

module attributes {stable_mosaic.version = 11 : i64} {
  func.func @_cagd_self_kernel(%arg0: i32, %arg1: memref<1x16x64xf32, #tpu.memory_space<vmem>>, %arg2: memref<1x16x64xf32, #tpu.memory_space<vmem>>, %arg3: memref<1x16x64xf32, #tpu.memory_space<vmem>>, %arg4: memref<64x64xf32, #tpu.memory_space<vmem>>, %arg5: memref<1x64xf32, #tpu.memory_space<vmem>>, %arg6: memref<64x128xf32, #tpu.memory_space<vmem>>, %arg7: memref<1x128xf32, #tpu.memory_space<vmem>>, %arg8: memref<64x64xf32, #tpu.memory_space<vmem>>, %arg9: memref<1x64xf32, #tpu.memory_space<vmem>>, %arg10: memref<1x64xf32, #tpu.memory_space<vmem>>, %arg11: memref<1x64xf32, #tpu.memory_space<vmem>>, %arg12: memref<1x16x64xf32, #tpu.memory_space<vmem>>) attributes {dimension_semantics = [#tpu.dimension_semantics<parallel>], iteration_bounds = array<i64: 2>, scalar_prefetch = 0 : i64, scratch_operands = 0 : i64, tpu.core_type = #tpu.core_type<tc>, window_params = [{transform_indices = @transform_0, window_bounds = array<i64: 1, 16, 64>}, {transform_indices = @transform_1, window_bounds = array<i64: 1, 16, 64>}, {transform_indices = @transform_2, window_bounds = array<i64: 1, 16, 64>}, {pipeline_mode = #tpu.pipeline_mode<synchronous>, transform_indices = @transform_3, window_bounds = array<i64: 64, 64>}, {pipeline_mode = #tpu.pipeline_mode<synchronous>, transform_indices = @transform_4, window_bounds = array<i64: 1, 64>}, {pipeline_mode = #tpu.pipeline_mode<synchronous>, transform_indices = @transform_5, window_bounds = array<i64: 64, 128>}, {pipeline_mode = #tpu.pipeline_mode<synchronous>, transform_indices = @transform_6, window_bounds = array<i64: 1, 128>}, {pipeline_mode = #tpu.pipeline_mode<synchronous>, transform_indices = @transform_7, window_bounds = array<i64: 64, 64>}, {pipeline_mode = #tpu.pipeline_mode<synchronous>, transform_indices = @transform_8, window_bounds = array<i64: 1, 64>}, {pipeline_mode = #tpu.pipeline_mode<synchronous>, transform_indices = @transform_9, window_bounds = array<i64: 1, 64>}, {pipeline_mode = #tpu.pipeline_mode<synchronous>, transform_indices = @transform_10, window_bounds = array<i64: 1, 64>}, {transform_indices = @transform_11, window_bounds = array<i64: 1, 16, 64>}]} {
    %c0 = arith.constant 0 : index
    %c0_0 = arith.constant 0 : index
    %c0_1 = arith.constant 0 : index
    %0 = vector.load %arg2[%c0, %c0_0, %c0_1] : memref<1x16x64xf32, #tpu.memory_space<vmem>>, vector<1x16x64xf32>
    %1 = vector.shape_cast %0 : vector<1x16x64xf32> to vector<16x64xf32>
    %c0_2 = arith.constant 0 : index
    %c0_3 = arith.constant 0 : index
    %c0_4 = arith.constant 0 : index
    %2 = vector.load %arg1[%c0_2, %c0_3, %c0_4] : memref<1x16x64xf32, #tpu.memory_space<vmem>>, vector<1x16x64xf32>
    %3 = vector.shape_cast %2 : vector<1x16x64xf32> to vector<16x64xf32>
    %4 = arith.subf %1, %3 : vector<16x64xf32>
    %c0_5 = arith.constant 0 : index
    %c0_6 = arith.constant 0 : index
    %5 = vector.load %arg4[%c0_5, %c0_6] : memref<64x64xf32, #tpu.memory_space<vmem>>, vector<64x64xf32>
    %c0_7 = arith.constant 0 : index
    %c0_8 = arith.constant 0 : index
    %6 = vector.load %arg5[%c0_7, %c0_8] : memref<1x64xf32, #tpu.memory_space<vmem>>, vector<1x64xf32>
    %c0_9 = arith.constant 0 : index
    %c0_10 = arith.constant 0 : index
    %7 = vector.load %arg6[%c0_9, %c0_10] : memref<64x128xf32, #tpu.memory_space<vmem>>, vector<64x128xf32>
    %c0_11 = arith.constant 0 : index
    %c0_12 = arith.constant 0 : index
    %8 = vector.load %arg7[%c0_11, %c0_12] : memref<1x128xf32, #tpu.memory_space<vmem>>, vector<1x128xf32>
    %c0_13 = arith.constant 0 : index
    %c0_14 = arith.constant 0 : index
    %9 = vector.load %arg8[%c0_13, %c0_14] : memref<64x64xf32, #tpu.memory_space<vmem>>, vector<64x64xf32>
    %c0_15 = arith.constant 0 : index
    %c0_16 = arith.constant 0 : index
    %10 = vector.load %arg9[%c0_15, %c0_16] : memref<1x64xf32, #tpu.memory_space<vmem>>, vector<1x64xf32>
    %c0_17 = arith.constant 0 : index
    %c0_18 = arith.constant 0 : index
    %11 = vector.load %arg10[%c0_17, %c0_18] : memref<1x64xf32, #tpu.memory_space<vmem>>, vector<1x64xf32>
    %c0_19 = arith.constant 0 : index
    %c0_20 = arith.constant 0 : index
    %12 = vector.load %arg11[%c0_19, %c0_20] : memref<1x64xf32, #tpu.memory_space<vmem>>, vector<1x64xf32>
    %13 = arith.truncf %4 : vector<16x64xf32> to vector<16x64xbf16>
    %14 = arith.truncf %5 : vector<64x64xf32> to vector<64x64xbf16>
    %cst = arith.constant dense<0.000000e+00> : vector<16x64xf32>
    %15 = tpu.matmul %13, %14, %cst {dimension_numbers = #tpu.dot_dimension_numbers<[1], [0], [0], [1], [0, 0, 1, 1], [], []>} : vector<16x64xbf16>, vector<64x64xbf16>, vector<16x64xf32> -> vector<16x64xf32>
    %16 = vector.broadcast %6 : vector<1x64xf32> to vector<16x64xf32>
    %17 = arith.addf %15, %16 : vector<16x64xf32>
    %18 = arith.truncf %4 : vector<16x64xf32> to vector<16x64xbf16>
    %19 = arith.truncf %7 : vector<64x128xf32> to vector<64x128xbf16>
    %cst_21 = arith.constant dense<0.000000e+00> : vector<16x128xf32>
    %20 = tpu.matmul %18, %19, %cst_21 {dimension_numbers = #tpu.dot_dimension_numbers<[1], [0], [0], [1], [0, 0, 1, 1], [], []>} : vector<16x64xbf16>, vector<64x128xbf16>, vector<16x128xf32> -> vector<16x128xf32>
    %21 = vector.broadcast %8 : vector<1x128xf32> to vector<16x128xf32>
    %22 = arith.addf %20, %21 : vector<16x128xf32>
    %23 = vector.extract_strided_slice %22 {offsets = [0, 0], sizes = [16, 64], strides = [1, 1]} : vector<16x128xf32> to vector<16x64xf32>
    %24 = vector.extract_strided_slice %22 {offsets = [0, 64], sizes = [16, 64], strides = [1, 1]} : vector<16x128xf32> to vector<16x64xf32>
    %cst_22 = arith.constant 0.000000e+00 : f32
    %25 = vector.broadcast %cst_22 : f32 to vector<16x64xf32>
    %26 = vector.extract_strided_slice %17 {offsets = [0, 0], sizes = [16, 8], strides = [1, 1]} : vector<16x64xf32> to vector<16x8xf32>
    %cst_23 = arith.constant 0.353553385 : f32
    %27 = vector.broadcast %cst_23 : f32 to vector<16x8xf32>
    %28 = arith.mulf %26, %27 : vector<16x8xf32>
    %29 = vector.extract_strided_slice %23 {offsets = [0, 0], sizes = [16, 8], strides = [1, 1]} : vector<16x64xf32> to vector<16x8xf32>
    %cst_24 = arith.constant dense<0.000000e+00> : vector<16x16xf32>
    %30 = tpu.matmul %28, %29, %cst_24 {dimension_numbers = #tpu.dot_dimension_numbers<[1], [1], [0], [0], [0, 0, 1, 0], [], []>} : vector<16x8xf32>, vector<16x8xf32>, vector<16x16xf32> -> vector<16x16xf32>
    %cst_25 = arith.constant dense<0xFF800000> : vector<16xf32>
    %31 = vector.multi_reduction <maximumf>, %30, %cst_25 [1] : vector<16x16xf32> to vector<16xf32>
    %32 = vector.shape_cast %31 : vector<16xf32> to vector<16x1xf32>
    %33 = vector.broadcast %32 : vector<16x1xf32> to vector<16x16xf32>
    %34 = arith.subf %30, %33 : vector<16x16xf32>
    %35 = math.exp %34 : vector<16x16xf32>
    %cst_26 = arith.constant dense<0.000000e+00> : vector<16xf32>
    %36 = vector.multi_reduction <add>, %35, %cst_26 [1] : vector<16x16xf32> to vector<16xf32>
    %37 = vector.shape_cast %36 : vector<16xf32> to vector<16x1xf32>
    %38 = tpu.reciprocal %37 {approx = true} : vector<16x1xf32> -> vector<16x1xf32>
    %39 = vector.broadcast %38 : vector<16x1xf32> to vector<16x16xf32>
    %40 = arith.mulf %35, %39 : vector<16x16xf32>
    %41 = vector.extract_strided_slice %24 {offsets = [0, 0], sizes = [16, 8], strides = [1, 1]} : vector<16x64xf32> to vector<16x8xf32>
    %cst_27 = arith.constant dense<0.000000e+00> : vector<16x8xf32>
    %42 = tpu.matmul %40, %41, %cst_27 {dimension_numbers = #tpu.dot_dimension_numbers<[1], [0], [0], [1], [0, 0, 1, 1], [], []>} : vector<16x16xf32>, vector<16x8xf32>, vector<16x8xf32> -> vector<16x8xf32>
    %43 = vector.extract_strided_slice %9 {offsets = [0, 0], sizes = [8, 64], strides = [1, 1]} : vector<64x64xf32> to vector<8x64xf32>
    %cst_28 = arith.constant dense<0.000000e+00> : vector<16x64xf32>
    %44 = tpu.matmul %42, %43, %cst_28 {dimension_numbers = #tpu.dot_dimension_numbers<[1], [0], [0], [1], [0, 0, 1, 1], [], []>} : vector<16x8xf32>, vector<8x64xf32>, vector<16x64xf32> -> vector<16x64xf32>
    %45 = arith.addf %25, %44 : vector<16x64xf32>
    %46 = vector.extract_strided_slice %17 {offsets = [0, 8], sizes = [16, 8], strides = [1, 1]} : vector<16x64xf32> to vector<16x8xf32>
    %cst_29 = arith.constant 0.353553385 : f32
    %47 = vector.broadcast %cst_29 : f32 to vector<16x8xf32>
    %48 = arith.mulf %46, %47 : vector<16x8xf32>
    %49 = vector.extract_strided_slice %23 {offsets = [0, 8], sizes = [16, 8], strides = [1, 1]} : vector<16x64xf32> to vector<16x8xf32>
    %cst_30 = arith.constant dense<0.000000e+00> : vector<16x16xf32>
    %50 = tpu.matmul %48, %49, %cst_30 {dimension_numbers = #tpu.dot_dimension_numbers<[1], [1], [0], [0], [0, 0, 1, 0], [], []>} : vector<16x8xf32>, vector<16x8xf32>, vector<16x16xf32> -> vector<16x16xf32>
    %cst_31 = arith.constant dense<0xFF800000> : vector<16xf32>
    %51 = vector.multi_reduction <maximumf>, %50, %cst_31 [1] : vector<16x16xf32> to vector<16xf32>
    %52 = vector.shape_cast %51 : vector<16xf32> to vector<16x1xf32>
    %53 = vector.broadcast %52 : vector<16x1xf32> to vector<16x16xf32>
    %54 = arith.subf %50, %53 : vector<16x16xf32>
    %55 = math.exp %54 : vector<16x16xf32>
    %cst_32 = arith.constant dense<0.000000e+00> : vector<16xf32>
    %56 = vector.multi_reduction <add>, %55, %cst_32 [1] : vector<16x16xf32> to vector<16xf32>
    %57 = vector.shape_cast %56 : vector<16xf32> to vector<16x1xf32>
    %58 = tpu.reciprocal %57 {approx = true} : vector<16x1xf32> -> vector<16x1xf32>
    %59 = vector.broadcast %58 : vector<16x1xf32> to vector<16x16xf32>
    %60 = arith.mulf %55, %59 : vector<16x16xf32>
    %61 = vector.extract_strided_slice %24 {offsets = [0, 8], sizes = [16, 8], strides = [1, 1]} : vector<16x64xf32> to vector<16x8xf32>
    %cst_33 = arith.constant dense<0.000000e+00> : vector<16x8xf32>
    %62 = tpu.matmul %60, %61, %cst_33 {dimension_numbers = #tpu.dot_dimension_numbers<[1], [0], [0], [1], [0, 0, 1, 1], [], []>} : vector<16x16xf32>, vector<16x8xf32>, vector<16x8xf32> -> vector<16x8xf32>
    %63 = vector.extract_strided_slice %9 {offsets = [8, 0], sizes = [8, 64], strides = [1, 1]} : vector<64x64xf32> to vector<8x64xf32>
    %cst_34 = arith.constant dense<0.000000e+00> : vector<16x64xf32>
    %64 = tpu.matmul %62, %63, %cst_34 {dimension_numbers = #tpu.dot_dimension_numbers<[1], [0], [0], [1], [0, 0, 1, 1], [], []>} : vector<16x8xf32>, vector<8x64xf32>, vector<16x64xf32> -> vector<16x64xf32>
    %65 = arith.addf %45, %64 : vector<16x64xf32>
    %66 = vector.extract_strided_slice %17 {offsets = [0, 16], sizes = [16, 8], strides = [1, 1]} : vector<16x64xf32> to vector<16x8xf32>
    %cst_35 = arith.constant 0.353553385 : f32
    %67 = vector.broadcast %cst_35 : f32 to vector<16x8xf32>
    %68 = arith.mulf %66, %67 : vector<16x8xf32>
    %69 = vector.extract_strided_slice %23 {offsets = [0, 16], sizes = [16, 8], strides = [1, 1]} : vector<16x64xf32> to vector<16x8xf32>
    %cst_36 = arith.constant dense<0.000000e+00> : vector<16x16xf32>
    %70 = tpu.matmul %68, %69, %cst_36 {dimension_numbers = #tpu.dot_dimension_numbers<[1], [1], [0], [0], [0, 0, 1, 0], [], []>} : vector<16x8xf32>, vector<16x8xf32>, vector<16x16xf32> -> vector<16x16xf32>
    %cst_37 = arith.constant dense<0xFF800000> : vector<16xf32>
    %71 = vector.multi_reduction <maximumf>, %70, %cst_37 [1] : vector<16x16xf32> to vector<16xf32>
    %72 = vector.shape_cast %71 : vector<16xf32> to vector<16x1xf32>
    %73 = vector.broadcast %72 : vector<16x1xf32> to vector<16x16xf32>
    %74 = arith.subf %70, %73 : vector<16x16xf32>
    %75 = math.exp %74 : vector<16x16xf32>
    %cst_38 = arith.constant dense<0.000000e+00> : vector<16xf32>
    %76 = vector.multi_reduction <add>, %75, %cst_38 [1] : vector<16x16xf32> to vector<16xf32>
    %77 = vector.shape_cast %76 : vector<16xf32> to vector<16x1xf32>
    %78 = tpu.reciprocal %77 {approx = true} : vector<16x1xf32> -> vector<16x1xf32>
    %79 = vector.broadcast %78 : vector<16x1xf32> to vector<16x16xf32>
    %80 = arith.mulf %75, %79 : vector<16x16xf32>
    %81 = vector.extract_strided_slice %24 {offsets = [0, 16], sizes = [16, 8], strides = [1, 1]} : vector<16x64xf32> to vector<16x8xf32>
    %cst_39 = arith.constant dense<0.000000e+00> : vector<16x8xf32>
    %82 = tpu.matmul %80, %81, %cst_39 {dimension_numbers = #tpu.dot_dimension_numbers<[1], [0], [0], [1], [0, 0, 1, 1], [], []>} : vector<16x16xf32>, vector<16x8xf32>, vector<16x8xf32> -> vector<16x8xf32>
    %83 = vector.extract_strided_slice %9 {offsets = [16, 0], sizes = [8, 64], strides = [1, 1]} : vector<64x64xf32> to vector<8x64xf32>
    %cst_40 = arith.constant dense<0.000000e+00> : vector<16x64xf32>
    %84 = tpu.matmul %82, %83, %cst_40 {dimension_numbers = #tpu.dot_dimension_numbers<[1], [0], [0], [1], [0, 0, 1, 1], [], []>} : vector<16x8xf32>, vector<8x64xf32>, vector<16x64xf32> -> vector<16x64xf32>
    %85 = arith.addf %65, %84 : vector<16x64xf32>
    %86 = vector.extract_strided_slice %17 {offsets = [0, 24], sizes = [16, 8], strides = [1, 1]} : vector<16x64xf32> to vector<16x8xf32>
    %cst_41 = arith.constant 0.353553385 : f32
    %87 = vector.broadcast %cst_41 : f32 to vector<16x8xf32>
    %88 = arith.mulf %86, %87 : vector<16x8xf32>
    %89 = vector.extract_strided_slice %23 {offsets = [0, 24], sizes = [16, 8], strides = [1, 1]} : vector<16x64xf32> to vector<16x8xf32>
    %cst_42 = arith.constant dense<0.000000e+00> : vector<16x16xf32>
    %90 = tpu.matmul %88, %89, %cst_42 {dimension_numbers = #tpu.dot_dimension_numbers<[1], [1], [0], [0], [0, 0, 1, 0], [], []>} : vector<16x8xf32>, vector<16x8xf32>, vector<16x16xf32> -> vector<16x16xf32>
    %cst_43 = arith.constant dense<0xFF800000> : vector<16xf32>
    %91 = vector.multi_reduction <maximumf>, %90, %cst_43 [1] : vector<16x16xf32> to vector<16xf32>
    %92 = vector.shape_cast %91 : vector<16xf32> to vector<16x1xf32>
    %93 = vector.broadcast %92 : vector<16x1xf32> to vector<16x16xf32>
    %94 = arith.subf %90, %93 : vector<16x16xf32>
    %95 = math.exp %94 : vector<16x16xf32>
    %cst_44 = arith.constant dense<0.000000e+00> : vector<16xf32>
    %96 = vector.multi_reduction <add>, %95, %cst_44 [1] : vector<16x16xf32> to vector<16xf32>
    %97 = vector.shape_cast %96 : vector<16xf32> to vector<16x1xf32>
    %98 = tpu.reciprocal %97 {approx = true} : vector<16x1xf32> -> vector<16x1xf32>
    %99 = vector.broadcast %98 : vector<16x1xf32> to vector<16x16xf32>
    %100 = arith.mulf %95, %99 : vector<16x16xf32>
    %101 = vector.extract_strided_slice %24 {offsets = [0, 24], sizes = [16, 8], strides = [1, 1]} : vector<16x64xf32> to vector<16x8xf32>
    %cst_45 = arith.constant dense<0.000000e+00> : vector<16x8xf32>
    %102 = tpu.matmul %100, %101, %cst_45 {dimension_numbers = #tpu.dot_dimension_numbers<[1], [0], [0], [1], [0, 0, 1, 1], [], []>} : vector<16x16xf32>, vector<16x8xf32>, vector<16x8xf32> -> vector<16x8xf32>
    %103 = vector.extract_strided_slice %9 {offsets = [24, 0], sizes = [8, 64], strides = [1, 1]} : vector<64x64xf32> to vector<8x64xf32>
    %cst_46 = arith.constant dense<0.000000e+00> : vector<16x64xf32>
    %104 = tpu.matmul %102, %103, %cst_46 {dimension_numbers = #tpu.dot_dimension_numbers<[1], [0], [0], [1], [0, 0, 1, 1], [], []>} : vector<16x8xf32>, vector<8x64xf32>, vector<16x64xf32> -> vector<16x64xf32>
    %105 = arith.addf %85, %104 : vector<16x64xf32>
    %106 = vector.extract_strided_slice %17 {offsets = [0, 32], sizes = [16, 8], strides = [1, 1]} : vector<16x64xf32> to vector<16x8xf32>
    %cst_47 = arith.constant 0.353553385 : f32
    %107 = vector.broadcast %cst_47 : f32 to vector<16x8xf32>
    %108 = arith.mulf %106, %107 : vector<16x8xf32>
    %109 = vector.extract_strided_slice %23 {offsets = [0, 32], sizes = [16, 8], strides = [1, 1]} : vector<16x64xf32> to vector<16x8xf32>
    %cst_48 = arith.constant dense<0.000000e+00> : vector<16x16xf32>
    %110 = tpu.matmul %108, %109, %cst_48 {dimension_numbers = #tpu.dot_dimension_numbers<[1], [1], [0], [0], [0, 0, 1, 0], [], []>} : vector<16x8xf32>, vector<16x8xf32>, vector<16x16xf32> -> vector<16x16xf32>
    %cst_49 = arith.constant dense<0xFF800000> : vector<16xf32>
    %111 = vector.multi_reduction <maximumf>, %110, %cst_49 [1] : vector<16x16xf32> to vector<16xf32>
    %112 = vector.shape_cast %111 : vector<16xf32> to vector<16x1xf32>
    %113 = vector.broadcast %112 : vector<16x1xf32> to vector<16x16xf32>
    %114 = arith.subf %110, %113 : vector<16x16xf32>
    %115 = math.exp %114 : vector<16x16xf32>
    %cst_50 = arith.constant dense<0.000000e+00> : vector<16xf32>
    %116 = vector.multi_reduction <add>, %115, %cst_50 [1] : vector<16x16xf32> to vector<16xf32>
    %117 = vector.shape_cast %116 : vector<16xf32> to vector<16x1xf32>
    %118 = tpu.reciprocal %117 {approx = true} : vector<16x1xf32> -> vector<16x1xf32>
    %119 = vector.broadcast %118 : vector<16x1xf32> to vector<16x16xf32>
    %120 = arith.mulf %115, %119 : vector<16x16xf32>
    %121 = vector.extract_strided_slice %24 {offsets = [0, 32], sizes = [16, 8], strides = [1, 1]} : vector<16x64xf32> to vector<16x8xf32>
    %cst_51 = arith.constant dense<0.000000e+00> : vector<16x8xf32>
    %122 = tpu.matmul %120, %121, %cst_51 {dimension_numbers = #tpu.dot_dimension_numbers<[1], [0], [0], [1], [0, 0, 1, 1], [], []>} : vector<16x16xf32>, vector<16x8xf32>, vector<16x8xf32> -> vector<16x8xf32>
    %123 = vector.extract_strided_slice %9 {offsets = [32, 0], sizes = [8, 64], strides = [1, 1]} : vector<64x64xf32> to vector<8x64xf32>
    %cst_52 = arith.constant dense<0.000000e+00> : vector<16x64xf32>
    %124 = tpu.matmul %122, %123, %cst_52 {dimension_numbers = #tpu.dot_dimension_numbers<[1], [0], [0], [1], [0, 0, 1, 1], [], []>} : vector<16x8xf32>, vector<8x64xf32>, vector<16x64xf32> -> vector<16x64xf32>
    %125 = arith.addf %105, %124 : vector<16x64xf32>
    %126 = vector.extract_strided_slice %17 {offsets = [0, 40], sizes = [16, 8], strides = [1, 1]} : vector<16x64xf32> to vector<16x8xf32>
    %cst_53 = arith.constant 0.353553385 : f32
    %127 = vector.broadcast %cst_53 : f32 to vector<16x8xf32>
    %128 = arith.mulf %126, %127 : vector<16x8xf32>
    %129 = vector.extract_strided_slice %23 {offsets = [0, 40], sizes = [16, 8], strides = [1, 1]} : vector<16x64xf32> to vector<16x8xf32>
    %cst_54 = arith.constant dense<0.000000e+00> : vector<16x16xf32>
    %130 = tpu.matmul %128, %129, %cst_54 {dimension_numbers = #tpu.dot_dimension_numbers<[1], [1], [0], [0], [0, 0, 1, 0], [], []>} : vector<16x8xf32>, vector<16x8xf32>, vector<16x16xf32> -> vector<16x16xf32>
    %cst_55 = arith.constant dense<0xFF800000> : vector<16xf32>
    %131 = vector.multi_reduction <maximumf>, %130, %cst_55 [1] : vector<16x16xf32> to vector<16xf32>
    %132 = vector.shape_cast %131 : vector<16xf32> to vector<16x1xf32>
    %133 = vector.broadcast %132 : vector<16x1xf32> to vector<16x16xf32>
    %134 = arith.subf %130, %133 : vector<16x16xf32>
    %135 = math.exp %134 : vector<16x16xf32>
    %cst_56 = arith.constant dense<0.000000e+00> : vector<16xf32>
    %136 = vector.multi_reduction <add>, %135, %cst_56 [1] : vector<16x16xf32> to vector<16xf32>
    %137 = vector.shape_cast %136 : vector<16xf32> to vector<16x1xf32>
    %138 = tpu.reciprocal %137 {approx = true} : vector<16x1xf32> -> vector<16x1xf32>
    %139 = vector.broadcast %138 : vector<16x1xf32> to vector<16x16xf32>
    %140 = arith.mulf %135, %139 : vector<16x16xf32>
    %141 = vector.extract_strided_slice %24 {offsets = [0, 40], sizes = [16, 8], strides = [1, 1]} : vector<16x64xf32> to vector<16x8xf32>
    %cst_57 = arith.constant dense<0.000000e+00> : vector<16x8xf32>
    %142 = tpu.matmul %140, %141, %cst_57 {dimension_numbers = #tpu.dot_dimension_numbers<[1], [0], [0], [1], [0, 0, 1, 1], [], []>} : vector<16x16xf32>, vector<16x8xf32>, vector<16x8xf32> -> vector<16x8xf32>
    %143 = vector.extract_strided_slice %9 {offsets = [40, 0], sizes = [8, 64], strides = [1, 1]} : vector<64x64xf32> to vector<8x64xf32>
    %cst_58 = arith.constant dense<0.000000e+00> : vector<16x64xf32>
    %144 = tpu.matmul %142, %143, %cst_58 {dimension_numbers = #tpu.dot_dimension_numbers<[1], [0], [0], [1], [0, 0, 1, 1], [], []>} : vector<16x8xf32>, vector<8x64xf32>, vector<16x64xf32> -> vector<16x64xf32>
    %145 = arith.addf %125, %144 : vector<16x64xf32>
    %146 = vector.extract_strided_slice %17 {offsets = [0, 48], sizes = [16, 8], strides = [1, 1]} : vector<16x64xf32> to vector<16x8xf32>
    %cst_59 = arith.constant 0.353553385 : f32
    %147 = vector.broadcast %cst_59 : f32 to vector<16x8xf32>
    %148 = arith.mulf %146, %147 : vector<16x8xf32>
    %149 = vector.extract_strided_slice %23 {offsets = [0, 48], sizes = [16, 8], strides = [1, 1]} : vector<16x64xf32> to vector<16x8xf32>
    %cst_60 = arith.constant dense<0.000000e+00> : vector<16x16xf32>
    %150 = tpu.matmul %148, %149, %cst_60 {dimension_numbers = #tpu.dot_dimension_numbers<[1], [1], [0], [0], [0, 0, 1, 0], [], []>} : vector<16x8xf32>, vector<16x8xf32>, vector<16x16xf32> -> vector<16x16xf32>
    %cst_61 = arith.constant dense<0xFF800000> : vector<16xf32>
    %151 = vector.multi_reduction <maximumf>, %150, %cst_61 [1] : vector<16x16xf32> to vector<16xf32>
    %152 = vector.shape_cast %151 : vector<16xf32> to vector<16x1xf32>
    %153 = vector.broadcast %152 : vector<16x1xf32> to vector<16x16xf32>
    %154 = arith.subf %150, %153 : vector<16x16xf32>
    %155 = math.exp %154 : vector<16x16xf32>
    %cst_62 = arith.constant dense<0.000000e+00> : vector<16xf32>
    %156 = vector.multi_reduction <add>, %155, %cst_62 [1] : vector<16x16xf32> to vector<16xf32>
    %157 = vector.shape_cast %156 : vector<16xf32> to vector<16x1xf32>
    %158 = tpu.reciprocal %157 {approx = true} : vector<16x1xf32> -> vector<16x1xf32>
    %159 = vector.broadcast %158 : vector<16x1xf32> to vector<16x16xf32>
    %160 = arith.mulf %155, %159 : vector<16x16xf32>
    %161 = vector.extract_strided_slice %24 {offsets = [0, 48], sizes = [16, 8], strides = [1, 1]} : vector<16x64xf32> to vector<16x8xf32>
    %cst_63 = arith.constant dense<0.000000e+00> : vector<16x8xf32>
    %162 = tpu.matmul %160, %161, %cst_63 {dimension_numbers = #tpu.dot_dimension_numbers<[1], [0], [0], [1], [0, 0, 1, 1], [], []>} : vector<16x16xf32>, vector<16x8xf32>, vector<16x8xf32> -> vector<16x8xf32>
    %163 = vector.extract_strided_slice %9 {offsets = [48, 0], sizes = [8, 64], strides = [1, 1]} : vector<64x64xf32> to vector<8x64xf32>
    %cst_64 = arith.constant dense<0.000000e+00> : vector<16x64xf32>
    %164 = tpu.matmul %162, %163, %cst_64 {dimension_numbers = #tpu.dot_dimension_numbers<[1], [0], [0], [1], [0, 0, 1, 1], [], []>} : vector<16x8xf32>, vector<8x64xf32>, vector<16x64xf32> -> vector<16x64xf32>
    %165 = arith.addf %145, %164 : vector<16x64xf32>
    %166 = vector.extract_strided_slice %17 {offsets = [0, 56], sizes = [16, 8], strides = [1, 1]} : vector<16x64xf32> to vector<16x8xf32>
    %cst_65 = arith.constant 0.353553385 : f32
    %167 = vector.broadcast %cst_65 : f32 to vector<16x8xf32>
    %168 = arith.mulf %166, %167 : vector<16x8xf32>
    %169 = vector.extract_strided_slice %23 {offsets = [0, 56], sizes = [16, 8], strides = [1, 1]} : vector<16x64xf32> to vector<16x8xf32>
    %cst_66 = arith.constant dense<0.000000e+00> : vector<16x16xf32>
    %170 = tpu.matmul %168, %169, %cst_66 {dimension_numbers = #tpu.dot_dimension_numbers<[1], [1], [0], [0], [0, 0, 1, 0], [], []>} : vector<16x8xf32>, vector<16x8xf32>, vector<16x16xf32> -> vector<16x16xf32>
    %cst_67 = arith.constant dense<0xFF800000> : vector<16xf32>
    %171 = vector.multi_reduction <maximumf>, %170, %cst_67 [1] : vector<16x16xf32> to vector<16xf32>
    %172 = vector.shape_cast %171 : vector<16xf32> to vector<16x1xf32>
    %173 = vector.broadcast %172 : vector<16x1xf32> to vector<16x16xf32>
    %174 = arith.subf %170, %173 : vector<16x16xf32>
    %175 = math.exp %174 : vector<16x16xf32>
    %cst_68 = arith.constant dense<0.000000e+00> : vector<16xf32>
    %176 = vector.multi_reduction <add>, %175, %cst_68 [1] : vector<16x16xf32> to vector<16xf32>
    %177 = vector.shape_cast %176 : vector<16xf32> to vector<16x1xf32>
    %178 = tpu.reciprocal %177 {approx = true} : vector<16x1xf32> -> vector<16x1xf32>
    %179 = vector.broadcast %178 : vector<16x1xf32> to vector<16x16xf32>
    %180 = arith.mulf %175, %179 : vector<16x16xf32>
    %181 = vector.extract_strided_slice %24 {offsets = [0, 56], sizes = [16, 8], strides = [1, 1]} : vector<16x64xf32> to vector<16x8xf32>
    %cst_69 = arith.constant dense<0.000000e+00> : vector<16x8xf32>
    %182 = tpu.matmul %180, %181, %cst_69 {dimension_numbers = #tpu.dot_dimension_numbers<[1], [0], [0], [1], [0, 0, 1, 1], [], []>} : vector<16x16xf32>, vector<16x8xf32>, vector<16x8xf32> -> vector<16x8xf32>
    %183 = vector.extract_strided_slice %9 {offsets = [56, 0], sizes = [8, 64], strides = [1, 1]} : vector<64x64xf32> to vector<8x64xf32>
    %cst_70 = arith.constant dense<0.000000e+00> : vector<16x64xf32>
    %184 = tpu.matmul %182, %183, %cst_70 {dimension_numbers = #tpu.dot_dimension_numbers<[1], [0], [0], [1], [0, 0, 1, 1], [], []>} : vector<16x8xf32>, vector<8x64xf32>, vector<16x64xf32> -> vector<16x64xf32>
    %185 = arith.addf %165, %184 : vector<16x64xf32>
    %186 = vector.broadcast %10 : vector<1x64xf32> to vector<16x64xf32>
    %187 = arith.addf %185, %186 : vector<16x64xf32>
    %188 = arith.addf %4, %187 : vector<16x64xf32>
    %cst_71 = arith.constant dense<0.000000e+00> : vector<16xf32>
    %189 = vector.multi_reduction <add>, %188, %cst_71 [1] : vector<16x64xf32> to vector<16xf32>
    %190 = vector.shape_cast %189 : vector<16xf32> to vector<16x1xf32>
    %cst_72 = arith.constant 6.400000e+01 : f32
    %191 = vector.broadcast %cst_72 : f32 to vector<16x1xf32>
    %192 = arith.divf %190, %191 : vector<16x1xf32>
    %193 = vector.broadcast %192 : vector<16x1xf32> to vector<16x64xf32>
    %194 = arith.subf %188, %193 : vector<16x64xf32>
    %195 = arith.mulf %194, %194 : vector<16x64xf32>
    %cst_73 = arith.constant dense<0.000000e+00> : vector<16xf32>
    %196 = vector.multi_reduction <add>, %195, %cst_73 [1] : vector<16x64xf32> to vector<16xf32>
    %197 = vector.shape_cast %196 : vector<16xf32> to vector<16x1xf32>
    %cst_74 = arith.constant 6.400000e+01 : f32
    %198 = vector.broadcast %cst_74 : f32 to vector<16x1xf32>
    %199 = arith.divf %197, %198 : vector<16x1xf32>
    %200 = vector.broadcast %192 : vector<16x1xf32> to vector<16x64xf32>
    %201 = arith.subf %188, %200 : vector<16x64xf32>
    %cst_75 = arith.constant 9.99999974E-6 : f32
    %202 = vector.broadcast %cst_75 : f32 to vector<16x1xf32>
    %203 = arith.addf %199, %202 : vector<16x1xf32>
    %204 = math.rsqrt %203 : vector<16x1xf32>
    %205 = vector.broadcast %204 : vector<16x1xf32> to vector<16x64xf32>
    %206 = arith.mulf %201, %205 : vector<16x64xf32>
    %207 = vector.broadcast %11 : vector<1x64xf32> to vector<16x64xf32>
    %208 = arith.mulf %206, %207 : vector<16x64xf32>
    %209 = vector.broadcast %12 : vector<1x64xf32> to vector<16x64xf32>
    %210 = arith.addf %208, %209 : vector<16x64xf32>
    %c0_76 = arith.constant 0 : index
    %c0_77 = arith.constant 0 : index
    %c0_78 = arith.constant 0 : index
    %211 = vector.load %arg3[%c0_76, %c0_77, %c0_78] : memref<1x16x64xf32, #tpu.memory_space<vmem>>, vector<1x16x64xf32>
    %212 = vector.shape_cast %211 : vector<1x16x64xf32> to vector<16x64xf32>
    %213 = arith.addf %210, %212 : vector<16x64xf32>
    %c0_79 = arith.constant 0 : index
    %c0_80 = arith.constant 0 : index
    %c0_81 = arith.constant 0 : index
    %214 = vector.load %arg12[%c0_79, %c0_80, %c0_81] : memref<1x16x64xf32, #tpu.memory_space<vmem>>, vector<1x16x64xf32>
    %215 = vector.shape_cast %214 : vector<1x16x64xf32> to vector<16x64xf32>
    %216 = vector.shape_cast %213 : vector<16x64xf32> to vector<1x16x64xf32>
    tpu.vector_store %arg12[%c0_79, %c0_80, %c0_81], %216 {strides = array<i32>} : memref<1x16x64xf32, #tpu.memory_space<vmem>>, vector<1x16x64xf32>,
    return
  }
  func.func @transform_0(%arg0: i32) -> (i32, i32, i32) {
    %c0_i32 = arith.constant 0 : i32
    %c0_i32_0 = arith.constant 0 : i32
    %c0_i32_1 = arith.constant 0 : i32
    return %arg0, %c0_i32, %c0_i32_0 : i32, i32, i32
  }
  func.func @transform_1(%arg0: i32) -> (i32, i32, i32) {
    %c0_i32 = arith.constant 0 : i32
    %c0_i32_0 = arith.constant 0 : i32
    %c0_i32_1 = arith.constant 0 : i32
    return %arg0, %c0_i32, %c0_i32_0 : i32, i32, i32
  }
  func.func @transform_2(%arg0: i32) -> (i32, i32, i32) {
    %c0_i32 = arith.constant 0 : i32
    %c0_i32_0 = arith.constant 0 : i32
    %c0_i32_1 = arith.constant 0 : i32
    return %arg0, %c0_i32, %c0_i32_0 : i32, i32, i32
  }
  func.func @transform_3(%arg0: i32) -> (i32, i32) {
    %c0_i32 = arith.constant 0 : i32
    %c0_i32_0 = arith.constant 0 : i32
    %c0_i32_1 = arith.constant 0 : i32
    return %c0_i32, %c0_i32_0 : i32, i32
  }
  func.func @transform_4(%arg0: i32) -> (i32, i32) {
    %c0_i32 = arith.constant 0 : i32
    %c0_i32_0 = arith.constant 0 : i32
    %c0_i32_1 = arith.constant 0 : i32
    return %c0_i32, %c0_i32_0 : i32, i32
  }
  func.func @transform_5(%arg0: i32) -> (i32, i32) {
    %c0_i32 = arith.constant 0 : i32
    %c0_i32_0 = arith.constant 0 : i32
    %c0_i32_1 = arith.constant 0 : i32
    return %c0_i32, %c0_i32_0 : i32, i32
  }
  func.func @transform_6(%arg0: i32) -> (i32, i32) {
    %c0_i32 = arith.constant 0 : i32
    %c0_i32_0 = arith.constant 0 : i32
    %c0_i32_1 = arith.constant 0 : i32
    return %c0_i32, %c0_i32_0 : i32, i32
  }
  func.func @transform_7(%arg0: i32) -> (i32, i32) {
    %c0_i32 = arith.constant 0 : i32
    %c0_i32_0 = arith.constant 0 : i32
    %c0_i32_1 = arith.constant 0 : i32
    return %c0_i32, %c0_i32_0 : i32, i32
  }
  func.func @transform_8(%arg0: i32) -> (i32, i32) {
    %c0_i32 = arith.constant 0 : i32
    %c0_i32_0 = arith.constant 0 : i32
    %c0_i32_1 = arith.constant 0 : i32
    return %c0_i32, %c0_i32_0 : i32, i32
  }
  func.func @transform_9(%arg0: i32) -> (i32, i32) {
    %c0_i32 = arith.constant 0 : i32
    %c0_i32_0 = arith.constant 0 : i32
    %c0_i32_1 = arith.constant 0 : i32
    return %c0_i32, %c0_i32_0 : i32, i32
  }
  func.func @transform_10(%arg0: i32) -> (i32, i32) {
    %c0_i32 = arith.constant 0 : i32
    %c0_i32_0 = arith.constant 0 : i32
    %c0_i32_1 = arith.constant 0 : i32
    return %c0_i32, %c0_i32_0 : i32, i32
  }
  func.func @transform_11(%arg0: i32) -> (i32, i32, i32) {
    %c0_i32 = arith.constant 0 : i32
    %c0_i32_0 = arith.constant 0 : i32
    %c0_i32_1 = arith.constant 0 : i32
    return %arg0, %c0_i32, %c0_i32_0 : i32, i32, i32
  }
}

</mosaic_0001>

<llo_original>
// kernel: diff_encoder_fwd.9
$region0: #{diff_encoder_fwd.9}
  #allocation0 [shape = 'u32[]', space=smem, size = 0x4, offset = 0x4, fixed_abs, tag = 'smem constant byte address 0x4 - core index']
  #allocation1 [shape = 'u32[144,128]{1,0:T(1,128)}', space=vmem, size = 0x12000, scoped, tag = 'internal scratch']
  %s0 = inlined_call_operand.vmem [shape: f32[2,16,3], index: 0, kind: input, shape index: {}]
  %s1 = inlined_call_operand.vmem [shape: f32[2,16,64], index: 1, kind: input, shape index: {}]
  %s2 = inlined_call_operand.vmem [shape: f32[16,64], index: 2, kind: input, shape index: {}]
  %s3 = inlined_call_operand.vmem [shape: f32[3,64], index: 3, kind: input, shape index: {}]
  %s4 = inlined_call_operand.vmem [shape: f32[1,64], index: 4, kind: input, shape index: {}]
  %s5 = inlined_call_operand.vmem [shape: f32[64,4], index: 5, kind: input, shape index: {}]
  %s6 = inlined_call_operand.vmem [shape: f32[4,64], index: 6, kind: input, shape index: {}]
  %s7 = inlined_call_operand.vmem [shape: f32[2,16,64], index: 7, kind: output, shape index: {}]
  %s8 = sld [smem:[#allocation0]]
  $region61: #{diff_encoder_fwd.9} parent=0
    _
  %s10 = ssub.s32 1, %s8
  %s11 = scalar_select 0, %s10, %s8
  loop: start=0, step=1, limit=4
  $region2: #{diff_encoder_fwd.9} parent=0 // loop_pre_header
    _
  $region3: #{diff_encoder_fwd.9} parent=0 // loop_header
    %s13 = sphi 0, %s17
    %p14 = scmp.ge.s32.totalorder %s13, 4
    %s23 = sphi 0, %s25
    %s26 = sphi 0, %s23
    %s27 = sphi 0, %s26
    %s43 = sphi 0, %s27
    %s49 = sphi 0, %s51
    %s52 = sphi 0, %s49
    %s53 = sphi 0, %s52
    %s69 = sphi 0, %s53
    %s73 = sphi 0, %s73
    %s75 = sphi 0, %s73
    %s76 = sphi 0, %s75
    %s90 = sphi 0, %s76
    %s94 = sphi 0, %s94
    %s96 = sphi 0, %s94
    %s97 = sphi 0, %s96
    %s111 = sphi 0, %s97
    %s115 = sphi 0, %s115
    %s117 = sphi 0, %s115
    %s118 = sphi 0, %s117
    %s132 = sphi 0, %s118
    %s136 = sphi 0, %s136
    %s138 = sphi 0, %s136
    %s139 = sphi 0, %s138
    %s153 = sphi 0, %s139
    %s157 = sphi 0, %s157
    %s159 = sphi 0, %s157
    %s160 = sphi 0, %s159
    %s174 = sphi 0, %s160
    %s180 = sphi 0, %s182
    %s183 = sphi 0, %s180
    %s184 = sphi 0, %s183
    %s200 = sphi 0, %s184
  $region4: #{diff_encoder_fwd.9} parent=0 // loop_header_branch
    %16 = sbr.rel (%p14) target = $region8
  $region5: #{diff_encoder_fwd.9} parent=0 // loop_body
    %s18 = ssub.s32 %s13, 1
    %s19 = ssub.s32 %s13, 2
    %s20 = sadd.s32 %s13, 1
    %s21 = ssub.s32 %s13, %s20
    %p22 = scmp.eq.s32.totalorder %s21, 0
    %s24 = sadd.s32 %s23, 1
    %s25 = scalar_select %p22, %s23, %s24
    %p28 = pneg %p22
    %p29 = scmp.eq.s32.totalorder %s13, 1
    %p30 = por %p28, %p29
    %p31 = scmp.ne.s32.totalorder %s23, %s26
    %p32 = scmp.eq.s32.totalorder %s13, 0
    %p33 = por %p31, %p32
    %p34 = scmp.ne.s32.totalorder %s23, %s26
    %p35 = scmp.eq.s32.totalorder %s18, 1
    %p36 = por %p34, %p35
    %p37 = scmp.ne.s32.totalorder %s26, %s27
    %p38 = scmp.eq.s32.totalorder %s18, 0
    %p39 = por %p37, %p38
    %p40 = scmp.ne.s32.totalorder %s26, %s27
    %p41 = scmp.eq.s32.totalorder %s19, 1
    %p42 = por %p40, %p41
    %p44 = scmp.ne.s32.totalorder %s27, %s43
    %p45 = scmp.eq.s32.totalorder %s19, 0
    %p46 = por %p44, %p45
    %s47 = ssub.s32 %s13, %s20
    %p48 = scmp.eq.s32.totalorder %s47, 0
    %s50 = sadd.s32 %s49, 1
    %s51 = scalar_select %p48, %s49, %s50
    %p54 = pneg %p48
    %p55 = scmp.eq.s32.totalorder %s13, 1
    %p56 = por %p54, %p55
    %p57 = scmp.ne.s32.totalorder %s49, %s52
    %p58 = scmp.eq.s32.totalorder %s13, 0
    %p59 = por %p57, %p58
    %p60 = scmp.ne.s32.totalorder %s49, %s52
    %p61 = scmp.eq.s32.totalorder %s18, 1
    %p62 = por %p60, %p61
    %p63 = scmp.ne.s32.totalorder %s52, %s53
    %p64 = scmp.eq.s32.totalorder %s18, 0
    %p65 = por %p63, %p64
    %p66 = scmp.ne.s32.totalorder %s52, %s53
    %p67 = scmp.eq.s32.totalorder %s19, 1
    %p68 = por %p66, %p67
    %p70 = scmp.ne.s32.totalorder %s53, %s69
    %p71 = scmp.eq.s32.totalorder %s19, 0
    %p72 = por %p70, %p71
    %s74 = sadd.s32 %s73, 1
    %p77 = scmp.eq.s32.totalorder %s13, 1
    %p78 = scmp.ne.s32.totalorder %s73, %s75
    %p79 = scmp.eq.s32.totalorder %s13, 0
    %p80 = por %p78, %p79
    %p81 = scmp.ne.s32.totalorder %s73, %s75
    %p82 = scmp.eq.s32.totalorder %s18, 1
    %p83 = por %p81, %p82
    %p84 = scmp.ne.s32.totalorder %s75, %s76
    %p85 = scmp.eq.s32.totalorder %s18, 0
    %p86 = por %p84, %p85
    %p87 = scmp.ne.s32.totalorder %s75, %s76
    %p88 = scmp.eq.s32.totalorder %s19, 1
    %p89 = por %p87, %p88
    %p91 = scmp.ne.s32.totalorder %s76, %s90
    %p92 = scmp.eq.s32.totalorder %s19, 0
    %p93 = por %p91, %p92
    %s95 = sadd.s32 %s94, 1
    %p98 = scmp.eq.s32.totalorder %s13, 1
    %p99 = scmp.ne.s32.totalorder %s94, %s96
    %p100 = scmp.eq.s32.totalorder %s13, 0
    %p101 = por %p99, %p100
    %p102 = scmp.ne.s32.totalorder %s94, %s96
    %p103 = scmp.eq.s32.totalorder %s18, 1
    %p104 = por %p102, %p103
    %p105 = scmp.ne.s32.totalorder %s96, %s97
    %p106 = scmp.eq.s32.totalorder %s18, 0
    %p107 = por %p105, %p106
    %p108 = scmp.ne.s32.totalorder %s96, %s97
    %p109 = scmp.eq.s32.totalorder %s19, 1
    %p110 = por %p108, %p109
    %p112 = scmp.ne.s32.totalorder %s97, %s111
    %p113 = scmp.eq.s32.totalorder %s19, 0
    %p114 = por %p112, %p113
    %s116 = sadd.s32 %s115, 1
    %p119 = scmp.eq.s32.totalorder %s13, 1
    %p120 = scmp.ne.s32.totalorder %s115, %s117
    %p121 = scmp.eq.s32.totalorder %s13, 0
    %p122 = por %p120, %p121
    %p123 = scmp.ne.s32.totalorder %s115, %s117
    %p124 = scmp.eq.s32.totalorder %s18, 1
    %p125 = por %p123, %p124
    %p126 = scmp.ne.s32.totalorder %s117, %s118
    %p127 = scmp.eq.s32.totalorder %s18, 0
    %p128 = por %p126, %p127
    %p129 = scmp.ne.s32.totalorder %s117, %s118
    %p130 = scmp.eq.s32.totalorder %s19, 1
    %p131 = por %p129, %p130
    %p133 = scmp.ne.s32.totalorder %s118, %s132
    %p134 = scmp.eq.s32.totalorder %s19, 0
    %p135 = por %p133, %p134
    %s137 = sadd.s32 %s136, 1
    %p140 = scmp.eq.s32.totalorder %s13, 1
    %p141 = scmp.ne.s32.totalorder %s136, %s138
    %p142 = scmp.eq.s32.totalorder %s13, 0
    %p143 = por %p141, %p142
    %p144 = scmp.ne.s32.totalorder %s136, %s138
    %p145 = scmp.eq.s32.totalorder %s18, 1
    %p146 = por %p144, %p145
    %p147 = scmp.ne.s32.totalorder %s138, %s139
    %p148 = scmp.eq.s32.totalorder %s18, 0
    %p149 = por %p147, %p148
    %p150 = scmp.ne.s32.totalorder %s138, %s139
    %p151 = scmp.eq.s32.totalorder %s19, 1
    %p152 = por %p150, %p151
    %p154 = scmp.ne.s32.totalorder %s139, %s153
    %p155 = scmp.eq.s32.totalorder %s19, 0
    %p156 = por %p154, %p155
    %s158 = sadd.s32 %s157, 1
    %p161 = scmp.eq.s32.totalorder %s13, 1
    %p162 = scmp.ne.s32.totalorder %s157, %s159
    %p163 = scmp.eq.s32.totalorder %s13, 0
    %p164 = por %p162, %p163
    %p165 = scmp.ne.s32.totalorder %s157, %s159
    %p166 = scmp.eq.s32.totalorder %s18, 1
    %p167 = por %p165, %p166
    %p168 = scmp.ne.s32.totalorder %s159, %s160
    %p169 = scmp.eq.s32.totalorder %s18, 0
    %p170 = por %p168, %p169
    %p171 = scmp.ne.s32.totalorder %s159, %s160
    %p172 = scmp.eq.s32.totalorder %s19, 1
    %p173 = por %p171, %p172
    %p175 = scmp.ne.s32.totalorder %s160, %s174
    %p176 = scmp.eq.s32.totalorder %s19, 0
    %p177 = por %p175, %p176
    %s178 = ssub.s32 %s13, %s20
    %p179 = scmp.eq.s32.totalorder %s178, 0
    %s181 = sadd.s32 %s180, 1
    %s182 = scalar_select %p179, %s180, %s181
    %p185 = pneg %p179
    %p186 = scmp.eq.s32.totalorder %s13, 1
    %p187 = por %p185, %p186
    %p188 = scmp.ne.s32.totalorder %s180, %s183
    %p189 = scmp.eq.s32.totalorder %s13, 0
    %p190 = por %p188, %p189
    %p191 = scmp.ne.s32.totalorder %s180, %s183
    %p192 = scmp.eq.s32.totalorder %s18, 1
    %p193 = por %p191, %p192
    %p194 = scmp.ne.s32.totalorder %s183, %s184
    %p195 = scmp.eq.s32.totalorder %s18, 0
    %p196 = por %p194, %p195
    %p197 = scmp.ne.s32.totalorder %s183, %s184
    %p198 = scmp.eq.s32.totalorder %s19, 1
    %p199 = por %p197, %p198
    %p201 = scmp.ne.s32.totalorder %s184, %s200
    %p202 = scmp.eq.s32.totalorder %s19, 0
    %p203 = por %p201, %p202
    %p204 = scmp.le.s32.totalorder 1, %s13
    %p205 = scmp.lt.s32.totalorder %s13, 3
    %p206 = pnand %p204, %p205
    %p207 = pneg %p206
    // Predicated region
    $region9: #{diff_encoder_fwd.9} parent=5 // pred_check
      _
    $region10: #{diff_encoder_fwd.9} parent=5 // pred_check_branch
      %209 = sbr.rel (%p206) target = $region12
    $region11: #{diff_encoder_fwd.9} parent=5 // pred_region
      %s210 = ssub.s32 %s13, 1
      // Predicated region
      $region13: #{diff_encoder_fwd.9} parent=11 // pred_check
        %p211 = pneg %p86
      $region14: #{diff_encoder_fwd.9} parent=11 // pred_check_branch
        %213 = sbr.rel (%p211) target = $region16
      $region15: #{diff_encoder_fwd.9} parent=11 // pred_region
        _
      $region16: #{diff_encoder_fwd.9} parent=11 // pred_fallthru
        _
      // Predicated region
      $region17: #{diff_encoder_fwd.9} parent=11 // pred_check
        %p214 = pneg %p107
      $region18: #{diff_encoder_fwd.9} parent=11 // pred_check_branch
        %216 = sbr.rel (%p214) target = $region20
      $region19: #{diff_encoder_fwd.9} parent=11 // pred_region
        _
      $region20: #{diff_encoder_fwd.9} parent=11 // pred_fallthru
        _
      // Predicated region
      $region21: #{diff_encoder_fwd.9} parent=11 // pred_check
        %p217 = pneg %p128
      $region22: #{diff_encoder_fwd.9} parent=11 // pred_check_branch
        %219 = sbr.rel (%p217) target = $region24
      $region23: #{diff_encoder_fwd.9} parent=11 // pred_region
        _
      $region24: #{diff_encoder_fwd.9} parent=11 // pred_fallthru
        _
      // Predicated region
      $region25: #{diff_encoder_fwd.9} parent=11 // pred_check
        %p220 = pneg %p149
      $region26: #{diff_encoder_fwd.9} parent=11 // pred_check_branch
        %222 = sbr.rel (%p220) target = $region28
      $region27: #{diff_encoder_fwd.9} parent=11 // pred_region
        _
      $region28: #{diff_encoder_fwd.9} parent=11 // pred_fallthru
        _
      // Predicated region
      $region29: #{diff_encoder_fwd.9} parent=11 // pred_check
        %p223 = pneg %p170
      $region30: #{diff_encoder_fwd.9} parent=11 // pred_check_branch
        %225 = sbr.rel (%p223) target = $region32
      $region31: #{diff_encoder_fwd.9} parent=11 // pred_region
        _
      $region32: #{diff_encoder_fwd.9} parent=11 // pred_fallthru
        _
    $region12: #{diff_encoder_fwd.9} parent=5 // pred_fallthru
      _
    %p226 = scmp.lt.s32.totalorder %s13, 2
    // Predicated region
    $region33: #{diff_encoder_fwd.9} parent=5 // pred_check
      %p227 = pneg %p226
    $region34: #{diff_encoder_fwd.9} parent=5 // pred_check_branch
      %229 = sbr.rel (%p227) target = $region36
    $region35: #{diff_encoder_fwd.9} parent=5 // pred_region
      // Predicated region
      $region37: #{diff_encoder_fwd.9} parent=35 // pred_check
        %p230 = pneg %p33
      $region38: #{diff_encoder_fwd.9} parent=35 // pred_check_branch
        %232 = sbr.rel (%p230) target = $region40
      $region39: #{diff_encoder_fwd.9} parent=35 // pred_region
        %p233 = scmp.lt.s32.totalorder %s13, 1
        %s234 = scalar_select %p233, %s13, 1
        %s235 = smul.addr %s234, 2
        %s236 = smul.addr %s235, 8
        %s237 = scalar_lea.vmem %s0, %s236
      $region40: #{diff_encoder_fwd.9} parent=35 // pred_fallthru
        _
      // Predicated region
      $region41: #{diff_encoder_fwd.9} parent=35 // pred_check
        %p238 = pneg %p59
      $region42: #{diff_encoder_fwd.9} parent=35 // pred_check_branch
        %240 = sbr.rel (%p238) target = $region44
      $region43: #{diff_encoder_fwd.9} parent=35 // pred_region
        %p241 = scmp.lt.s32.totalorder %s13, 1
        %s242 = scalar_select %p241, %s13, 1
        %s243 = smul.addr %s242, 2
        %s244 = smul.addr %s243, 8
        %s245 = scalar_lea.vmem %s1, %s244
      $region44: #{diff_encoder_fwd.9} parent=35 // pred_fallthru
        _
    $region36: #{diff_encoder_fwd.9} parent=5 // pred_fallthru
      _
    %p246 = scmp.le.s32.totalorder 1, %s13
    %p247 = scmp.lt.s32.totalorder %s13, 3
    %p248 = pnand %p246, %p247
    %p249 = pneg %p248
    // Predicated region
    $region45: #{diff_encoder_fwd.9} parent=5 // pred_check
      _
    $region46: #{diff_encoder_fwd.9} parent=5 // pred_check_branch
      %251 = sbr.rel (%p248) target = $region48
    $region47: #{diff_encoder_fwd.9} parent=5 // pred_region
      %s252 = ssub.s32 %s13, 1
      %p253 = scmp.lt.s32.totalorder %s18, 1
      %s254 = scalar_select %p253, %s18, 1
      %s255 = smul.addr %s254, 2
      %s256 = smul.addr %s255, 8
      %s257 = scalar_lea.vmem %s0, %s256
      %p258 = pneg %p39
      %p259 = pneg %p36
      %p260 = scmp.lt.s32.totalorder %s18, 1
      %s261 = scalar_select %p260, %s18, 1
      %s262 = smul.addr %s261, 2
      %s263 = smul.addr %s262, 8
      %s264 = scalar_lea.vmem %s1, %s263
      %p265 = pneg %p65
      %p266 = pneg %p62
      %p267 = pneg %p86
      %p268 = pneg %p83
      %p269 = pneg %p107
      %p270 = pneg %p104
      %p271 = pneg %p128
      %p272 = pneg %p125
      %p273 = pneg %p149
      %p274 = pneg %p146
      %p275 = pneg %p170
      %p276 = pneg %p167
      %p277 = pneg %p196
      %p278 = pneg %p193
      %p279 = scmp.lt.s32.totalorder %s18, 1
      %s280 = scalar_select %p279, %s18, 1
      %s281 = smul.addr %s280, 2
      %s282 = smul.addr %s281, 8
      %s283 = scalar_lea.vmem %s7, %s282
      %p284 = scmp.lt.s32.totalorder %s18, 1
      %s285 = scalar_select %p284, %s18, 1
      %s286 = smul.addr %s285, 2
      %s287 = smul.addr %s286, 8
      %s288 = scalar_lea.vmem %s0, %s287
      %p289 = scmp.lt.s32.totalorder %s18, 1
      %s290 = scalar_select %p289, %s18, 1
      %s291 = smul.addr %s290, 2
      %s292 = smul.addr %s291, 8
      %s293 = scalar_lea.vmem %s1, %s292
      %p294 = scmp.lt.s32.totalorder %s18, 1
      %s295 = scalar_select %p294, %s18, 1
      %s296 = smul.addr %s295, 2
      %s297 = smul.addr %s296, 8
      %s298 = scalar_lea.vmem %s7, %s297
      %v299 = vld [vmem:[%s288] sm:$0xff]
      %v300 = vld [vmem:[%s288 + $0x8] sm:$0xff]
      %v301 = vld [vmem:[%s3] sm:$0x7]
      %303 = vset.pattern.permute.xlu0 0
      %304 = vperm.xlu0 %303, %v299
      %v305 = vpop.permute.xlu0 %304
      %308 = vset.pattern.permute.xlu0 0
      %309 = vperm.xlu0 %308, %v300
      %v310 = vpop.permute.xlu0 %309
      %v312 = vlaneseq
      %v313 = vshrl.u32 %v312, 7
      %v314 = vsub.s32 0, %v313
      %v315 = vrot.slane %v301, %v314
      %v316 = vmul.f32 %v305, %v315
      %v317 = vmul.f32 %v310, %v315
      %318 = vset.pattern.permute.xlu0 1
      %319 = vperm.xlu0 %318, %v299
      %v320 = vpop.permute.xlu0 %319
      %322 = vset.pattern.permute.xlu0 1
      %323 = vperm.xlu0 %322, %v300
      %v324 = vpop.permute.xlu0 %323
      %v326 = vlaneseq
      %v327 = vshrl.u32 %v326, 7
      %v328 = vsub.s32 1, %v327
      %v329 = vrot.slane %v301, %v328
      %v330 = vmul.f32 %v320, %v329
      %v331 = vmul.f32 %v324, %v329
      %v332 = vadd.f32 %v316, %v330
      %v333 = vadd.f32 %v317, %v331
      %334 = vset.pattern.permute.xlu0 2
      %335 = vperm.xlu0 %334, %v299
      %v336 = vpop.permute.xlu0 %335
      %338 = vset.pattern.permute.xlu0 2
      %339 = vperm.xlu0 %338, %v300
      %v340 = vpop.permute.xlu0 %339
      %v342 = vlaneseq
      %v343 = vshrl.u32 %v342, 7
      %v344 = vsub.s32 2, %v343
      %v345 = vrot.slane %v301, %v344
      %v346 = vmul.f32 %v336, %v345
      %v347 = vmul.f32 %v340, %v345
      %v348 = vadd.f32 %v332, %v346
      %v349 = vadd.f32 %v333, %v347
      %v350 = vld [vmem:[%s4] sm:$0x1]
      %v352 = vlaneseq
      %v353 = vshrl.u32 %v352, 7
      %v354 = vsub.s32 0, %v353
      %v355 = vrot.slane %v350, %v354
      %v357 = vadd.f32 %v348, %v355
      %v358 = vadd.f32 %v349, %v355
      %vm359 = vcmask 523264
      %v360 = vsel %vm359, %v357, 0.0
      %v361 = vsel %vm359, %v358, 0.0
      %v362 = vadd.f32 %v360, %v361
      %v363 = vrot.slane %v362, 4
      %v364 = vadd.f32 %v362, %v363
      %v365 = vrot.slane %v364, 2
      %v366 = vadd.f32 %v364, %v365
      %v367 = vrot.slane %v366, 1
      %v368 = vadd.f32 %v366, %v367
      %v369 = vrcp.pop 16.0
      %v370 = vmul.f32 %v368, %v369
      %v371 = vsel %vm359, %v357, -inf
      %v372 = vsel %vm359, %v358, -inf
      %v373 = vmax.f32 %v371, %v372
      %v374 = vrot.slane %v373, 4
      %v375 = vmax.f32 %v373, %v374
      %v376 = vrot.slane %v375, 2
      %v377 = vmax.f32 %v375, %v376
      %v378 = vrot.slane %v377, 1
      %v379 = vmax.f32 %v377, %v378
      %v380 = vld [vmem:[%s5] sm:$0xff]
      %v381 = vld [vmem:[%s5 + $0x8] sm:$0xff]
      %v382 = vld [vmem:[%s5 + $0x10] sm:$0xff]
      %v383 = vld [vmem:[%s5 + $0x18] sm:$0xff]
      %v384 = vld [vmem:[%s5 + $0x20] sm:$0xff]
      %v385 = vld [vmem:[%s5 + $0x28] sm:$0xff]
      %v386 = vld [vmem:[%s5 + $0x30] sm:$0xff]
      %v387 = vld [vmem:[%s5 + $0x38] sm:$0xff]
      %v388 = vld [vmem:[%s6] sm:$0xf]
      %v390 = vsel %vm359, %v370, 0
      %392 = vmatprep.subr.mxu0 0.0
      %393 = vmatpush1.msra.mxu0 %v380
      %394 = vmatprep.subr.mxu0 0.0
      %395 = vmatpush1.msra.mxu0 %v381
      %396 = vmatprep.subr.mxu0 0.0
      %397 = vmatpush1.msra.mxu0 %v382
      %398 = vmatprep.subr.mxu0 0.0
      %399 = vmatpush1.msra.mxu0 %v383
      %400 = vmatprep.subr.mxu0 0.0
      %401 = vmatpush1.msra.mxu0 %v384
      %402 = vmatprep.subr.mxu0 0.0
      %403 = vmatpush1.msra.mxu0 %v385
      %404 = vmatprep.subr.mxu0 0.0
      %405 = vmatpush1.msra.mxu0 %v386
      %406 = vmatprep.subr.mxu0 0.0
      %407 = vmatpush1.msra.mxu0 %v387
      %408 = vmatprep.subr.mxu0 0.0
      %409 = vmatpush1.msra.mxu0 0.0
      %410 = vmatprep.subr.mxu0 0.0
      %411 = vmatpush1.msra.mxu0 0.0
      %412 = vmatprep.subr.mxu0 0.0
      %413 = vmatpush1.msra.mxu0 0.0
      %414 = vmatprep.subr.mxu0 0.0
      %415 = vmatpush1.msra.mxu0 0.0
      %416 = vmatprep.subr.mxu0 0.0
      %417 = vmatpush1.msra.mxu0 0.0
      %418 = vmatprep.subr.mxu0 0.0
      %419 = vmatpush1.msra.mxu0 0.0
      %420 = vmatprep.subr.mxu0 0.0
      %421 = vmatpush1.msra.mxu0 0.0
      %422 = vmatprep.subr.mxu0 0.0
      %423 = vmatpush1.msra.mxu0 0.0
      %424 = vmatprep.subr.mxu0 0.0
      %425 = vmatpush1.msra.mxu0 0.0
      %426 = vmatprep.subr.mxu0 0.0
      %427 = vmatpush1.msra.mxu0 0.0
      %428 = vmatprep.subr.mxu0 0.0
      %429 = vmatpush1.msra.mxu0 0.0
      %430 = vmatprep.subr.mxu0 0.0
      %431 = vmatpush1.msra.mxu0 0.0
      %432 = vmatprep.subr.mxu0 0.0
      %433 = vmatpush1.msra.mxu0 0.0
      %434 = vmatprep.subr.mxu0 0.0
      %435 = vmatpush1.msra.mxu0 0.0
      %436 = vmatprep.subr.mxu0 0.0
      %437 = vmatpush1.msra.mxu0 0.0
      %438 = vmatprep.subr.mxu0 0.0
      %439 = vmatpush1.msra.mxu0 0.0
      %440 = vmatprep.subr.mxu0 0.0
      %441 = vmatpush1.msra.mxu0 0.0
      %442 = vmatprep.subr.mxu0 0.0
      %443 = vmatpush1.msra.mxu0 0.0
      %444 = vmatprep.subr.mxu0 0.0
      %445 = vmatpush1.msra.mxu0 0.0
      %446 = vmatprep.subr.mxu0 0.0
      %447 = vmatpush1.msra.mxu0 0.0
      %448 = vmatprep.subr.mxu0 0.0
      %449 = vmatpush1.msra.mxu0 0.0
      %450 = vmatprep.subr.mxu0 0.0
      %451 = vmatpush1.msra.mxu0 0.0
      %452 = vmatprep.subr.mxu0 0.0
      %453 = vmatpush1.msra.mxu0 0.0
      %454 = vmatprep.subr.mxu0 0.0
      %455 = vmatpush1.msra.mxu0 0.0
      %456 = vmatprep.mubr.f32.mxu0 0.0
      %457 = vmatmul.mubr.f32.gmra.mrb[0].mxu0 %v390
      %v458 = vpop.f32.mrb[0].mxu0
      %v459 = vadd.f32 0.0, %v458
      %v460 = vpop.f32.mrb[0].mxu0
      %461 = vdwg.mxu0
      %v462 = vmax.f32 %v459, 0.0
      %v464 = vsel %vm359, %v379, 0
      %466 = vmatprep.subr.mxu0 0.0
      %467 = vmatpush1.msra.mxu0 %v380
      %468 = vmatprep.subr.mxu0 0.0
      %469 = vmatpush1.msra.mxu0 %v381
      %470 = vmatprep.subr.mxu0 0.0
      %471 = vmatpush1.msra.mxu0 %v382
      %472 = vmatprep.subr.mxu0 0.0
      %473 = vmatpush1.msra.mxu0 %v383
      %474 = vmatprep.subr.mxu0 0.0
      %475 = vmatpush1.msra.mxu0 %v384
      %476 = vmatprep.subr.mxu0 0.0
      %477 = vmatpush1.msra.mxu0 %v385
      %478 = vmatprep.subr.mxu0 0.0
      %479 = vmatpush1.msra.mxu0 %v386
      %480 = vmatprep.subr.mxu0 0.0
      %481 = vmatpush1.msra.mxu0 %v387
      %482 = vmatprep.subr.mxu0 0.0
      %483 = vmatpush1.msra.mxu0 0.0
      %484 = vmatprep.subr.mxu0 0.0
      %485 = vmatpush1.msra.mxu0 0.0
      %486 = vmatprep.subr.mxu0 0.0
      %487 = vmatpush1.msra.mxu0 0.0
      %488 = vmatprep.subr.mxu0 0.0
      %489 = vmatpush1.msra.mxu0 0.0
      %490 = vmatprep.subr.mxu0 0.0
      %491 = vmatpush1.msra.mxu0 0.0
      %492 = vmatprep.subr.mxu0 0.0
      %493 = vmatpush1.msra.mxu0 0.0
      %494 = vmatprep.subr.mxu0 0.0
      %495 = vmatpush1.msra.mxu0 0.0
      %496 = vmatprep.subr.mxu0 0.0
      %497 = vmatpush1.msra.mxu0 0.0
      %498 = vmatprep.subr.mxu0 0.0
      %499 = vmatpush1.msra.mxu0 0.0
      %500 = vmatprep.subr.mxu0 0.0
      %501 = vmatpush1.msra.mxu0 0.0
      %502 = vmatprep.subr.mxu0 0.0
      %503 = vmatpush1.msra.mxu0 0.0
      %504 = vmatprep.subr.mxu0 0.0
      %505 = vmatpush1.msra.mxu0 0.0
      %506 = vmatprep.subr.mxu0 0.0
      %507 = vmatpush1.msra.mxu0 0.0
      %508 = vmatprep.subr.mxu0 0.0
      %509 = vmatpush1.msra.mxu0 0.0
      %510 = vmatprep.subr.mxu0 0.0
      %511 = vmatpush1.msra.mxu0 0.0
      %512 = vmatprep.subr.mxu0 0.0
      %513 = vmatpush1.msra.mxu0 0.0
      %514 = vmatprep.subr.mxu0 0.0
      %515 = vmatpush1.msra.mxu0 0.0
      %516 = vmatprep.subr.mxu0 0.0
      %517 = vmatpush1.msra.mxu0 0.0
      %518 = vmatprep.subr.mxu0 0.0
      %519 = vmatpush1.msra.mxu0 0.0
      %520 = vmatprep.subr.mxu0 0.0
      %521 = vmatpush1.msra.mxu0 0.0
      %522 = vmatprep.subr.mxu0 0.0
      %523 = vmatpush1.msra.mxu0 0.0
      %524 = vmatprep.subr.mxu0 0.0
      %525 = vmatpush1.msra.mxu0 0.0
      %526 = vmatprep.subr.mxu0 0.0
      %527 = vmatpush1.msra.mxu0 0.0
      %528 = vmatprep.subr.mxu0 0.0
      %529 = vmatpush1.msra.mxu0 0.0
      %530 = vmatprep.mubr.f32.mxu0 0.0
      %531 = vmatmul.mubr.f32.gmra.mrb[0].mxu0 %v464
      %v532 = vpop.f32.mrb[0].mxu0
      %v533 = vadd.f32 0.0, %v532
      %v534 = vpop.f32.mrb[0].mxu0
      %535 = vdwg.mxu0
      %v536 = vmax.f32 %v533, 0.0
      %vm537 = vcmask 31744
      %v539 = vsel %vm537, %v536, 0
      %vm541 = vcmask 1043456
      %v543 = vsel %vm541, %v388, 0
      %545 = vmatprep.subr.mxu0 0.0
      %546 = vmatpush1.msra.mxu0 %v543
      %547 = vmatprep.subr.mxu0 0.0
      %548 = vmatpush1.msra.mxu0 0.0
      %549 = vmatprep.subr.mxu0 0.0
      %550 = vmatpush1.msra.mxu0 0.0
      %551 = vmatprep.subr.mxu0 0.0
      %552 = vmatpush1.msra.mxu0 0.0
      %553 = vmatprep.subr.mxu0 0.0
      %554 = vmatpush1.msra.mxu0 0.0
      %555 = vmatprep.subr.mxu0 0.0
      %556 = vmatpush1.msra.mxu0 0.0
      %557 = vmatprep.subr.mxu0 0.0
      %558 = vmatpush1.msra.mxu0 0.0
      %559 = vmatprep.subr.mxu0 0.0
      %560 = vmatpush1.msra.mxu0 0.0
      %561 = vmatprep.subr.mxu0 0.0
      %562 = vmatpush1.msra.mxu0 0.0
      %563 = vmatprep.subr.mxu0 0.0
      %564 = vmatpush1.msra.mxu0 0.0
      %565 = vmatprep.subr.mxu0 0.0
      %566 = vmatpush1.msra.mxu0 0.0
      %567 = vmatprep.subr.mxu0 0.0
      %568 = vmatpush1.msra.mxu0 0.0
      %569 = vmatprep.subr.mxu0 0.0
      %570 = vmatpush1.msra.mxu0 0.0
      %571 = vmatprep.subr.mxu0 0.0
      %572 = vmatpush1.msra.mxu0 0.0
      %573 = vmatprep.subr.mxu0 0.0
      %574 = vmatpush1.msra.mxu0 0.0
      %575 = vmatprep.subr.mxu0 0.0
      %576 = vmatpush1.msra.mxu0 0.0
      %577 = vmatprep.subr.mxu0 0.0
      %578 = vmatpush1.msra.mxu0 0.0
      %579 = vmatprep.subr.mxu0 0.0
      %580 = vmatpush1.msra.mxu0 0.0
      %581 = vmatprep.subr.mxu0 0.0
      %582 = vmatpush1.msra.mxu0 0.0
      %583 = vmatprep.subr.mxu0 0.0
      %584 = vmatpush1.msra.mxu0 0.0
      %585 = vmatprep.subr.mxu0 0.0
      %586 = vmatpush1.msra.mxu0 0.0
      %587 = vmatprep.subr.mxu0 0.0
      %588 = vmatpush1.msra.mxu0 0.0
      %589 = vmatprep.subr.mxu0 0.0
      %590 = vmatpush1.msra.mxu0 0.0
      %591 = vmatprep.subr.mxu0 0.0
      %592 = vmatpush1.msra.mxu0 0.0
      %593 = vmatprep.subr.mxu0 0.0
      %594 = vmatpush1.msra.mxu0 0.0
      %595 = vmatprep.subr.mxu0 0.0
      %596 = vmatpush1.msra.mxu0 0.0
      %597 = vmatprep.subr.mxu0 0.0
      %598 = vmatpush1.msra.mxu0 0.0
      %599 = vmatprep.subr.mxu0 0.0
      %600 = vmatpush1.msra.mxu0 0.0
      %601 = vmatprep.subr.mxu0 0.0
      %602 = vmatpush1.msra.mxu0 0.0
      %603 = vmatprep.subr.mxu0 0.0
      %604 = vmatpush1.msra.mxu0 0.0
      %605 = vmatprep.subr.mxu0 0.0
      %606 = vmatpush1.msra.mxu0 0.0
      %607 = vmatprep.subr.mxu0 0.0
      %608 = vmatpush1.msra.mxu0 0.0
      %609 = vmatprep.mubr.f32.mxu0 0.0
      %610 = vmatmul.mubr.f32.gmra.mrb[0].mxu0 %v539
      %v611 = vpop.f32.mrb[0].mxu0
      %v612 = vadd.f32 0.0, %v611
      %v613 = vpop.f32.mrb[0].mxu0
      %614 = vdwg.mxu0
      %v616 = vsel %vm537, %v462, 0
      %618 = vmatprep.subr.mxu0 0.0
      %619 = vmatpush1.msra.mxu0 %v543
      %620 = vmatprep.subr.mxu0 0.0
      %621 = vmatpush1.msra.mxu0 0.0
      %622 = vmatprep.subr.mxu0 0.0
      %623 = vmatpush1.msra.mxu0 0.0
      %624 = vmatprep.subr.mxu0 0.0
      %625 = vmatpush1.msra.mxu0 0.0
      %626 = vmatprep.subr.mxu0 0.0
      %627 = vmatpush1.msra.mxu0 0.0
      %628 = vmatprep.subr.mxu0 0.0
      %629 = vmatpush1.msra.mxu0 0.0
      %630 = vmatprep.subr.mxu0 0.0
      %631 = vmatpush1.msra.mxu0 0.0
      %632 = vmatprep.subr.mxu0 0.0
      %633 = vmatpush1.msra.mxu0 0.0
      %634 = vmatprep.subr.mxu0 0.0
      %635 = vmatpush1.msra.mxu0 0.0
      %636 = vmatprep.subr.mxu0 0.0
      %637 = vmatpush1.msra.mxu0 0.0
      %638 = vmatprep.subr.mxu0 0.0
      %639 = vmatpush1.msra.mxu0 0.0
      %640 = vmatprep.subr.mxu0 0.0
      %641 = vmatpush1.msra.mxu0 0.0
      %642 = vmatprep.subr.mxu0 0.0
      %643 = vmatpush1.msra.mxu0 0.0
      %644 = vmatprep.subr.mxu0 0.0
      %645 = vmatpush1.msra.mxu0 0.0
      %646 = vmatprep.subr.mxu0 0.0
      %647 = vmatpush1.msra.mxu0 0.0
      %648 = vmatprep.subr.mxu0 0.0
      %649 = vmatpush1.msra.mxu0 0.0
      %650 = vmatprep.subr.mxu0 0.0
      %651 = vmatpush1.msra.mxu0 0.0
      %652 = vmatprep.subr.mxu0 0.0
      %653 = vmatpush1.msra.mxu0 0.0
      %654 = vmatprep.subr.mxu0 0.0
      %655 = vmatpush1.msra.mxu0 0.0
      %656 = vmatprep.subr.mxu0 0.0
      %657 = vmatpush1.msra.mxu0 0.0
      %658 = vmatprep.subr.mxu0 0.0
      %659 = vmatpush1.msra.mxu0 0.0
      %660 = vmatprep.subr.mxu0 0.0
      %661 = vmatpush1.msra.mxu0 0.0
      %662 = vmatprep.subr.mxu0 0.0
      %663 = vmatpush1.msra.mxu0 0.0
      %664 = vmatprep.subr.mxu0 0.0
      %665 = vmatpush1.msra.mxu0 0.0
      %666 = vmatprep.subr.mxu0 0.0
      %667 = vmatpush1.msra.mxu0 0.0
      %668 = vmatprep.subr.mxu0 0.0
      %669 = vmatpush1.msra.mxu0 0.0
      %670 = vmatprep.subr.mxu0 0.0
      %671 = vmatpush1.msra.mxu0 0.0
      %672 = vmatprep.subr.mxu0 0.0
      %673 = vmatpush1.msra.mxu0 0.0
      %674 = vmatprep.subr.mxu0 0.0
      %675 = vmatpush1.msra.mxu0 0.0
      %676 = vmatprep.subr.mxu0 0.0
      %677 = vmatpush1.msra.mxu0 0.0
      %678 = vmatprep.subr.mxu0 0.0
      %679 = vmatpush1.msra.mxu0 0.0
      %680 = vmatprep.subr.mxu0 0.0
      %681 = vmatpush1.msra.mxu0 0.0
      %682 = vmatprep.mubr.f32.mxu0 0.0
      %683 = vmatmul.mubr.f32.gmra.mrb[0].mxu0 %v616
      %v684 = vpop.f32.mrb[0].mxu0
      %v685 = vadd.f32 %v612, %v684
      %v686 = vpop.f32.mrb[0].mxu0
      %687 = vdwg.mxu0
      %v688 = vxor.u32 %v685, 2147483648
      %v689 = vmul.f32 %v688, 1.442695
      %v690 = vpow.pop %v689
      %v691 = vadd.f32 %v690, 1.0
      %v692 = vrcp.pop %v691
      %v693 = vmul.f32 1.0, %v692
      %v694 = vld [vmem:[%s293] sm:$0xff]
      %v695 = vld [vmem:[%s293 + $0x8] sm:$0xff]
      %v696 = vlaneseq
      %v697 = vshrl.u32 %v696, 7
      %v698 = vsub.s32 0, %v697
      %v699 = vrot.slane %v693, %v698
      %v700 = vmul.f32 %v694, %v699
      %v701 = vmul.f32 %v695, %v699
      %v702 = vld [vmem:[%s2] sm:$0xff]
      %v703 = vld [vmem:[%s2 + $0x8] sm:$0xff]
      %v704 = vadd.f32 %v700, %v702
      %v705 = vadd.f32 %v701, %v703
      %706 = vst.msk [vmem:[%s298] sm:$0xff] %vm359, %v704
      %707 = vst.msk [vmem:[%s298 + $0x8] sm:$0xff] %vm359, %v705
      %p708 = scmp.lt.s32.totalorder %s18, 1
      %s709 = scalar_select %p708, %s18, 1
      %s710 = smul.addr %s709, 2
      %s711 = smul.addr %s710, 8
      %s712 = scalar_lea.vmem %s7, %s711
      // Predicated region
      $region49: #{diff_encoder_fwd.9} parent=47 // pred_check
        %p713 = pneg %p193
      $region50: #{diff_encoder_fwd.9} parent=47 // pred_check_branch
        %715 = sbr.rel (%p713) target = $region52
      $region51: #{diff_encoder_fwd.9} parent=47 // pred_region
        _
      $region52: #{diff_encoder_fwd.9} parent=47 // pred_fallthru
        _
    $region48: #{diff_encoder_fwd.9} parent=5 // pred_fallthru
      _
    %p716 = scmp.le.s32.totalorder 2, %s13
    // Predicated region
    $region53: #{diff_encoder_fwd.9} parent=5 // pred_check
      %p717 = pneg %p716
    $region54: #{diff_encoder_fwd.9} parent=5 // pred_check_branch
      %719 = sbr.rel (%p717) target = $region56
    $region55: #{diff_encoder_fwd.9} parent=5 // pred_region
      %s720 = ssub.s32 %s13, 2
      // Predicated region
      $region57: #{diff_encoder_fwd.9} parent=55 // pred_check
        %p721 = pneg %p199
      $region58: #{diff_encoder_fwd.9} parent=55 // pred_check_branch
        %723 = sbr.rel (%p721) target = $region60
      $region59: #{diff_encoder_fwd.9} parent=55 // pred_region
        %p724 = scmp.lt.s32.totalorder %s19, 1
        %s725 = scalar_select %p724, %s19, 1
        %s726 = smul.addr %s725, 2
        %s727 = smul.addr %s726, 8
        %s728 = scalar_lea.vmem %s7, %s727
      $region60: #{diff_encoder_fwd.9} parent=55 // pred_fallthru
        _
    $region56: #{diff_encoder_fwd.9} parent=5 // pred_fallthru
      _
  $region6: #{diff_encoder_fwd.9} parent=0 // loop_footer
    %s17 = sadd.s32 1, %s13
  $region7: #{diff_encoder_fwd.9} parent=0 // loop_footer_branch
    %12 = sbr.rel target = $region3
  $region8: #{diff_encoder_fwd.9} parent=0 // loop_exit
    _

// kernel: diff_encoder_fwd.11
$region0: #{diff_encoder_fwd.11}
  #allocation0 [shape = 'u32[]', space=smem, size = 0x4, offset = 0x4, fixed_abs, tag = 'smem constant byte address 0x4 - core index']
  #allocation1 [shape = 'u32[144,128]{1,0:T(1,128)}', space=vmem, size = 0x12000, scoped, tag = 'internal scratch']
  %s0 = inlined_call_operand.vmem [shape: f32[2,16,64], index: 0, kind: input, shape index: {}]
  %s1 = inlined_call_operand.vmem [shape: f32[2,16,64], index: 1, kind: input, shape index: {}]
  %s2 = inlined_call_operand.vmem [shape: f32[64,64], index: 2, kind: input, shape index: {}]
  %s3 = inlined_call_operand.vmem [shape: f32[1,64], index: 3, kind: input, shape index: {}]
  %s4 = inlined_call_operand.vmem [shape: f32[64,128], index: 4, kind: input, shape index: {}]
  %s5 = inlined_call_operand.vmem [shape: f32[1,128], index: 5, kind: input, shape index: {}]
  %s6 = inlined_call_operand.vmem [shape: f32[64,64], index: 6, kind: input, shape index: {}]
  %s7 = inlined_call_operand.vmem [shape: f32[1,64], index: 7, kind: input, shape index: {}]
  %s8 = inlined_call_operand.vmem [shape: f32[1,64], index: 8, kind: input, shape index: {}]
  %s9 = inlined_call_operand.vmem [shape: f32[1,64], index: 9, kind: input, shape index: {}]
  %s10 = inlined_call_operand.vmem [shape: f32[64,128], index: 10, kind: input, shape index: {}]
  %s11 = inlined_call_operand.vmem [shape: f32[1,128], index: 11, kind: input, shape index: {}]
  %s12 = inlined_call_operand.vmem [shape: f32[128,64], index: 12, kind: input, shape index: {}]
  %s13 = inlined_call_operand.vmem [shape: f32[1,64], index: 13, kind: input, shape index: {}]
  %s14 = inlined_call_operand.vmem [shape: f32[1,64], index: 14, kind: input, shape index: {}]
  %s15 = inlined_call_operand.vmem [shape: f32[1,64], index: 15, kind: input, shape index: {}]
  %s16 = inlined_call_operand.vmem [shape: f32[2,16,64], index: 16, kind: output, shape index: {}]
  %s17 = sld [smem:[#allocation0]]
  $region97: #{diff_encoder_fwd.11} parent=0
    _
  %s19 = ssub.s32 1, %s17
  %s20 = scalar_select 0, %s19, %s17
  loop: start=0, step=1, limit=4
  $region2: #{diff_encoder_fwd.11} parent=0 // loop_pre_header
    _
  $region3: #{diff_encoder_fwd.11} parent=0 // loop_header
    %s22 = sphi 0, %s26
    %p23 = scmp.ge.s32.totalorder %s22, 4
    %s32 = sphi 0, %s34
    %s35 = sphi 0, %s32
    %s36 = sphi 0, %s35
    %s52 = sphi 0, %s36
    %s58 = sphi 0, %s60
    %s61 = sphi 0, %s58
    %s62 = sphi 0, %s61
    %s78 = sphi 0, %s62
    %s82 = sphi 0, %s82
    %s84 = sphi 0, %s82
    %s85 = sphi 0, %s84
    %s99 = sphi 0, %s85
    %s103 = sphi 0, %s103
    %s105 = sphi 0, %s103
    %s106 = sphi 0, %s105
    %s120 = sphi 0, %s106
    %s124 = sphi 0, %s124
    %s126 = sphi 0, %s124
    %s127 = sphi 0, %s126
    %s141 = sphi 0, %s127
    %s145 = sphi 0, %s145
    %s147 = sphi 0, %s145
    %s148 = sphi 0, %s147
    %s162 = sphi 0, %s148
    %s166 = sphi 0, %s166
    %s168 = sphi 0, %s166
    %s169 = sphi 0, %s168
    %s183 = sphi 0, %s169
    %s187 = sphi 0, %s187
    %s189 = sphi 0, %s187
    %s190 = sphi 0, %s189
    %s204 = sphi 0, %s190
    %s208 = sphi 0, %s208
    %s210 = sphi 0, %s208
    %s211 = sphi 0, %s210
    %s225 = sphi 0, %s211
    %s229 = sphi 0, %s229
    %s231 = sphi 0, %s229
    %s232 = sphi 0, %s231
    %s246 = sphi 0, %s232
    %s250 = sphi 0, %s250
    %s252 = sphi 0, %s250
    %s253 = sphi 0, %s252
    %s267 = sphi 0, %s253
    %s271 = sphi 0, %s271
    %s273 = sphi 0, %s271
    %s274 = sphi 0, %s273
    %s288 = sphi 0, %s274
    %s292 = sphi 0, %s292
    %s294 = sphi 0, %s292
    %s295 = sphi 0, %s294
    %s309 = sphi 0, %s295
    %s313 = sphi 0, %s313
    %s315 = sphi 0, %s313
    %s316 = sphi 0, %s315
    %s330 = sphi 0, %s316
    %s334 = sphi 0, %s334
    %s336 = sphi 0, %s334
    %s337 = sphi 0, %s336
    %s351 = sphi 0, %s337
    %s355 = sphi 0, %s355
    %s357 = sphi 0, %s355
    %s358 = sphi 0, %s357
    %s372 = sphi 0, %s358
    %s378 = sphi 0, %s380
    %s381 = sphi 0, %s378
    %s382 = sphi 0, %s381
    %s398 = sphi 0, %s382
  $region4: #{diff_encoder_fwd.11} parent=0 // loop_header_branch
    %25 = sbr.rel (%p23) target = $region8
  $region5: #{diff_encoder_fwd.11} parent=0 // loop_body
    %s27 = ssub.s32 %s22, 1
    %s28 = ssub.s32 %s22, 2
    %s29 = sadd.s32 %s22, 1
    %s30 = ssub.s32 %s22, %s29
    %p31 = scmp.eq.s32.totalorder %s30, 0
    %s33 = sadd.s32 %s32, 1
    %s34 = scalar_select %p31, %s32, %s33
    %p37 = pneg %p31
    %p38 = scmp.eq.s32.totalorder %s22, 1
    %p39 = por %p37, %p38
    %p40 = scmp.ne.s32.totalorder %s32, %s35
    %p41 = scmp.eq.s32.totalorder %s22, 0
    %p42 = por %p40, %p41
    %p43 = scmp.ne.s32.totalorder %s32, %s35
    %p44 = scmp.eq.s32.totalorder %s27, 1
    %p45 = por %p43, %p44
    %p46 = scmp.ne.s32.totalorder %s35, %s36
    %p47 = scmp.eq.s32.totalorder %s27, 0
    %p48 = por %p46, %p47
    %p49 = scmp.ne.s32.totalorder %s35, %s36
    %p50 = scmp.eq.s32.totalorder %s28, 1
    %p51 = por %p49, %p50
    %p53 = scmp.ne.s32.totalorder %s36, %s52
    %p54 = scmp.eq.s32.totalorder %s28, 0
    %p55 = por %p53, %p54
    %s56 = ssub.s32 %s22, %s29
    %p57 = scmp.eq.s32.totalorder %s56, 0
    %s59 = sadd.s32 %s58, 1
    %s60 = scalar_select %p57, %s58, %s59
    %p63 = pneg %p57
    %p64 = scmp.eq.s32.totalorder %s22, 1
    %p65 = por %p63, %p64
    %p66 = scmp.ne.s32.totalorder %s58, %s61
    %p67 = scmp.eq.s32.totalorder %s22, 0
    %p68 = por %p66, %p67
    %p69 = scmp.ne.s32.totalorder %s58, %s61
    %p70 = scmp.eq.s32.totalorder %s27, 1
    %p71 = por %p69, %p70
    %p72 = scmp.ne.s32.totalorder %s61, %s62
    %p73 = scmp.eq.s32.totalorder %s27, 0
    %p74 = por %p72, %p73
    %p75 = scmp.ne.s32.totalorder %s61, %s62
    %p76 = scmp.eq.s32.totalorder %s28, 1
    %p77 = por %p75, %p76
    %p79 = scmp.ne.s32.totalorder %s62, %s78
    %p80 = scmp.eq.s32.totalorder %s28, 0
    %p81 = por %p79, %p80
    %s83 = sadd.s32 %s82, 1
    %p86 = scmp.eq.s32.totalorder %s22, 1
    %p87 = scmp.ne.s32.totalorder %s82, %s84
    %p88 = scmp.eq.s32.totalorder %s22, 0
    %p89 = por %p87, %p88
    %p90 = scmp.ne.s32.totalorder %s82, %s84
    %p91 = scmp.eq.s32.totalorder %s27, 1
    %p92 = por %p90, %p91
    %p93 = scmp.ne.s32.totalorder %s84, %s85
    %p94 = scmp.eq.s32.totalorder %s27, 0
    %p95 = por %p93, %p94
    %p96 = scmp.ne.s32.totalorder %s84, %s85
    %p97 = scmp.eq.s32.totalorder %s28, 1
    %p98 = por %p96, %p97
    %p100 = scmp.ne.s32.totalorder %s85, %s99
    %p101 = scmp.eq.s32.totalorder %s28, 0
    %p102 = por %p100, %p101
    %s104 = sadd.s32 %s103, 1
    %p107 = scmp.eq.s32.totalorder %s22, 1
    %p108 = scmp.ne.s32.totalorder %s103, %s105
    %p109 = scmp.eq.s32.totalorder %s22, 0
    %p110 = por %p108, %p109
    %p111 = scmp.ne.s32.totalorder %s103, %s105
    %p112 = scmp.eq.s32.totalorder %s27, 1
    %p113 = por %p111, %p112
    %p114 = scmp.ne.s32.totalorder %s105, %s106
    %p115 = scmp.eq.s32.totalorder %s27, 0
    %p116 = por %p114, %p115
    %p117 = scmp.ne.s32.totalorder %s105, %s106
    %p118 = scmp.eq.s32.totalorder %s28, 1
    %p119 = por %p117, %p118
    %p121 = scmp.ne.s32.totalorder %s106, %s120
    %p122 = scmp.eq.s32.totalorder %s28, 0
    %p123 = por %p121, %p122
    %s125 = sadd.s32 %s124, 1
    %p128 = scmp.eq.s32.totalorder %s22, 1
    %p129 = scmp.ne.s32.totalorder %s124, %s126
    %p130 = scmp.eq.s32.totalorder %s22, 0
    %p131 = por %p129, %p130
    %p132 = scmp.ne.s32.totalorder %s124, %s126
    %p133 = scmp.eq.s32.totalorder %s27, 1
    %p134 = por %p132, %p133
    %p135 = scmp.ne.s32.totalorder %s126, %s127
    %p136 = scmp.eq.s32.totalorder %s27, 0
    %p137 = por %p135, %p136
    %p138 = scmp.ne.s32.totalorder %s126, %s127
    %p139 = scmp.eq.s32.totalorder %s28, 1
    %p140 = por %p138, %p139
    %p142 = scmp.ne.s32.totalorder %s127, %s141
    %p143 = scmp.eq.s32.totalorder %s28, 0
    %p144 = por %p142, %p143
    %s146 = sadd.s32 %s145, 1
    %p149 = scmp.eq.s32.totalorder %s22, 1
    %p150 = scmp.ne.s32.totalorder %s145, %s147
    %p151 = scmp.eq.s32.totalorder %s22, 0
    %p152 = por %p150, %p151
    %p153 = scmp.ne.s32.totalorder %s145, %s147
    %p154 = scmp.eq.s32.totalorder %s27, 1
    %p155 = por %p153, %p154
    %p156 = scmp.ne.s32.totalorder %s147, %s148
    %p157 = scmp.eq.s32.totalorder %s27, 0
    %p158 = por %p156, %p157
    %p159 = scmp.ne.s32.totalorder %s147, %s148
    %p160 = scmp.eq.s32.totalorder %s28, 1
    %p161 = por %p159, %p160
    %p163 = scmp.ne.s32.totalorder %s148, %s162
    %p164 = scmp.eq.s32.totalorder %s28, 0
    %p165 = por %p163, %p164
    %s167 = sadd.s32 %s166, 1
    %p170 = scmp.eq.s32.totalorder %s22, 1
    %p171 = scmp.ne.s32.totalorder %s166, %s168
    %p172 = scmp.eq.s32.totalorder %s22, 0
    %p173 = por %p171, %p172
    %p174 = scmp.ne.s32.totalorder %s166, %s168
    %p175 = scmp.eq.s32.totalorder %s27, 1
    %p176 = por %p174, %p175
    %p177 = scmp.ne.s32.totalorder %s168, %s169
    %p178 = scmp.eq.s32.totalorder %s27, 0
    %p179 = por %p177, %p178
    %p180 = scmp.ne.s32.totalorder %s168, %s169
    %p181 = scmp.eq.s32.totalorder %s28, 1
    %p182 = por %p180, %p181
    %p184 = scmp.ne.s32.totalorder %s169, %s183
    %p185 = scmp.eq.s32.totalorder %s28, 0
    %p186 = por %p184, %p185
    %s188 = sadd.s32 %s187, 1
    %p191 = scmp.eq.s32.totalorder %s22, 1
    %p192 = scmp.ne.s32.totalorder %s187, %s189
    %p193 = scmp.eq.s32.totalorder %s22, 0
    %p194 = por %p192, %p193
    %p195 = scmp.ne.s32.totalorder %s187, %s189
    %p196 = scmp.eq.s32.totalorder %s27, 1
    %p197 = por %p195, %p196
    %p198 = scmp.ne.s32.totalorder %s189, %s190
    %p199 = scmp.eq.s32.totalorder %s27, 0
    %p200 = por %p198, %p199
    %p201 = scmp.ne.s32.totalorder %s189, %s190
    %p202 = scmp.eq.s32.totalorder %s28, 1
    %p203 = por %p201, %p202
    %p205 = scmp.ne.s32.totalorder %s190, %s204
    %p206 = scmp.eq.s32.totalorder %s28, 0
    %p207 = por %p205, %p206
    %s209 = sadd.s32 %s208, 1
    %p212 = scmp.eq.s32.totalorder %s22, 1
    %p213 = scmp.ne.s32.totalorder %s208, %s210
    %p214 = scmp.eq.s32.totalorder %s22, 0
    %p215 = por %p213, %p214
    %p216 = scmp.ne.s32.totalorder %s208, %s210
    %p217 = scmp.eq.s32.totalorder %s27, 1
    %p218 = por %p216, %p217
    %p219 = scmp.ne.s32.totalorder %s210, %s211
    %p220 = scmp.eq.s32.totalorder %s27, 0
    %p221 = por %p219, %p220
    %p222 = scmp.ne.s32.totalorder %s210, %s211
    %p223 = scmp.eq.s32.totalorder %s28, 1
    %p224 = por %p222, %p223
    %p226 = scmp.ne.s32.totalorder %s211, %s225
    %p227 = scmp.eq.s32.totalorder %s28, 0
    %p228 = por %p226, %p227
    %s230 = sadd.s32 %s229, 1
    %p233 = scmp.eq.s32.totalorder %s22, 1
    %p234 = scmp.ne.s32.totalorder %s229, %s231
    %p235 = scmp.eq.s32.totalorder %s22, 0
    %p236 = por %p234, %p235
    %p237 = scmp.ne.s32.totalorder %s229, %s231
    %p238 = scmp.eq.s32.totalorder %s27, 1
    %p239 = por %p237, %p238
    %p240 = scmp.ne.s32.totalorder %s231, %s232
    %p241 = scmp.eq.s32.totalorder %s27, 0
    %p242 = por %p240, %p241
    %p243 = scmp.ne.s32.totalorder %s231, %s232
    %p244 = scmp.eq.s32.totalorder %s28, 1
    %p245 = por %p243, %p244
    %p247 = scmp.ne.s32.totalorder %s232, %s246
    %p248 = scmp.eq.s32.totalorder %s28, 0
    %p249 = por %p247, %p248
    %s251 = sadd.s32 %s250, 1
    %p254 = scmp.eq.s32.totalorder %s22, 1
    %p255 = scmp.ne.s32.totalorder %s250, %s252
    %p256 = scmp.eq.s32.totalorder %s22, 0
    %p257 = por %p255, %p256
    %p258 = scmp.ne.s32.totalorder %s250, %s252
    %p259 = scmp.eq.s32.totalorder %s27, 1
    %p260 = por %p258, %p259
    %p261 = scmp.ne.s32.totalorder %s252, %s253
    %p262 = scmp.eq.s32.totalorder %s27, 0
    %p263 = por %p261, %p262
    %p264 = scmp.ne.s32.totalorder %s252, %s253
    %p265 = scmp.eq.s32.totalorder %s28, 1
    %p266 = por %p264, %p265
    %p268 = scmp.ne.s32.totalorder %s253, %s267
    %p269 = scmp.eq.s32.totalorder %s28, 0
    %p270 = por %p268, %p269
    %s272 = sadd.s32 %s271, 1
    %p275 = scmp.eq.s32.totalorder %s22, 1
    %p276 = scmp.ne.s32.totalorder %s271, %s273
    %p277 = scmp.eq.s32.totalorder %s22, 0
    %p278 = por %p276, %p277
    %p279 = scmp.ne.s32.totalorder %s271, %s273
    %p280 = scmp.eq.s32.totalorder %s27, 1
    %p281 = por %p279, %p280
    %p282 = scmp.ne.s32.totalorder %s273, %s274
    %p283 = scmp.eq.s32.totalorder %s27, 0
    %p284 = por %p282, %p283
    %p285 = scmp.ne.s32.totalorder %s273, %s274
    %p286 = scmp.eq.s32.totalorder %s28, 1
    %p287 = por %p285, %p286
    %p289 = scmp.ne.s32.totalorder %s274, %s288
    %p290 = scmp.eq.s32.totalorder %s28, 0
    %p291 = por %p289, %p290
    %s293 = sadd.s32 %s292, 1
    %p296 = scmp.eq.s32.totalorder %s22, 1
    %p297 = scmp.ne.s32.totalorder %s292, %s294
    %p298 = scmp.eq.s32.totalorder %s22, 0
    %p299 = por %p297, %p298
    %p300 = scmp.ne.s32.totalorder %s292, %s294
    %p301 = scmp.eq.s32.totalorder %s27, 1
    %p302 = por %p300, %p301
    %p303 = scmp.ne.s32.totalorder %s294, %s295
    %p304 = scmp.eq.s32.totalorder %s27, 0
    %p305 = por %p303, %p304
    %p306 = scmp.ne.s32.totalorder %s294, %s295
    %p307 = scmp.eq.s32.totalorder %s28, 1
    %p308 = por %p306, %p307
    %p310 = scmp.ne.s32.totalorder %s295, %s309
    %p311 = scmp.eq.s32.totalorder %s28, 0
    %p312 = por %p310, %p311
    %s314 = sadd.s32 %s313, 1
    %p317 = scmp.eq.s32.totalorder %s22, 1
    %p318 = scmp.ne.s32.totalorder %s313, %s315
    %p319 = scmp.eq.s32.totalorder %s22, 0
    %p320 = por %p318, %p319
    %p321 = scmp.ne.s32.totalorder %s313, %s315
    %p322 = scmp.eq.s32.totalorder %s27, 1
    %p323 = por %p321, %p322
    %p324 = scmp.ne.s32.totalorder %s315, %s316
    %p325 = scmp.eq.s32.totalorder %s27, 0
    %p326 = por %p324, %p325
    %p327 = scmp.ne.s32.totalorder %s315, %s316
    %p328 = scmp.eq.s32.totalorder %s28, 1
    %p329 = por %p327, %p328
    %p331 = scmp.ne.s32.totalorder %s316, %s330
    %p332 = scmp.eq.s32.totalorder %s28, 0
    %p333 = por %p331, %p332
    %s335 = sadd.s32 %s334, 1
    %p338 = scmp.eq.s32.totalorder %s22, 1
    %p339 = scmp.ne.s32.totalorder %s334, %s336
    %p340 = scmp.eq.s32.totalorder %s22, 0
    %p341 = por %p339, %p340
    %p342 = scmp.ne.s32.totalorder %s334, %s336
    %p343 = scmp.eq.s32.totalorder %s27, 1
    %p344 = por %p342, %p343
    %p345 = scmp.ne.s32.totalorder %s336, %s337
    %p346 = scmp.eq.s32.totalorder %s27, 0
    %p347 = por %p345, %p346
    %p348 = scmp.ne.s32.totalorder %s336, %s337
    %p349 = scmp.eq.s32.totalorder %s28, 1
    %p350 = por %p348, %p349
    %p352 = scmp.ne.s32.totalorder %s337, %s351
    %p353 = scmp.eq.s32.totalorder %s28, 0
    %p354 = por %p352, %p353
    %s356 = sadd.s32 %s355, 1
    %p359 = scmp.eq.s32.totalorder %s22, 1
    %p360 = scmp.ne.s32.totalorder %s355, %s357
    %p361 = scmp.eq.s32.totalorder %s22, 0
    %p362 = por %p360, %p361
    %p363 = scmp.ne.s32.totalorder %s355, %s357
    %p364 = scmp.eq.s32.totalorder %s27, 1
    %p365 = por %p363, %p364
    %p366 = scmp.ne.s32.totalorder %s357, %s358
    %p367 = scmp.eq.s32.totalorder %s27, 0
    %p368 = por %p366, %p367
    %p369 = scmp.ne.s32.totalorder %s357, %s358
    %p370 = scmp.eq.s32.totalorder %s28, 1
    %p371 = por %p369, %p370
    %p373 = scmp.ne.s32.totalorder %s358, %s372
    %p374 = scmp.eq.s32.totalorder %s28, 0
    %p375 = por %p373, %p374
    %s376 = ssub.s32 %s22, %s29
    %p377 = scmp.eq.s32.totalorder %s376, 0
    %s379 = sadd.s32 %s378, 1
    %s380 = scalar_select %p377, %s378, %s379
    %p383 = pneg %p377
    %p384 = scmp.eq.s32.totalorder %s22, 1
    %p385 = por %p383, %p384
    %p386 = scmp.ne.s32.totalorder %s378, %s381
    %p387 = scmp.eq.s32.totalorder %s22, 0
    %p388 = por %p386, %p387
    %p389 = scmp.ne.s32.totalorder %s378, %s381
    %p390 = scmp.eq.s32.totalorder %s27, 1
    %p391 = por %p389, %p390
    %p392 = scmp.ne.s32.totalorder %s381, %s382
    %p393 = scmp.eq.s32.totalorder %s27, 0
    %p394 = por %p392, %p393
    %p395 = scmp.ne.s32.totalorder %s381, %s382
    %p396 = scmp.eq.s32.totalorder %s28, 1
    %p397 = por %p395, %p396
    %p399 = scmp.ne.s32.totalorder %s382, %s398
    %p400 = scmp.eq.s32.totalorder %s28, 0
    %p401 = por %p399, %p400
    %p402 = scmp.le.s32.totalorder 1, %s22
    %p403 = scmp.lt.s32.totalorder %s22, 3
    %p404 = pnand %p402, %p403
    %p405 = pneg %p404
    // Predicated region
    $region9: #{diff_encoder_fwd.11} parent=5 // pred_check
      _
    $region10: #{diff_encoder_fwd.11} parent=5 // pred_check_branch
      %407 = sbr.rel (%p404) target = $region12
    $region11: #{diff_encoder_fwd.11} parent=5 // pred_region
      %s408 = ssub.s32 %s22, 1
      // Predicated region
      $region13: #{diff_encoder_fwd.11} parent=11 // pred_check
        %p409 = pneg %p95
      $region14: #{diff_encoder_fwd.11} parent=11 // pred_check_branch
        %411 = sbr.rel (%p409) target = $region16
      $region15: #{diff_encoder_fwd.11} parent=11 // pred_region
        _
      $region16: #{diff_encoder_fwd.11} parent=11 // pred_fallthru
        _
      // Predicated region
      $region17: #{diff_encoder_fwd.11} parent=11 // pred_check
        %p412 = pneg %p116
      $region18: #{diff_encoder_fwd.11} parent=11 // pred_check_branch
        %414 = sbr.rel (%p412) target = $region20
      $region19: #{diff_encoder_fwd.11} parent=11 // pred_region
        _
      $region20: #{diff_encoder_fwd.11} parent=11 // pred_fallthru
        _
      // Predicated region
      $region21: #{diff_encoder_fwd.11} parent=11 // pred_check
        %p415 = pneg %p137
      $region22: #{diff_encoder_fwd.11} parent=11 // pred_check_branch
        %417 = sbr.rel (%p415) target = $region24
      $region23: #{diff_encoder_fwd.11} parent=11 // pred_region
        _
      $region24: #{diff_encoder_fwd.11} parent=11 // pred_fallthru
        _
      // Predicated region
      $region25: #{diff_encoder_fwd.11} parent=11 // pred_check
        %p418 = pneg %p158
      $region26: #{diff_encoder_fwd.11} parent=11 // pred_check_branch
        %420 = sbr.rel (%p418) target = $region28
      $region27: #{diff_encoder_fwd.11} parent=11 // pred_region
        _
      $region28: #{diff_encoder_fwd.11} parent=11 // pred_fallthru
        _
      // Predicated region
      $region29: #{diff_encoder_fwd.11} parent=11 // pred_check
        %p421 = pneg %p179
      $region30: #{diff_encoder_fwd.11} parent=11 // pred_check_branch
        %423 = sbr.rel (%p421) target = $region32
      $region31: #{diff_encoder_fwd.11} parent=11 // pred_region
        _
      $region32: #{diff_encoder_fwd.11} parent=11 // pred_fallthru
        _
      // Predicated region
      $region33: #{diff_encoder_fwd.11} parent=11 // pred_check
        %p424 = pneg %p200
      $region34: #{diff_encoder_fwd.11} parent=11 // pred_check_branch
        %426 = sbr.rel (%p424) target = $region36
      $region35: #{diff_encoder_fwd.11} parent=11 // pred_region
        _
      $region36: #{diff_encoder_fwd.11} parent=11 // pred_fallthru
        _
      // Predicated region
      $region37: #{diff_encoder_fwd.11} parent=11 // pred_check
        %p427 = pneg %p221
      $region38: #{diff_encoder_fwd.11} parent=11 // pred_check_branch
        %429 = sbr.rel (%p427) target = $region40
      $region39: #{diff_encoder_fwd.11} parent=11 // pred_region
        _
      $region40: #{diff_encoder_fwd.11} parent=11 // pred_fallthru
        _
      // Predicated region
      $region41: #{diff_encoder_fwd.11} parent=11 // pred_check
        %p430 = pneg %p242
      $region42: #{diff_encoder_fwd.11} parent=11 // pred_check_branch
        %432 = sbr.rel (%p430) target = $region44
      $region43: #{diff_encoder_fwd.11} parent=11 // pred_region
        _
      $region44: #{diff_encoder_fwd.11} parent=11 // pred_fallthru
        _
      // Predicated region
      $region45: #{diff_encoder_fwd.11} parent=11 // pred_check
        %p433 = pneg %p263
      $region46: #{diff_encoder_fwd.11} parent=11 // pred_check_branch
        %435 = sbr.rel (%p433) target = $region48
      $region47: #{diff_encoder_fwd.11} parent=11 // pred_region
        _
      $region48: #{diff_encoder_fwd.11} parent=11 // pred_fallthru
        _
      // Predicated region
      $region49: #{diff_encoder_fwd.11} parent=11 // pred_check
        %p436 = pneg %p284
      $region50: #{diff_encoder_fwd.11} parent=11 // pred_check_branch
        %438 = sbr.rel (%p436) target = $region52
      $region51: #{diff_encoder_fwd.11} parent=11 // pred_region
        _
      $region52: #{diff_encoder_fwd.11} parent=11 // pred_fallthru
        _
      // Predicated region
      $region53: #{diff_encoder_fwd.11} parent=11 // pred_check
        %p439 = pneg %p305
      $region54: #{diff_encoder_fwd.11} parent=11 // pred_check_branch
        %441 = sbr.rel (%p439) target = $region56
      $region55: #{diff_encoder_fwd.11} parent=11 // pred_region
        _
      $region56: #{diff_encoder_fwd.11} parent=11 // pred_fallthru
        _
      // Predicated region
      $region57: #{diff_encoder_fwd.11} parent=11 // pred_check
        %p442 = pneg %p326
      $region58: #{diff_encoder_fwd.11} parent=11 // pred_check_branch
        %444 = sbr.rel (%p442) target = $region60
      $region59: #{diff_encoder_fwd.11} parent=11 // pred_region
        _
      $region60: #{diff_encoder_fwd.11} parent=11 // pred_fallthru
        _
      // Predicated region
      $region61: #{diff_encoder_fwd.11} parent=11 // pred_check
        %p445 = pneg %p347
      $region62: #{diff_encoder_fwd.11} parent=11 // pred_check_branch
        %447 = sbr.rel (%p445) target = $region64
      $region63: #{diff_encoder_fwd.11} parent=11 // pred_region
        _
      $region64: #{diff_encoder_fwd.11} parent=11 // pred_fallthru
        _
      // Predicated region
      $region65: #{diff_encoder_fwd.11} parent=11 // pred_check
        %p448 = pneg %p368
      $region66: #{diff_encoder_fwd.11} parent=11 // pred_check_branch
        %450 = sbr.rel (%p448) target = $region68
      $region67: #{diff_encoder_fwd.11} parent=11 // pred_region
        _
      $region68: #{diff_encoder_fwd.11} parent=11 // pred_fallthru
        _
    $region12: #{diff_encoder_fwd.11} parent=5 // pred_fallthru
      _
    %p451 = scmp.lt.s32.totalorder %s22, 2
    // Predicated region
    $region69: #{diff_encoder_fwd.11} parent=5 // pred_check
      %p452 = pneg %p451
    $region70: #{diff_encoder_fwd.11} parent=5 // pred_check_branch
      %454 = sbr.rel (%p452) target = $region72
    $region71: #{diff_encoder_fwd.11} parent=5 // pred_region
      // Predicated region
      $region73: #{diff_encoder_fwd.11} parent=71 // pred_check
        %p455 = pneg %p42
      $region74: #{diff_encoder_fwd.11} parent=71 // pred_check_branch
        %457 = sbr.rel (%p455) target = $region76
      $region75: #{diff_encoder_fwd.11} parent=71 // pred_region
        %p458 = scmp.lt.s32.totalorder %s22, 1
        %s459 = scalar_select %p458, %s22, 1
        %s460 = smul.addr %s459, 2
        %s461 = smul.addr %s460, 8
        %s462 = scalar_lea.vmem %s0, %s461
      $region76: #{diff_encoder_fwd.11} parent=71 // pred_fallthru
        _
      // Predicated region
      $region77: #{diff_encoder_fwd.11} parent=71 // pred_check
        %p463 = pneg %p68
      $region78: #{diff_encoder_fwd.11} parent=71 // pred_check_branch
        %465 = sbr.rel (%p463) target = $region80
      $region79: #{diff_encoder_fwd.11} parent=71 // pred_region
        %p466 = scmp.lt.s32.totalorder %s22, 1
        %s467 = scalar_select %p466, %s22, 1
        %s468 = smul.addr %s467, 2
        %s469 = smul.addr %s468, 8
        %s470 = scalar_lea.vmem %s1, %s469
      $region80: #{diff_encoder_fwd.11} parent=71 // pred_fallthru
        _
    $region72: #{diff_encoder_fwd.11} parent=5 // pred_fallthru
      _
    %p471 = scmp.le.s32.totalorder 1, %s22
    %p472 = scmp.lt.s32.totalorder %s22, 3
    %p473 = pnand %p471, %p472
    %p474 = pneg %p473
    // Predicated region
    $region81: #{diff_encoder_fwd.11} parent=5 // pred_check
      _
    $region82: #{diff_encoder_fwd.11} parent=5 // pred_check_branch
      %476 = sbr.rel (%p473) target = $region84
    $region83: #{diff_encoder_fwd.11} parent=5 // pred_region
      %s477 = ssub.s32 %s22, 1
      %p478 = scmp.lt.s32.totalorder %s27, 1
      %s479 = scalar_select %p478, %s27, 1
      %s480 = smul.addr %s479, 2
      %s481 = smul.addr %s480, 8
      %s482 = scalar_lea.vmem %s0, %s481
      %p483 = pneg %p48
      %p484 = pneg %p45
      %p485 = scmp.lt.s32.totalorder %s27, 1
      %s486 = scalar_select %p485, %s27, 1
      %s487 = smul.addr %s486, 2
      %s488 = smul.addr %s487, 8
      %s489 = scalar_lea.vmem %s1, %s488
      %p490 = pneg %p74
      %p491 = pneg %p71
      %p492 = pneg %p95
      %p493 = pneg %p92
      %p494 = pneg %p116
      %p495 = pneg %p113
      %p496 = pneg %p137
      %p497 = pneg %p134
      %p498 = pneg %p158
      %p499 = pneg %p155
      %p500 = pneg %p179
      %p501 = pneg %p176
      %p502 = pneg %p200
      %p503 = pneg %p197
      %p504 = pneg %p221
      %p505 = pneg %p218
      %p506 = pneg %p242
      %p507 = pneg %p239
      %p508 = pneg %p263
      %p509 = pneg %p260
      %p510 = pneg %p284
      %p511 = pneg %p281
      %p512 = pneg %p305
      %p513 = pneg %p302
      %p514 = pneg %p326
      %p515 = pneg %p323
      %p516 = pneg %p347
      %p517 = pneg %p344
      %p518 = pneg %p368
      %p519 = pneg %p365
      %p520 = pneg %p394
      %p521 = pneg %p391
      %p522 = scmp.lt.s32.totalorder %s27, 1
      %s523 = scalar_select %p522, %s27, 1
      %s524 = smul.addr %s523, 2
      %s525 = smul.addr %s524, 8
      %s526 = scalar_lea.vmem %s16, %s525
      %p527 = scmp.lt.s32.totalorder %s27, 1
      %s528 = scalar_select %p527, %s27, 1
      %s529 = smul.addr %s528, 2
      %s530 = smul.addr %s529, 8
      %s531 = scalar_lea.vmem %s0, %s530
      %p532 = scmp.lt.s32.totalorder %s27, 1
      %s533 = scalar_select %p532, %s27, 1
      %s534 = smul.addr %s533, 2
      %s535 = smul.addr %s534, 8
      %s536 = scalar_lea.vmem %s1, %s535
      %p537 = scmp.lt.s32.totalorder %s27, 1
      %s538 = scalar_select %p537, %s27, 1
      %s539 = smul.addr %s538, 2
      %s540 = smul.addr %s539, 8
      %s541 = scalar_lea.vmem %s16, %s540
      %v543 = vld [vmem:[%s531] sm:$0xff]
      %v544 = vld [vmem:[%s531 + $0x8] sm:$0xff]
      %v545 = vld [vmem:[%s536] sm:$0xff]
      %v546 = vld [vmem:[%s536 + $0x8] sm:$0xff]
      %v547 = vld [vmem:[%s2] sm:$0xff]
      %v548 = vld [vmem:[%s2 + $0x8] sm:$0xff]
      %v549 = vld [vmem:[%s2 + $0x10] sm:$0xff]
      %v550 = vld [vmem:[%s2 + $0x18] sm:$0xff]
      %v551 = vld [vmem:[%s2 + $0x20] sm:$0xff]
      %v552 = vld [vmem:[%s2 + $0x28] sm:$0xff]
      %v553 = vld [vmem:[%s2 + $0x30] sm:$0xff]
      %v554 = vld [vmem:[%s2 + $0x38] sm:$0xff]
      %v555 = vld [vmem:[%s3] sm:$0x1]
      %v556 = vld [vmem:[%s4] sm:$0xff]
      %v557 = vld [vmem:[%s4 + $0x8] sm:$0xff]
      %v558 = vld [vmem:[%s4 + $0x10] sm:$0xff]
      %v559 = vld [vmem:[%s4 + $0x18] sm:$0xff]
      %v560 = vld [vmem:[%s4 + $0x20] sm:$0xff]
      %v561 = vld [vmem:[%s4 + $0x28] sm:$0xff]
      %v562 = vld [vmem:[%s4 + $0x30] sm:$0xff]
      %v563 = vld [vmem:[%s4 + $0x38] sm:$0xff]
      %v564 = vld [vmem:[%s5] sm:$0x1]
      %v565 = vld [vmem:[%s6] sm:$0xff]
      %v566 = vld [vmem:[%s6 + $0x8] sm:$0xff]
      %v567 = vld [vmem:[%s6 + $0x10] sm:$0xff]
      %v568 = vld [vmem:[%s6 + $0x18] sm:$0xff]
      %v569 = vld [vmem:[%s6 + $0x20] sm:$0xff]
      %v570 = vld [vmem:[%s6 + $0x28] sm:$0xff]
      %v571 = vld [vmem:[%s6 + $0x30] sm:$0xff]
      %v572 = vld [vmem:[%s6 + $0x38] sm:$0xff]
      %v573 = vld [vmem:[%s7] sm:$0x1]
      %v574 = vld [vmem:[%s8] sm:$0x1]
      %v575 = vld [vmem:[%s9] sm:$0x1]
      %v576 = vpack.c.bf16 %v544, %v543
      %v577 = vpack.c.bf16 %v548, %v547
      %v578 = vpack.c.bf16 %v550, %v549
      %v579 = vpack.c.bf16 %v552, %v551
      %v580 = vpack.c.bf16 %v554, %v553
      %v582 = vlaneseq
      %v583 = vshrl.u32 %v582, 7
      %v584 = vsub.s32 0, %v583
      %v585 = vrot.slane %v555, %v584
      %vm587 = vcmask 523264
      %v589 = vsel %vm587, %v576, 0
      %591 = vmatprep.subr.bf16.mxu0 0
      %592 = vmatpush1.bf16.msra.mxu0 %v577
      %593 = vmatprep.subr.bf16.mxu0 0
      %594 = vmatpush1.bf16.msra.mxu0 %v578
      %595 = vmatprep.subr.bf16.mxu0 0
      %596 = vmatpush1.bf16.msra.mxu0 %v579
      %597 = vmatprep.subr.bf16.mxu0 0
      %598 = vmatpush1.bf16.msra.mxu0 %v580
      %599 = vmatprep.subr.bf16.mxu0 0
      %600 = vmatpush1.bf16.msra.mxu0 0
      %601 = vmatprep.subr.bf16.mxu0 0
      %602 = vmatpush1.bf16.msra.mxu0 0
      %603 = vmatprep.subr.bf16.mxu0 0
      %604 = vmatpush1.bf16.msra.mxu0 0
      %605 = vmatprep.subr.bf16.mxu0 0
      %606 = vmatpush1.bf16.msra.mxu0 0
      %607 = vmatprep.subr.bf16.mxu0 0
      %608 = vmatpush1.bf16.msra.mxu0 0
      %609 = vmatprep.subr.bf16.mxu0 0
      %610 = vmatpush1.bf16.msra.mxu0 0
      %611 = vmatprep.subr.bf16.mxu0 0
      %612 = vmatpush1.bf16.msra.mxu0 0
      %613 = vmatprep.subr.bf16.mxu0 0
      %614 = vmatpush1.bf16.msra.mxu0 0
      %615 = vmatprep.subr.bf16.mxu0 0
      %616 = vmatpush1.bf16.msra.mxu0 0
      %617 = vmatprep.subr.bf16.mxu0 0
      %618 = vmatpush1.bf16.msra.mxu0 0
      %619 = vmatprep.subr.bf16.mxu0 0
      %620 = vmatpush1.bf16.msra.mxu0 0
      %621 = vmatprep.subr.bf16.mxu0 0
      %622 = vmatpush1.bf16.msra.mxu0 0
      %623 = vmatprep.mubr.bf16.mxu0 0
      %624 = vmatmul.mubr.bf16.gmra.mrb[0].mxu0 %v589
      %v625 = vpop.f32.mrb[0].mxu0
      %v626 = vadd.f32 %v585, %v625
      %v627 = vpop.f32.mrb[0].mxu0
      %v628 = vpop.f32.mrb[0].mxu0
      %v629 = vadd.f32 %v585, %v628
      %v630 = vpop.f32.mrb[0].mxu0
      %631 = vdwg.mxu0
      %v632 = vpack.c.bf16 %v546, %v545
      %v633 = vpack.c.bf16 %v557, %v556
      %v634 = vpack.c.bf16 %v559, %v558
      %v635 = vpack.c.bf16 %v561, %v560
      %v636 = vpack.c.bf16 %v563, %v562
      %v638 = vlaneseq
      %v639 = vshrl.u32 %v638, 7
      %v640 = vsub.s32 0, %v639
      %v641 = vrot.slane %v564, %v640
      %v644 = vsel %vm587, %v632, 0
      %646 = vmatprep.subr.bf16.mxu0 0
      %647 = vmatpush1.bf16.msra.mxu0 %v633
      %648 = vmatprep.subr.bf16.mxu0 0
      %649 = vmatpush1.bf16.msra.mxu0 %v634
      %650 = vmatprep.subr.bf16.mxu0 0
      %651 = vmatpush1.bf16.msra.mxu0 %v635
      %652 = vmatprep.subr.bf16.mxu0 0
      %653 = vmatpush1.bf16.msra.mxu0 %v636
      %654 = vmatprep.subr.bf16.mxu0 0
      %655 = vmatpush1.bf16.msra.mxu0 0
      %656 = vmatprep.subr.bf16.mxu0 0
      %657 = vmatpush1.bf16.msra.mxu0 0
      %658 = vmatprep.subr.bf16.mxu0 0
      %659 = vmatpush1.bf16.msra.mxu0 0
      %660 = vmatprep.subr.bf16.mxu0 0
      %661 = vmatpush1.bf16.msra.mxu0 0
      %662 = vmatprep.subr.bf16.mxu0 0
      %663 = vmatpush1.bf16.msra.mxu0 0
      %664 = vmatprep.subr.bf16.mxu0 0
      %665 = vmatpush1.bf16.msra.mxu0 0
      %666 = vmatprep.subr.bf16.mxu0 0
      %667 = vmatpush1.bf16.msra.mxu0 0
      %668 = vmatprep.subr.bf16.mxu0 0
      %669 = vmatpush1.bf16.msra.mxu0 0
      %670 = vmatprep.subr.bf16.mxu0 0
      %671 = vmatpush1.bf16.msra.mxu0 0
      %672 = vmatprep.subr.bf16.mxu0 0
      %673 = vmatpush1.bf16.msra.mxu0 0
      %674 = vmatprep.subr.bf16.mxu0 0
      %675 = vmatpush1.bf16.msra.mxu0 0
      %676 = vmatprep.subr.bf16.mxu0 0
      %677 = vmatpush1.bf16.msra.mxu0 0
      %678 = vmatprep.mubr.bf16.mxu0 0
      %679 = vmatmul.mubr.bf16.gmra.mrb[0].mxu0 %v644
      %v680 = vpop.f32.mrb[0].mxu0
      %v681 = vadd.f32 %v641, %v680
      %v682 = vpop.f32.mrb[0].mxu0
      %v683 = vpop.f32.mrb[0].mxu0
      %v684 = vadd.f32 %v641, %v683
      %v685 = vpop.f32.mrb[0].mxu0
      %686 = vdwg.mxu0
      %v687 = vmul.f32 %v626, 0.35355338
      %v688 = vmul.f32 %v629, 0.35355338
      %vm689 = vcmask 64512
      %v691 = vsel %vm689, %v687, 0
      %v694 = vsel %vm689, %v688, 0
      %v697 = vsel %vm689, %v681, 0
      %v700 = vsel %vm689, %v684, 0
      %702 = vmatprep.subr.mxu0 0.0
      %703 = vmatpush1.xpose.msra.mxu0 %v697
      %704 = vmatprep.subr.mxu0 0.0
      %705 = vmatpush1.xpose.msra.mxu0 %v700
      %706 = vmatprep.subr.mxu0 0.0
      %707 = vmatpush1.xpose.msra.mxu0 0.0
      %708 = vmatprep.subr.mxu0 0.0
      %709 = vmatpush1.xpose.msra.mxu0 0.0
      %710 = vmatprep.subr.mxu0 0.0
      %711 = vmatpush1.xpose.msra.mxu0 0.0
      %712 = vmatprep.subr.mxu0 0.0
      %713 = vmatpush1.xpose.msra.mxu0 0.0
      %714 = vmatprep.subr.mxu0 0.0
      %715 = vmatpush1.xpose.msra.mxu0 0.0
      %716 = vmatprep.subr.mxu0 0.0
      %717 = vmatpush1.xpose.msra.mxu0 0.0
      %718 = vmatprep.subr.mxu0 0.0
      %719 = vmatpush1.xpose.msra.mxu0 0.0
      %720 = vmatprep.subr.mxu0 0.0
      %721 = vmatpush1.xpose.msra.mxu0 0.0
      %722 = vmatprep.subr.mxu0 0.0
      %723 = vmatpush1.xpose.msra.mxu0 0.0
      %724 = vmatprep.subr.mxu0 0.0
      %725 = vmatpush1.xpose.msra.mxu0 0.0
      %726 = vmatprep.subr.mxu0 0.0
      %727 = vmatpush1.xpose.msra.mxu0 0.0
      %728 = vmatprep.subr.mxu0 0.0
      %729 = vmatpush1.xpose.msra.mxu0 0.0
      %730 = vmatprep.subr.mxu0 0.0
      %731 = vmatpush1.xpose.msra.mxu0 0.0
      %732 = vmatprep.subr.mxu0 0.0
      %733 = vmatpush1.xpose.msra.mxu0 0.0
      %734 = vmatprep.subr.mxu0 0.0
      %735 = vmatpush1.xpose.msra.mxu0 0.0
      %736 = vmatprep.subr.mxu0 0.0
      %737 = vmatpush1.xpose.msra.mxu0 0.0
      %738 = vmatprep.subr.mxu0 0.0
      %739 = vmatpush1.xpose.msra.mxu0 0.0
      %740 = vmatprep.subr.mxu0 0.0
      %741 = vmatpush1.xpose.msra.mxu0 0.0
      %742 = vmatprep.subr.mxu0 0.0
      %743 = vmatpush1.xpose.msra.mxu0 0.0
      %744 = vmatprep.subr.mxu0 0.0
      %745 = vmatpush1.xpose.msra.mxu0 0.0
      %746 = vmatprep.subr.mxu0 0.0
      %747 = vmatpush1.xpose.msra.mxu0 0.0
      %748 = vmatprep.subr.mxu0 0.0
      %749 = vmatpush1.xpose.msra.mxu0 0.0
      %750 = vmatprep.subr.mxu0 0.0
      %751 = vmatpush1.xpose.msra.mxu0 0.0
      %752 = vmatprep.subr.mxu0 0.0
      %753 = vmatpush1.xpose.msra.mxu0 0.0
      %754 = vmatprep.subr.mxu0 0.0
      %755 = vmatpush1.xpose.msra.mxu0 0.0
      %756 = vmatprep.subr.mxu0 0.0
      %757 = vmatpush1.xpose.msra.mxu0 0.0
      %758 = vmatprep.subr.mxu0 0.0
      %759 = vmatpush1.xpose.msra.mxu0 0.0
      %760 = vmatprep.subr.mxu0 0.0
      %761 = vmatpush1.xpose.msra.mxu0 0.0
      %762 = vmatprep.subr.mxu0 0.0
      %763 = vmatpush1.xpose.msra.mxu0 0.0
      %764 = vmatprep.subr.mxu0 0.0
      %765 = vmatpush1.xpose.msra.mxu0 0.0
      %766 = vmatprep.mubr.f32.mxu0 0.0
      %767 = vmatmul.mubr.f32.gmra.mrb[0].mxu0 %v691
      %v768 = vpop.f32.mrb[0].mxu0
      %v769 = vadd.f32 0.0, %v768
      %v770 = vpop.f32.mrb[0].mxu0
      %771 = vmatprep.mubr.f32.mxu0 0.0
      %772 = vmatmul.mubr.f32.gmra.mrb[0].mxu0 %v694
      %v773 = vpop.f32.mrb[0].mxu0
      %v774 = vadd.f32 0.0, %v773
      %v775 = vpop.f32.mrb[0].mxu0
      %776 = vdwg.mxu0
      %vm777 = vcmask 130048
      %v778 = vsel %vm777, %v769, -inf
      %779 = vmax.xlane.f32.xlu0 %v778
      %v780 = vpop.xlane.xlu0 %779
      %v781 = vsel %vm777, %v774, -inf
      %782 = vmax.xlane.f32.xlu0 %v781
      %v783 = vpop.xlane.xlu0 %782
      %v784 = vsub.f32 %v769, %v780
      %v785 = vsub.f32 %v774, %v783
      %v786 = vmul.f32 %v784, 1.442695
      %v787 = vpow.pop %v786
      %v788 = vmul.f32 %v785, 1.442695
      %v789 = vpow.pop %v788
      %v790 = vsel %vm777, %v787, 0.0
      %791 = vadd.xlane.f32.xlu0 %v790
      %v792 = vpop.xlane.xlu0 %791
      %v793 = vsel %vm777, %v789, 0.0
      %794 = vadd.xlane.f32.xlu0 %v793
      %v795 = vpop.xlane.xlu0 %794
      %v796 = vrcp.pop %v792
      %v797 = vrcp.pop %v795
      %v798 = vmul.f32 %v787, %v796
      %v799 = vmul.f32 %v789, %v797
      %800 = vrot.lane.b32.xlu0 %v681, 64
      %v801 = vpop.permute.xlu0 %800
      %802 = vrot.lane.b32.xlu0 %v684, 64
      %v803 = vpop.permute.xlu0 %802
      %v807 = vsel %vm777, %v798, 0
      %v810 = vsel %vm777, %v799, 0
      %812 = vmatprep.subr.mxu0 0.0
      %813 = vmatpush1.msra.mxu0 %v801
      %814 = vmatprep.subr.mxu0 0.0
      %815 = vmatpush1.msra.mxu0 %v803
      %816 = vmatprep.subr.mxu0 0.0
      %817 = vmatpush1.msra.mxu0 0.0
      %818 = vmatprep.subr.mxu0 0.0
      %819 = vmatpush1.msra.mxu0 0.0
      %820 = vmatprep.subr.mxu0 0.0
      %821 = vmatpush1.msra.mxu0 0.0
      %822 = vmatprep.subr.mxu0 0.0
      %823 = vmatpush1.msra.mxu0 0.0
      %824 = vmatprep.subr.mxu0 0.0
      %825 = vmatpush1.msra.mxu0 0.0
      %826 = vmatprep.subr.mxu0 0.0
      %827 = vmatpush1.msra.mxu0 0.0
      %828 = vmatprep.subr.mxu0 0.0
      %829 = vmatpush1.msra.mxu0 0.0
      %830 = vmatprep.subr.mxu0 0.0
      %831 = vmatpush1.msra.mxu0 0.0
      %832 = vmatprep.subr.mxu0 0.0
      %833 = vmatpush1.msra.mxu0 0.0
      %834 = vmatprep.subr.mxu0 0.0
      %835 = vmatpush1.msra.mxu0 0.0
      %836 = vmatprep.subr.mxu0 0.0
      %837 = vmatpush1.msra.mxu0 0.0
      %838 = vmatprep.subr.mxu0 0.0
      %839 = vmatpush1.msra.mxu0 0.0
      %840 = vmatprep.subr.mxu0 0.0
      %841 = vmatpush1.msra.mxu0 0.0
      %842 = vmatprep.subr.mxu0 0.0
      %843 = vmatpush1.msra.mxu0 0.0
      %844 = vmatprep.subr.mxu0 0.0
      %845 = vmatpush1.msra.mxu0 0.0
      %846 = vmatprep.subr.mxu0 0.0
      %847 = vmatpush1.msra.mxu0 0.0
      %848 = vmatprep.subr.mxu0 0.0
      %849 = vmatpush1.msra.mxu0 0.0
      %850 = vmatprep.subr.mxu0 0.0
      %851 = vmatpush1.msra.mxu0 0.0
      %852 = vmatprep.subr.mxu0 0.0
      %853 = vmatpush1.msra.mxu0 0.0
      %854 = vmatprep.subr.mxu0 0.0
      %855 = vmatpush1.msra.mxu0 0.0
      %856 = vmatprep.subr.mxu0 0.0
      %857 = vmatpush1.msra.mxu0 0.0
      %858 = vmatprep.subr.mxu0 0.0
      %859 = vmatpush1.msra.mxu0 0.0
      %860 = vmatprep.subr.mxu0 0.0
      %861 = vmatpush1.msra.mxu0 0.0
      %862 = vmatprep.subr.mxu0 0.0
      %863 = vmatpush1.msra.mxu0 0.0
      %864 = vmatprep.subr.mxu0 0.0
      %865 = vmatpush1.msra.mxu0 0.0
      %866 = vmatprep.subr.mxu0 0.0
      %867 = vmatpush1.msra.mxu0 0.0
      %868 = vmatprep.subr.mxu0 0.0
      %869 = vmatpush1.msra.mxu0 0.0
      %870 = vmatprep.subr.mxu0 0.0
      %871 = vmatpush1.msra.mxu0 0.0
      %872 = vmatprep.subr.mxu0 0.0
      %873 = vmatpush1.msra.mxu0 0.0
      %874 = vmatprep.subr.mxu0 0.0
      %875 = vmatpush1.msra.mxu0 0.0
      %876 = vmatprep.mubr.f32.mxu0 0.0
      %877 = vmatmul.mubr.f32.gmra.mrb[0].mxu0 %v807
      %v878 = vpop.f32.mrb[0].mxu0
      %v879 = vadd.f32 0.0, %v878
      %v880 = vpop.f32.mrb[0].mxu0
      %881 = vmatprep.mubr.f32.mxu0 0.0
      %882 = vmatmul.mubr.f32.gmra.mrb[0].mxu0 %v810
      %v883 = vpop.f32.mrb[0].mxu0
      %v884 = vadd.f32 0.0, %v883
      %v885 = vpop.f32.mrb[0].mxu0
      %886 = vdwg.mxu0
      %887 = vrot.lane.b32.xlu0 %v687, 120
      %v888 = vpop.permute.xlu0 %887
      %889 = vrot.lane.b32.xlu0 %v688, 120
      %v890 = vpop.permute.xlu0 %889
      %891 = vrot.lane.b32.xlu0 %v681, 120
      %v892 = vpop.permute.xlu0 %891
      %893 = vrot.lane.b32.xlu0 %v684, 120
      %v894 = vpop.permute.xlu0 %893
      %v895 = vsel %vm689, %v888, 0
      %v897 = vsel %vm689, %v890, 0
      %v899 = vsel %vm689, %v892, 0
      %v901 = vsel %vm689, %v894, 0
      %903 = vmatprep.subr.mxu0 0.0
      %904 = vmatpush1.xpose.msra.mxu0 %v899
      %905 = vmatprep.subr.mxu0 0.0
      %906 = vmatpush1.xpose.msra.mxu0 %v901
      %907 = vmatprep.subr.mxu0 0.0
      %908 = vmatpush1.xpose.msra.mxu0 0.0
      %909 = vmatprep.subr.mxu0 0.0
      %910 = vmatpush1.xpose.msra.mxu0 0.0
      %911 = vmatprep.subr.mxu0 0.0
      %912 = vmatpush1.xpose.msra.mxu0 0.0
      %913 = vmatprep.subr.mxu0 0.0
      %914 = vmatpush1.xpose.msra.mxu0 0.0
      %915 = vmatprep.subr.mxu0 0.0
      %916 = vmatpush1.xpose.msra.mxu0 0.0
      %917 = vmatprep.subr.mxu0 0.0
      %918 = vmatpush1.xpose.msra.mxu0 0.0
      %919 = vmatprep.subr.mxu0 0.0
      %920 = vmatpush1.xpose.msra.mxu0 0.0
      %921 = vmatprep.subr.mxu0 0.0
      %922 = vmatpush1.xpose.msra.mxu0 0.0
      %923 = vmatprep.subr.mxu0 0.0
      %924 = vmatpush1.xpose.msra.mxu0 0.0
      %925 = vmatprep.subr.mxu0 0.0
      %926 = vmatpush1.xpose.msra.mxu0 0.0
      %927 = vmatprep.subr.mxu0 0.0
      %928 = vmatpush1.xpose.msra.mxu0 0.0
      %929 = vmatprep.subr.mxu0 0.0
      %930 = vmatpush1.xpose.msra.mxu0 0.0
      %931 = vmatprep.subr.mxu0 0.0
      %932 = vmatpush1.xpose.msra.mxu0 0.0
      %933 = vmatprep.subr.mxu0 0.0
      %934 = vmatpush1.xpose.msra.mxu0 0.0
      %935 = vmatprep.subr.mxu0 0.0
      %936 = vmatpush1.xpose.msra.mxu0 0.0
      %937 = vmatprep.subr.mxu0 0.0
      %938 = vmatpush1.xpose.msra.mxu0 0.0
      %939 = vmatprep.subr.mxu0 0.0
      %940 = vmatpush1.xpose.msra.mxu0 0.0
      %941 = vmatprep.subr.mxu0 0.0
      %942 = vmatpush1.xpose.msra.mxu0 0.0
      %943 = vmatprep.subr.mxu0 0.0
      %944 = vmatpush1.xpose.msra.mxu0 0.0
      %945 = vmatprep.subr.mxu0 0.0
      %946 = vmatpush1.xpose.msra.mxu0 0.0
      %947 = vmatprep.subr.mxu0 0.0
      %948 = vmatpush1.xpose.msra.mxu0 0.0
      %949 = vmatprep.subr.mxu0 0.0
      %950 = vmatpush1.xpose.msra.mxu0 0.0
      %951 = vmatprep.subr.mxu0 0.0
      %952 = vmatpush1.xpose.msra.mxu0 0.0
      %953 = vmatprep.subr.mxu0 0.0
      %954 = vmatpush1.xpose.msra.mxu0 0.0
      %955 = vmatprep.subr.mxu0 0.0
      %956 = vmatpush1.xpose.msra.mxu0 0.0
      %957 = vmatprep.subr.mxu0 0.0
      %958 = vmatpush1.xpose.msra.mxu0 0.0
      %959 = vmatprep.subr.mxu0 0.0
      %960 = vmatpush1.xpose.msra.mxu0 0.0
      %961 = vmatprep.subr.mxu0 0.0
      %962 = vmatpush1.xpose.msra.mxu0 0.0
      %963 = vmatprep.subr.mxu0 0.0
      %964 = vmatpush1.xpose.msra.mxu0 0.0
      %965 = vmatprep.subr.mxu0 0.0
      %966 = vmatpush1.xpose.msra.mxu0 0.0
      %967 = vmatprep.mubr.f32.mxu0 0.0
      %968 = vmatmul.mubr.f32.gmra.mrb[0].mxu0 %v895
      %v969 = vpop.f32.mrb[0].mxu0
      %v970 = vadd.f32 0.0, %v969
      %v971 = vpop.f32.mrb[0].mxu0
      %972 = vmatprep.mubr.f32.mxu0 0.0
      %973 = vmatmul.mubr.f32.gmra.mrb[0].mxu0 %v897
      %v974 = vpop.f32.mrb[0].mxu0
      %v975 = vadd.f32 0.0, %v974
      %v976 = vpop.f32.mrb[0].mxu0
      %977 = vdwg.mxu0
      %v978 = vsel %vm777, %v970, -inf
      %979 = vmax.xlane.f32.xlu0 %v978
      %v980 = vpop.xlane.xlu0 %979
      %v981 = vsel %vm777, %v975, -inf
      %982 = vmax.xlane.f32.xlu0 %v981
      %v983 = vpop.xlane.xlu0 %982
      %v984 = vsub.f32 %v970, %v980
      %v985 = vsub.f32 %v975, %v983
      %v986 = vmul.f32 %v984, 1.442695
      %v987 = vpow.pop %v986
      %v988 = vmul.f32 %v985, 1.442695
      %v989 = vpow.pop %v988
      %v990 = vsel %vm777, %v987, 0.0
      %991 = vadd.xlane.f32.xlu0 %v990
      %v992 = vpop.xlane.xlu0 %991
      %v993 = vsel %vm777, %v989, 0.0
      %994 = vadd.xlane.f32.xlu0 %v993
      %v995 = vpop.xlane.xlu0 %994
      %v996 = vrcp.pop %v992
      %v997 = vrcp.pop %v995
      %v998 = vmul.f32 %v987, %v996
      %v999 = vmul.f32 %v989, %v997
      %1000 = vrot.lane.b32.xlu0 %v681, 56
      %v1001 = vpop.permute.xlu0 %1000
      %1002 = vrot.lane.b32.xlu0 %v684, 56
      %v1003 = vpop.permute.xlu0 %1002
      %v1007 = vsel %vm777, %v998, 0
      %v1010 = vsel %vm777, %v999, 0
      %1012 = vmatprep.subr.mxu0 0.0
      %1013 = vmatpush1.msra.mxu0 %v1001
      %1014 = vmatprep.subr.mxu0 0.0
      %1015 = vmatpush1.msra.mxu0 %v1003
      %1016 = vmatprep.subr.mxu0 0.0
      %1017 = vmatpush1.msra.mxu0 0.0
      %1018 = vmatprep.subr.mxu0 0.0
      %1019 = vmatpush1.msra.mxu0 0.0
      %1020 = vmatprep.subr.mxu0 0.0
      %1021 = vmatpush1.msra.mxu0 0.0
      %1022 = vmatprep.subr.mxu0 0.0
      %1023 = vmatpush1.msra.mxu0 0.0
      %1024 = vmatprep.subr.mxu0 0.0
      %1025 = vmatpush1.msra.mxu0 0.0
      %1026 = vmatprep.subr.mxu0 0.0
      %1027 = vmatpush1.msra.mxu0 0.0
      %1028 = vmatprep.subr.mxu0 0.0
      %1029 = vmatpush1.msra.mxu0 0.0
      %1030 = vmatprep.subr.mxu0 0.0
      %1031 = vmatpush1.msra.mxu0 0.0
      %1032 = vmatprep.subr.mxu0 0.0
      %1033 = vmatpush1.msra.mxu0 0.0
      %1034 = vmatprep.subr.mxu0 0.0
      %1035 = vmatpush1.msra.mxu0 0.0
      %1036 = vmatprep.subr.mxu0 0.0
      %1037 = vmatpush1.msra.mxu0 0.0
      %1038 = vmatprep.subr.mxu0 0.0
      %1039 = vmatpush1.msra.mxu0 0.0
      %1040 = vmatprep.subr.mxu0 0.0
      %1041 = vmatpush1.msra.mxu0 0.0
      %1042 = vmatprep.subr.mxu0 0.0
      %1043 = vmatpush1.msra.mxu0 0.0
      %1044 = vmatprep.subr.mxu0 0.0
      %1045 = vmatpush1.msra.mxu0 0.0
      %1046 = vmatprep.subr.mxu0 0.0
      %1047 = vmatpush1.msra.mxu0 0.0
      %1048 = vmatprep.subr.mxu0 0.0
      %1049 = vmatpush1.msra.mxu0 0.0
      %1050 = vmatprep.subr.mxu0 0.0
      %1051 = vmatpush1.msra.mxu0 0.0
      %1052 = vmatprep.subr.mxu0 0.0
      %1053 = vmatpush1.msra.mxu0 0.0
      %1054 = vmatprep.subr.mxu0 0.0
      %1055 = vmatpush1.msra.mxu0 0.0
      %1056 = vmatprep.subr.mxu0 0.0
      %1057 = vmatpush1.msra.mxu0 0.0
      %1058 = vmatprep.subr.mxu0 0.0
      %1059 = vmatpush1.msra.mxu0 0.0
      %1060 = vmatprep.subr.mxu0 0.0
      %1061 = vmatpush1.msra.mxu0 0.0
      %1062 = vmatprep.subr.mxu0 0.0
      %1063 = vmatpush1.msra.mxu0 0.0
      %1064 = vmatprep.subr.mxu0 0.0
      %1065 = vmatpush1.msra.mxu0 0.0
      %1066 = vmatprep.subr.mxu0 0.0
      %1067 = vmatpush1.msra.mxu0 0.0
      %1068 = vmatprep.subr.mxu0 0.0
      %1069 = vmatpush1.msra.mxu0 0.0
      %1070 = vmatprep.subr.mxu0 0.0
      %1071 = vmatpush1.msra.mxu0 0.0
      %1072 = vmatprep.subr.mxu0 0.0
      %1073 = vmatpush1.msra.mxu0 0.0
      %1074 = vmatprep.subr.mxu0 0.0
      %1075 = vmatpush1.msra.mxu0 0.0
      %1076 = vmatprep.mubr.f32.mxu0 0.0
      %1077 = vmatmul.mubr.f32.gmra.mrb[0].mxu0 %v1007
      %v1078 = vpop.f32.mrb[0].mxu0
      %v1079 = vadd.f32 0.0, %v1078
      %v1080 = vpop.f32.mrb[0].mxu0
      %1081 = vmatprep.mubr.f32.mxu0 0.0
      %1082 = vmatmul.mubr.f32.gmra.mrb[0].mxu0 %v1010
      %v1083 = vpop.f32.mrb[0].mxu0
      %v1084 = vadd.f32 0.0, %v1083
      %v1085 = vpop.f32.mrb[0].mxu0
      %1086 = vdwg.mxu0
      %v1088 = vsel %vm689, %v1079, 0
      %v1091 = vsel %vm689, %v1084, 0
      %1093 = vmatprep.subr.mxu0 0.0
      %1094 = vmatpush1.msra.mxu0 %v566
      %1095 = vmatprep.subr.mxu0 0.0
      %1096 = vmatpush1.msra.mxu0 0.0
      %1097 = vmatprep.subr.mxu0 0.0
      %1098 = vmatpush1.msra.mxu0 0.0
      %1099 = vmatprep.subr.mxu0 0.0
      %1100 = vmatpush1.msra.mxu0 0.0
      %1101 = vmatprep.subr.mxu0 0.0
      %1102 = vmatpush1.msra.mxu0 0.0
      %1103 = vmatprep.subr.mxu0 0.0
      %1104 = vmatpush1.msra.mxu0 0.0
      %1105 = vmatprep.subr.mxu0 0.0
      %1106 = vmatpush1.msra.mxu0 0.0
      %1107 = vmatprep.subr.mxu0 0.0
      %1108 = vmatpush1.msra.mxu0 0.0
      %1109 = vmatprep.subr.mxu0 0.0
      %1110 = vmatpush1.msra.mxu0 0.0
      %1111 = vmatprep.subr.mxu0 0.0
      %1112 = vmatpush1.msra.mxu0 0.0
      %1113 = vmatprep.subr.mxu0 0.0
      %1114 = vmatpush1.msra.mxu0 0.0
      %1115 = vmatprep.subr.mxu0 0.0
      %1116 = vmatpush1.msra.mxu0 0.0
      %1117 = vmatprep.subr.mxu0 0.0
      %1118 = vmatpush1.msra.mxu0 0.0
      %1119 = vmatprep.subr.mxu0 0.0
      %1120 = vmatpush1.msra.mxu0 0.0
      %1121 = vmatprep.subr.mxu0 0.0
      %1122 = vmatpush1.msra.mxu0 0.0
      %1123 = vmatprep.subr.mxu0 0.0
      %1124 = vmatpush1.msra.mxu0 0.0
      %1125 = vmatprep.subr.mxu0 0.0
      %1126 = vmatpush1.msra.mxu0 0.0
      %1127 = vmatprep.subr.mxu0 0.0
      %1128 = vmatpush1.msra.mxu0 0.0
      %1129 = vmatprep.subr.mxu0 0.0
      %1130 = vmatpush1.msra.mxu0 0.0
      %1131 = vmatprep.subr.mxu0 0.0
      %1132 = vmatpush1.msra.mxu0 0.0
      %1133 = vmatprep.subr.mxu0 0.0
      %1134 = vmatpush1.msra.mxu0 0.0
      %1135 = vmatprep.subr.mxu0 0.0
      %1136 = vmatpush1.msra.mxu0 0.0
      %1137 = vmatprep.subr.mxu0 0.0
      %1138 = vmatpush1.msra.mxu0 0.0
      %1139 = vmatprep.subr.mxu0 0.0
      %1140 = vmatpush1.msra.mxu0 0.0
      %1141 = vmatprep.subr.mxu0 0.0
      %1142 = vmatpush1.msra.mxu0 0.0
      %1143 = vmatprep.subr.mxu0 0.0
      %1144 = vmatpush1.msra.mxu0 0.0
      %1145 = vmatprep.subr.mxu0 0.0
      %1146 = vmatpush1.msra.mxu0 0.0
      %1147 = vmatprep.subr.mxu0 0.0
      %1148 = vmatpush1.msra.mxu0 0.0
      %1149 = vmatprep.subr.mxu0 0.0
      %1150 = vmatpush1.msra.mxu0 0.0
      %1151 = vmatprep.subr.mxu0 0.0
      %1152 = vmatpush1.msra.mxu0 0.0
      %1153 = vmatprep.subr.mxu0 0.0
      %1154 = vmatpush1.msra.mxu0 0.0
      %1155 = vmatprep.subr.mxu0 0.0
      %1156 = vmatpush1.msra.mxu0 0.0
      %1157 = vmatprep.mubr.f32.mxu0 0.0
      %1158 = vmatmul.mubr.f32.gmra.mrb[0].mxu0 %v1088
      %v1159 = vpop.f32.mrb[0].mxu0
      %v1160 = vadd.f32 0.0, %v1159
      %v1161 = vpop.f32.mrb[0].mxu0
      %1162 = vmatprep.mubr.f32.mxu0 0.0
      %1163 = vmatmul.mubr.f32.gmra.mrb[0].mxu0 %v1091
      %v1164 = vpop.f32.mrb[0].mxu0
      %v1165 = vadd.f32 0.0, %v1164
      %v1166 = vpop.f32.mrb[0].mxu0
      %1167 = vdwg.mxu0
      %v1169 = vsel %vm689, %v879, 0
      %v1172 = vsel %vm689, %v884, 0
      %1174 = vmatprep.subr.mxu0 0.0
      %1175 = vmatpush1.msra.mxu0 %v565
      %1176 = vmatprep.subr.mxu0 0.0
      %1177 = vmatpush1.msra.mxu0 0.0
      %1178 = vmatprep.subr.mxu0 0.0
      %1179 = vmatpush1.msra.mxu0 0.0
      %1180 = vmatprep.subr.mxu0 0.0
      %1181 = vmatpush1.msra.mxu0 0.0
      %1182 = vmatprep.subr.mxu0 0.0
      %1183 = vmatpush1.msra.mxu0 0.0
      %1184 = vmatprep.subr.mxu0 0.0
      %1185 = vmatpush1.msra.mxu0 0.0
      %1186 = vmatprep.subr.mxu0 0.0
      %1187 = vmatpush1.msra.mxu0 0.0
      %1188 = vmatprep.subr.mxu0 0.0
      %1189 = vmatpush1.msra.mxu0 0.0
      %1190 = vmatprep.subr.mxu0 0.0
      %1191 = vmatpush1.msra.mxu0 0.0
      %1192 = vmatprep.subr.mxu0 0.0
      %1193 = vmatpush1.msra.mxu0 0.0
      %1194 = vmatprep.subr.mxu0 0.0
      %1195 = vmatpush1.msra.mxu0 0.0
      %1196 = vmatprep.subr.mxu0 0.0
      %1197 = vmatpush1.msra.mxu0 0.0
      %1198 = vmatprep.subr.mxu0 0.0
      %1199 = vmatpush1.msra.mxu0 0.0
      %1200 = vmatprep.subr.mxu0 0.0
      %1201 = vmatpush1.msra.mxu0 0.0
      %1202 = vmatprep.subr.mxu0 0.0
      %1203 = vmatpush1.msra.mxu0 0.0
      %1204 = vmatprep.subr.mxu0 0.0
      %1205 = vmatpush1.msra.mxu0 0.0
      %1206 = vmatprep.subr.mxu0 0.0
      %1207 = vmatpush1.msra.mxu0 0.0
      %1208 = vmatprep.subr.mxu0 0.0
      %1209 = vmatpush1.msra.mxu0 0.0
      %1210 = vmatprep.subr.mxu0 0.0
      %1211 = vmatpush1.msra.mxu0 0.0
      %1212 = vmatprep.subr.mxu0 0.0
      %1213 = vmatpush1.msra.mxu0 0.0
      %1214 = vmatprep.subr.mxu0 0.0
      %1215 = vmatpush1.msra.mxu0 0.0
      %1216 = vmatprep.subr.mxu0 0.0
      %1217 = vmatpush1.msra.mxu0 0.0
      %1218 = vmatprep.subr.mxu0 0.0
      %1219 = vmatpush1.msra.mxu0 0.0
      %1220 = vmatprep.subr.mxu0 0.0
      %1221 = vmatpush1.msra.mxu0 0.0
      %1222 = vmatprep.subr.mxu0 0.0
      %1223 = vmatpush1.msra.mxu0 0.0
      %1224 = vmatprep.subr.mxu0 0.0
      %1225 = vmatpush1.msra.mxu0 0.0
      %1226 = vmatprep.subr.mxu0 0.0
      %1227 = vmatpush1.msra.mxu0 0.0
      %1228 = vmatprep.subr.mxu0 0.0
      %1229 = vmatpush1.msra.mxu0 0.0
      %1230 = vmatprep.subr.mxu0 0.0
      %1231 = vmatpush1.msra.mxu0 0.0
      %1232 = vmatprep.subr.mxu0 0.0
      %1233 = vmatpush1.msra.mxu0 0.0
      %1234 = vmatprep.subr.mxu0 0.0
      %1235 = vmatpush1.msra.mxu0 0.0
      %1236 = vmatprep.subr.mxu0 0.0
      %1237 = vmatpush1.msra.mxu0 0.0
      %1238 = vmatprep.mubr.f32.mxu0 0.0
      %1239 = vmatmul.mubr.f32.gmra.mrb[0].mxu0 %v1169
      %v1240 = vpop.f32.mrb[0].mxu0
      %v1241 = vadd.f32 %v1160, %v1240
      %v1242 = vpop.f32.mrb[0].mxu0
      %1243 = vmatprep.mubr.f32.mxu0 0.0
      %1244 = vmatmul.mubr.f32.gmra.mrb[0].mxu0 %v1172
      %v1245 = vpop.f32.mrb[0].mxu0
      %v1246 = vadd.f32 %v1165, %v1245
      %v1247 = vpop.f32.mrb[0].mxu0
      %1248 = vdwg.mxu0
      %1249 = vrot.lane.b32.xlu0 %v687, 112
      %v1250 = vpop.permute.xlu0 %1249
      %1251 = vrot.lane.b32.xlu0 %v688, 112
      %v1252 = vpop.permute.xlu0 %1251
      %1253 = vrot.lane.b32.xlu0 %v681, 112
      %v1254 = vpop.permute.xlu0 %1253
      %1255 = vrot.lane.b32.xlu0 %v684, 112
      %v1256 = vpop.permute.xlu0 %1255
      %v1257 = vsel %vm689, %v1250, 0
      %v1259 = vsel %vm689, %v1252, 0
      %v1261 = vsel %vm689, %v1254, 0
      %v1263 = vsel %vm689, %v1256, 0
      %1265 = vmatprep.subr.mxu0 0.0
      %1266 = vmatpush1.xpose.msra.mxu0 %v1261
      %1267 = vmatprep.subr.mxu0 0.0
      %1268 = vmatpush1.xpose.msra.mxu0 %v1263
      %1269 = vmatprep.subr.mxu0 0.0
      %1270 = vmatpush1.xpose.msra.mxu0 0.0
      %1271 = vmatprep.subr.mxu0 0.0
      %1272 = vmatpush1.xpose.msra.mxu0 0.0
      %1273 = vmatprep.subr.mxu0 0.0
      %1274 = vmatpush1.xpose.msra.mxu0 0.0
      %1275 = vmatprep.subr.mxu0 0.0
      %1276 = vmatpush1.xpose.msra.mxu0 0.0
      %1277 = vmatprep.subr.mxu0 0.0
      %1278 = vmatpush1.xpose.msra.mxu0 0.0
      %1279 = vmatprep.subr.mxu0 0.0
      %1280 = vmatpush1.xpose.msra.mxu0 0.0
      %1281 = vmatprep.subr.mxu0 0.0
      %1282 = vmatpush1.xpose.msra.mxu0 0.0
      %1283 = vmatprep.subr.mxu0 0.0
      %1284 = vmatpush1.xpose.msra.mxu0 0.0
      %1285 = vmatprep.subr.mxu0 0.0
      %1286 = vmatpush1.xpose.msra.mxu0 0.0
      %1287 = vmatprep.subr.mxu0 0.0
      %1288 = vmatpush1.xpose.msra.mxu0 0.0
      %1289 = vmatprep.subr.mxu0 0.0
      %1290 = vmatpush1.xpose.msra.mxu0 0.0
      %1291 = vmatprep.subr.mxu0 0.0
      %1292 = vmatpush1.xpose.msra.mxu0 0.0
      %1293 = vmatprep.subr.mxu0 0.0
      %1294 = vmatpush1.xpose.msra.mxu0 0.0
      %1295 = vmatprep.subr.mxu0 0.0
      %1296 = vmatpush1.xpose.msra.mxu0 0.0
      %1297 = vmatprep.subr.mxu0 0.0
      %1298 = vmatpush1.xpose.msra.mxu0 0.0
      %1299 = vmatprep.subr.mxu0 0.0
      %1300 = vmatpush1.xpose.msra.mxu0 0.0
      %1301 = vmatprep.subr.mxu0 0.0
      %1302 = vmatpush1.xpose.msra.mxu0 0.0
      %1303 = vmatprep.subr.mxu0 0.0
      %1304 = vmatpush1.xpose.msra.mxu0 0.0
      %1305 = vmatprep.subr.mxu0 0.0
      %1306 = vmatpush1.xpose.msra.mxu0 0.0
      %1307 = vmatprep.subr.mxu0 0.0
      %1308 = vmatpush1.xpose.msra.mxu0 0.0
      %1309 = vmatprep.subr.mxu0 0.0
      %1310 = vmatpush1.xpose.msra.mxu0 0.0
      %1311 = vmatprep.subr.mxu0 0.0
      %1312 = vmatpush1.xpose.msra.mxu0 0.0
      %1313 = vmatprep.subr.mxu0 0.0
      %1314 = vmatpush1.xpose.msra.mxu0 0.0
      %1315 = vmatprep.subr.mxu0 0.0
      %1316 = vmatpush1.xpose.msra.mxu0 0.0
      %1317 = vmatprep.subr.mxu0 0.0
      %1318 = vmatpush1.xpose.msra.mxu0 0.0
      %1319 = vmatprep.subr.mxu0 0.0
      %1320 = vmatpush1.xpose.msra.mxu0 0.0
      %1321 = vmatprep.subr.mxu0 0.0
      %1322 = vmatpush1.xpose.msra.mxu0 0.0
      %1323 = vmatprep.subr.mxu0 0.0
      %1324 = vmatpush1.xpose.msra.mxu0 0.0
      %1325 = vmatprep.subr.mxu0 0.0
      %1326 = vmatpush1.xpose.msra.mxu0 0.0
      %1327 = vmatprep.subr.mxu0 0.0
      %1328 = vmatpush1.xpose.msra.mxu0 0.0
      %1329 = vmatprep.mubr.f32.mxu0 0.0
      %1330 = vmatmul.mubr.f32.gmra.mrb[0].mxu0 %v1257
      %v1331 = vpop.f32.mrb[0].mxu0
      %v1332 = vadd.f32 0.0, %v1331
      %v1333 = vpop.f32.mrb[0].mxu0
      %1334 = vmatprep.mubr.f32.mxu0 0.0
      %1335 = vmatmul.mubr.f32.gmra.mrb[0].mxu0 %v1259
      %v1336 = vpop.f32.mrb[0].mxu0
      %v1337 = vadd.f32 0.0, %v1336
      %v1338 = vpop.f32.mrb[0].mxu0
      %1339 = vdwg.mxu0
      %v1340 = vsel %vm777, %v1332, -inf
      %1341 = vmax.xlane.f32.xlu0 %v1340
      %v1342 = vpop.xlane.xlu0 %1341
      %v1343 = vsel %vm777, %v1337, -inf
      %1344 = vmax.xlane.f32.xlu0 %v1343
      %v1345 = vpop.xlane.xlu0 %1344
      %v1346 = vsub.f32 %v1332, %v1342
      %v1347 = vsub.f32 %v1337, %v1345
      %v1348 = vmul.f32 %v1346, 1.442695
      %v1349 = vpow.pop %v1348
      %v1350 = vmul.f32 %v1347, 1.442695
      %v1351 = vpow.pop %v1350
      %v1352 = vsel %vm777, %v1349, 0.0
      %1353 = vadd.xlane.f32.xlu0 %v1352
      %v1354 = vpop.xlane.xlu0 %1353
      %v1355 = vsel %vm777, %v1351, 0.0
      %1356 = vadd.xlane.f32.xlu0 %v1355
      %v1357 = vpop.xlane.xlu0 %1356
      %v1358 = vrcp.pop %v1354
      %v1359 = vrcp.pop %v1357
      %v1360 = vmul.f32 %v1349, %v1358
      %v1361 = vmul.f32 %v1351, %v1359
      %1362 = vrot.lane.b32.xlu0 %v681, 48
      %v1363 = vpop.permute.xlu0 %1362
      %1364 = vrot.lane.b32.xlu0 %v684, 48
      %v1365 = vpop.permute.xlu0 %1364
      %v1369 = vsel %vm777, %v1360, 0
      %v1372 = vsel %vm777, %v1361, 0
      %1374 = vmatprep.subr.mxu0 0.0
      %1375 = vmatpush1.msra.mxu0 %v1363
      %1376 = vmatprep.subr.mxu0 0.0
      %1377 = vmatpush1.msra.mxu0 %v1365
      %1378 = vmatprep.subr.mxu0 0.0
      %1379 = vmatpush1.msra.mxu0 0.0
      %1380 = vmatprep.subr.mxu0 0.0
      %1381 = vmatpush1.msra.mxu0 0.0
      %1382 = vmatprep.subr.mxu0 0.0
      %1383 = vmatpush1.msra.mxu0 0.0
      %1384 = vmatprep.subr.mxu0 0.0
      %1385 = vmatpush1.msra.mxu0 0.0
      %1386 = vmatprep.subr.mxu0 0.0
      %1387 = vmatpush1.msra.mxu0 0.0
      %1388 = vmatprep.subr.mxu0 0.0
      %1389 = vmatpush1.msra.mxu0 0.0
      %1390 = vmatprep.subr.mxu0 0.0
      %1391 = vmatpush1.msra.mxu0 0.0
      %1392 = vmatprep.subr.mxu0 0.0
      %1393 = vmatpush1.msra.mxu0 0.0
      %1394 = vmatprep.subr.mxu0 0.0
      %1395 = vmatpush1.msra.mxu0 0.0
      %1396 = vmatprep.subr.mxu0 0.0
      %1397 = vmatpush1.msra.mxu0 0.0
      %1398 = vmatprep.subr.mxu0 0.0
      %1399 = vmatpush1.msra.mxu0 0.0
      %1400 = vmatprep.subr.mxu0 0.0
      %1401 = vmatpush1.msra.mxu0 0.0
      %1402 = vmatprep.subr.mxu0 0.0
      %1403 = vmatpush1.msra.mxu0 0.0
      %1404 = vmatprep.subr.mxu0 0.0
      %1405 = vmatpush1.msra.mxu0 0.0
      %1406 = vmatprep.subr.mxu0 0.0
      %1407 = vmatpush1.msra.mxu0 0.0
      %1408 = vmatprep.subr.mxu0 0.0
      %1409 = vmatpush1.msra.mxu0 0.0
      %1410 = vmatprep.subr.mxu0 0.0
      %1411 = vmatpush1.msra.mxu0 0.0
      %1412 = vmatprep.subr.mxu0 0.0
      %1413 = vmatpush1.msra.mxu0 0.0
      %1414 = vmatprep.subr.mxu0 0.0
      %1415 = vmatpush1.msra.mxu0 0.0
      %1416 = vmatprep.subr.mxu0 0.0
      %1417 = vmatpush1.msra.mxu0 0.0
      %1418 = vmatprep.subr.mxu0 0.0
      %1419 = vmatpush1.msra.mxu0 0.0
      %1420 = vmatprep.subr.mxu0 0.0
      %1421 = vmatpush1.msra.mxu0 0.0
      %1422 = vmatprep.subr.mxu0 0.0
      %1423 = vmatpush1.msra.mxu0 0.0
      %1424 = vmatprep.subr.mxu0 0.0
      %1425 = vmatpush1.msra.mxu0 0.0
      %1426 = vmatprep.subr.mxu0 0.0
      %1427 = vmatpush1.msra.mxu0 0.0
      %1428 = vmatprep.subr.mxu0 0.0
      %1429 = vmatpush1.msra.mxu0 0.0
      %1430 = vmatprep.subr.mxu0 0.0
      %1431 = vmatpush1.msra.mxu0 0.0
      %1432 = vmatprep.subr.mxu0 0.0
      %1433 = vmatpush1.msra.mxu0 0.0
      %1434 = vmatprep.subr.mxu0 0.0
      %1435 = vmatpush1.msra.mxu0 0.0
      %1436 = vmatprep.subr.mxu0 0.0
      %1437 = vmatpush1.msra.mxu0 0.0
      %1438 = vmatprep.mubr.f32.mxu0 0.0
      %1439 = vmatmul.mubr.f32.gmra.mrb[0].mxu0 %v1369
      %v1440 = vpop.f32.mrb[0].mxu0
      %v1441 = vadd.f32 0.0, %v1440
      %v1442 = vpop.f32.mrb[0].mxu0
      %1443 = vmatprep.mubr.f32.mxu0 0.0
      %1444 = vmatmul.mubr.f32.gmra.mrb[0].mxu0 %v1372
      %v1445 = vpop.f32.mrb[0].mxu0
      %v1446 = vadd.f32 0.0, %v1445
      %v1447 = vpop.f32.mrb[0].mxu0
      %1448 = vdwg.mxu0
      %v1450 = vsel %vm689, %v1441, 0
      %v1453 = vsel %vm689, %v1446, 0
      %1455 = vmatprep.subr.mxu0 0.0
      %1456 = vmatpush1.msra.mxu0 %v567
      %1457 = vmatprep.subr.mxu0 0.0
      %1458 = vmatpush1.msra.mxu0 0.0
      %1459 = vmatprep.subr.mxu0 0.0
      %1460 = vmatpush1.msra.mxu0 0.0
      %1461 = vmatprep.subr.mxu0 0.0
      %1462 = vmatpush1.msra.mxu0 0.0
      %1463 = vmatprep.subr.mxu0 0.0
      %1464 = vmatpush1.msra.mxu0 0.0
      %1465 = vmatprep.subr.mxu0 0.0
      %1466 = vmatpush1.msra.mxu0 0.0
      %1467 = vmatprep.subr.mxu0 0.0
      %1468 = vmatpush1.msra.mxu0 0.0
      %1469 = vmatprep.subr.mxu0 0.0
      %1470 = vmatpush1.msra.mxu0 0.0
      %1471 = vmatprep.subr.mxu0 0.0
      %1472 = vmatpush1.msra.mxu0 0.0
      %1473 = vmatprep.subr.mxu0 0.0
      %1474 = vmatpush1.msra.mxu0 0.0
      %1475 = vmatprep.subr.mxu0 0.0
      %1476 = vmatpush1.msra.mxu0 0.0
      %1477 = vmatprep.subr.mxu0 0.0
      %1478 = vmatpush1.msra.mxu0 0.0
      %1479 = vmatprep.subr.mxu0 0.0
      %1480 = vmatpush1.msra.mxu0 0.0
      %1481 = vmatprep.subr.mxu0 0.0
      %1482 = vmatpush1.msra.mxu0 0.0
      %1483 = vmatprep.subr.mxu0 0.0
      %1484 = vmatpush1.msra.mxu0 0.0
      %1485 = vmatprep.subr.mxu0 0.0
      %1486 = vmatpush1.msra.mxu0 0.0
      %1487 = vmatprep.subr.mxu0 0.0
      %1488 = vmatpush1.msra.mxu0 0.0
      %1489 = vmatprep.subr.mxu0 0.0
      %1490 = vmatpush1.msra.mxu0 0.0
      %1491 = vmatprep.subr.mxu0 0.0
      %1492 = vmatpush1.msra.mxu0 0.0
      %1493 = vmatprep.subr.mxu0 0.0
      %1494 = vmatpush1.msra.mxu0 0.0
      %1495 = vmatprep.subr.mxu0 0.0
      %1496 = vmatpush1.msra.mxu0 0.0
      %1497 = vmatprep.subr.mxu0 0.0
      %1498 = vmatpush1.msra.mxu0 0.0
      %1499 = vmatprep.subr.mxu0 0.0
      %1500 = vmatpush1.msra.mxu0 0.0
      %1501 = vmatprep.subr.mxu0 0.0
      %1502 = vmatpush1.msra.mxu0 0.0
      %1503 = vmatprep.subr.mxu0 0.0
      %1504 = vmatpush1.msra.mxu0 0.0
      %1505 = vmatprep.subr.mxu0 0.0
      %1506 = vmatpush1.msra.mxu0 0.0
      %1507 = vmatprep.subr.mxu0 0.0
      %1508 = vmatpush1.msra.mxu0 0.0
      %1509 = vmatprep.subr.mxu0 0.0
      %1510 = vmatpush1.msra.mxu0 0.0
      %1511 = vmatprep.subr.mxu0 0.0
      %1512 = vmatpush1.msra.mxu0 0.0
      %1513 = vmatprep.subr.mxu0 0.0
      %1514 = vmatpush1.msra.mxu0 0.0
      %1515 = vmatprep.subr.mxu0 0.0
      %1516 = vmatpush1.msra.mxu0 0.0
      %1517 = vmatprep.subr.mxu0 0.0
      %1518 = vmatpush1.msra.mxu0 0.0
      %1519 = vmatprep.mubr.f32.mxu0 0.0
      %1520 = vmatmul.mubr.f32.gmra.mrb[0].mxu0 %v1450
      %v1521 = vpop.f32.mrb[0].mxu0
      %v1522 = vadd.f32 0.0, %v1521
      %v1523 = vpop.f32.mrb[0].mxu0
      %1524 = vmatprep.mubr.f32.mxu0 0.0
      %1525 = vmatmul.mubr.f32.gmra.mrb[0].mxu0 %v1453
      %v1526 = vpop.f32.mrb[0].mxu0
      %v1527 = vadd.f32 0.0, %v1526
      %v1528 = vpop.f32.mrb[0].mxu0
      %1529 = vdwg.mxu0
      %v1530 = vadd.f32 %v1241, %v1522
      %v1531 = vadd.f32 %v1246, %v1527
      %1532 = vrot.lane.b32.xlu0 %v687, 104
      %v1533 = vpop.permute.xlu0 %1532
      %1534 = vrot.lane.b32.xlu0 %v688, 104
      %v1535 = vpop.permute.xlu0 %1534
      %1536 = vrot.lane.b32.xlu0 %v681, 104
      %v1537 = vpop.permute.xlu0 %1536
      %1538 = vrot.lane.b32.xlu0 %v684, 104
      %v1539 = vpop.permute.xlu0 %1538
      %v1540 = vsel %vm689, %v1533, 0
      %v1542 = vsel %vm689, %v1535, 0
      %v1544 = vsel %vm689, %v1537, 0
      %v1546 = vsel %vm689, %v1539, 0
      %1548 = vmatprep.subr.mxu0 0.0
      %1549 = vmatpush1.xpose.msra.mxu0 %v1544
      %1550 = vmatprep.subr.mxu0 0.0
      %1551 = vmatpush1.xpose.msra.mxu0 %v1546
      %1552 = vmatprep.subr.mxu0 0.0
      %1553 = vmatpush1.xpose.msra.mxu0 0.0
      %1554 = vmatprep.subr.mxu0 0.0
      %1555 = vmatpush1.xpose.msra.mxu0 0.0
      %1556 = vmatprep.subr.mxu0 0.0
      %1557 = vmatpush1.xpose.msra.mxu0 0.0
      %1558 = vmatprep.subr.mxu0 0.0
      %1559 = vmatpush1.xpose.msra.mxu0 0.0
      %1560 = vmatprep.subr.mxu0 0.0
      %1561 = vmatpush1.xpose.msra.mxu0 0.0
      %1562 = vmatprep.subr.mxu0 0.0
      %1563 = vmatpush1.xpose.msra.mxu0 0.0
      %1564 = vmatprep.subr.mxu0 0.0
      %1565 = vmatpush1.xpose.msra.mxu0 0.0
      %1566 = vmatprep.subr.mxu0 0.0
      %1567 = vmatpush1.xpose.msra.mxu0 0.0
      %1568 = vmatprep.subr.mxu0 0.0
      %1569 = vmatpush1.xpose.msra.mxu0 0.0
      %1570 = vmatprep.subr.mxu0 0.0
      %1571 = vmatpush1.xpose.msra.mxu0 0.0
      %1572 = vmatprep.subr.mxu0 0.0
      %1573 = vmatpush1.xpose.msra.mxu0 0.0
      %1574 = vmatprep.subr.mxu0 0.0
      %1575 = vmatpush1.xpose.msra.mxu0 0.0
      %1576 = vmatprep.subr.mxu0 0.0
      %1577 = vmatpush1.xpose.msra.mxu0 0.0
      %1578 = vmatprep.subr.mxu0 0.0
      %1579 = vmatpush1.xpose.msra.mxu0 0.0
      %1580 = vmatprep.subr.mxu0 0.0
      %1581 = vmatpush1.xpose.msra.mxu0 0.0
      %1582 = vmatprep.subr.mxu0 0.0
      %1583 = vmatpush1.xpose.msra.mxu0 0.0
      %1584 = vmatprep.subr.mxu0 0.0
      %1585 = vmatpush1.xpose.msra.mxu0 0.0
      %1586 = vmatprep.subr.mxu0 0.0
      %1587 = vmatpush1.xpose.msra.mxu0 0.0
      %1588 = vmatprep.subr.mxu0 0.0
      %1589 = vmatpush1.xpose.msra.mxu0 0.0
      %1590 = vmatprep.subr.mxu0 0.0
      %1591 = vmatpush1.xpose.msra.mxu0 0.0
      %1592 = vmatprep.subr.mxu0 0.0
      %1593 = vmatpush1.xpose.msra.mxu0 0.0
      %1594 = vmatprep.subr.mxu0 0.0
      %1595 = vmatpush1.xpose.msra.mxu0 0.0
      %1596 = vmatprep.subr.mxu0 0.0
      %1597 = vmatpush1.xpose.msra.mxu0 0.0
      %1598 = vmatprep.subr.mxu0 0.0
      %1599 = vmatpush1.xpose.msra.mxu0 0.0
      %1600 = vmatprep.subr.mxu0 0.0
      %1601 = vmatpush1.xpose.msra.mxu0 0.0
      %1602 = vmatprep.subr.mxu0 0.0
      %1603 = vmatpush1.xpose.msra.mxu0 0.0
      %1604 = vmatprep.subr.mxu0 0.0
      %1605 = vmatpush1.xpose.msra.mxu0 0.0
      %1606 = vmatprep.subr.mxu0 0.0
      %1607 = vmatpush1.xpose.msra.mxu0 0.0
      %1608 = vmatprep.subr.mxu0 0.0
      %1609 = vmatpush1.xpose.msra.mxu0 0.0
      %1610 = vmatprep.subr.mxu0 0.0
      %1611 = vmatpush1.xpose.msra.mxu0 0.0
      %1612 = vmatprep.mubr.f32.mxu0 0.0
      %1613 = vmatmul.mubr.f32.gmra.mrb[0].mxu0 %v1540
      %v1614 = vpop.f32.mrb[0].mxu0
      %v1615 = vadd.f32 0.0, %v1614
      %v1616 = vpop.f32.mrb[0].mxu0
      %1617 = vmatprep.mubr.f32.mxu0 0.0
      %1618 = vmatmul.mubr.f32.gmra.mrb[0].mxu0 %v1542
      %v1619 = vpop.f32.mrb[0].mxu0
      %v1620 = vadd.f32 0.0, %v1619
      %v1621 = vpop.f32.mrb[0].mxu0
      %1622 = vdwg.mxu0
      %v1623 = vsel %vm777, %v1615, -inf
      %1624 = vmax.xlane.f32.xlu0 %v1623
      %v1625 = vpop.xlane.xlu0 %1624
      %v1626 = vsel %vm777, %v1620, -inf
      %1627 = vmax.xlane.f32.xlu0 %v1626
      %v1628 = vpop.xlane.xlu0 %1627
      %v1629 = vsub.f32 %v1615, %v1625
      %v1630 = vsub.f32 %v1620, %v1628
      %v1631 = vmul.f32 %v1629, 1.442695
      %v1632 = vpow.pop %v1631
      %v1633 = vmul.f32 %v1630, 1.442695
      %v1634 = vpow.pop %v1633
      %v1635 = vsel %vm777, %v1632, 0.0
      %1636 = vadd.xlane.f32.xlu0 %v1635
      %v1637 = vpop.xlane.xlu0 %1636
      %v1638 = vsel %vm777, %v1634, 0.0
      %1639 = vadd.xlane.f32.xlu0 %v1638
      %v1640 = vpop.xlane.xlu0 %1639
      %v1641 = vrcp.pop %v1637
      %v1642 = vrcp.pop %v1640
      %v1643 = vmul.f32 %v1632, %v1641
      %v1644 = vmul.f32 %v1634, %v1642
      %1645 = vrot.lane.b32.xlu0 %v681, 40
      %v1646 = vpop.permute.xlu0 %1645
      %1647 = vrot.lane.b32.xlu0 %v684, 40
      %v1648 = vpop.permute.xlu0 %1647
      %v1652 = vsel %vm777, %v1643, 0
      %v1655 = vsel %vm777, %v1644, 0
      %1657 = vmatprep.subr.mxu0 0.0
      %1658 = vmatpush1.msra.mxu0 %v1646
      %1659 = vmatprep.subr.mxu0 0.0
      %1660 = vmatpush1.msra.mxu0 %v1648
      %1661 = vmatprep.subr.mxu0 0.0
      %1662 = vmatpush1.msra.mxu0 0.0
      %1663 = vmatprep.subr.mxu0 0.0
      %1664 = vmatpush1.msra.mxu0 0.0
      %1665 = vmatprep.subr.mxu0 0.0
      %1666 = vmatpush1.msra.mxu0 0.0
      %1667 = vmatprep.subr.mxu0 0.0
      %1668 = vmatpush1.msra.mxu0 0.0
      %1669 = vmatprep.subr.mxu0 0.0
      %1670 = vmatpush1.msra.mxu0 0.0
      %1671 = vmatprep.subr.mxu0 0.0
      %1672 = vmatpush1.msra.mxu0 0.0
      %1673 = vmatprep.subr.mxu0 0.0
      %1674 = vmatpush1.msra.mxu0 0.0
      %1675 = vmatprep.subr.mxu0 0.0
      %1676 = vmatpush1.msra.mxu0 0.0
      %1677 = vmatprep.subr.mxu0 0.0
      %1678 = vmatpush1.msra.mxu0 0.0
      %1679 = vmatprep.subr.mxu0 0.0
      %1680 = vmatpush1.msra.mxu0 0.0
      %1681 = vmatprep.subr.mxu0 0.0
      %1682 = vmatpush1.msra.mxu0 0.0
      %1683 = vmatprep.subr.mxu0 0.0
      %1684 = vmatpush1.msra.mxu0 0.0
      %1685 = vmatprep.subr.mxu0 0.0
      %1686 = vmatpush1.msra.mxu0 0.0
      %1687 = vmatprep.subr.mxu0 0.0
      %1688 = vmatpush1.msra.mxu0 0.0
      %1689 = vmatprep.subr.mxu0 0.0
      %1690 = vmatpush1.msra.mxu0 0.0
      %1691 = vmatprep.subr.mxu0 0.0
      %1692 = vmatpush1.msra.mxu0 0.0
      %1693 = vmatprep.subr.mxu0 0.0
      %1694 = vmatpush1.msra.mxu0 0.0
      %1695 = vmatprep.subr.mxu0 0.0
      %1696 = vmatpush1.msra.mxu0 0.0
      %1697 = vmatprep.subr.mxu0 0.0
      %1698 = vmatpush1.msra.mxu0 0.0
      %1699 = vmatprep.subr.mxu0 0.0
      %1700 = vmatpush1.msra.mxu0 0.0
      %1701 = vmatprep.subr.mxu0 0.0
      %1702 = vmatpush1.msra.mxu0 0.0
      %1703 = vmatprep.subr.mxu0 0.0
      %1704 = vmatpush1.msra.mxu0 0.0
      %1705 = vmatprep.subr.mxu0 0.0
      %1706 = vmatpush1.msra.mxu0 0.0
      %1707 = vmatprep.subr.mxu0 0.0
      %1708 = vmatpush1.msra.mxu0 0.0
      %1709 = vmatprep.subr.mxu0 0.0
      %1710 = vmatpush1.msra.mxu0 0.0
      %1711 = vmatprep.subr.mxu0 0.0
      %1712 = vmatpush1.msra.mxu0 0.0
      %1713 = vmatprep.subr.mxu0 0.0
      %1714 = vmatpush1.msra.mxu0 0.0
      %1715 = vmatprep.subr.mxu0 0.0
      %1716 = vmatpush1.msra.mxu0 0.0
      %1717 = vmatprep.subr.mxu0 0.0
      %1718 = vmatpush1.msra.mxu0 0.0
      %1719 = vmatprep.subr.mxu0 0.0
      %1720 = vmatpush1.msra.mxu0 0.0
      %1721 = vmatprep.mubr.f32.mxu0 0.0
      %1722 = vmatmul.mubr.f32.gmra.mrb[0].mxu0 %v1652
      %v1723 = vpop.f32.mrb[0].mxu0
      %v1724 = vadd.f32 0.0, %v1723
      %v1725 = vpop.f32.mrb[0].mxu0
      %1726 = vmatprep.mubr.f32.mxu0 0.0
      %1727 = vmatmul.mubr.f32.gmra.mrb[0].mxu0 %v1655
      %v1728 = vpop.f32.mrb[0].mxu0
      %v1729 = vadd.f32 0.0, %v1728
      %v1730 = vpop.f32.mrb[0].mxu0
      %1731 = vdwg.mxu0
      %v1733 = vsel %vm689, %v1724, 0
      %v1736 = vsel %vm689, %v1729, 0
      %1738 = vmatprep.subr.mxu0 0.0
      %1739 = vmatpush1.msra.mxu0 %v568
      %1740 = vmatprep.subr.mxu0 0.0
      %1741 = vmatpush1.msra.mxu0 0.0
      %1742 = vmatprep.subr.mxu0 0.0
      %1743 = vmatpush1.msra.mxu0 0.0
      %1744 = vmatprep.subr.mxu0 0.0
      %1745 = vmatpush1.msra.mxu0 0.0
      %1746 = vmatprep.subr.mxu0 0.0
      %1747 = vmatpush1.msra.mxu0 0.0
      %1748 = vmatprep.subr.mxu0 0.0
      %1749 = vmatpush1.msra.mxu0 0.0
      %1750 = vmatprep.subr.mxu0 0.0
      %1751 = vmatpush1.msra.mxu0 0.0
      %1752 = vmatprep.subr.mxu0 0.0
      %1753 = vmatpush1.msra.mxu0 0.0
      %1754 = vmatprep.subr.mxu0 0.0
      %1755 = vmatpush1.msra.mxu0 0.0
      %1756 = vmatprep.subr.mxu0 0.0
      %1757 = vmatpush1.msra.mxu0 0.0
      %1758 = vmatprep.subr.mxu0 0.0
      %1759 = vmatpush1.msra.mxu0 0.0
      %1760 = vmatprep.subr.mxu0 0.0
      %1761 = vmatpush1.msra.mxu0 0.0
      %1762 = vmatprep.subr.mxu0 0.0
      %1763 = vmatpush1.msra.mxu0 0.0
      %1764 = vmatprep.subr.mxu0 0.0
      %1765 = vmatpush1.msra.mxu0 0.0
      %1766 = vmatprep.subr.mxu0 0.0
      %1767 = vmatpush1.msra.mxu0 0.0
      %1768 = vmatprep.subr.mxu0 0.0
      %1769 = vmatpush1.msra.mxu0 0.0
      %1770 = vmatprep.subr.mxu0 0.0
      %1771 = vmatpush1.msra.mxu0 0.0
      %1772 = vmatprep.subr.mxu0 0.0
      %1773 = vmatpush1.msra.mxu0 0.0
      %1774 = vmatprep.subr.mxu0 0.0
      %1775 = vmatpush1.msra.mxu0 0.0
      %1776 = vmatprep.subr.mxu0 0.0
      %1777 = vmatpush1.msra.mxu0 0.0
      %1778 = vmatprep.subr.mxu0 0.0
      %1779 = vmatpush1.msra.mxu0 0.0
      %1780 = vmatprep.subr.mxu0 0.0
      %1781 = vmatpush1.msra.mxu0 0.0
      %1782 = vmatprep.subr.mxu0 0.0
      %1783 = vmatpush1.msra.mxu0 0.0
      %1784 = vmatprep.subr.mxu0 0.0
      %1785 = vmatpush1.msra.mxu0 0.0
      %1786 = vmatprep.subr.mxu0 0.0
      %1787 = vmatpush1.msra.mxu0 0.0
      %1788 = vmatprep.subr.mxu0 0.0
      %1789 = vmatpush1.msra.mxu0 0.0
      %1790 = vmatprep.subr.mxu0 0.0
      %1791 = vmatpush1.msra.mxu0 0.0
      %1792 = vmatprep.subr.mxu0 0.0
      %1793 = vmatpush1.msra.mxu0 0.0
      %1794 = vmatprep.subr.mxu0 0.0
      %1795 = vmatpush1.msra.mxu0 0.0
      %1796 = vmatprep.subr.mxu0 0.0
      %1797 = vmatpush1.msra.mxu0 0.0
      %1798 = vmatprep.subr.mxu0 0.0
      %1799 = vmatpush1.msra.mxu0 0.0
      %1800 = vmatprep.subr.mxu0 0.0
      %1801 = vmatpush1.msra.mxu0 0.0
      %1802 = vmatprep.mubr.f32.mxu0 0.0
      %1803 = vmatmul.mubr.f32.gmra.mrb[0].mxu0 %v1733
      %v1804 = vpop.f32.mrb[0].mxu0
      %v1805 = vadd.f32 0.0, %v1804
      %v1806 = vpop.f32.mrb[0].mxu0
      %1807 = vmatprep.mubr.f32.mxu0 0.0
      %1808 = vmatmul.mubr.f32.gmra.mrb[0].mxu0 %v1736
      %v1809 = vpop.f32.mrb[0].mxu0
      %v1810 = vadd.f32 0.0, %v1809
      %v1811 = vpop.f32.mrb[0].mxu0
      %1812 = vdwg.mxu0
      %v1813 = vadd.f32 %v1530, %v1805
      %v1814 = vadd.f32 %v1531, %v1810
      %1815 = vrot.lane.b32.xlu0 %v687, 96
      %v1816 = vpop.permute.xlu0 %1815
      %1817 = vrot.lane.b32.xlu0 %v688, 96
      %v1818 = vpop.permute.xlu0 %1817
      %1819 = vrot.lane.b32.xlu0 %v681, 96
      %v1820 = vpop.permute.xlu0 %1819
      %1821 = vrot.lane.b32.xlu0 %v684, 96
      %v1822 = vpop.permute.xlu0 %1821
      %v1823 = vsel %vm689, %v1816, 0
      %v1825 = vsel %vm689, %v1818, 0
      %v1827 = vsel %vm689, %v1820, 0
      %v1829 = vsel %vm689, %v1822, 0
      %1831 = vmatprep.subr.mxu0 0.0
      %1832 = vmatpush1.xpose.msra.mxu0 %v1827
      %1833 = vmatprep.subr.mxu0 0.0
      %1834 = vmatpush1.xpose.msra.mxu0 %v1829
      %1835 = vmatprep.subr.mxu0 0.0
      %1836 = vmatpush1.xpose.msra.mxu0 0.0
      %1837 = vmatprep.subr.mxu0 0.0
      %1838 = vmatpush1.xpose.msra.mxu0 0.0
      %1839 = vmatprep.subr.mxu0 0.0
      %1840 = vmatpush1.xpose.msra.mxu0 0.0
      %1841 = vmatprep.subr.mxu0 0.0
      %1842 = vmatpush1.xpose.msra.mxu0 0.0
      %1843 = vmatprep.subr.mxu0 0.0
      %1844 = vmatpush1.xpose.msra.mxu0 0.0
      %1845 = vmatprep.subr.mxu0 0.0
      %1846 = vmatpush1.xpose.msra.mxu0 0.0
      %1847 = vmatprep.subr.mxu0 0.0
      %1848 = vmatpush1.xpose.msra.mxu0 0.0
      %1849 = vmatprep.subr.mxu0 0.0
      %1850 = vmatpush1.xpose.msra.mxu0 0.0
      %1851 = vmatprep.subr.mxu0 0.0
      %1852 = vmatpush1.xpose.msra.mxu0 0.0
      %1853 = vmatprep.subr.mxu0 0.0
      %1854 = vmatpush1.xpose.msra.mxu0 0.0
      %1855 = vmatprep.subr.mxu0 0.0
      %1856 = vmatpush1.xpose.msra.mxu0 0.0
      %1857 = vmatprep.subr.mxu0 0.0
      %1858 = vmatpush1.xpose.msra.mxu0 0.0
      %1859 = vmatprep.subr.mxu0 0.0
      %1860 = vmatpush1.xpose.msra.mxu0 0.0
      %1861 = vmatprep.subr.mxu0 0.0
      %1862 = vmatpush1.xpose.msra.mxu0 0.0
      %1863 = vmatprep.subr.mxu0 0.0
      %1864 = vmatpush1.xpose.msra.mxu0 0.0
      %1865 = vmatprep.subr.mxu0 0.0
      %1866 = vmatpush1.xpose.msra.mxu0 0.0
      %1867 = vmatprep.subr.mxu0 0.0
      %1868 = vmatpush1.xpose.msra.mxu0 0.0
      %1869 = vmatprep.subr.mxu0 0.0
      %1870 = vmatpush1.xpose.msra.mxu0 0.0
      %1871 = vmatprep.subr.mxu0 0.0
      %1872 = vmatpush1.xpose.msra.mxu0 0.0
      %1873 = vmatprep.subr.mxu0 0.0
      %1874 = vmatpush1.xpose.msra.mxu0 0.0
      %1875 = vmatprep.subr.mxu0 0.0
      %1876 = vmatpush1.xpose.msra.mxu0 0.0
      %1877 = vmatprep.subr.mxu0 0.0
      %1878 = vmatpush1.xpose.msra.mxu0 0.0
      %1879 = vmatprep.subr.mxu0 0.0
      %1880 = vmatpush1.xpose.msra.mxu0 0.0
      %1881 = vmatprep.subr.mxu0 0.0
      %1882 = vmatpush1.xpose.msra.mxu0 0.0
      %1883 = vmatprep.subr.mxu0 0.0
      %1884 = vmatpush1.xpose.msra.mxu0 0.0
      %1885 = vmatprep.subr.mxu0 0.0
      %1886 = vmatpush1.xpose.msra.mxu0 0.0
      %1887 = vmatprep.subr.mxu0 0.0
      %1888 = vmatpush1.xpose.msra.mxu0 0.0
      %1889 = vmatprep.subr.mxu0 0.0
      %1890 = vmatpush1.xpose.msra.mxu0 0.0
      %1891 = vmatprep.subr.mxu0 0.0
      %1892 = vmatpush1.xpose.msra.mxu0 0.0
      %1893 = vmatprep.subr.mxu0 0.0
      %1894 = vmatpush1.xpose.msra.mxu0 0.0
      %1895 = vmatprep.mubr.f32.mxu0 0.0
      %1896 = vmatmul.mubr.f32.gmra.mrb[0].mxu0 %v1823
      %v1897 = vpop.f32.mrb[0].mxu0
      %v1898 = vadd.f32 0.0, %v1897
      %v1899 = vpop.f32.mrb[0].mxu0
      %1900 = vmatprep.mubr.f32.mxu0 0.0
      %1901 = vmatmul.mubr.f32.gmra.mrb[0].mxu0 %v1825
      %v1902 = vpop.f32.mrb[0].mxu0
      %v1903 = vadd.f32 0.0, %v1902
      %v1904 = vpop.f32.mrb[0].mxu0
      %1905 = vdwg.mxu0
      %v1906 = vsel %vm777, %v1898, -inf
      %1907 = vmax.xlane.f32.xlu0 %v1906
      %v1908 = vpop.xlane.xlu0 %1907
      %v1909 = vsel %vm777, %v1903, -inf
      %1910 = vmax.xlane.f32.xlu0 %v1909
      %v1911 = vpop.xlane.xlu0 %1910
      %v1912 = vsub.f32 %v1898, %v1908
      %v1913 = vsub.f32 %v1903, %v1911
      %v1914 = vmul.f32 %v1912, 1.442695
      %v1915 = vpow.pop %v1914
      %v1916 = vmul.f32 %v1913, 1.442695
      %v1917 = vpow.pop %v1916
      %v1918 = vsel %vm777, %v1915, 0.0
      %1919 = vadd.xlane.f32.xlu0 %v1918
      %v1920 = vpop.xlane.xlu0 %1919
      %v1921 = vsel %vm777, %v1917, 0.0
      %1922 = vadd.xlane.f32.xlu0 %v1921
      %v1923 = vpop.xlane.xlu0 %1922
      %v1924 = vrcp.pop %v1920
      %v1925 = vrcp.pop %v1923
      %v1926 = vmul.f32 %v1915, %v1924
      %v1927 = vmul.f32 %v1917, %v1925
      %1928 = vrot.lane.b32.xlu0 %v681, 32
      %v1929 = vpop.permute.xlu0 %1928
      %1930 = vrot.lane.b32.xlu0 %v684, 32
      %v1931 = vpop.permute.xlu0 %1930
      %v1935 = vsel %vm777, %v1926, 0
      %v1938 = vsel %vm777, %v1927, 0
      %1940 = vmatprep.subr.mxu0 0.0
      %1941 = vmatpush1.msra.mxu0 %v1929
      %1942 = vmatprep.subr.mxu0 0.0
      %1943 = vmatpush1.msra.mxu0 %v1931
      %1944 = vmatprep.subr.mxu0 0.0
      %1945 = vmatpush1.msra.mxu0 0.0
      %1946 = vmatprep.subr.mxu0 0.0
      %1947 = vmatpush1.msra.mxu0 0.0
      %1948 = vmatprep.subr.mxu0 0.0
      %1949 = vmatpush1.msra.mxu0 0.0
      %1950 = vmatprep.subr.mxu0 0.0
      %1951 = vmatpush1.msra.mxu0 0.0
      %1952 = vmatprep.subr.mxu0 0.0
      %1953 = vmatpush1.msra.mxu0 0.0
      %1954 = vmatprep.subr.mxu0 0.0
      %1955 = vmatpush1.msra.mxu0 0.0
      %1956 = vmatprep.subr.mxu0 0.0
      %1957 = vmatpush1.msra.mxu0 0.0
      %1958 = vmatprep.subr.mxu0 0.0
      %1959 = vmatpush1.msra.mxu0 0.0
      %1960 = vmatprep.subr.mxu0 0.0
      %1961 = vmatpush1.msra.mxu0 0.0
      %1962 = vmatprep.subr.mxu0 0.0
      %1963 = vmatpush1.msra.mxu0 0.0
      %1964 = vmatprep.subr.mxu0 0.0
      %1965 = vmatpush1.msra.mxu0 0.0
      %1966 = vmatprep.subr.mxu0 0.0
      %1967 = vmatpush1.msra.mxu0 0.0
      %1968 = vmatprep.subr.mxu0 0.0
      %1969 = vmatpush1.msra.mxu0 0.0
      %1970 = vmatprep.subr.mxu0 0.0
      %1971 = vmatpush1.msra.mxu0 0.0
      %1972 = vmatprep.subr.mxu0 0.0
      %1973 = vmatpush1.msra.mxu0 0.0
      %1974 = vmatprep.subr.mxu0 0.0
      %1975 = vmatpush1.msra.mxu0 0.0
      %1976 = vmatprep.subr.mxu0 0.0
      %1977 = vmatpush1.msra.mxu0 0.0
      %1978 = vmatprep.subr.mxu0 0.0
      %1979 = vmatpush1.msra.mxu0 0.0
      %1980 = vmatprep.subr.mxu0 0.0
      %1981 = vmatpush1.msra.mxu0 0.0
      %1982 = vmatprep.subr.mxu0 0.0
      %1983 = vmatpush1.msra.mxu0 0.0
      %1984 = vmatprep.subr.mxu0 0.0
      %1985 = vmatpush1.msra.mxu0 0.0
      %1986 = vmatprep.subr.mxu0 0.0
      %1987 = vmatpush1.msra.mxu0 0.0
      %1988 = vmatprep.subr.mxu0 0.0
      %1989 = vmatpush1.msra.mxu0 0.0
      %1990 = vmatprep.subr.mxu0 0.0
      %1991 = vmatpush1.msra.mxu0 0.0
      %1992 = vmatprep.subr.mxu0 0.0
      %1993 = vmatpush1.msra.mxu0 0.0
      %1994 = vmatprep.subr.mxu0 0.0
      %1995 = vmatpush1.msra.mxu0 0.0
      %1996 = vmatprep.subr.mxu0 0.0
      %1997 = vmatpush1.msra.mxu0 0.0
      %1998 = vmatprep.subr.mxu0 0.0
      %1999 = vmatpush1.msra.mxu0 0.0
      %2000 = vmatprep.subr.mxu0 0.0
      %2001 = vmatpush1.msra.mxu0 0.0
      %2002 = vmatprep.subr.mxu0 0.0
      %2003 = vmatpush1.msra.mxu0 0.0
      %2004 = vmatprep.mubr.f32.mxu0 0.0
      %2005 = vmatmul.mubr.f32.gmra.mrb[0].mxu0 %v1935
      %v2006 = vpop.f32.mrb[0].mxu0
      %v2007 = vadd.f32 0.0, %v2006
      %v2008 = vpop.f32.mrb[0].mxu0
      %2009 = vmatprep.mubr.f32.mxu0 0.0
      %2010 = vmatmul.mubr.f32.gmra.mrb[0].mxu0 %v1938
      %v2011 = vpop.f32.mrb[0].mxu0
      %v2012 = vadd.f32 0.0, %v2011
      %v2013 = vpop.f32.mrb[0].mxu0
      %2014 = vdwg.mxu0
      %v2016 = vsel %vm689, %v2007, 0
      %v2019 = vsel %vm689, %v2012, 0
      %2021 = vmatprep.subr.mxu0 0.0
      %2022 = vmatpush1.msra.mxu0 %v569
      %2023 = vmatprep.subr.mxu0 0.0
      %2024 = vmatpush1.msra.mxu0 0.0
      %2025 = vmatprep.subr.mxu0 0.0
      %2026 = vmatpush1.msra.mxu0 0.0
      %2027 = vmatprep.subr.mxu0 0.0
      %2028 = vmatpush1.msra.mxu0 0.0
      %2029 = vmatprep.subr.mxu0 0.0
      %2030 = vmatpush1.msra.mxu0 0.0
      %2031 = vmatprep.subr.mxu0 0.0
      %2032 = vmatpush1.msra.mxu0 0.0
      %2033 = vmatprep.subr.mxu0 0.0
      %2034 = vmatpush1.msra.mxu0 0.0
      %2035 = vmatprep.subr.mxu0 0.0
      %2036 = vmatpush1.msra.mxu0 0.0
      %2037 = vmatprep.subr.mxu0 0.0
      %2038 = vmatpush1.msra.mxu0 0.0
      %2039 = vmatprep.subr.mxu0 0.0
      %2040 = vmatpush1.msra.mxu0 0.0
      %2041 = vmatprep.subr.mxu0 0.0
      %2042 = vmatpush1.msra.mxu0 0.0
      %2043 = vmatprep.subr.mxu0 0.0
      %2044 = vmatpush1.msra.mxu0 0.0
      %2045 = vmatprep.subr.mxu0 0.0
      %2046 = vmatpush1.msra.mxu0 0.0
      %2047 = vmatprep.subr.mxu0 0.0
      %2048 = vmatpush1.msra.mxu0 0.0
      %2049 = vmatprep.subr.mxu0 0.0
      %2050 = vmatpush1.msra.mxu0 0.0
      %2051 = vmatprep.subr.mxu0 0.0
      %2052 = vmatpush1.msra.mxu0 0.0
      %2053 = vmatprep.subr.mxu0 0.0
      %2054 = vmatpush1.msra.mxu0 0.0
      %2055 = vmatprep.subr.mxu0 0.0
      %2056 = vmatpush1.msra.mxu0 0.0
      %2057 = vmatprep.subr.mxu0 0.0
      %2058 = vmatpush1.msra.mxu0 0.0
      %2059 = vmatprep.subr.mxu0 0.0
      %2060 = vmatpush1.msra.mxu0 0.0
      %2061 = vmatprep.subr.mxu0 0.0
      %2062 = vmatpush1.msra.mxu0 0.0
      %2063 = vmatprep.subr.mxu0 0.0
      %2064 = vmatpush1.msra.mxu0 0.0
      %2065 = vmatprep.subr.mxu0 0.0
      %2066 = vmatpush1.msra.mxu0 0.0
      %2067 = vmatprep.subr.mxu0 0.0
      %2068 = vmatpush1.msra.mxu0 0.0
      %2069 = vmatprep.subr.mxu0 0.0
      %2070 = vmatpush1.msra.mxu0 0.0
      %2071 = vmatprep.subr.mxu0 0.0
      %2072 = vmatpush1.msra.mxu0 0.0
      %2073 = vmatprep.subr.mxu0 0.0
      %2074 = vmatpush1.msra.mxu0 0.0
      %2075 = vmatprep.subr.mxu0 0.0
      %2076 = vmatpush1.msra.mxu0 0.0
      %2077 = vmatprep.subr.mxu0 0.0
      %2078 = vmatpush1.msra.mxu0 0.0
      %2079 = vmatprep.subr.mxu0 0.0
      %2080 = vmatpush1.msra.mxu0 0.0
      %2081 = vmatprep.subr.mxu0 0.0
      %2082 = vmatpush1.msra.mxu0 0.0
      %2083 = vmatprep.subr.mxu0 0.0
      %2084 = vmatpush1.msra.mxu0 0.0
      %2085 = vmatprep.mubr.f32.mxu0 0.0
      %2086 = vmatmul.mubr.f32.gmra.mrb[0].mxu0 %v2016
      %v2087 = vpop.f32.mrb[0].mxu0
      %v2088 = vadd.f32 0.0, %v2087
      %v2089 = vpop.f32.mrb[0].mxu0
      %2090 = vmatprep.mubr.f32.mxu0 0.0
      %2091 = vmatmul.mubr.f32.gmra.mrb[0].mxu0 %v2019
      %v2092 = vpop.f32.mrb[0].mxu0
      %v2093 = vadd.f32 0.0, %v2092
      %v2094 = vpop.f32.mrb[0].mxu0
      %2095 = vdwg.mxu0
      %v2096 = vadd.f32 %v1813, %v2088
      %v2097 = vadd.f32 %v1814, %v2093
      %2098 = vrot.lane.b32.xlu0 %v687, 88
      %v2099 = vpop.permute.xlu0 %2098
      %2100 = vrot.lane.b32.xlu0 %v688, 88
      %v2101 = vpop.permute.xlu0 %2100
      %2102 = vrot.lane.b32.xlu0 %v681, 88
      %v2103 = vpop.permute.xlu0 %2102
      %2104 = vrot.lane.b32.xlu0 %v684, 88
      %v2105 = vpop.permute.xlu0 %2104
      %v2106 = vsel %vm689, %v2099, 0
      %v2108 = vsel %vm689, %v2101, 0
      %v2110 = vsel %vm689, %v2103, 0
      %v2112 = vsel %vm689, %v2105, 0
      %2114 = vmatprep.subr.mxu0 0.0
      %2115 = vmatpush1.xpose.msra.mxu0 %v2110
      %2116 = vmatprep.subr.mxu0 0.0
      %2117 = vmatpush1.xpose.msra.mxu0 %v2112
      %2118 = vmatprep.subr.mxu0 0.0
      %2119 = vmatpush1.xpose.msra.mxu0 0.0
      %2120 = vmatprep.subr.mxu0 0.0
      %2121 = vmatpush1.xpose.msra.mxu0 0.0
      %2122 = vmatprep.subr.mxu0 0.0
      %2123 = vmatpush1.xpose.msra.mxu0 0.0
      %2124 = vmatprep.subr.mxu0 0.0
      %2125 = vmatpush1.xpose.msra.mxu0 0.0
      %2126 = vmatprep.subr.mxu0 0.0
      %2127 = vmatpush1.xpose.msra.mxu0 0.0
      %2128 = vmatprep.subr.mxu0 0.0
      %2129 = vmatpush1.xpose.msra.mxu0 0.0
      %2130 = vmatprep.subr.mxu0 0.0
      %2131 = vmatpush1.xpose.msra.mxu0 0.0
      %2132 = vmatprep.subr.mxu0 0.0
      %2133 = vmatpush1.xpose.msra.mxu0 0.0
      %2134 = vmatprep.subr.mxu0 0.0
      %2135 = vmatpush1.xpose.msra.mxu0 0.0
      %2136 = vmatprep.subr.mxu0 0.0
      %2137 = vmatpush1.xpose.msra.mxu0 0.0
      %2138 = vmatprep.subr.mxu0 0.0
      %2139 = vmatpush1.xpose.msra.mxu0 0.0
      %2140 = vmatprep.subr.mxu0 0.0
      %2141 = vmatpush1.xpose.msra.mxu0 0.0
      %2142 = vmatprep.subr.mxu0 0.0
      %2143 = vmatpush1.xpose.msra.mxu0 0.0
      %2144 = vmatprep.subr.mxu0 0.0
      %2145 = vmatpush1.xpose.msra.mxu0 0.0
      %2146 = vmatprep.subr.mxu0 0.0
      %2147 = vmatpush1.xpose.msra.mxu0 0.0
      %2148 = vmatprep.subr.mxu0 0.0
      %2149 = vmatpush1.xpose.msra.mxu0 0.0
      %2150 = vmatprep.subr.mxu0 0.0
      %2151 = vmatpush1.xpose.msra.mxu0 0.0
      %2152 = vmatprep.subr.mxu0 0.0
      %2153 = vmatpush1.xpose.msra.mxu0 0.0
      %2154 = vmatprep.subr.mxu0 0.0
      %2155 = vmatpush1.xpose.msra.mxu0 0.0
      %2156 = vmatprep.subr.mxu0 0.0
      %2157 = vmatpush1.xpose.msra.mxu0 0.0
      %2158 = vmatprep.subr.mxu0 0.0
      %2159 = vmatpush1.xpose.msra.mxu0 0.0
      %2160 = vmatprep.subr.mxu0 0.0
      %2161 = vmatpush1.xpose.msra.mxu0 0.0
      %2162 = vmatprep.subr.mxu0 0.0
      %2163 = vmatpush1.xpose.msra.mxu0 0.0
      %2164 = vmatprep.subr.mxu0 0.0
      %2165 = vmatpush1.xpose.msra.mxu0 0.0
      %2166 = vmatprep.subr.mxu0 0.0
      %2167 = vmatpush1.xpose.msra.mxu0 0.0
      %2168 = vmatprep.subr.mxu0 0.0
      %2169 = vmatpush1.xpose.msra.mxu0 0.0
      %2170 = vmatprep.subr.mxu0 0.0
      %2171 = vmatpush1.xpose.msra.mxu0 0.0
      %2172 = vmatprep.subr.mxu0 0.0
      %2173 = vmatpush1.xpose.msra.mxu0 0.0
      %2174 = vmatprep.subr.mxu0 0.0
      %2175 = vmatpush1.xpose.msra.mxu0 0.0
      %2176 = vmatprep.subr.mxu0 0.0
      %2177 = vmatpush1.xpose.msra.mxu0 0.0
      %2178 = vmatprep.mubr.f32.mxu0 0.0
      %2179 = vmatmul.mubr.f32.gmra.mrb[0].mxu0 %v2106
      %v2180 = vpop.f32.mrb[0].mxu0
      %v2181 = vadd.f32 0.0, %v2180
      %v2182 = vpop.f32.mrb[0].mxu0
      %2183 = vmatprep.mubr.f32.mxu0 0.0
      %2184 = vmatmul.mubr.f32.gmra.mrb[0].mxu0 %v2108
      %v2185 = vpop.f32.mrb[0].mxu0
      %v2186 = vadd.f32 0.0, %v2185
      %v2187 = vpop.f32.mrb[0].mxu0
      %2188 = vdwg.mxu0
      %v2189 = vsel %vm777, %v2181, -inf
      %2190 = vmax.xlane.f32.xlu0 %v2189
      %v2191 = vpop.xlane.xlu0 %2190
      %v2192 = vsel %vm777, %v2186, -inf
      %2193 = vmax.xlane.f32.xlu0 %v2192
      %v2194 = vpop.xlane.xlu0 %2193
      %v2195 = vsub.f32 %v2181, %v2191
      %v2196 = vsub.f32 %v2186, %v2194
      %v2197 = vmul.f32 %v2195, 1.442695
      %v2198 = vpow.pop %v2197
      %v2199 = vmul.f32 %v2196, 1.442695
      %v2200 = vpow.pop %v2199
      %v2201 = vsel %vm777, %v2198, 0.0
      %2202 = vadd.xlane.f32.xlu0 %v2201
      %v2203 = vpop.xlane.xlu0 %2202
      %v2204 = vsel %vm777, %v2200, 0.0
      %2205 = vadd.xlane.f32.xlu0 %v2204
      %v2206 = vpop.xlane.xlu0 %2205
      %v2207 = vrcp.pop %v2203
      %v2208 = vrcp.pop %v2206
      %v2209 = vmul.f32 %v2198, %v2207
      %v2210 = vmul.f32 %v2200, %v2208
      %2211 = vrot.lane.b32.xlu0 %v681, 24
      %v2212 = vpop.permute.xlu0 %2211
      %2213 = vrot.lane.b32.xlu0 %v684, 24
      %v2214 = vpop.permute.xlu0 %2213
      %v2218 = vsel %vm777, %v2209, 0
      %v2221 = vsel %vm777, %v2210, 0
      %2223 = vmatprep.subr.mxu0 0.0
      %2224 = vmatpush1.msra.mxu0 %v2212
      %2225 = vmatprep.subr.mxu0 0.0
      %2226 = vmatpush1.msra.mxu0 %v2214
      %2227 = vmatprep.subr.mxu0 0.0
      %2228 = vmatpush1.msra.mxu0 0.0
      %2229 = vmatprep.subr.mxu0 0.0
      %2230 = vmatpush1.msra.mxu0 0.0
      %2231 = vmatprep.subr.mxu0 0.0
      %2232 = vmatpush1.msra.mxu0 0.0
      %2233 = vmatprep.subr.mxu0 0.0
      %2234 = vmatpush1.msra.mxu0 0.0
      %2235 = vmatprep.subr.mxu0 0.0
      %2236 = vmatpush1.msra.mxu0 0.0
      %2237 = vmatprep.subr.mxu0 0.0
      %2238 = vmatpush1.msra.mxu0 0.0
      %2239 = vmatprep.subr.mxu0 0.0
      %2240 = vmatpush1.msra.mxu0 0.0
      %2241 = vmatprep.subr.mxu0 0.0
      %2242 = vmatpush1.msra.mxu0 0.0
      %2243 = vmatprep.subr.mxu0 0.0
      %2244 = vmatpush1.msra.mxu0 0.0
      %2245 = vmatprep.subr.mxu0 0.0
      %2246 = vmatpush1.msra.mxu0 0.0
      %2247 = vmatprep.subr.mxu0 0.0
      %2248 = vmatpush1.msra.mxu0 0.0
      %2249 = vmatprep.subr.mxu0 0.0
      %2250 = vmatpush1.msra.mxu0 0.0
      %2251 = vmatprep.subr.mxu0 0.0
      %2252 = vmatpush1.msra.mxu0 0.0
      %2253 = vmatprep.subr.mxu0 0.0
      %2254 = vmatpush1.msra.mxu0 0.0
      %2255 = vmatprep.subr.mxu0 0.0
      %2256 = vmatpush1.msra.mxu0 0.0
      %2257 = vmatprep.subr.mxu0 0.0
      %2258 = vmatpush1.msra.mxu0 0.0
      %2259 = vmatprep.subr.mxu0 0.0
      %2260 = vmatpush1.msra.mxu0 0.0
      %2261 = vmatprep.subr.mxu0 0.0
      %2262 = vmatpush1.msra.mxu0 0.0
      %2263 = vmatprep.subr.mxu0 0.0
      %2264 = vmatpush1.msra.mxu0 0.0
      %2265 = vmatprep.subr.mxu0 0.0
      %2266 = vmatpush1.msra.mxu0 0.0
      %2267 = vmatprep.subr.mxu0 0.0
      %2268 = vmatpush1.msra.mxu0 0.0
      %2269 = vmatprep.subr.mxu0 0.0
      %2270 = vmatpush1.msra.mxu0 0.0
      %2271 = vmatprep.subr.mxu0 0.0
      %2272 = vmatpush1.msra.mxu0 0.0
      %2273 = vmatprep.subr.mxu0 0.0
      %2274 = vmatpush1.msra.mxu0 0.0
      %2275 = vmatprep.subr.mxu0 0.0
      %2276 = vmatpush1.msra.mxu0 0.0
      %2277 = vmatprep.subr.mxu0 0.0
      %2278 = vmatpush1.msra.mxu0 0.0
      %2279 = vmatprep.subr.mxu0 0.0
      %2280 = vmatpush1.msra.mxu0 0.0
      %2281 = vmatprep.subr.mxu0 0.0
      %2282 = vmatpush1.msra.mxu0 0.0
      %2283 = vmatprep.subr.mxu0 0.0
      %2284 = vmatpush1.msra.mxu0 0.0
      %2285 = vmatprep.subr.mxu0 0.0
      %2286 = vmatpush1.msra.mxu0 0.0
      %2287 = vmatprep.mubr.f32.mxu0 0.0
      %2288 = vmatmul.mubr.f32.gmra.mrb[0].mxu0 %v2218
      %v2289 = vpop.f32.mrb[0].mxu0
      %v2290 = vadd.f32 0.0, %v2289
      %v2291 = vpop.f32.mrb[0].mxu0
      %2292 = vmatprep.mubr.f32.mxu0 0.0
      %2293 = vmatmul.mubr.f32.gmra.mrb[0].mxu0 %v2221
      %v2294 = vpop.f32.mrb[0].mxu0
      %v2295 = vadd.f32 0.0, %v2294
      %v2296 = vpop.f32.mrb[0].mxu0
      %2297 = vdwg.mxu0
      %v2299 = vsel %vm689, %v2290, 0
      %v2302 = vsel %vm689, %v2295, 0
      %2304 = vmatprep.subr.mxu0 0.0
      %2305 = vmatpush1.msra.mxu0 %v570
      %2306 = vmatprep.subr.mxu0 0.0
      %2307 = vmatpush1.msra.mxu0 0.0
      %2308 = vmatprep.subr.mxu0 0.0
      %2309 = vmatpush1.msra.mxu0 0.0
      %2310 = vmatprep.subr.mxu0 0.0
      %2311 = vmatpush1.msra.mxu0 0.0
      %2312 = vmatprep.subr.mxu0 0.0
      %2313 = vmatpush1.msra.mxu0 0.0
      %2314 = vmatprep.subr.mxu0 0.0
      %2315 = vmatpush1.msra.mxu0 0.0
      %2316 = vmatprep.subr.mxu0 0.0
      %2317 = vmatpush1.msra.mxu0 0.0
      %2318 = vmatprep.subr.mxu0 0.0
      %2319 = vmatpush1.msra.mxu0 0.0
      %2320 = vmatprep.subr.mxu0 0.0
      %2321 = vmatpush1.msra.mxu0 0.0
      %2322 = vmatprep.subr.mxu0 0.0
      %2323 = vmatpush1.msra.mxu0 0.0
      %2324 = vmatprep.subr.mxu0 0.0
      %2325 = vmatpush1.msra.mxu0 0.0
      %2326 = vmatprep.subr.mxu0 0.0
      %2327 = vmatpush1.msra.mxu0 0.0
      %2328 = vmatprep.subr.mxu0 0.0
      %2329 = vmatpush1.msra.mxu0 0.0
      %2330 = vmatprep.subr.mxu0 0.0
      %2331 = vmatpush1.msra.mxu0 0.0
      %2332 = vmatprep.subr.mxu0 0.0
      %2333 = vmatpush1.msra.mxu0 0.0
      %2334 = vmatprep.subr.mxu0 0.0
      %2335 = vmatpush1.msra.mxu0 0.0
      %2336 = vmatprep.subr.mxu0 0.0
      %2337 = vmatpush1.msra.mxu0 0.0
      %2338 = vmatprep.subr.mxu0 0.0
      %2339 = vmatpush1.msra.mxu0 0.0
      %2340 = vmatprep.subr.mxu0 0.0
      %2341 = vmatpush1.msra.mxu0 0.0
      %2342 = vmatprep.subr.mxu0 0.0
      %2343 = vmatpush1.msra.mxu0 0.0
      %2344 = vmatprep.subr.mxu0 0.0
      %2345 = vmatpush1.msra.mxu0 0.0
      %2346 = vmatprep.subr.mxu0 0.0
      %2347 = vmatpush1.msra.mxu0 0.0
      %2348 = vmatprep.subr.mxu0 0.0
      %2349 = vmatpush1.msra.mxu0 0.0
      %2350 = vmatprep.subr.mxu0 0.0
      %2351 = vmatpush1.msra.mxu0 0.0
      %2352 = vmatprep.subr.mxu0 0.0
      %2353 = vmatpush1.msra.mxu0 0.0
      %2354 = vmatprep.subr.mxu0 0.0
      %2355 = vmatpush1.msra.mxu0 0.0
      %2356 = vmatprep.subr.mxu0 0.0
      %2357 = vmatpush1.msra.mxu0 0.0
      %2358 = vmatprep.subr.mxu0 0.0
      %2359 = vmatpush1.msra.mxu0 0.0
      %2360 = vmatprep.subr.mxu0 0.0
      %2361 = vmatpush1.msra.mxu0 0.0
      %2362 = vmatprep.subr.mxu0 0.0
      %2363 = vmatpush1.msra.mxu0 0.0
      %2364 = vmatprep.subr.mxu0 0.0
      %2365 = vmatpush1.msra.mxu0 0.0
      %2366 = vmatprep.subr.mxu0 0.0
      %2367 = vmatpush1.msra.mxu0 0.0
      %2368 = vmatprep.mubr.f32.mxu0 0.0
      %2369 = vmatmul.mubr.f32.gmra.mrb[0].mxu0 %v2299
      %v2370 = vpop.f32.mrb[0].mxu0
      %v2371 = vadd.f32 0.0, %v2370
      %v2372 = vpop.f32.mrb[0].mxu0
      %2373 = vmatprep.mubr.f32.mxu0 0.0
      %2374 = vmatmul.mubr.f32.gmra.mrb[0].mxu0 %v2302
      %v2375 = vpop.f32.mrb[0].mxu0
      %v2376 = vadd.f32 0.0, %v2375
      %v2377 = vpop.f32.mrb[0].mxu0
      %2378 = vdwg.mxu0
      %v2379 = vadd.f32 %v2096, %v2371
      %v2380 = vadd.f32 %v2097, %v2376
      %2381 = vrot.lane.b32.xlu0 %v687, 80
      %v2382 = vpop.permute.xlu0 %2381
      %2383 = vrot.lane.b32.xlu0 %v688, 80
      %v2384 = vpop.permute.xlu0 %2383
      %2385 = vrot.lane.b32.xlu0 %v681, 80
      %v2386 = vpop.permute.xlu0 %2385
      %2387 = vrot.lane.b32.xlu0 %v684, 80
      %v2388 = vpop.permute.xlu0 %2387
      %v2389 = vsel %vm689, %v2382, 0
      %v2391 = vsel %vm689, %v2384, 0
      %v2393 = vsel %vm689, %v2386, 0
      %v2395 = vsel %vm689, %v2388, 0
      %2397 = vmatprep.subr.mxu0 0.0
      %2398 = vmatpush1.xpose.msra.mxu0 %v2393
      %2399 = vmatprep.subr.mxu0 0.0
      %2400 = vmatpush1.xpose.msra.mxu0 %v2395
      %2401 = vmatprep.subr.mxu0 0.0
      %2402 = vmatpush1.xpose.msra.mxu0 0.0
      %2403 = vmatprep.subr.mxu0 0.0
      %2404 = vmatpush1.xpose.msra.mxu0 0.0
      %2405 = vmatprep.subr.mxu0 0.0
      %2406 = vmatpush1.xpose.msra.mxu0 0.0
      %2407 = vmatprep.subr.mxu0 0.0
      %2408 = vmatpush1.xpose.msra.mxu0 0.0
      %2409 = vmatprep.subr.mxu0 0.0
      %2410 = vmatpush1.xpose.msra.mxu0 0.0
      %2411 = vmatprep.subr.mxu0 0.0
      %2412 = vmatpush1.xpose.msra.mxu0 0.0
      %2413 = vmatprep.subr.mxu0 0.0
      %2414 = vmatpush1.xpose.msra.mxu0 0.0
      %2415 = vmatprep.subr.mxu0 0.0
      %2416 = vmatpush1.xpose.msra.mxu0 0.0
      %2417 = vmatprep.subr.mxu0 0.0
      %2418 = vmatpush1.xpose.msra.mxu0 0.0
      %2419 = vmatprep.subr.mxu0 0.0
      %2420 = vmatpush1.xpose.msra.mxu0 0.0
      %2421 = vmatprep.subr.mxu0 0.0
      %2422 = vmatpush1.xpose.msra.mxu0 0.0
      %2423 = vmatprep.subr.mxu0 0.0
      %2424 = vmatpush1.xpose.msra.mxu0 0.0
      %2425 = vmatprep.subr.mxu0 0.0
      %2426 = vmatpush1.xpose.msra.mxu0 0.0
      %2427 = vmatprep.subr.mxu0 0.0
      %2428 = vmatpush1.xpose.msra.mxu0 0.0
      %2429 = vmatprep.subr.mxu0 0.0
      %2430 = vmatpush1.xpose.msra.mxu0 0.0
      %2431 = vmatprep.subr.mxu0 0.0
      %2432 = vmatpush1.xpose.msra.mxu0 0.0
      %2433 = vmatprep.subr.mxu0 0.0
      %2434 = vmatpush1.xpose.msra.mxu0 0.0
      %2435 = vmatprep.subr.mxu0 0.0
      %2436 = vmatpush1.xpose.msra.mxu0 0.0
      %2437 = vmatprep.subr.mxu0 0.0
      %2438 = vmatpush1.xpose.msra.mxu0 0.0
      %2439 = vmatprep.subr.mxu0 0.0
      %2440 = vmatpush1.xpose.msra.mxu0 0.0
      %2441 = vmatprep.subr.mxu0 0.0
      %2442 = vmatpush1.xpose.msra.mxu0 0.0
      %2443 = vmatprep.subr.mxu0 0.0
      %2444 = vmatpush1.xpose.msra.mxu0 0.0
      %2445 = vmatprep.subr.mxu0 0.0
      %2446 = vmatpush1.xpose.msra.mxu0 0.0
      %2447 = vmatprep.subr.mxu0 0.0
      %2448 = vmatpush1.xpose.msra.mxu0 0.0
      %2449 = vmatprep.subr.mxu0 0.0
      %2450 = vmatpush1.xpose.msra.mxu0 0.0
      %2451 = vmatprep.subr.mxu0 0.0
      %2452 = vmatpush1.xpose.msra.mxu0 0.0
      %2453 = vmatprep.subr.mxu0 0.0
      %2454 = vmatpush1.xpose.msra.mxu0 0.0
      %2455 = vmatprep.subr.mxu0 0.0
      %2456 = vmatpush1.xpose.msra.mxu0 0.0
      %2457 = vmatprep.subr.mxu0 0.0
      %2458 = vmatpush1.xpose.msra.mxu0 0.0
      %2459 = vmatprep.subr.mxu0 0.0
      %2460 = vmatpush1.xpose.msra.mxu0 0.0
      %2461 = vmatprep.mubr.f32.mxu0 0.0
      %2462 = vmatmul.mubr.f32.gmra.mrb[0].mxu0 %v2389
      %v2463 = vpop.f32.mrb[0].mxu0
      %v2464 = vadd.f32 0.0, %v2463
      %v2465 = vpop.f32.mrb[0].mxu0
      %2466 = vmatprep.mubr.f32.mxu0 0.0
      %2467 = vmatmul.mubr.f32.gmra.mrb[0].mxu0 %v2391
      %v2468 = vpop.f32.mrb[0].mxu0
      %v2469 = vadd.f32 0.0, %v2468
      %v2470 = vpop.f32.mrb[0].mxu0
      %2471 = vdwg.mxu0
      %v2472 = vsel %vm777, %v2464, -inf
      %2473 = vmax.xlane.f32.xlu0 %v2472
      %v2474 = vpop.xlane.xlu0 %2473
      %v2475 = vsel %vm777, %v2469, -inf
      %2476 = vmax.xlane.f32.xlu0 %v2475
      %v2477 = vpop.xlane.xlu0 %2476
      %v2478 = vsub.f32 %v2464, %v2474
      %v2479 = vsub.f32 %v2469, %v2477
      %v2480 = vmul.f32 %v2478, 1.442695
      %v2481 = vpow.pop %v2480
      %v2482 = vmul.f32 %v2479, 1.442695
      %v2483 = vpow.pop %v2482
      %v2484 = vsel %vm777, %v2481, 0.0
      %2485 = vadd.xlane.f32.xlu0 %v2484
      %v2486 = vpop.xlane.xlu0 %2485
      %v2487 = vsel %vm777, %v2483, 0.0
      %2488 = vadd.xlane.f32.xlu0 %v2487
      %v2489 = vpop.xlane.xlu0 %2488
      %v2490 = vrcp.pop %v2486
      %v2491 = vrcp.pop %v2489
      %v2492 = vmul.f32 %v2481, %v2490
      %v2493 = vmul.f32 %v2483, %v2491
      %2494 = vrot.lane.b32.xlu0 %v681, 16
      %v2495 = vpop.permute.xlu0 %2494
      %2496 = vrot.lane.b32.xlu0 %v684, 16
      %v2497 = vpop.permute.xlu0 %2496
      %v2501 = vsel %vm777, %v2492, 0
      %v2504 = vsel %vm777, %v2493, 0
      %2506 = vmatprep.subr.mxu0 0.0
      %2507 = vmatpush1.msra.mxu0 %v2495
      %2508 = vmatprep.subr.mxu0 0.0
      %2509 = vmatpush1.msra.mxu0 %v2497
      %2510 = vmatprep.subr.mxu0 0.0
      %2511 = vmatpush1.msra.mxu0 0.0
      %2512 = vmatprep.subr.mxu0 0.0
      %2513 = vmatpush1.msra.mxu0 0.0
      %2514 = vmatprep.subr.mxu0 0.0
      %2515 = vmatpush1.msra.mxu0 0.0
      %2516 = vmatprep.subr.mxu0 0.0
      %2517 = vmatpush1.msra.mxu0 0.0
      %2518 = vmatprep.subr.mxu0 0.0
      %2519 = vmatpush1.msra.mxu0 0.0
      %2520 = vmatprep.subr.mxu0 0.0
      %2521 = vmatpush1.msra.mxu0 0.0
      %2522 = vmatprep.subr.mxu0 0.0
      %2523 = vmatpush1.msra.mxu0 0.0
      %2524 = vmatprep.subr.mxu0 0.0
      %2525 = vmatpush1.msra.mxu0 0.0
      %2526 = vmatprep.subr.mxu0 0.0
      %2527 = vmatpush1.msra.mxu0 0.0
      %2528 = vmatprep.subr.mxu0 0.0
      %2529 = vmatpush1.msra.mxu0 0.0
      %2530 = vmatprep.subr.mxu0 0.0
      %2531 = vmatpush1.msra.mxu0 0.0
      %2532 = vmatprep.subr.mxu0 0.0
      %2533 = vmatpush1.msra.mxu0 0.0
      %2534 = vmatprep.subr.mxu0 0.0
      %2535 = vmatpush1.msra.mxu0 0.0
      %2536 = vmatprep.subr.mxu0 0.0
      %2537 = vmatpush1.msra.mxu0 0.0
      %2538 = vmatprep.subr.mxu0 0.0
      %2539 = vmatpush1.msra.mxu0 0.0
      %2540 = vmatprep.subr.mxu0 0.0
      %2541 = vmatpush1.msra.mxu0 0.0
      %2542 = vmatprep.subr.mxu0 0.0
      %2543 = vmatpush1.msra.mxu0 0.0
      %2544 = vmatprep.subr.mxu0 0.0
      %2545 = vmatpush1.msra.mxu0 0.0
      %2546 = vmatprep.subr.mxu0 0.0
      %2547 = vmatpush1.msra.mxu0 0.0
      %2548 = vmatprep.subr.mxu0 0.0
      %2549 = vmatpush1.msra.mxu0 0.0
      %2550 = vmatprep.subr.mxu0 0.0
      %2551 = vmatpush1.msra.mxu0 0.0
      %2552 = vmatprep.subr.mxu0 0.0
      %2553 = vmatpush1.msra.mxu0 0.0
      %2554 = vmatprep.subr.mxu0 0.0
      %2555 = vmatpush1.msra.mxu0 0.0
      %2556 = vmatprep.subr.mxu0 0.0
      %2557 = vmatpush1.msra.mxu0 0.0
      %2558 = vmatprep.subr.mxu0 0.0
      %2559 = vmatpush1.msra.mxu0 0.0
      %2560 = vmatprep.subr.mxu0 0.0
      %2561 = vmatpush1.msra.mxu0 0.0
      %2562 = vmatprep.subr.mxu0 0.0
      %2563 = vmatpush1.msra.mxu0 0.0
      %2564 = vmatprep.subr.mxu0 0.0
      %2565 = vmatpush1.msra.mxu0 0.0
      %2566 = vmatprep.subr.mxu0 0.0
      %2567 = vmatpush1.msra.mxu0 0.0
      %2568 = vmatprep.subr.mxu0 0.0
      %2569 = vmatpush1.msra.mxu0 0.0
      %2570 = vmatprep.mubr.f32.mxu0 0.0
      %2571 = vmatmul.mubr.f32.gmra.mrb[0].mxu0 %v2501
      %v2572 = vpop.f32.mrb[0].mxu0
      %v2573 = vadd.f32 0.0, %v2572
      %v2574 = vpop.f32.mrb[0].mxu0
      %2575 = vmatprep.mubr.f32.mxu0 0.0
      %2576 = vmatmul.mubr.f32.gmra.mrb[0].mxu0 %v2504
      %v2577 = vpop.f32.mrb[0].mxu0
      %v2578 = vadd.f32 0.0, %v2577
      %v2579 = vpop.f32.mrb[0].mxu0
      %2580 = vdwg.mxu0
      %v2582 = vsel %vm689, %v2573, 0
      %v2585 = vsel %vm689, %v2578, 0
      %2587 = vmatprep.subr.mxu0 0.0
      %2588 = vmatpush1.msra.mxu0 %v571
      %2589 = vmatprep.subr.mxu0 0.0
      %2590 = vmatpush1.msra.mxu0 0.0
      %2591 = vmatprep.subr.mxu0 0.0
      %2592 = vmatpush1.msra.mxu0 0.0
      %2593 = vmatprep.subr.mxu0 0.0
      %2594 = vmatpush1.msra.mxu0 0.0
      %2595 = vmatprep.subr.mxu0 0.0
      %2596 = vmatpush1.msra.mxu0 0.0
      %2597 = vmatprep.subr.mxu0 0.0
      %2598 = vmatpush1.msra.mxu0 0.0
      %2599 = vmatprep.subr.mxu0 0.0
      %2600 = vmatpush1.msra.mxu0 0.0
      %2601 = vmatprep.subr.mxu0 0.0
      %2602 = vmatpush1.msra.mxu0 0.0
      %2603 = vmatprep.subr.mxu0 0.0
      %2604 = vmatpush1.msra.mxu0 0.0
      %2605 = vmatprep.subr.mxu0 0.0
      %2606 = vmatpush1.msra.mxu0 0.0
      %2607 = vmatprep.subr.mxu0 0.0
      %2608 = vmatpush1.msra.mxu0 0.0
      %2609 = vmatprep.subr.mxu0 0.0
      %2610 = vmatpush1.msra.mxu0 0.0
      %2611 = vmatprep.subr.mxu0 0.0
      %2612 = vmatpush1.msra.mxu0 0.0
      %2613 = vmatprep.subr.mxu0 0.0
      %2614 = vmatpush1.msra.mxu0 0.0
      %2615 = vmatprep.subr.mxu0 0.0
      %2616 = vmatpush1.msra.mxu0 0.0
      %2617 = vmatprep.subr.mxu0 0.0
      %2618 = vmatpush1.msra.mxu0 0.0
      %2619 = vmatprep.subr.mxu0 0.0
      %2620 = vmatpush1.msra.mxu0 0.0
      %2621 = vmatprep.subr.mxu0 0.0
      %2622 = vmatpush1.msra.mxu0 0.0
      %2623 = vmatprep.subr.mxu0 0.0
      %2624 = vmatpush1.msra.mxu0 0.0
      %2625 = vmatprep.subr.mxu0 0.0
      %2626 = vmatpush1.msra.mxu0 0.0
      %2627 = vmatprep.subr.mxu0 0.0
      %2628 = vmatpush1.msra.mxu0 0.0
      %2629 = vmatprep.subr.mxu0 0.0
      %2630 = vmatpush1.msra.mxu0 0.0
      %2631 = vmatprep.subr.mxu0 0.0
      %2632 = vmatpush1.msra.mxu0 0.0
      %2633 = vmatprep.subr.mxu0 0.0
      %2634 = vmatpush1.msra.mxu0 0.0
      %2635 = vmatprep.subr.mxu0 0.0
      %2636 = vmatpush1.msra.mxu0 0.0
      %2637 = vmatprep.subr.mxu0 0.0
      %2638 = vmatpush1.msra.mxu0 0.0
      %2639 = vmatprep.subr.mxu0 0.0
      %2640 = vmatpush1.msra.mxu0 0.0
      %2641 = vmatprep.subr.mxu0 0.0
      %2642 = vmatpush1.msra.mxu0 0.0
      %2643 = vmatprep.subr.mxu0 0.0
      %2644 = vmatpush1.msra.mxu0 0.0
      %2645 = vmatprep.subr.mxu0 0.0
      %2646 = vmatpush1.msra.mxu0 0.0
      %2647 = vmatprep.subr.mxu0 0.0
      %2648 = vmatpush1.msra.mxu0 0.0
      %2649 = vmatprep.subr.mxu0 0.0
      %2650 = vmatpush1.msra.mxu0 0.0
      %2651 = vmatprep.mubr.f32.mxu0 0.0
      %2652 = vmatmul.mubr.f32.gmra.mrb[0].mxu0 %v2582
      %v2653 = vpop.f32.mrb[0].mxu0
      %v2654 = vadd.f32 0.0, %v2653
      %v2655 = vpop.f32.mrb[0].mxu0
      %2656 = vmatprep.mubr.f32.mxu0 0.0
      %2657 = vmatmul.mubr.f32.gmra.mrb[0].mxu0 %v2585
      %v2658 = vpop.f32.mrb[0].mxu0
      %v2659 = vadd.f32 0.0, %v2658
      %v2660 = vpop.f32.mrb[0].mxu0
      %2661 = vdwg.mxu0
      %v2662 = vadd.f32 %v2379, %v2654
      %v2663 = vadd.f32 %v2380, %v2659
      %2664 = vrot.lane.b32.xlu0 %v687, 72
      %v2665 = vpop.permute.xlu0 %2664
      %2666 = vrot.lane.b32.xlu0 %v688, 72
      %v2667 = vpop.permute.xlu0 %2666
      %2668 = vrot.lane.b32.xlu0 %v681, 72
      %v2669 = vpop.permute.xlu0 %2668
      %2670 = vrot.lane.b32.xlu0 %v684, 72
      %v2671 = vpop.permute.xlu0 %2670
      %v2672 = vsel %vm689, %v2665, 0
      %v2674 = vsel %vm689, %v2667, 0
      %v2676 = vsel %vm689, %v2669, 0
      %v2678 = vsel %vm689, %v2671, 0
      %2680 = vmatprep.subr.mxu0 0.0
      %2681 = vmatpush1.xpose.msra.mxu0 %v2676
      %2682 = vmatprep.subr.mxu0 0.0
      %2683 = vmatpush1.xpose.msra.mxu0 %v2678
      %2684 = vmatprep.subr.mxu0 0.0
      %2685 = vmatpush1.xpose.msra.mxu0 0.0
      %2686 = vmatprep.subr.mxu0 0.0
      %2687 = vmatpush1.xpose.msra.mxu0 0.0
      %2688 = vmatprep.subr.mxu0 0.0
      %2689 = vmatpush1.xpose.msra.mxu0 0.0
      %2690 = vmatprep.subr.mxu0 0.0
      %2691 = vmatpush1.xpose.msra.mxu0 0.0
      %2692 = vmatprep.subr.mxu0 0.0
      %2693 = vmatpush1.xpose.msra.mxu0 0.0
      %2694 = vmatprep.subr.mxu0 0.0
      %2695 = vmatpush1.xpose.msra.mxu0 0.0
      %2696 = vmatprep.subr.mxu0 0.0
      %2697 = vmatpush1.xpose.msra.mxu0 0.0
      %2698 = vmatprep.subr.mxu0 0.0
      %2699 = vmatpush1.xpose.msra.mxu0 0.0
      %2700 = vmatprep.subr.mxu0 0.0
      %2701 = vmatpush1.xpose.msra.mxu0 0.0
      %2702 = vmatprep.subr.mxu0 0.0
      %2703 = vmatpush1.xpose.msra.mxu0 0.0
      %2704 = vmatprep.subr.mxu0 0.0
      %2705 = vmatpush1.xpose.msra.mxu0 0.0
      %2706 = vmatprep.subr.mxu0 0.0
      %2707 = vmatpush1.xpose.msra.mxu0 0.0
      %2708 = vmatprep.subr.mxu0 0.0
      %2709 = vmatpush1.xpose.msra.mxu0 0.0
      %2710 = vmatprep.subr.mxu0 0.0
      %2711 = vmatpush1.xpose.msra.mxu0 0.0
      %2712 = vmatprep.subr.mxu0 0.0
      %2713 = vmatpush1.xpose.msra.mxu0 0.0
      %2714 = vmatprep.subr.mxu0 0.0
      %2715 = vmatpush1.xpose.msra.mxu0 0.0
      %2716 = vmatprep.subr.mxu0 0.0
      %2717 = vmatpush1.xpose.msra.mxu0 0.0
      %2718 = vmatprep.subr.mxu0 0.0
      %2719 = vmatpush1.xpose.msra.mxu0 0.0
      %2720 = vmatprep.subr.mxu0 0.0
      %2721 = vmatpush1.xpose.msra.mxu0 0.0
      %2722 = vmatprep.subr.mxu0 0.0
      %2723 = vmatpush1.xpose.msra.mxu0 0.0
      %2724 = vmatprep.subr.mxu0 0.0
      %2725 = vmatpush1.xpose.msra.mxu0 0.0
      %2726 = vmatprep.subr.mxu0 0.0
      %2727 = vmatpush1.xpose.msra.mxu0 0.0
      %2728 = vmatprep.subr.mxu0 0.0
      %2729 = vmatpush1.xpose.msra.mxu0 0.0
      %2730 = vmatprep.subr.mxu0 0.0
      %2731 = vmatpush1.xpose.msra.mxu0 0.0
      %2732 = vmatprep.subr.mxu0 0.0
      %2733 = vmatpush1.xpose.msra.mxu0 0.0
      %2734 = vmatprep.subr.mxu0 0.0
      %2735 = vmatpush1.xpose.msra.mxu0 0.0
      %2736 = vmatprep.subr.mxu0 0.0
      %2737 = vmatpush1.xpose.msra.mxu0 0.0
      %2738 = vmatprep.subr.mxu0 0.0
      %2739 = vmatpush1.xpose.msra.mxu0 0.0
      %2740 = vmatprep.subr.mxu0 0.0
      %2741 = vmatpush1.xpose.msra.mxu0 0.0
      %2742 = vmatprep.subr.mxu0 0.0
      %2743 = vmatpush1.xpose.msra.mxu0 0.0
      %2744 = vmatprep.mubr.f32.mxu0 0.0
      %2745 = vmatmul.mubr.f32.gmra.mrb[0].mxu0 %v2672
      %v2746 = vpop.f32.mrb[0].mxu0
      %v2747 = vadd.f32 0.0, %v2746
      %v2748 = vpop.f32.mrb[0].mxu0
      %2749 = vmatprep.mubr.f32.mxu0 0.0
      %2750 = vmatmul.mubr.f32.gmra.mrb[0].mxu0 %v2674
      %v2751 = vpop.f32.mrb[0].mxu0
      %v2752 = vadd.f32 0.0, %v2751
      %v2753 = vpop.f32.mrb[0].mxu0
      %2754 = vdwg.mxu0
      %v2755 = vsel %vm777, %v2747, -inf
      %2756 = vmax.xlane.f32.xlu0 %v2755
      %v2757 = vpop.xlane.xlu0 %2756
      %v2758 = vsel %vm777, %v2752, -inf
      %2759 = vmax.xlane.f32.xlu0 %v2758
      %v2760 = vpop.xlane.xlu0 %2759
      %v2761 = vsub.f32 %v2747, %v2757
      %v2762 = vsub.f32 %v2752, %v2760
      %v2763 = vmul.f32 %v2761, 1.442695
      %v2764 = vpow.pop %v2763
      %v2765 = vmul.f32 %v2762, 1.442695
      %v2766 = vpow.pop %v2765
      %v2767 = vsel %vm777, %v2764, 0.0
      %2768 = vadd.xlane.f32.xlu0 %v2767
      %v2769 = vpop.xlane.xlu0 %2768
      %v2770 = vsel %vm777, %v2766, 0.0
      %2771 = vadd.xlane.f32.xlu0 %v2770
      %v2772 = vpop.xlane.xlu0 %2771
      %v2773 = vrcp.pop %v2769
      %v2774 = vrcp.pop %v2772
      %v2775 = vmul.f32 %v2764, %v2773
      %v2776 = vmul.f32 %v2766, %v2774
      %2777 = vrot.lane.b32.xlu0 %v681, 8
      %v2778 = vpop.permute.xlu0 %2777
      %2779 = vrot.lane.b32.xlu0 %v684, 8
      %v2780 = vpop.permute.xlu0 %2779
      %v2784 = vsel %vm777, %v2775, 0
      %v2787 = vsel %vm777, %v2776, 0
      %2789 = vmatprep.subr.mxu0 0.0
      %2790 = vmatpush1.msra.mxu0 %v2778
      %2791 = vmatprep.subr.mxu0 0.0
      %2792 = vmatpush1.msra.mxu0 %v2780
      %2793 = vmatprep.subr.mxu0 0.0
      %2794 = vmatpush1.msra.mxu0 0.0
      %2795 = vmatprep.subr.mxu0 0.0
      %2796 = vmatpush1.msra.mxu0 0.0
      %2797 = vmatprep.subr.mxu0 0.0
      %2798 = vmatpush1.msra.mxu0 0.0
      %2799 = vmatprep.subr.mxu0 0.0
      %2800 = vmatpush1.msra.mxu0 0.0
      %2801 = vmatprep.subr.mxu0 0.0
      %2802 = vmatpush1.msra.mxu0 0.0
      %2803 = vmatprep.subr.mxu0 0.0
      %2804 = vmatpush1.msra.mxu0 0.0
      %2805 = vmatprep.subr.mxu0 0.0
      %2806 = vmatpush1.msra.mxu0 0.0
      %2807 = vmatprep.subr.mxu0 0.0
      %2808 = vmatpush1.msra.mxu0 0.0
      %2809 = vmatprep.subr.mxu0 0.0
      %2810 = vmatpush1.msra.mxu0 0.0
      %2811 = vmatprep.subr.mxu0 0.0
      %2812 = vmatpush1.msra.mxu0 0.0
      %2813 = vmatprep.subr.mxu0 0.0
      %2814 = vmatpush1.msra.mxu0 0.0
      %2815 = vmatprep.subr.mxu0 0.0
      %2816 = vmatpush1.msra.mxu0 0.0
      %2817 = vmatprep.subr.mxu0 0.0
      %2818 = vmatpush1.msra.mxu0 0.0
      %2819 = vmatprep.subr.mxu0 0.0
      %2820 = vmatpush1.msra.mxu0 0.0
      %2821 = vmatprep.subr.mxu0 0.0
      %2822 = vmatpush1.msra.mxu0 0.0
      %2823 = vmatprep.subr.mxu0 0.0
      %2824 = vmatpush1.msra.mxu0 0.0
      %2825 = vmatprep.subr.mxu0 0.0
      %2826 = vmatpush1.msra.mxu0 0.0
      %2827 = vmatprep.subr.mxu0 0.0
      %2828 = vmatpush1.msra.mxu0 0.0
      %2829 = vmatprep.subr.mxu0 0.0
      %2830 = vmatpush1.msra.mxu0 0.0
      %2831 = vmatprep.subr.mxu0 0.0
      %2832 = vmatpush1.msra.mxu0 0.0
      %2833 = vmatprep.subr.mxu0 0.0
      %2834 = vmatpush1.msra.mxu0 0.0
      %2835 = vmatprep.subr.mxu0 0.0
      %2836 = vmatpush1.msra.mxu0 0.0
      %2837 = vmatprep.subr.mxu0 0.0
      %2838 = vmatpush1.msra.mxu0 0.0
      %2839 = vmatprep.subr.mxu0 0.0
      %2840 = vmatpush1.msra.mxu0 0.0
      %2841 = vmatprep.subr.mxu0 0.0
      %2842 = vmatpush1.msra.mxu0 0.0
      %2843 = vmatprep.subr.mxu0 0.0
      %2844 = vmatpush1.msra.mxu0 0.0
      %2845 = vmatprep.subr.mxu0 0.0
      %2846 = vmatpush1.msra.mxu0 0.0
      %2847 = vmatprep.subr.mxu0 0.0
      %2848 = vmatpush1.msra.mxu0 0.0
      %2849 = vmatprep.subr.mxu0 0.0
      %2850 = vmatpush1.msra.mxu0 0.0
      %2851 = vmatprep.subr.mxu0 0.0
      %2852 = vmatpush1.msra.mxu0 0.0
      %2853 = vmatprep.mubr.f32.mxu0 0.0
      %2854 = vmatmul.mubr.f32.gmra.mrb[0].mxu0 %v2784
      %v2855 = vpop.f32.mrb[0].mxu0
      %v2856 = vadd.f32 0.0, %v2855
      %v2857 = vpop.f32.mrb[0].mxu0
      %2858 = vmatprep.mubr.f32.mxu0 0.0
      %2859 = vmatmul.mubr.f32.gmra.mrb[0].mxu0 %v2787
      %v2860 = vpop.f32.mrb[0].mxu0
      %v2861 = vadd.f32 0.0, %v2860
      %v2862 = vpop.f32.mrb[0].mxu0
      %2863 = vdwg.mxu0
      %v2865 = vsel %vm689, %v2856, 0
      %v2868 = vsel %vm689, %v2861, 0
      %2870 = vmatprep.subr.mxu0 0.0
      %2871 = vmatpush1.msra.mxu0 %v572
      %2872 = vmatprep.subr.mxu0 0.0
      %2873 = vmatpush1.msra.mxu0 0.0
      %2874 = vmatprep.subr.mxu0 0.0
      %2875 = vmatpush1.msra.mxu0 0.0
      %2876 = vmatprep.subr.mxu0 0.0
      %2877 = vmatpush1.msra.mxu0 0.0
      %2878 = vmatprep.subr.mxu0 0.0
      %2879 = vmatpush1.msra.mxu0 0.0
      %2880 = vmatprep.subr.mxu0 0.0
      %2881 = vmatpush1.msra.mxu0 0.0
      %2882 = vmatprep.subr.mxu0 0.0
      %2883 = vmatpush1.msra.mxu0 0.0
      %2884 = vmatprep.subr.mxu0 0.0
      %2885 = vmatpush1.msra.mxu0 0.0
      %2886 = vmatprep.subr.mxu0 0.0
      %2887 = vmatpush1.msra.mxu0 0.0
      %2888 = vmatprep.subr.mxu0 0.0
      %2889 = vmatpush1.msra.mxu0 0.0
      %2890 = vmatprep.subr.mxu0 0.0
      %2891 = vmatpush1.msra.mxu0 0.0
      %2892 = vmatprep.subr.mxu0 0.0
      %2893 = vmatpush1.msra.mxu0 0.0
      %2894 = vmatprep.subr.mxu0 0.0
      %2895 = vmatpush1.msra.mxu0 0.0
      %2896 = vmatprep.subr.mxu0 0.0
      %2897 = vmatpush1.msra.mxu0 0.0
      %2898 = vmatprep.subr.mxu0 0.0
      %2899 = vmatpush1.msra.mxu0 0.0
      %2900 = vmatprep.subr.mxu0 0.0
      %2901 = vmatpush1.msra.mxu0 0.0
      %2902 = vmatprep.subr.mxu0 0.0
      %2903 = vmatpush1.msra.mxu0 0.0
      %2904 = vmatprep.subr.mxu0 0.0
      %2905 = vmatpush1.msra.mxu0 0.0
      %2906 = vmatprep.subr.mxu0 0.0
      %2907 = vmatpush1.msra.mxu0 0.0
      %2908 = vmatprep.subr.mxu0 0.0
      %2909 = vmatpush1.msra.mxu0 0.0
      %2910 = vmatprep.subr.mxu0 0.0
      %2911 = vmatpush1.msra.mxu0 0.0
      %2912 = vmatprep.subr.mxu0 0.0
      %2913 = vmatpush1.msra.mxu0 0.0
      %2914 = vmatprep.subr.mxu0 0.0
      %2915 = vmatpush1.msra.mxu0 0.0
      %2916 = vmatprep.subr.mxu0 0.0
      %2917 = vmatpush1.msra.mxu0 0.0
      %2918 = vmatprep.subr.mxu0 0.0
      %2919 = vmatpush1.msra.mxu0 0.0
      %2920 = vmatprep.subr.mxu0 0.0
      %2921 = vmatpush1.msra.mxu0 0.0
      %2922 = vmatprep.subr.mxu0 0.0
      %2923 = vmatpush1.msra.mxu0 0.0
      %2924 = vmatprep.subr.mxu0 0.0
      %2925 = vmatpush1.msra.mxu0 0.0
      %2926 = vmatprep.subr.mxu0 0.0
      %2927 = vmatpush1.msra.mxu0 0.0
      %2928 = vmatprep.subr.mxu0 0.0
      %2929 = vmatpush1.msra.mxu0 0.0
      %2930 = vmatprep.subr.mxu0 0.0
      %2931 = vmatpush1.msra.mxu0 0.0
      %2932 = vmatprep.subr.mxu0 0.0
      %2933 = vmatpush1.msra.mxu0 0.0
      %2934 = vmatprep.mubr.f32.mxu0 0.0
      %2935 = vmatmul.mubr.f32.gmra.mrb[0].mxu0 %v2865
      %v2936 = vpop.f32.mrb[0].mxu0
      %v2937 = vadd.f32 0.0, %v2936
      %v2938 = vpop.f32.mrb[0].mxu0
      %2939 = vmatprep.mubr.f32.mxu0 0.0
      %2940 = vmatmul.mubr.f32.gmra.mrb[0].mxu0 %v2868
      %v2941 = vpop.f32.mrb[0].mxu0
      %v2942 = vadd.f32 0.0, %v2941
      %v2943 = vpop.f32.mrb[0].mxu0
      %2944 = vdwg.mxu0
      %v2945 = vadd.f32 %v2662, %v2937
      %v2946 = vadd.f32 %v2663, %v2942
      %v2948 = vlaneseq
      %v2949 = vshrl.u32 %v2948, 7
      %v2950 = vsub.s32 0, %v2949
      %v2951 = vrot.slane %v573, %v2950
      %v2953 = vadd.f32 %v2945, %v2951
      %v2954 = vadd.f32 %v2946, %v2951
      %v2955 = vadd.f32 %v543, %v2953
      %v2956 = vadd.f32 %v544, %v2954
      %v2957 = vsel %vm587, %v2955, 0.0
      %2958 = vadd.xlane.f32.xlu0 %v2957
      %v2959 = vpop.xlane.xlu0 %2958
      %v2960 = vsel %vm587, %v2956, 0.0
      %2961 = vadd.xlane.f32.xlu0 %v2960
      %v2962 = vpop.xlane.xlu0 %2961
      %v2963 = vrcp.pop 64.0
      %v2964 = vmul.f32 %v2959, %v2963
      %v2965 = vmul.f32 %v2962, %v2963
      %v2966 = vsub.f32 %v2955, %v2964
      %v2967 = vsub.f32 %v2956, %v2965
      %v2968 = vmul.f32 %v2966, %v2966
      %v2969 = vmul.f32 %v2967, %v2967
      %v2970 = vsel %vm587, %v2968, 0.0
      %2971 = vadd.xlane.f32.xlu0 %v2970
      %v2972 = vpop.xlane.xlu0 %2971
      %v2973 = vsel %vm587, %v2969, 0.0
      %2974 = vadd.xlane.f32.xlu0 %v2973
      %v2975 = vpop.xlane.xlu0 %2974
      %v2976 = vmul.f32 %v2972, %v2963
      %v2977 = vmul.f32 %v2975, %v2963
      %v2978 = vadd.f32 %v2976, 1e-05
      %v2979 = vadd.f32 %v2977, 1e-05
      %v2980 = vrsqrt.pop %v2978
      %v2981 = vrsqrt.pop %v2979
      %v2982 = vmul.f32 %v2966, %v2980
      %v2983 = vmul.f32 %v2967, %v2981
      %v2985 = vlaneseq
      %v2986 = vshrl.u32 %v2985, 7
      %v2987 = vsub.s32 0, %v2986
      %v2988 = vrot.slane %v574, %v2987
      %v2990 = vmul.f32 %v2982, %v2988
      %v2991 = vmul.f32 %v2983, %v2988
      %v2993 = vlaneseq
      %v2994 = vshrl.u32 %v2993, 7
      %v2995 = vsub.s32 0, %v2994
      %v2996 = vrot.slane %v575, %v2995
      %v2998 = vadd.f32 %v2990, %v2996
      %v2999 = vadd.f32 %v2991, %v2996
      %v3000 = vpack.c.bf16 %v2999, %v2998
      %v3001 = vld [vmem:[%s10] sm:$0xff]
      %v3002 = vld [vmem:[%s10 + $0x8] sm:$0xff]
      %v3003 = vld [vmem:[%s10 + $0x10] sm:$0xff]
      %v3004 = vld [vmem:[%s10 + $0x18] sm:$0xff]
      %v3005 = vld [vmem:[%s10 + $0x20] sm:$0xff]
      %v3006 = vld [vmem:[%s10 + $0x28] sm:$0xff]
      %v3007 = vld [vmem:[%s10 + $0x30] sm:$0xff]
      %v3008 = vld [vmem:[%s10 + $0x38] sm:$0xff]
      %v3009 = vpack.c.bf16 %v3002, %v3001
      %v3010 = vpack.c.bf16 %v3004, %v3003
      %v3011 = vpack.c.bf16 %v3006, %v3005
      %v3012 = vpack.c.bf16 %v3008, %v3007
      %v3013 = vld [vmem:[%s11] sm:$0x1]
      %v3015 = vlaneseq
      %v3016 = vshrl.u32 %v3015, 7
      %v3017 = vsub.s32 0, %v3016
      %v3018 = vrot.slane %v3013, %v3017
      %v3021 = vsel %vm587, %v3000, 0
      %3023 = vmatprep.subr.bf16.mxu0 0
      %3024 = vmatpush1.bf16.msra.mxu0 %v3009
      %3025 = vmatprep.subr.bf16.mxu0 0
      %3026 = vmatpush1.bf16.msra.mxu0 %v3010
      %3027 = vmatprep.subr.bf16.mxu0 0
      %3028 = vmatpush1.bf16.msra.mxu0 %v3011
      %3029 = vmatprep.subr.bf16.mxu0 0
      %3030 = vmatpush1.bf16.msra.mxu0 %v3012
      %3031 = vmatprep.subr.bf16.mxu0 0
      %3032 = vmatpush1.bf16.msra.mxu0 0
      %3033 = vmatprep.subr.bf16.mxu0 0
      %3034 = vmatpush1.bf16.msra.mxu0 0
      %3035 = vmatprep.subr.bf16.mxu0 0
      %3036 = vmatpush1.bf16.msra.mxu0 0
      %3037 = vmatprep.subr.bf16.mxu0 0
      %3038 = vmatpush1.bf16.msra.mxu0 0
      %3039 = vmatprep.subr.bf16.mxu0 0
      %3040 = vmatpush1.bf16.msra.mxu0 0
      %3041 = vmatprep.subr.bf16.mxu0 0
      %3042 = vmatpush1.bf16.msra.mxu0 0
      %3043 = vmatprep.subr.bf16.mxu0 0
      %3044 = vmatpush1.bf16.msra.mxu0 0
      %3045 = vmatprep.subr.bf16.mxu0 0
      %3046 = vmatpush1.bf16.msra.mxu0 0
      %3047 = vmatprep.subr.bf16.mxu0 0
      %3048 = vmatpush1.bf16.msra.mxu0 0
      %3049 = vmatprep.subr.bf16.mxu0 0
      %3050 = vmatpush1.bf16.msra.mxu0 0
      %3051 = vmatprep.subr.bf16.mxu0 0
      %3052 = vmatpush1.bf16.msra.mxu0 0
      %3053 = vmatprep.subr.bf16.mxu0 0
      %3054 = vmatpush1.bf16.msra.mxu0 0
      %3055 = vmatprep.mubr.bf16.mxu0 0
      %3056 = vmatmul.mubr.bf16.gmra.mrb[0].mxu0 %v3021
      %v3057 = vpop.f32.mrb[0].mxu0
      %v3058 = vadd.f32 %v3018, %v3057
      %v3059 = vpop.f32.mrb[0].mxu0
      %v3060 = vpop.f32.mrb[0].mxu0
      %v3061 = vadd.f32 %v3018, %v3060
      %v3062 = vpop.f32.mrb[0].mxu0
      %3063 = vdwg.mxu0
      %v3064 = vmax.f32 %v3058, 0.0
      %v3065 = vmax.f32 %v3061, 0.0
      %v3066 = vpack.c.bf16 %v3065, %v3064
      %v3067 = vld [vmem:[%s12] sm:$0xff]
      %v3068 = vld [vmem:[%s12 + $0x8] sm:$0xff]
      %v3069 = vld [vmem:[%s12 + $0x10] sm:$0xff]
      %v3070 = vld [vmem:[%s12 + $0x18] sm:$0xff]
      %v3071 = vld [vmem:[%s12 + $0x20] sm:$0xff]
      %v3072 = vld [vmem:[%s12 + $0x28] sm:$0xff]
      %v3073 = vld [vmem:[%s12 + $0x30] sm:$0xff]
      %v3074 = vld [vmem:[%s12 + $0x38] sm:$0xff]
      %v3075 = vld [vmem:[%s12 + $0x40] sm:$0xff]
      %v3076 = vld [vmem:[%s12 + $0x48] sm:$0xff]
      %v3077 = vld [vmem:[%s12 + $0x50] sm:$0xff]
      %v3078 = vld [vmem:[%s12 + $0x58] sm:$0xff]
      %v3079 = vld [vmem:[%s12 + $0x60] sm:$0xff]
      %v3080 = vld [vmem:[%s12 + $0x68] sm:$0xff]
      %v3081 = vld [vmem:[%s12 + $0x70] sm:$0xff]
      %v3082 = vld [vmem:[%s12 + $0x78] sm:$0xff]
      %v3083 = vpack.c.bf16 %v3068, %v3067
      %v3084 = vpack.c.bf16 %v3070, %v3069
      %v3085 = vpack.c.bf16 %v3072, %v3071
      %v3086 = vpack.c.bf16 %v3074, %v3073
      %v3087 = vpack.c.bf16 %v3076, %v3075
      %v3088 = vpack.c.bf16 %v3078, %v3077
      %v3089 = vpack.c.bf16 %v3080, %v3079
      %v3090 = vpack.c.bf16 %v3082, %v3081
      %v3091 = vld [vmem:[%s13] sm:$0x1]
      %v3093 = vlaneseq
      %v3094 = vshrl.u32 %v3093, 7
      %v3095 = vsub.s32 0, %v3094
      %v3096 = vrot.slane %v3091, %v3095
      %3098 = vmatprep.subr.bf16.mxu0 0
      %3099 = vmatpush1.bf16.msra.mxu0 %v3083
      %3100 = vmatprep.subr.bf16.mxu0 0
      %3101 = vmatpush1.bf16.msra.mxu0 %v3084
      %3102 = vmatprep.subr.bf16.mxu0 0
      %3103 = vmatpush1.bf16.msra.mxu0 %v3085
      %3104 = vmatprep.subr.bf16.mxu0 0
      %3105 = vmatpush1.bf16.msra.mxu0 %v3086
      %3106 = vmatprep.subr.bf16.mxu0 0
      %3107 = vmatpush1.bf16.msra.mxu0 %v3087
      %3108 = vmatprep.subr.bf16.mxu0 0
      %3109 = vmatpush1.bf16.msra.mxu0 %v3088
      %3110 = vmatprep.subr.bf16.mxu0 0
      %3111 = vmatpush1.bf16.msra.mxu0 %v3089
      %3112 = vmatprep.subr.bf16.mxu0 0
      %3113 = vmatpush1.bf16.msra.mxu0 %v3090
      %3114 = vmatprep.subr.bf16.mxu0 0
      %3115 = vmatpush1.bf16.msra.mxu0 0
      %3116 = vmatprep.subr.bf16.mxu0 0
      %3117 = vmatpush1.bf16.msra.mxu0 0
      %3118 = vmatprep.subr.bf16.mxu0 0
      %3119 = vmatpush1.bf16.msra.mxu0 0
      %3120 = vmatprep.subr.bf16.mxu0 0
      %3121 = vmatpush1.bf16.msra.mxu0 0
      %3122 = vmatprep.subr.bf16.mxu0 0
      %3123 = vmatpush1.bf16.msra.mxu0 0
      %3124 = vmatprep.subr.bf16.mxu0 0
      %3125 = vmatpush1.bf16.msra.mxu0 0
      %3126 = vmatprep.subr.bf16.mxu0 0
      %3127 = vmatpush1.bf16.msra.mxu0 0
      %3128 = vmatprep.subr.bf16.mxu0 0
      %3129 = vmatpush1.bf16.msra.mxu0 0
      %3130 = vmatprep.mubr.bf16.mxu0 0
      %3131 = vmatmul.mubr.bf16.gmra.mrb[0].mxu0 %v3066
      %v3132 = vpop.f32.mrb[0].mxu0
      %v3133 = vadd.f32 %v3096, %v3132
      %v3134 = vpop.f32.mrb[0].mxu0
      %v3135 = vpop.f32.mrb[0].mxu0
      %v3136 = vadd.f32 %v3096, %v3135
      %v3137 = vpop.f32.mrb[0].mxu0
      %3138 = vdwg.mxu0
      %v3139 = vadd.f32 %v2998, %v3133
      %v3140 = vadd.f32 %v2999, %v3136
      %v3141 = vld [vmem:[%s14] sm:$0x1]
      %v3142 = vld [vmem:[%s15] sm:$0x1]
      %v3143 = vsel %vm587, %v3139, 0.0
      %3144 = vadd.xlane.f32.xlu0 %v3143
      %v3145 = vpop.xlane.xlu0 %3144
      %v3146 = vsel %vm587, %v3140, 0.0
      %3147 = vadd.xlane.f32.xlu0 %v3146
      %v3148 = vpop.xlane.xlu0 %3147
      %v3149 = vmul.f32 %v3145, %v2963
      %v3150 = vmul.f32 %v3148, %v2963
      %v3151 = vsub.f32 %v3139, %v3149
      %v3152 = vsub.f32 %v3140, %v3150
      %v3153 = vmul.f32 %v3151, %v3151
      %v3154 = vmul.f32 %v3152, %v3152
      %v3155 = vsel %vm587, %v3153, 0.0
      %3156 = vadd.xlane.f32.xlu0 %v3155
      %v3157 = vpop.xlane.xlu0 %3156
      %v3158 = vsel %vm587, %v3154, 0.0
      %3159 = vadd.xlane.f32.xlu0 %v3158
      %v3160 = vpop.xlane.xlu0 %3159
      %v3161 = vmul.f32 %v3157, %v2963
      %v3162 = vmul.f32 %v3160, %v2963
      %v3163 = vadd.f32 %v3161, 1e-05
      %v3164 = vadd.f32 %v3162, 1e-05
      %v3165 = vrsqrt.pop %v3163
      %v3166 = vrsqrt.pop %v3164
      %v3167 = vmul.f32 %v3151, %v3165
      %v3168 = vmul.f32 %v3152, %v3166
      %v3170 = vlaneseq
      %v3171 = vshrl.u32 %v3170, 7
      %v3172 = vsub.s32 0, %v3171
      %v3173 = vrot.slane %v3141, %v3172
      %v3175 = vmul.f32 %v3167, %v3173
      %v3176 = vmul.f32 %v3168, %v3173
      %v3178 = vlaneseq
      %v3179 = vshrl.u32 %v3178, 7
      %v3180 = vsub.s32 0, %v3179
      %v3181 = vrot.slane %v3142, %v3180
      %v3183 = vadd.f32 %v3175, %v3181
      %v3184 = vadd.f32 %v3176, %v3181
      %3185 = vst.msk [vmem:[%s541] sm:$0xff] %vm587, %v3183
      %3186 = vst.msk [vmem:[%s541 + $0x8] sm:$0xff] %vm587, %v3184
      %p3187 = scmp.lt.s32.totalorder %s27, 1
      %s3188 = scalar_select %p3187, %s27, 1
      %s3189 = smul.addr %s3188, 2
      %s3190 = smul.addr %s3189, 8
      %s3191 = scalar_lea.vmem %s16, %s3190
      // Predicated region
      $region85: #{diff_encoder_fwd.11} parent=83 // pred_check
        %p3192 = pneg %p391
      $region86: #{diff_encoder_fwd.11} parent=83 // pred_check_branch
        %3194 = sbr.rel (%p3192) target = $region88
      $region87: #{diff_encoder_fwd.11} parent=83 // pred_region
        _
      $region88: #{diff_encoder_fwd.11} parent=83 // pred_fallthru
        _
    $region84: #{diff_encoder_fwd.11} parent=5 // pred_fallthru
      _
    %p3195 = scmp.le.s32.totalorder 2, %s22
    // Predicated region
    $region89: #{diff_encoder_fwd.11} parent=5 // pred_check
      %p3196 = pneg %p3195
    $region90: #{diff_encoder_fwd.11} parent=5 // pred_check_branch
      %3198 = sbr.rel (%p3196) target = $region92
    $region91: #{diff_encoder_fwd.11} parent=5 // pred_region
      %s3199 = ssub.s32 %s22, 2
      // Predicated region
      $region93: #{diff_encoder_fwd.11} parent=91 // pred_check
        %p3200 = pneg %p397
      $region94: #{diff_encoder_fwd.11} parent=91 // pred_check_branch
        %3202 = sbr.rel (%p3200) target = $region96
      $region95: #{diff_encoder_fwd.11} parent=91 // pred_region
        %p3203 = scmp.lt.s32.totalorder %s28, 1
        %s3204 = scalar_select %p3203, %s28, 1
        %s3205 = smul.addr %s3204, 2
        %s3206 = smul.addr %s3205, 8
        %s3207 = scalar_lea.vmem %s16, %s3206
      $region96: #{diff_encoder_fwd.11} parent=91 // pred_fallthru
        _
    $region92: #{diff_encoder_fwd.11} parent=5 // pred_fallthru
      _
  $region6: #{diff_encoder_fwd.11} parent=0 // loop_footer
    %s26 = sadd.s32 1, %s22
  $region7: #{diff_encoder_fwd.11} parent=0 // loop_footer_branch
    %21 = sbr.rel target = $region3
  $region8: #{diff_encoder_fwd.11} parent=0 // loop_exit
    _

// kernel: diff_encoder_fwd.12
$region0: #{diff_encoder_fwd.12}
  #allocation0 [shape = 'u32[]', space=smem, size = 0x4, offset = 0x4, fixed_abs, tag = 'smem constant byte address 0x4 - core index']
  #allocation1 [shape = 'u32[144,128]{1,0:T(1,128)}', space=vmem, size = 0x12000, scoped, tag = 'internal scratch']
  %s0 = inlined_call_operand.vmem [shape: f32[2,16,64], index: 0, kind: input, shape index: {}]
  %s1 = inlined_call_operand.vmem [shape: f32[2,16,64], index: 1, kind: input, shape index: {}]
  %s2 = inlined_call_operand.vmem [shape: f32[2,16,64], index: 2, kind: input, shape index: {}]
  %s3 = inlined_call_operand.vmem [shape: f32[64,64], index: 3, kind: input, shape index: {}]
  %s4 = inlined_call_operand.vmem [shape: f32[1,64], index: 4, kind: input, shape index: {}]
  %s5 = inlined_call_operand.vmem [shape: f32[64,128], index: 5, kind: input, shape index: {}]
  %s6 = inlined_call_operand.vmem [shape: f32[1,128], index: 6, kind: input, shape index: {}]
  %s7 = inlined_call_operand.vmem [shape: f32[64,64], index: 7, kind: input, shape index: {}]
  %s8 = inlined_call_operand.vmem [shape: f32[1,64], index: 8, kind: input, shape index: {}]
  %s9 = inlined_call_operand.vmem [shape: f32[1,64], index: 9, kind: input, shape index: {}]
  %s10 = inlined_call_operand.vmem [shape: f32[1,64], index: 10, kind: input, shape index: {}]
  %s11 = inlined_call_operand.vmem [shape: f32[2,16,64], index: 11, kind: output, shape index: {}]
  %s12 = sld [smem:[#allocation0]]
  $region77: #{diff_encoder_fwd.12} parent=0
    _
  %s14 = ssub.s32 1, %s12
  %s15 = scalar_select 0, %s14, %s12
  loop: start=0, step=1, limit=4
  $region2: #{diff_encoder_fwd.12} parent=0 // loop_pre_header
    _
  $region3: #{diff_encoder_fwd.12} parent=0 // loop_header
    %s17 = sphi 0, %s21
    %p18 = scmp.ge.s32.totalorder %s17, 4
    %s27 = sphi 0, %s29
    %s30 = sphi 0, %s27
    %s31 = sphi 0, %s30
    %s47 = sphi 0, %s31
    %s53 = sphi 0, %s55
    %s56 = sphi 0, %s53
    %s57 = sphi 0, %s56
    %s73 = sphi 0, %s57
    %s79 = sphi 0, %s81
    %s82 = sphi 0, %s79
    %s83 = sphi 0, %s82
    %s99 = sphi 0, %s83
    %s103 = sphi 0, %s103
    %s105 = sphi 0, %s103
    %s106 = sphi 0, %s105
    %s120 = sphi 0, %s106
    %s124 = sphi 0, %s124
    %s126 = sphi 0, %s124
    %s127 = sphi 0, %s126
    %s141 = sphi 0, %s127
    %s145 = sphi 0, %s145
    %s147 = sphi 0, %s145
    %s148 = sphi 0, %s147
    %s162 = sphi 0, %s148
    %s166 = sphi 0, %s166
    %s168 = sphi 0, %s166
    %s169 = sphi 0, %s168
    %s183 = sphi 0, %s169
    %s187 = sphi 0, %s187
    %s189 = sphi 0, %s187
    %s190 = sphi 0, %s189
    %s204 = sphi 0, %s190
    %s208 = sphi 0, %s208
    %s210 = sphi 0, %s208
    %s211 = sphi 0, %s210
    %s225 = sphi 0, %s211
    %s229 = sphi 0, %s229
    %s231 = sphi 0, %s229
    %s232 = sphi 0, %s231
    %s246 = sphi 0, %s232
    %s250 = sphi 0, %s250
    %s252 = sphi 0, %s250
    %s253 = sphi 0, %s252
    %s267 = sphi 0, %s253
    %s273 = sphi 0, %s275
    %s276 = sphi 0, %s273
    %s277 = sphi 0, %s276
    %s293 = sphi 0, %s277
  $region4: #{diff_encoder_fwd.12} parent=0 // loop_header_branch
    %20 = sbr.rel (%p18) target = $region8
  $region5: #{diff_encoder_fwd.12} parent=0 // loop_body
    %s22 = ssub.s32 %s17, 1
    %s23 = ssub.s32 %s17, 2
    %s24 = sadd.s32 %s17, 1
    %s25 = ssub.s32 %s17, %s24
    %p26 = scmp.eq.s32.totalorder %s25, 0
    %s28 = sadd.s32 %s27, 1
    %s29 = scalar_select %p26, %s27, %s28
    %p32 = pneg %p26
    %p33 = scmp.eq.s32.totalorder %s17, 1
    %p34 = por %p32, %p33
    %p35 = scmp.ne.s32.totalorder %s27, %s30
    %p36 = scmp.eq.s32.totalorder %s17, 0
    %p37 = por %p35, %p36
    %p38 = scmp.ne.s32.totalorder %s27, %s30
    %p39 = scmp.eq.s32.totalorder %s22, 1
    %p40 = por %p38, %p39
    %p41 = scmp.ne.s32.totalorder %s30, %s31
    %p42 = scmp.eq.s32.totalorder %s22, 0
    %p43 = por %p41, %p42
    %p44 = scmp.ne.s32.totalorder %s30, %s31
    %p45 = scmp.eq.s32.totalorder %s23, 1
    %p46 = por %p44, %p45
    %p48 = scmp.ne.s32.totalorder %s31, %s47
    %p49 = scmp.eq.s32.totalorder %s23, 0
    %p50 = por %p48, %p49
    %s51 = ssub.s32 %s17, %s24
    %p52 = scmp.eq.s32.totalorder %s51, 0
    %s54 = sadd.s32 %s53, 1
    %s55 = scalar_select %p52, %s53, %s54
    %p58 = pneg %p52
    %p59 = scmp.eq.s32.totalorder %s17, 1
    %p60 = por %p58, %p59
    %p61 = scmp.ne.s32.totalorder %s53, %s56
    %p62 = scmp.eq.s32.totalorder %s17, 0
    %p63 = por %p61, %p62
    %p64 = scmp.ne.s32.totalorder %s53, %s56
    %p65 = scmp.eq.s32.totalorder %s22, 1
    %p66 = por %p64, %p65
    %p67 = scmp.ne.s32.totalorder %s56, %s57
    %p68 = scmp.eq.s32.totalorder %s22, 0
    %p69 = por %p67, %p68
    %p70 = scmp.ne.s32.totalorder %s56, %s57
    %p71 = scmp.eq.s32.totalorder %s23, 1
    %p72 = por %p70, %p71
    %p74 = scmp.ne.s32.totalorder %s57, %s73
    %p75 = scmp.eq.s32.totalorder %s23, 0
    %p76 = por %p74, %p75
    %s77 = ssub.s32 %s17, %s24
    %p78 = scmp.eq.s32.totalorder %s77, 0
    %s80 = sadd.s32 %s79, 1
    %s81 = scalar_select %p78, %s79, %s80
    %p84 = pneg %p78
    %p85 = scmp.eq.s32.totalorder %s17, 1
    %p86 = por %p84, %p85
    %p87 = scmp.ne.s32.totalorder %s79, %s82
    %p88 = scmp.eq.s32.totalorder %s17, 0
    %p89 = por %p87, %p88
    %p90 = scmp.ne.s32.totalorder %s79, %s82
    %p91 = scmp.eq.s32.totalorder %s22, 1
    %p92 = por %p90, %p91
    %p93 = scmp.ne.s32.totalorder %s82, %s83
    %p94 = scmp.eq.s32.totalorder %s22, 0
    %p95 = por %p93, %p94
    %p96 = scmp.ne.s32.totalorder %s82, %s83
    %p97 = scmp.eq.s32.totalorder %s23, 1
    %p98 = por %p96, %p97
    %p100 = scmp.ne.s32.totalorder %s83, %s99
    %p101 = scmp.eq.s32.totalorder %s23, 0
    %p102 = por %p100, %p101
    %s104 = sadd.s32 %s103, 1
    %p107 = scmp.eq.s32.totalorder %s17, 1
    %p108 = scmp.ne.s32.totalorder %s103, %s105
    %p109 = scmp.eq.s32.totalorder %s17, 0
    %p110 = por %p108, %p109
    %p111 = scmp.ne.s32.totalorder %s103, %s105
    %p112 = scmp.eq.s32.totalorder %s22, 1
    %p113 = por %p111, %p112
    %p114 = scmp.ne.s32.totalorder %s105, %s106
    %p115 = scmp.eq.s32.totalorder %s22, 0
    %p116 = por %p114, %p115
    %p117 = scmp.ne.s32.totalorder %s105, %s106
    %p118 = scmp.eq.s32.totalorder %s23, 1
    %p119 = por %p117, %p118
    %p121 = scmp.ne.s32.totalorder %s106, %s120
    %p122 = scmp.eq.s32.totalorder %s23, 0
    %p123 = por %p121, %p122
    %s125 = sadd.s32 %s124, 1
    %p128 = scmp.eq.s32.totalorder %s17, 1
    %p129 = scmp.ne.s32.totalorder %s124, %s126
    %p130 = scmp.eq.s32.totalorder %s17, 0
    %p131 = por %p129, %p130
    %p132 = scmp.ne.s32.totalorder %s124, %s126
    %p133 = scmp.eq.s32.totalorder %s22, 1
    %p134 = por %p132, %p133
    %p135 = scmp.ne.s32.totalorder %s126, %s127
    %p136 = scmp.eq.s32.totalorder %s22, 0
    %p137 = por %p135, %p136
    %p138 = scmp.ne.s32.totalorder %s126, %s127
    %p139 = scmp.eq.s32.totalorder %s23, 1
    %p140 = por %p138, %p139
    %p142 = scmp.ne.s32.totalorder %s127, %s141
    %p143 = scmp.eq.s32.totalorder %s23, 0
    %p144 = por %p142, %p143
    %s146 = sadd.s32 %s145, 1
    %p149 = scmp.eq.s32.totalorder %s17, 1
    %p150 = scmp.ne.s32.totalorder %s145, %s147
    %p151 = scmp.eq.s32.totalorder %s17, 0
    %p152 = por %p150, %p151
    %p153 = scmp.ne.s32.totalorder %s145, %s147
    %p154 = scmp.eq.s32.totalorder %s22, 1
    %p155 = por %p153, %p154
    %p156 = scmp.ne.s32.totalorder %s147, %s148
    %p157 = scmp.eq.s32.totalorder %s22, 0
    %p158 = por %p156, %p157
    %p159 = scmp.ne.s32.totalorder %s147, %s148
    %p160 = scmp.eq.s32.totalorder %s23, 1
    %p161 = por %p159, %p160
    %p163 = scmp.ne.s32.totalorder %s148, %s162
    %p164 = scmp.eq.s32.totalorder %s23, 0
    %p165 = por %p163, %p164
    %s167 = sadd.s32 %s166, 1
    %p170 = scmp.eq.s32.totalorder %s17, 1
    %p171 = scmp.ne.s32.totalorder %s166, %s168
    %p172 = scmp.eq.s32.totalorder %s17, 0
    %p173 = por %p171, %p172
    %p174 = scmp.ne.s32.totalorder %s166, %s168
    %p175 = scmp.eq.s32.totalorder %s22, 1
    %p176 = por %p174, %p175
    %p177 = scmp.ne.s32.totalorder %s168, %s169
    %p178 = scmp.eq.s32.totalorder %s22, 0
    %p179 = por %p177, %p178
    %p180 = scmp.ne.s32.totalorder %s168, %s169
    %p181 = scmp.eq.s32.totalorder %s23, 1
    %p182 = por %p180, %p181
    %p184 = scmp.ne.s32.totalorder %s169, %s183
    %p185 = scmp.eq.s32.totalorder %s23, 0
    %p186 = por %p184, %p185
    %s188 = sadd.s32 %s187, 1
    %p191 = scmp.eq.s32.totalorder %s17, 1
    %p192 = scmp.ne.s32.totalorder %s187, %s189
    %p193 = scmp.eq.s32.totalorder %s17, 0
    %p194 = por %p192, %p193
    %p195 = scmp.ne.s32.totalorder %s187, %s189
    %p196 = scmp.eq.s32.totalorder %s22, 1
    %p197 = por %p195, %p196
    %p198 = scmp.ne.s32.totalorder %s189, %s190
    %p199 = scmp.eq.s32.totalorder %s22, 0
    %p200 = por %p198, %p199
    %p201 = scmp.ne.s32.totalorder %s189, %s190
    %p202 = scmp.eq.s32.totalorder %s23, 1
    %p203 = por %p201, %p202
    %p205 = scmp.ne.s32.totalorder %s190, %s204
    %p206 = scmp.eq.s32.totalorder %s23, 0
    %p207 = por %p205, %p206
    %s209 = sadd.s32 %s208, 1
    %p212 = scmp.eq.s32.totalorder %s17, 1
    %p213 = scmp.ne.s32.totalorder %s208, %s210
    %p214 = scmp.eq.s32.totalorder %s17, 0
    %p215 = por %p213, %p214
    %p216 = scmp.ne.s32.totalorder %s208, %s210
    %p217 = scmp.eq.s32.totalorder %s22, 1
    %p218 = por %p216, %p217
    %p219 = scmp.ne.s32.totalorder %s210, %s211
    %p220 = scmp.eq.s32.totalorder %s22, 0
    %p221 = por %p219, %p220
    %p222 = scmp.ne.s32.totalorder %s210, %s211
    %p223 = scmp.eq.s32.totalorder %s23, 1
    %p224 = por %p222, %p223
    %p226 = scmp.ne.s32.totalorder %s211, %s225
    %p227 = scmp.eq.s32.totalorder %s23, 0
    %p228 = por %p226, %p227
    %s230 = sadd.s32 %s229, 1
    %p233 = scmp.eq.s32.totalorder %s17, 1
    %p234 = scmp.ne.s32.totalorder %s229, %s231
    %p235 = scmp.eq.s32.totalorder %s17, 0
    %p236 = por %p234, %p235
    %p237 = scmp.ne.s32.totalorder %s229, %s231
    %p238 = scmp.eq.s32.totalorder %s22, 1
    %p239 = por %p237, %p238
    %p240 = scmp.ne.s32.totalorder %s231, %s232
    %p241 = scmp.eq.s32.totalorder %s22, 0
    %p242 = por %p240, %p241
    %p243 = scmp.ne.s32.totalorder %s231, %s232
    %p244 = scmp.eq.s32.totalorder %s23, 1
    %p245 = por %p243, %p244
    %p247 = scmp.ne.s32.totalorder %s232, %s246
    %p248 = scmp.eq.s32.totalorder %s23, 0
    %p249 = por %p247, %p248
    %s251 = sadd.s32 %s250, 1
    %p254 = scmp.eq.s32.totalorder %s17, 1
    %p255 = scmp.ne.s32.totalorder %s250, %s252
    %p256 = scmp.eq.s32.totalorder %s17, 0
    %p257 = por %p255, %p256
    %p258 = scmp.ne.s32.totalorder %s250, %s252
    %p259 = scmp.eq.s32.totalorder %s22, 1
    %p260 = por %p258, %p259
    %p261 = scmp.ne.s32.totalorder %s252, %s253
    %p262 = scmp.eq.s32.totalorder %s22, 0
    %p263 = por %p261, %p262
    %p264 = scmp.ne.s32.totalorder %s252, %s253
    %p265 = scmp.eq.s32.totalorder %s23, 1
    %p266 = por %p264, %p265
    %p268 = scmp.ne.s32.totalorder %s253, %s267
    %p269 = scmp.eq.s32.totalorder %s23, 0
    %p270 = por %p268, %p269
    %s271 = ssub.s32 %s17, %s24
    %p272 = scmp.eq.s32.totalorder %s271, 0
    %s274 = sadd.s32 %s273, 1
    %s275 = scalar_select %p272, %s273, %s274
    %p278 = pneg %p272
    %p279 = scmp.eq.s32.totalorder %s17, 1
    %p280 = por %p278, %p279
    %p281 = scmp.ne.s32.totalorder %s273, %s276
    %p282 = scmp.eq.s32.totalorder %s17, 0
    %p283 = por %p281, %p282
    %p284 = scmp.ne.s32.totalorder %s273, %s276
    %p285 = scmp.eq.s32.totalorder %s22, 1
    %p286 = por %p284, %p285
    %p287 = scmp.ne.s32.totalorder %s276, %s277
    %p288 = scmp.eq.s32.totalorder %s22, 0
    %p289 = por %p287, %p288
    %p290 = scmp.ne.s32.totalorder %s276, %s277
    %p291 = scmp.eq.s32.totalorder %s23, 1
    %p292 = por %p290, %p291
    %p294 = scmp.ne.s32.totalorder %s277, %s293
    %p295 = scmp.eq.s32.totalorder %s23, 0
    %p296 = por %p294, %p295
    %p297 = scmp.le.s32.totalorder 1, %s17
    %p298 = scmp.lt.s32.totalorder %s17, 3
    %p299 = pnand %p297, %p298
    %p300 = pneg %p299
    // Predicated region
    $region9: #{diff_encoder_fwd.12} parent=5 // pred_check
      _
    $region10: #{diff_encoder_fwd.12} parent=5 // pred_check_branch
      %302 = sbr.rel (%p299) target = $region12
    $region11: #{diff_encoder_fwd.12} parent=5 // pred_region
      %s303 = ssub.s32 %s17, 1
      // Predicated region
      $region13: #{diff_encoder_fwd.12} parent=11 // pred_check
        %p304 = pneg %p116
      $region14: #{diff_encoder_fwd.12} parent=11 // pred_check_branch
        %306 = sbr.rel (%p304) target = $region16
      $region15: #{diff_encoder_fwd.12} parent=11 // pred_region
        _
      $region16: #{diff_encoder_fwd.12} parent=11 // pred_fallthru
        _
      // Predicated region
      $region17: #{diff_encoder_fwd.12} parent=11 // pred_check
        %p307 = pneg %p137
      $region18: #{diff_encoder_fwd.12} parent=11 // pred_check_branch
        %309 = sbr.rel (%p307) target = $region20
      $region19: #{diff_encoder_fwd.12} parent=11 // pred_region
        _
      $region20: #{diff_encoder_fwd.12} parent=11 // pred_fallthru
        _
      // Predicated region
      $region21: #{diff_encoder_fwd.12} parent=11 // pred_check
        %p310 = pneg %p158
      $region22: #{diff_encoder_fwd.12} parent=11 // pred_check_branch
        %312 = sbr.rel (%p310) target = $region24
      $region23: #{diff_encoder_fwd.12} parent=11 // pred_region
        _
      $region24: #{diff_encoder_fwd.12} parent=11 // pred_fallthru
        _
      // Predicated region
      $region25: #{diff_encoder_fwd.12} parent=11 // pred_check
        %p313 = pneg %p179
      $region26: #{diff_encoder_fwd.12} parent=11 // pred_check_branch
        %315 = sbr.rel (%p313) target = $region28
      $region27: #{diff_encoder_fwd.12} parent=11 // pred_region
        _
      $region28: #{diff_encoder_fwd.12} parent=11 // pred_fallthru
        _
      // Predicated region
      $region29: #{diff_encoder_fwd.12} parent=11 // pred_check
        %p316 = pneg %p200
      $region30: #{diff_encoder_fwd.12} parent=11 // pred_check_branch
        %318 = sbr.rel (%p316) target = $region32
      $region31: #{diff_encoder_fwd.12} parent=11 // pred_region
        _
      $region32: #{diff_encoder_fwd.12} parent=11 // pred_fallthru
        _
      // Predicated region
      $region33: #{diff_encoder_fwd.12} parent=11 // pred_check
        %p319 = pneg %p221
      $region34: #{diff_encoder_fwd.12} parent=11 // pred_check_branch
        %321 = sbr.rel (%p319) target = $region36
      $region35: #{diff_encoder_fwd.12} parent=11 // pred_region
        _
      $region36: #{diff_encoder_fwd.12} parent=11 // pred_fallthru
        _
      // Predicated region
      $region37: #{diff_encoder_fwd.12} parent=11 // pred_check
        %p322 = pneg %p242
      $region38: #{diff_encoder_fwd.12} parent=11 // pred_check_branch
        %324 = sbr.rel (%p322) target = $region40
      $region39: #{diff_encoder_fwd.12} parent=11 // pred_region
        _
      $region40: #{diff_encoder_fwd.12} parent=11 // pred_fallthru
        _
      // Predicated region
      $region41: #{diff_encoder_fwd.12} parent=11 // pred_check
        %p325 = pneg %p263
      $region42: #{diff_encoder_fwd.12} parent=11 // pred_check_branch
        %327 = sbr.rel (%p325) target = $region44
      $region43: #{diff_encoder_fwd.12} parent=11 // pred_region
        _
      $region44: #{diff_encoder_fwd.12} parent=11 // pred_fallthru
        _
    $region12: #{diff_encoder_fwd.12} parent=5 // pred_fallthru
      _
    %p328 = scmp.lt.s32.totalorder %s17, 2
    // Predicated region
    $region45: #{diff_encoder_fwd.12} parent=5 // pred_check
      %p329 = pneg %p328
    $region46: #{diff_encoder_fwd.12} parent=5 // pred_check_branch
      %331 = sbr.rel (%p329) target = $region48
    $region47: #{diff_encoder_fwd.12} parent=5 // pred_region
      // Predicated region
      $region49: #{diff_encoder_fwd.12} parent=47 // pred_check
        %p332 = pneg %p37
      $region50: #{diff_encoder_fwd.12} parent=47 // pred_check_branch
        %334 = sbr.rel (%p332) target = $region52
      $region51: #{diff_encoder_fwd.12} parent=47 // pred_region
        %p335 = scmp.lt.s32.totalorder %s17, 1
        %s336 = scalar_select %p335, %s17, 1
        %s337 = smul.addr %s336, 2
        %s338 = smul.addr %s337, 8
        %s339 = scalar_lea.vmem %s0, %s338
      $region52: #{diff_encoder_fwd.12} parent=47 // pred_fallthru
        _
      // Predicated region
      $region53: #{diff_encoder_fwd.12} parent=47 // pred_check
        %p340 = pneg %p63
      $region54: #{diff_encoder_fwd.12} parent=47 // pred_check_branch
        %342 = sbr.rel (%p340) target = $region56
      $region55: #{diff_encoder_fwd.12} parent=47 // pred_region
        %p343 = scmp.lt.s32.totalorder %s17, 1
        %s344 = scalar_select %p343, %s17, 1
        %s345 = smul.addr %s344, 2
        %s346 = smul.addr %s345, 8
        %s347 = scalar_lea.vmem %s1, %s346
      $region56: #{diff_encoder_fwd.12} parent=47 // pred_fallthru
        _
      // Predicated region
      $region57: #{diff_encoder_fwd.12} parent=47 // pred_check
        %p348 = pneg %p89
      $region58: #{diff_encoder_fwd.12} parent=47 // pred_check_branch
        %350 = sbr.rel (%p348) target = $region60
      $region59: #{diff_encoder_fwd.12} parent=47 // pred_region
        %p351 = scmp.lt.s32.totalorder %s17, 1
        %s352 = scalar_select %p351, %s17, 1
        %s353 = smul.addr %s352, 2
        %s354 = smul.addr %s353, 8
        %s355 = scalar_lea.vmem %s2, %s354
      $region60: #{diff_encoder_fwd.12} parent=47 // pred_fallthru
        _
    $region48: #{diff_encoder_fwd.12} parent=5 // pred_fallthru
      _
    %p356 = scmp.le.s32.totalorder 1, %s17
    %p357 = scmp.lt.s32.totalorder %s17, 3
    %p358 = pnand %p356, %p357
    %p359 = pneg %p358
    // Predicated region
    $region61: #{diff_encoder_fwd.12} parent=5 // pred_check
      _
    $region62: #{diff_encoder_fwd.12} parent=5 // pred_check_branch
      %361 = sbr.rel (%p358) target = $region64
    $region63: #{diff_encoder_fwd.12} parent=5 // pred_region
      %s362 = ssub.s32 %s17, 1
      %p363 = scmp.lt.s32.totalorder %s22, 1
      %s364 = scalar_select %p363, %s22, 1
      %s365 = smul.addr %s364, 2
      %s366 = smul.addr %s365, 8
      %s367 = scalar_lea.vmem %s0, %s366
      %p368 = pneg %p43
      %p369 = pneg %p40
      %p370 = scmp.lt.s32.totalorder %s22, 1
      %s371 = scalar_select %p370, %s22, 1
      %s372 = smul.addr %s371, 2
      %s373 = smul.addr %s372, 8
      %s374 = scalar_lea.vmem %s1, %s373
      %p375 = pneg %p69
      %p376 = pneg %p66
      %p377 = scmp.lt.s32.totalorder %s22, 1
      %s378 = scalar_select %p377, %s22, 1
      %s379 = smul.addr %s378, 2
      %s380 = smul.addr %s379, 8
      %s381 = scalar_lea.vmem %s2, %s380
      %p382 = pneg %p95
      %p383 = pneg %p92
      %p384 = pneg %p116
      %p385 = pneg %p113
      %p386 = pneg %p137
      %p387 = pneg %p134
      %p388 = pneg %p158
      %p389 = pneg %p155
      %p390 = pneg %p179
      %p391 = pneg %p176
      %p392 = pneg %p200
      %p393 = pneg %p197
      %p394 = pneg %p221
      %p395 = pneg %p218
      %p396 = pneg %p242
      %p397 = pneg %p239
      %p398 = pneg %p263
      %p399 = pneg %p260
      %p400 = pneg %p289
      %p401 = pneg %p286
      %p402 = scmp.lt.s32.totalorder %s22, 1
      %s403 = scalar_select %p402, %s22, 1
      %s404 = smul.addr %s403, 2
      %s405 = smul.addr %s404, 8
      %s406 = scalar_lea.vmem %s11, %s405
      %p407 = scmp.lt.s32.totalorder %s22, 1
      %s408 = scalar_select %p407, %s22, 1
      %s409 = smul.addr %s408, 2
      %s410 = smul.addr %s409, 8
      %s411 = scalar_lea.vmem %s0, %s410
      %p412 = scmp.lt.s32.totalorder %s22, 1
      %s413 = scalar_select %p412, %s22, 1
      %s414 = smul.addr %s413, 2
      %s415 = smul.addr %s414, 8
      %s416 = scalar_lea.vmem %s1, %s415
      %p417 = scmp.lt.s32.totalorder %s22, 1
      %s418 = scalar_select %p417, %s22, 1
      %s419 = smul.addr %s418, 2
      %s420 = smul.addr %s419, 8
      %s421 = scalar_lea.vmem %s2, %s420
      %p422 = scmp.lt.s32.totalorder %s22, 1
      %s423 = scalar_select %p422, %s22, 1
      %s424 = smul.addr %s423, 2
      %s425 = smul.addr %s424, 8
      %s426 = scalar_lea.vmem %s11, %s425
      %v428 = vld [vmem:[%s416] sm:$0xff]
      %v429 = vld [vmem:[%s416 + $0x8] sm:$0xff]
      %v430 = vld [vmem:[%s411] sm:$0xff]
      %v431 = vld [vmem:[%s411 + $0x8] sm:$0xff]
      %v432 = vsub.f32 %v428, %v430
      %v433 = vsub.f32 %v429, %v431
      %v434 = vld [vmem:[%s3] sm:$0xff]
      %v435 = vld [vmem:[%s3 + $0x8] sm:$0xff]
      %v436 = vld [vmem:[%s3 + $0x10] sm:$0xff]
      %v437 = vld [vmem:[%s3 + $0x18] sm:$0xff]
      %v438 = vld [vmem:[%s3 + $0x20] sm:$0xff]
      %v439 = vld [vmem:[%s3 + $0x28] sm:$0xff]
      %v440 = vld [vmem:[%s3 + $0x30] sm:$0xff]
      %v441 = vld [vmem:[%s3 + $0x38] sm:$0xff]
      %v442 = vld [vmem:[%s4] sm:$0x1]
      %v443 = vld [vmem:[%s5] sm:$0xff]
      %v444 = vld [vmem:[%s5 + $0x8] sm:$0xff]
      %v445 = vld [vmem:[%s5 + $0x10] sm:$0xff]
      %v446 = vld [vmem:[%s5 + $0x18] sm:$0xff]
      %v447 = vld [vmem:[%s5 + $0x20] sm:$0xff]
      %v448 = vld [vmem:[%s5 + $0x28] sm:$0xff]
      %v449 = vld [vmem:[%s5 + $0x30] sm:$0xff]
      %v450 = vld [vmem:[%s5 + $0x38] sm:$0xff]
      %v451 = vld [vmem:[%s6] sm:$0x1]
      %v452 = vld [vmem:[%s7] sm:$0xff]
      %v453 = vld [vmem:[%s7 + $0x8] sm:$0xff]
      %v454 = vld [vmem:[%s7 + $0x10] sm:$0xff]
      %v455 = vld [vmem:[%s7 + $0x18] sm:$0xff]
      %v456 = vld [vmem:[%s7 + $0x20] sm:$0xff]
      %v457 = vld [vmem:[%s7 + $0x28] sm:$0xff]
      %v458 = vld [vmem:[%s7 + $0x30] sm:$0xff]
      %v459 = vld [vmem:[%s7 + $0x38] sm:$0xff]
      %v460 = vld [vmem:[%s8] sm:$0x1]
      %v461 = vld [vmem:[%s9] sm:$0x1]
      %v462 = vld [vmem:[%s10] sm:$0x1]
      %v463 = vpack.c.bf16 %v433, %v432
      %v464 = vpack.c.bf16 %v435, %v434
      %v465 = vpack.c.bf16 %v437, %v436
      %v466 = vpack.c.bf16 %v439, %v438
      %v467 = vpack.c.bf16 %v441, %v440
      %v469 = vlaneseq
      %v470 = vshrl.u32 %v469, 7
      %v471 = vsub.s32 0, %v470
      %v472 = vrot.slane %v442, %v471
      %vm474 = vcmask 523264
      %v476 = vsel %vm474, %v463, 0
      %478 = vmatprep.subr.bf16.mxu0 0
      %479 = vmatpush1.bf16.msra.mxu0 %v464
      %480 = vmatprep.subr.bf16.mxu0 0
      %481 = vmatpush1.bf16.msra.mxu0 %v465
      %482 = vmatprep.subr.bf16.mxu0 0
      %483 = vmatpush1.bf16.msra.mxu0 %v466
      %484 = vmatprep.subr.bf16.mxu0 0
      %485 = vmatpush1.bf16.msra.mxu0 %v467
      %486 = vmatprep.subr.bf16.mxu0 0
      %487 = vmatpush1.bf16.msra.mxu0 0
      %488 = vmatprep.subr.bf16.mxu0 0
      %489 = vmatpush1.bf16.msra.mxu0 0
      %490 = vmatprep.subr.bf16.mxu0 0
      %491 = vmatpush1.bf16.msra.mxu0 0
      %492 = vmatprep.subr.bf16.mxu0 0
      %493 = vmatpush1.bf16.msra.mxu0 0
      %494 = vmatprep.subr.bf16.mxu0 0
      %495 = vmatpush1.bf16.msra.mxu0 0
      %496 = vmatprep.subr.bf16.mxu0 0
      %497 = vmatpush1.bf16.msra.mxu0 0
      %498 = vmatprep.subr.bf16.mxu0 0
      %499 = vmatpush1.bf16.msra.mxu0 0
      %500 = vmatprep.subr.bf16.mxu0 0
      %501 = vmatpush1.bf16.msra.mxu0 0
      %502 = vmatprep.subr.bf16.mxu0 0
      %503 = vmatpush1.bf16.msra.mxu0 0
      %504 = vmatprep.subr.bf16.mxu0 0
      %505 = vmatpush1.bf16.msra.mxu0 0
      %506 = vmatprep.subr.bf16.mxu0 0
      %507 = vmatpush1.bf16.msra.mxu0 0
      %508 = vmatprep.subr.bf16.mxu0 0
      %509 = vmatpush1.bf16.msra.mxu0 0
      %510 = vmatprep.mubr.bf16.mxu0 0
      %511 = vmatmul.mubr.bf16.gmra.mrb[0].mxu0 %v476
      %v512 = vpop.f32.mrb[0].mxu0
      %v513 = vadd.f32 %v472, %v512
      %v514 = vpop.f32.mrb[0].mxu0
      %v515 = vpop.f32.mrb[0].mxu0
      %v516 = vadd.f32 %v472, %v515
      %v517 = vpop.f32.mrb[0].mxu0
      %518 = vdwg.mxu0
      %v519 = vpack.c.bf16 %v444, %v443
      %v520 = vpack.c.bf16 %v446, %v445
      %v521 = vpack.c.bf16 %v448, %v447
      %v522 = vpack.c.bf16 %v450, %v449
      %v524 = vlaneseq
      %v525 = vshrl.u32 %v524, 7
      %v526 = vsub.s32 0, %v525
      %v527 = vrot.slane %v451, %v526
      %529 = vmatprep.subr.bf16.mxu0 0
      %530 = vmatpush1.bf16.msra.mxu0 %v519
      %531 = vmatprep.subr.bf16.mxu0 0
      %532 = vmatpush1.bf16.msra.mxu0 %v520
      %533 = vmatprep.subr.bf16.mxu0 0
      %534 = vmatpush1.bf16.msra.mxu0 %v521
      %535 = vmatprep.subr.bf16.mxu0 0
      %536 = vmatpush1.bf16.msra.mxu0 %v522
      %537 = vmatprep.subr.bf16.mxu0 0
      %538 = vmatpush1.bf16.msra.mxu0 0
      %539 = vmatprep.subr.bf16.mxu0 0
      %540 = vmatpush1.bf16.msra.mxu0 0
      %541 = vmatprep.subr.bf16.mxu0 0
      %542 = vmatpush1.bf16.msra.mxu0 0
      %543 = vmatprep.subr.bf16.mxu0 0
      %544 = vmatpush1.bf16.msra.mxu0 0
      %545 = vmatprep.subr.bf16.mxu0 0
      %546 = vmatpush1.bf16.msra.mxu0 0
      %547 = vmatprep.subr.bf16.mxu0 0
      %548 = vmatpush1.bf16.msra.mxu0 0
      %549 = vmatprep.subr.bf16.mxu0 0
      %550 = vmatpush1.bf16.msra.mxu0 0
      %551 = vmatprep.subr.bf16.mxu0 0
      %552 = vmatpush1.bf16.msra.mxu0 0
      %553 = vmatprep.subr.bf16.mxu0 0
      %554 = vmatpush1.bf16.msra.mxu0 0
      %555 = vmatprep.subr.bf16.mxu0 0
      %556 = vmatpush1.bf16.msra.mxu0 0
      %557 = vmatprep.subr.bf16.mxu0 0
      %558 = vmatpush1.bf16.msra.mxu0 0
      %559 = vmatprep.subr.bf16.mxu0 0
      %560 = vmatpush1.bf16.msra.mxu0 0
      %561 = vmatprep.mubr.bf16.mxu0 0
      %562 = vmatmul.mubr.bf16.gmra.mrb[0].mxu0 %v476
      %v563 = vpop.f32.mrb[0].mxu0
      %v564 = vadd.f32 %v527, %v563
      %v565 = vpop.f32.mrb[0].mxu0
      %v566 = vpop.f32.mrb[0].mxu0
      %v567 = vadd.f32 %v527, %v566
      %v568 = vpop.f32.mrb[0].mxu0
      %569 = vdwg.mxu0
      %v570 = vmul.f32 %v513, 0.35355338
      %v571 = vmul.f32 %v516, 0.35355338
      %vm572 = vcmask 64512
      %v574 = vsel %vm572, %v570, 0
      %v577 = vsel %vm572, %v571, 0
      %v580 = vsel %vm572, %v564, 0
      %v583 = vsel %vm572, %v567, 0
      %585 = vmatprep.subr.mxu0 0.0
      %586 = vmatpush1.xpose.msra.mxu0 %v580
      %587 = vmatprep.subr.mxu0 0.0
      %588 = vmatpush1.xpose.msra.mxu0 %v583
      %589 = vmatprep.subr.mxu0 0.0
      %590 = vmatpush1.xpose.msra.mxu0 0.0
      %591 = vmatprep.subr.mxu0 0.0
      %592 = vmatpush1.xpose.msra.mxu0 0.0
      %593 = vmatprep.subr.mxu0 0.0
      %594 = vmatpush1.xpose.msra.mxu0 0.0
      %595 = vmatprep.subr.mxu0 0.0
      %596 = vmatpush1.xpose.msra.mxu0 0.0
      %597 = vmatprep.subr.mxu0 0.0
      %598 = vmatpush1.xpose.msra.mxu0 0.0
      %599 = vmatprep.subr.mxu0 0.0
      %600 = vmatpush1.xpose.msra.mxu0 0.0
      %601 = vmatprep.subr.mxu0 0.0
      %602 = vmatpush1.xpose.msra.mxu0 0.0
      %603 = vmatprep.subr.mxu0 0.0
      %604 = vmatpush1.xpose.msra.mxu0 0.0
      %605 = vmatprep.subr.mxu0 0.0
      %606 = vmatpush1.xpose.msra.mxu0 0.0
      %607 = vmatprep.subr.mxu0 0.0
      %608 = vmatpush1.xpose.msra.mxu0 0.0
      %609 = vmatprep.subr.mxu0 0.0
      %610 = vmatpush1.xpose.msra.mxu0 0.0
      %611 = vmatprep.subr.mxu0 0.0
      %612 = vmatpush1.xpose.msra.mxu0 0.0
      %613 = vmatprep.subr.mxu0 0.0
      %614 = vmatpush1.xpose.msra.mxu0 0.0
      %615 = vmatprep.subr.mxu0 0.0
      %616 = vmatpush1.xpose.msra.mxu0 0.0
      %617 = vmatprep.subr.mxu0 0.0
      %618 = vmatpush1.xpose.msra.mxu0 0.0
      %619 = vmatprep.subr.mxu0 0.0
      %620 = vmatpush1.xpose.msra.mxu0 0.0
      %621 = vmatprep.subr.mxu0 0.0
      %622 = vmatpush1.xpose.msra.mxu0 0.0
      %623 = vmatprep.subr.mxu0 0.0
      %624 = vmatpush1.xpose.msra.mxu0 0.0
      %625 = vmatprep.subr.mxu0 0.0
      %626 = vmatpush1.xpose.msra.mxu0 0.0
      %627 = vmatprep.subr.mxu0 0.0
      %628 = vmatpush1.xpose.msra.mxu0 0.0
      %629 = vmatprep.subr.mxu0 0.0
      %630 = vmatpush1.xpose.msra.mxu0 0.0
      %631 = vmatprep.subr.mxu0 0.0
      %632 = vmatpush1.xpose.msra.mxu0 0.0
      %633 = vmatprep.subr.mxu0 0.0
      %634 = vmatpush1.xpose.msra.mxu0 0.0
      %635 = vmatprep.subr.mxu0 0.0
      %636 = vmatpush1.xpose.msra.mxu0 0.0
      %637 = vmatprep.subr.mxu0 0.0
      %638 = vmatpush1.xpose.msra.mxu0 0.0
      %639 = vmatprep.subr.mxu0 0.0
      %640 = vmatpush1.xpose.msra.mxu0 0.0
      %641 = vmatprep.subr.mxu0 0.0
      %642 = vmatpush1.xpose.msra.mxu0 0.0
      %643 = vmatprep.subr.mxu0 0.0
      %644 = vmatpush1.xpose.msra.mxu0 0.0
      %645 = vmatprep.subr.mxu0 0.0
      %646 = vmatpush1.xpose.msra.mxu0 0.0
      %647 = vmatprep.subr.mxu0 0.0
      %648 = vmatpush1.xpose.msra.mxu0 0.0
      %649 = vmatprep.mubr.f32.mxu0 0.0
      %650 = vmatmul.mubr.f32.gmra.mrb[0].mxu0 %v574
      %v651 = vpop.f32.mrb[0].mxu0
      %v652 = vadd.f32 0.0, %v651
      %v653 = vpop.f32.mrb[0].mxu0
      %654 = vmatprep.mubr.f32.mxu0 0.0
      %655 = vmatmul.mubr.f32.gmra.mrb[0].mxu0 %v577
      %v656 = vpop.f32.mrb[0].mxu0
      %v657 = vadd.f32 0.0, %v656
      %v658 = vpop.f32.mrb[0].mxu0
      %659 = vdwg.mxu0
      %vm660 = vcmask 130048
      %v661 = vsel %vm660, %v652, -inf
      %662 = vmax.xlane.f32.xlu0 %v661
      %v663 = vpop.xlane.xlu0 %662
      %v664 = vsel %vm660, %v657, -inf
      %665 = vmax.xlane.f32.xlu0 %v664
      %v666 = vpop.xlane.xlu0 %665
      %v667 = vsub.f32 %v652, %v663
      %v668 = vsub.f32 %v657, %v666
      %v669 = vmul.f32 %v667, 1.442695
      %v670 = vpow.pop %v669
      %v671 = vmul.f32 %v668, 1.442695
      %v672 = vpow.pop %v671
      %v673 = vsel %vm660, %v670, 0.0
      %674 = vadd.xlane.f32.xlu0 %v673
      %v675 = vpop.xlane.xlu0 %674
      %v676 = vsel %vm660, %v672, 0.0
      %677 = vadd.xlane.f32.xlu0 %v676
      %v678 = vpop.xlane.xlu0 %677
      %v679 = vrcp.pop %v675
      %v680 = vrcp.pop %v678
      %v681 = vmul.f32 %v670, %v679
      %v682 = vmul.f32 %v672, %v680
      %683 = vrot.lane.b32.xlu0 %v564, 64
      %v684 = vpop.permute.xlu0 %683
      %685 = vrot.lane.b32.xlu0 %v567, 64
      %v686 = vpop.permute.xlu0 %685
      %v690 = vsel %vm660, %v681, 0
      %v693 = vsel %vm660, %v682, 0
      %695 = vmatprep.subr.mxu0 0.0
      %696 = vmatpush1.msra.mxu0 %v684
      %697 = vmatprep.subr.mxu0 0.0
      %698 = vmatpush1.msra.mxu0 %v686
      %699 = vmatprep.subr.mxu0 0.0
      %700 = vmatpush1.msra.mxu0 0.0
      %701 = vmatprep.subr.mxu0 0.0
      %702 = vmatpush1.msra.mxu0 0.0
      %703 = vmatprep.subr.mxu0 0.0
      %704 = vmatpush1.msra.mxu0 0.0
      %705 = vmatprep.subr.mxu0 0.0
      %706 = vmatpush1.msra.mxu0 0.0
      %707 = vmatprep.subr.mxu0 0.0
      %708 = vmatpush1.msra.mxu0 0.0
      %709 = vmatprep.subr.mxu0 0.0
      %710 = vmatpush1.msra.mxu0 0.0
      %711 = vmatprep.subr.mxu0 0.0
      %712 = vmatpush1.msra.mxu0 0.0
      %713 = vmatprep.subr.mxu0 0.0
      %714 = vmatpush1.msra.mxu0 0.0
      %715 = vmatprep.subr.mxu0 0.0
      %716 = vmatpush1.msra.mxu0 0.0
      %717 = vmatprep.subr.mxu0 0.0
      %718 = vmatpush1.msra.mxu0 0.0
      %719 = vmatprep.subr.mxu0 0.0
      %720 = vmatpush1.msra.mxu0 0.0
      %721 = vmatprep.subr.mxu0 0.0
      %722 = vmatpush1.msra.mxu0 0.0
      %723 = vmatprep.subr.mxu0 0.0
      %724 = vmatpush1.msra.mxu0 0.0
      %725 = vmatprep.subr.mxu0 0.0
      %726 = vmatpush1.msra.mxu0 0.0
      %727 = vmatprep.subr.mxu0 0.0
      %728 = vmatpush1.msra.mxu0 0.0
      %729 = vmatprep.subr.mxu0 0.0
      %730 = vmatpush1.msra.mxu0 0.0
      %731 = vmatprep.subr.mxu0 0.0
      %732 = vmatpush1.msra.mxu0 0.0
      %733 = vmatprep.subr.mxu0 0.0
      %734 = vmatpush1.msra.mxu0 0.0
      %735 = vmatprep.subr.mxu0 0.0
      %736 = vmatpush1.msra.mxu0 0.0
      %737 = vmatprep.subr.mxu0 0.0
      %738 = vmatpush1.msra.mxu0 0.0
      %739 = vmatprep.subr.mxu0 0.0
      %740 = vmatpush1.msra.mxu0 0.0
      %741 = vmatprep.subr.mxu0 0.0
      %742 = vmatpush1.msra.mxu0 0.0
      %743 = vmatprep.subr.mxu0 0.0
      %744 = vmatpush1.msra.mxu0 0.0
      %745 = vmatprep.subr.mxu0 0.0
      %746 = vmatpush1.msra.mxu0 0.0
      %747 = vmatprep.subr.mxu0 0.0
      %748 = vmatpush1.msra.mxu0 0.0
      %749 = vmatprep.subr.mxu0 0.0
      %750 = vmatpush1.msra.mxu0 0.0
      %751 = vmatprep.subr.mxu0 0.0
      %752 = vmatpush1.msra.mxu0 0.0
      %753 = vmatprep.subr.mxu0 0.0
      %754 = vmatpush1.msra.mxu0 0.0
      %755 = vmatprep.subr.mxu0 0.0
      %756 = vmatpush1.msra.mxu0 0.0
      %757 = vmatprep.subr.mxu0 0.0
      %758 = vmatpush1.msra.mxu0 0.0
      %759 = vmatprep.mubr.f32.mxu0 0.0
      %760 = vmatmul.mubr.f32.gmra.mrb[0].mxu0 %v690
      %v761 = vpop.f32.mrb[0].mxu0
      %v762 = vadd.f32 0.0, %v761
      %v763 = vpop.f32.mrb[0].mxu0
      %764 = vmatprep.mubr.f32.mxu0 0.0
      %765 = vmatmul.mubr.f32.gmra.mrb[0].mxu0 %v693
      %v766 = vpop.f32.mrb[0].mxu0
      %v767 = vadd.f32 0.0, %v766
      %v768 = vpop.f32.mrb[0].mxu0
      %769 = vdwg.mxu0
      %770 = vrot.lane.b32.xlu0 %v570, 120
      %v771 = vpop.permute.xlu0 %770
      %772 = vrot.lane.b32.xlu0 %v571, 120
      %v773 = vpop.permute.xlu0 %772
      %774 = vrot.lane.b32.xlu0 %v564, 120
      %v775 = vpop.permute.xlu0 %774
      %776 = vrot.lane.b32.xlu0 %v567, 120
      %v777 = vpop.permute.xlu0 %776
      %v778 = vsel %vm572, %v771, 0
      %v780 = vsel %vm572, %v773, 0
      %v782 = vsel %vm572, %v775, 0
      %v784 = vsel %vm572, %v777, 0
      %786 = vmatprep.subr.mxu0 0.0
      %787 = vmatpush1.xpose.msra.mxu0 %v782
      %788 = vmatprep.subr.mxu0 0.0
      %789 = vmatpush1.xpose.msra.mxu0 %v784
      %790 = vmatprep.subr.mxu0 0.0
      %791 = vmatpush1.xpose.msra.mxu0 0.0
      %792 = vmatprep.subr.mxu0 0.0
      %793 = vmatpush1.xpose.msra.mxu0 0.0
      %794 = vmatprep.subr.mxu0 0.0
      %795 = vmatpush1.xpose.msra.mxu0 0.0
      %796 = vmatprep.subr.mxu0 0.0
      %797 = vmatpush1.xpose.msra.mxu0 0.0
      %798 = vmatprep.subr.mxu0 0.0
      %799 = vmatpush1.xpose.msra.mxu0 0.0
      %800 = vmatprep.subr.mxu0 0.0
      %801 = vmatpush1.xpose.msra.mxu0 0.0
      %802 = vmatprep.subr.mxu0 0.0
      %803 = vmatpush1.xpose.msra.mxu0 0.0
      %804 = vmatprep.subr.mxu0 0.0
      %805 = vmatpush1.xpose.msra.mxu0 0.0
      %806 = vmatprep.subr.mxu0 0.0
      %807 = vmatpush1.xpose.msra.mxu0 0.0
      %808 = vmatprep.subr.mxu0 0.0
      %809 = vmatpush1.xpose.msra.mxu0 0.0
      %810 = vmatprep.subr.mxu0 0.0
      %811 = vmatpush1.xpose.msra.mxu0 0.0
      %812 = vmatprep.subr.mxu0 0.0
      %813 = vmatpush1.xpose.msra.mxu0 0.0
      %814 = vmatprep.subr.mxu0 0.0
      %815 = vmatpush1.xpose.msra.mxu0 0.0
      %816 = vmatprep.subr.mxu0 0.0
      %817 = vmatpush1.xpose.msra.mxu0 0.0
      %818 = vmatprep.subr.mxu0 0.0
      %819 = vmatpush1.xpose.msra.mxu0 0.0
      %820 = vmatprep.subr.mxu0 0.0
      %821 = vmatpush1.xpose.msra.mxu0 0.0
      %822 = vmatprep.subr.mxu0 0.0
      %823 = vmatpush1.xpose.msra.mxu0 0.0
      %824 = vmatprep.subr.mxu0 0.0
      %825 = vmatpush1.xpose.msra.mxu0 0.0
      %826 = vmatprep.subr.mxu0 0.0
      %827 = vmatpush1.xpose.msra.mxu0 0.0
      %828 = vmatprep.subr.mxu0 0.0
      %829 = vmatpush1.xpose.msra.mxu0 0.0
      %830 = vmatprep.subr.mxu0 0.0
      %831 = vmatpush1.xpose.msra.mxu0 0.0
      %832 = vmatprep.subr.mxu0 0.0
      %833 = vmatpush1.xpose.msra.mxu0 0.0
      %834 = vmatprep.subr.mxu0 0.0
      %835 = vmatpush1.xpose.msra.mxu0 0.0
      %836 = vmatprep.subr.mxu0 0.0
      %837 = vmatpush1.xpose.msra.mxu0 0.0
      %838 = vmatprep.subr.mxu0 0.0
      %839 = vmatpush1.xpose.msra.mxu0 0.0
      %840 = vmatprep.subr.mxu0 0.0
      %841 = vmatpush1.xpose.msra.mxu0 0.0
      %842 = vmatprep.subr.mxu0 0.0
      %843 = vmatpush1.xpose.msra.mxu0 0.0
      %844 = vmatprep.subr.mxu0 0.0
      %845 = vmatpush1.xpose.msra.mxu0 0.0
      %846 = vmatprep.subr.mxu0 0.0
      %847 = vmatpush1.xpose.msra.mxu0 0.0
      %848 = vmatprep.subr.mxu0 0.0
      %849 = vmatpush1.xpose.msra.mxu0 0.0
      %850 = vmatprep.mubr.f32.mxu0 0.0
      %851 = vmatmul.mubr.f32.gmra.mrb[0].mxu0 %v778
      %v852 = vpop.f32.mrb[0].mxu0
      %v853 = vadd.f32 0.0, %v852
      %v854 = vpop.f32.mrb[0].mxu0
      %855 = vmatprep.mubr.f32.mxu0 0.0
      %856 = vmatmul.mubr.f32.gmra.mrb[0].mxu0 %v780
      %v857 = vpop.f32.mrb[0].mxu0
      %v858 = vadd.f32 0.0, %v857
      %v859 = vpop.f32.mrb[0].mxu0
      %860 = vdwg.mxu0
      %v861 = vsel %vm660, %v853, -inf
      %862 = vmax.xlane.f32.xlu0 %v861
      %v863 = vpop.xlane.xlu0 %862
      %v864 = vsel %vm660, %v858, -inf
      %865 = vmax.xlane.f32.xlu0 %v864
      %v866 = vpop.xlane.xlu0 %865
      %v867 = vsub.f32 %v853, %v863
      %v868 = vsub.f32 %v858, %v866
      %v869 = vmul.f32 %v867, 1.442695
      %v870 = vpow.pop %v869
      %v871 = vmul.f32 %v868, 1.442695
      %v872 = vpow.pop %v871
      %v873 = vsel %vm660, %v870, 0.0
      %874 = vadd.xlane.f32.xlu0 %v873
      %v875 = vpop.xlane.xlu0 %874
      %v876 = vsel %vm660, %v872, 0.0
      %877 = vadd.xlane.f32.xlu0 %v876
      %v878 = vpop.xlane.xlu0 %877
      %v879 = vrcp.pop %v875
      %v880 = vrcp.pop %v878
      %v881 = vmul.f32 %v870, %v879
      %v882 = vmul.f32 %v872, %v880
      %883 = vrot.lane.b32.xlu0 %v564, 56
      %v884 = vpop.permute.xlu0 %883
      %885 = vrot.lane.b32.xlu0 %v567, 56
      %v886 = vpop.permute.xlu0 %885
      %v890 = vsel %vm660, %v881, 0
      %v893 = vsel %vm660, %v882, 0
      %895 = vmatprep.subr.mxu0 0.0
      %896 = vmatpush1.msra.mxu0 %v884
      %897 = vmatprep.subr.mxu0 0.0
      %898 = vmatpush1.msra.mxu0 %v886
      %899 = vmatprep.subr.mxu0 0.0
      %900 = vmatpush1.msra.mxu0 0.0
      %901 = vmatprep.subr.mxu0 0.0
      %902 = vmatpush1.msra.mxu0 0.0
      %903 = vmatprep.subr.mxu0 0.0
      %904 = vmatpush1.msra.mxu0 0.0
      %905 = vmatprep.subr.mxu0 0.0
      %906 = vmatpush1.msra.mxu0 0.0
      %907 = vmatprep.subr.mxu0 0.0
      %908 = vmatpush1.msra.mxu0 0.0
      %909 = vmatprep.subr.mxu0 0.0
      %910 = vmatpush1.msra.mxu0 0.0
      %911 = vmatprep.subr.mxu0 0.0
      %912 = vmatpush1.msra.mxu0 0.0
      %913 = vmatprep.subr.mxu0 0.0
      %914 = vmatpush1.msra.mxu0 0.0
      %915 = vmatprep.subr.mxu0 0.0
      %916 = vmatpush1.msra.mxu0 0.0
      %917 = vmatprep.subr.mxu0 0.0
      %918 = vmatpush1.msra.mxu0 0.0
      %919 = vmatprep.subr.mxu0 0.0
      %920 = vmatpush1.msra.mxu0 0.0
      %921 = vmatprep.subr.mxu0 0.0
      %922 = vmatpush1.msra.mxu0 0.0
      %923 = vmatprep.subr.mxu0 0.0
      %924 = vmatpush1.msra.mxu0 0.0
      %925 = vmatprep.subr.mxu0 0.0
      %926 = vmatpush1.msra.mxu0 0.0
      %927 = vmatprep.subr.mxu0 0.0
      %928 = vmatpush1.msra.mxu0 0.0
      %929 = vmatprep.subr.mxu0 0.0
      %930 = vmatpush1.msra.mxu0 0.0
      %931 = vmatprep.subr.mxu0 0.0
      %932 = vmatpush1.msra.mxu0 0.0
      %933 = vmatprep.subr.mxu0 0.0
      %934 = vmatpush1.msra.mxu0 0.0
      %935 = vmatprep.subr.mxu0 0.0
      %936 = vmatpush1.msra.mxu0 0.0
      %937 = vmatprep.subr.mxu0 0.0
      %938 = vmatpush1.msra.mxu0 0.0
      %939 = vmatprep.subr.mxu0 0.0
      %940 = vmatpush1.msra.mxu0 0.0
      %941 = vmatprep.subr.mxu0 0.0
      %942 = vmatpush1.msra.mxu0 0.0
      %943 = vmatprep.subr.mxu0 0.0
      %944 = vmatpush1.msra.mxu0 0.0
      %945 = vmatprep.subr.mxu0 0.0
      %946 = vmatpush1.msra.mxu0 0.0
      %947 = vmatprep.subr.mxu0 0.0
      %948 = vmatpush1.msra.mxu0 0.0
      %949 = vmatprep.subr.mxu0 0.0
      %950 = vmatpush1.msra.mxu0 0.0
      %951 = vmatprep.subr.mxu0 0.0
      %952 = vmatpush1.msra.mxu0 0.0
      %953 = vmatprep.subr.mxu0 0.0
      %954 = vmatpush1.msra.mxu0 0.0
      %955 = vmatprep.subr.mxu0 0.0
      %956 = vmatpush1.msra.mxu0 0.0
      %957 = vmatprep.subr.mxu0 0.0
      %958 = vmatpush1.msra.mxu0 0.0
      %959 = vmatprep.mubr.f32.mxu0 0.0
      %960 = vmatmul.mubr.f32.gmra.mrb[0].mxu0 %v890
      %v961 = vpop.f32.mrb[0].mxu0
      %v962 = vadd.f32 0.0, %v961
      %v963 = vpop.f32.mrb[0].mxu0
      %964 = vmatprep.mubr.f32.mxu0 0.0
      %965 = vmatmul.mubr.f32.gmra.mrb[0].mxu0 %v893
      %v966 = vpop.f32.mrb[0].mxu0
      %v967 = vadd.f32 0.0, %v966
      %v968 = vpop.f32.mrb[0].mxu0
      %969 = vdwg.mxu0
      %v971 = vsel %vm572, %v962, 0
      %v974 = vsel %vm572, %v967, 0
      %976 = vmatprep.subr.mxu0 0.0
      %977 = vmatpush1.msra.mxu0 %v453
      %978 = vmatprep.subr.mxu0 0.0
      %979 = vmatpush1.msra.mxu0 0.0
      %980 = vmatprep.subr.mxu0 0.0
      %981 = vmatpush1.msra.mxu0 0.0
      %982 = vmatprep.subr.mxu0 0.0
      %983 = vmatpush1.msra.mxu0 0.0
      %984 = vmatprep.subr.mxu0 0.0
      %985 = vmatpush1.msra.mxu0 0.0
      %986 = vmatprep.subr.mxu0 0.0
      %987 = vmatpush1.msra.mxu0 0.0
      %988 = vmatprep.subr.mxu0 0.0
      %989 = vmatpush1.msra.mxu0 0.0
      %990 = vmatprep.subr.mxu0 0.0
      %991 = vmatpush1.msra.mxu0 0.0
      %992 = vmatprep.subr.mxu0 0.0
      %993 = vmatpush1.msra.mxu0 0.0
      %994 = vmatprep.subr.mxu0 0.0
      %995 = vmatpush1.msra.mxu0 0.0
      %996 = vmatprep.subr.mxu0 0.0
      %997 = vmatpush1.msra.mxu0 0.0
      %998 = vmatprep.subr.mxu0 0.0
      %999 = vmatpush1.msra.mxu0 0.0
      %1000 = vmatprep.subr.mxu0 0.0
      %1001 = vmatpush1.msra.mxu0 0.0
      %1002 = vmatprep.subr.mxu0 0.0
      %1003 = vmatpush1.msra.mxu0 0.0
      %1004 = vmatprep.subr.mxu0 0.0
      %1005 = vmatpush1.msra.mxu0 0.0
      %1006 = vmatprep.subr.mxu0 0.0
      %1007 = vmatpush1.msra.mxu0 0.0
      %1008 = vmatprep.subr.mxu0 0.0
      %1009 = vmatpush1.msra.mxu0 0.0
      %1010 = vmatprep.subr.mxu0 0.0
      %1011 = vmatpush1.msra.mxu0 0.0
      %1012 = vmatprep.subr.mxu0 0.0
      %1013 = vmatpush1.msra.mxu0 0.0
      %1014 = vmatprep.subr.mxu0 0.0
      %1015 = vmatpush1.msra.mxu0 0.0
      %1016 = vmatprep.subr.mxu0 0.0
      %1017 = vmatpush1.msra.mxu0 0.0
      %1018 = vmatprep.subr.mxu0 0.0
      %1019 = vmatpush1.msra.mxu0 0.0
      %1020 = vmatprep.subr.mxu0 0.0
      %1021 = vmatpush1.msra.mxu0 0.0
      %1022 = vmatprep.subr.mxu0 0.0
      %1023 = vmatpush1.msra.mxu0 0.0
      %1024 = vmatprep.subr.mxu0 0.0
      %1025 = vmatpush1.msra.mxu0 0.0
      %1026 = vmatprep.subr.mxu0 0.0
      %1027 = vmatpush1.msra.mxu0 0.0
      %1028 = vmatprep.subr.mxu0 0.0
      %1029 = vmatpush1.msra.mxu0 0.0
      %1030 = vmatprep.subr.mxu0 0.0
      %1031 = vmatpush1.msra.mxu0 0.0
      %1032 = vmatprep.subr.mxu0 0.0
      %1033 = vmatpush1.msra.mxu0 0.0
      %1034 = vmatprep.subr.mxu0 0.0
      %1035 = vmatpush1.msra.mxu0 0.0
      %1036 = vmatprep.subr.mxu0 0.0
      %1037 = vmatpush1.msra.mxu0 0.0
      %1038 = vmatprep.subr.mxu0 0.0
      %1039 = vmatpush1.msra.mxu0 0.0
      %1040 = vmatprep.mubr.f32.mxu0 0.0
      %1041 = vmatmul.mubr.f32.gmra.mrb[0].mxu0 %v971
      %v1042 = vpop.f32.mrb[0].mxu0
      %v1043 = vadd.f32 0.0, %v1042
      %v1044 = vpop.f32.mrb[0].mxu0
      %1045 = vmatprep.mubr.f32.mxu0 0.0
      %1046 = vmatmul.mubr.f32.gmra.mrb[0].mxu0 %v974
      %v1047 = vpop.f32.mrb[0].mxu0
      %v1048 = vadd.f32 0.0, %v1047
      %v1049 = vpop.f32.mrb[0].mxu0
      %1050 = vdwg.mxu0
      %v1052 = vsel %vm572, %v762, 0
      %v1055 = vsel %vm572, %v767, 0
      %1057 = vmatprep.subr.mxu0 0.0
      %1058 = vmatpush1.msra.mxu0 %v452
      %1059 = vmatprep.subr.mxu0 0.0
      %1060 = vmatpush1.msra.mxu0 0.0
      %1061 = vmatprep.subr.mxu0 0.0
      %1062 = vmatpush1.msra.mxu0 0.0
      %1063 = vmatprep.subr.mxu0 0.0
      %1064 = vmatpush1.msra.mxu0 0.0
      %1065 = vmatprep.subr.mxu0 0.0
      %1066 = vmatpush1.msra.mxu0 0.0
      %1067 = vmatprep.subr.mxu0 0.0
      %1068 = vmatpush1.msra.mxu0 0.0
      %1069 = vmatprep.subr.mxu0 0.0
      %1070 = vmatpush1.msra.mxu0 0.0
      %1071 = vmatprep.subr.mxu0 0.0
      %1072 = vmatpush1.msra.mxu0 0.0
      %1073 = vmatprep.subr.mxu0 0.0
      %1074 = vmatpush1.msra.mxu0 0.0
      %1075 = vmatprep.subr.mxu0 0.0
      %1076 = vmatpush1.msra.mxu0 0.0
      %1077 = vmatprep.subr.mxu0 0.0
      %1078 = vmatpush1.msra.mxu0 0.0
      %1079 = vmatprep.subr.mxu0 0.0
      %1080 = vmatpush1.msra.mxu0 0.0
      %1081 = vmatprep.subr.mxu0 0.0
      %1082 = vmatpush1.msra.mxu0 0.0
      %1083 = vmatprep.subr.mxu0 0.0
      %1084 = vmatpush1.msra.mxu0 0.0
      %1085 = vmatprep.subr.mxu0 0.0
      %1086 = vmatpush1.msra.mxu0 0.0
      %1087 = vmatprep.subr.mxu0 0.0
      %1088 = vmatpush1.msra.mxu0 0.0
      %1089 = vmatprep.subr.mxu0 0.0
      %1090 = vmatpush1.msra.mxu0 0.0
      %1091 = vmatprep.subr.mxu0 0.0
      %1092 = vmatpush1.msra.mxu0 0.0
      %1093 = vmatprep.subr.mxu0 0.0
      %1094 = vmatpush1.msra.mxu0 0.0
      %1095 = vmatprep.subr.mxu0 0.0
      %1096 = vmatpush1.msra.mxu0 0.0
      %1097 = vmatprep.subr.mxu0 0.0
      %1098 = vmatpush1.msra.mxu0 0.0
      %1099 = vmatprep.subr.mxu0 0.0
      %1100 = vmatpush1.msra.mxu0 0.0
      %1101 = vmatprep.subr.mxu0 0.0
      %1102 = vmatpush1.msra.mxu0 0.0
      %1103 = vmatprep.subr.mxu0 0.0
      %1104 = vmatpush1.msra.mxu0 0.0
      %1105 = vmatprep.subr.mxu0 0.0
      %1106 = vmatpush1.msra.mxu0 0.0
      %1107 = vmatprep.subr.mxu0 0.0
      %1108 = vmatpush1.msra.mxu0 0.0
      %1109 = vmatprep.subr.mxu0 0.0
      %1110 = vmatpush1.msra.mxu0 0.0
      %1111 = vmatprep.subr.mxu0 0.0
      %1112 = vmatpush1.msra.mxu0 0.0
      %1113 = vmatprep.subr.mxu0 0.0
      %1114 = vmatpush1.msra.mxu0 0.0
      %1115 = vmatprep.subr.mxu0 0.0
      %1116 = vmatpush1.msra.mxu0 0.0
      %1117 = vmatprep.subr.mxu0 0.0
      %1118 = vmatpush1.msra.mxu0 0.0
      %1119 = vmatprep.subr.mxu0 0.0
      %1120 = vmatpush1.msra.mxu0 0.0
      %1121 = vmatprep.mubr.f32.mxu0 0.0
      %1122 = vmatmul.mubr.f32.gmra.mrb[0].mxu0 %v1052
      %v1123 = vpop.f32.mrb[0].mxu0
      %v1124 = vadd.f32 %v1043, %v1123
      %v1125 = vpop.f32.mrb[0].mxu0
      %1126 = vmatprep.mubr.f32.mxu0 0.0
      %1127 = vmatmul.mubr.f32.gmra.mrb[0].mxu0 %v1055
      %v1128 = vpop.f32.mrb[0].mxu0
      %v1129 = vadd.f32 %v1048, %v1128
      %v1130 = vpop.f32.mrb[0].mxu0
      %1131 = vdwg.mxu0
      %1132 = vrot.lane.b32.xlu0 %v570, 112
      %v1133 = vpop.permute.xlu0 %1132
      %1134 = vrot.lane.b32.xlu0 %v571, 112
      %v1135 = vpop.permute.xlu0 %1134
      %1136 = vrot.lane.b32.xlu0 %v564, 112
      %v1137 = vpop.permute.xlu0 %1136
      %1138 = vrot.lane.b32.xlu0 %v567, 112
      %v1139 = vpop.permute.xlu0 %1138
      %v1140 = vsel %vm572, %v1133, 0
      %v1142 = vsel %vm572, %v1135, 0
      %v1144 = vsel %vm572, %v1137, 0
      %v1146 = vsel %vm572, %v1139, 0
      %1148 = vmatprep.subr.mxu0 0.0
      %1149 = vmatpush1.xpose.msra.mxu0 %v1144
      %1150 = vmatprep.subr.mxu0 0.0
      %1151 = vmatpush1.xpose.msra.mxu0 %v1146
      %1152 = vmatprep.subr.mxu0 0.0
      %1153 = vmatpush1.xpose.msra.mxu0 0.0
      %1154 = vmatprep.subr.mxu0 0.0
      %1155 = vmatpush1.xpose.msra.mxu0 0.0
      %1156 = vmatprep.subr.mxu0 0.0
      %1157 = vmatpush1.xpose.msra.mxu0 0.0
      %1158 = vmatprep.subr.mxu0 0.0
      %1159 = vmatpush1.xpose.msra.mxu0 0.0
      %1160 = vmatprep.subr.mxu0 0.0
      %1161 = vmatpush1.xpose.msra.mxu0 0.0
      %1162 = vmatprep.subr.mxu0 0.0
      %1163 = vmatpush1.xpose.msra.mxu0 0.0
      %1164 = vmatprep.subr.mxu0 0.0
      %1165 = vmatpush1.xpose.msra.mxu0 0.0
      %1166 = vmatprep.subr.mxu0 0.0
      %1167 = vmatpush1.xpose.msra.mxu0 0.0
      %1168 = vmatprep.subr.mxu0 0.0
      %1169 = vmatpush1.xpose.msra.mxu0 0.0
      %1170 = vmatprep.subr.mxu0 0.0
      %1171 = vmatpush1.xpose.msra.mxu0 0.0
      %1172 = vmatprep.subr.mxu0 0.0
      %1173 = vmatpush1.xpose.msra.mxu0 0.0
      %1174 = vmatprep.subr.mxu0 0.0
      %1175 = vmatpush1.xpose.msra.mxu0 0.0
      %1176 = vmatprep.subr.mxu0 0.0
      %1177 = vmatpush1.xpose.msra.mxu0 0.0
      %1178 = vmatprep.subr.mxu0 0.0
      %1179 = vmatpush1.xpose.msra.mxu0 0.0
      %1180 = vmatprep.subr.mxu0 0.0
      %1181 = vmatpush1.xpose.msra.mxu0 0.0
      %1182 = vmatprep.subr.mxu0 0.0
      %1183 = vmatpush1.xpose.msra.mxu0 0.0
      %1184 = vmatprep.subr.mxu0 0.0
      %1185 = vmatpush1.xpose.msra.mxu0 0.0
      %1186 = vmatprep.subr.mxu0 0.0
      %1187 = vmatpush1.xpose.msra.mxu0 0.0
      %1188 = vmatprep.subr.mxu0 0.0
      %1189 = vmatpush1.xpose.msra.mxu0 0.0
      %1190 = vmatprep.subr.mxu0 0.0
      %1191 = vmatpush1.xpose.msra.mxu0 0.0
      %1192 = vmatprep.subr.mxu0 0.0
      %1193 = vmatpush1.xpose.msra.mxu0 0.0
      %1194 = vmatprep.subr.mxu0 0.0
      %1195 = vmatpush1.xpose.msra.mxu0 0.0
      %1196 = vmatprep.subr.mxu0 0.0
      %1197 = vmatpush1.xpose.msra.mxu0 0.0
      %1198 = vmatprep.subr.mxu0 0.0
      %1199 = vmatpush1.xpose.msra.mxu0 0.0
      %1200 = vmatprep.subr.mxu0 0.0
      %1201 = vmatpush1.xpose.msra.mxu0 0.0
      %1202 = vmatprep.subr.mxu0 0.0
      %1203 = vmatpush1.xpose.msra.mxu0 0.0
      %1204 = vmatprep.subr.mxu0 0.0
      %1205 = vmatpush1.xpose.msra.mxu0 0.0
      %1206 = vmatprep.subr.mxu0 0.0
      %1207 = vmatpush1.xpose.msra.mxu0 0.0
      %1208 = vmatprep.subr.mxu0 0.0
      %1209 = vmatpush1.xpose.msra.mxu0 0.0
      %1210 = vmatprep.subr.mxu0 0.0
      %1211 = vmatpush1.xpose.msra.mxu0 0.0
      %1212 = vmatprep.mubr.f32.mxu0 0.0
      %1213 = vmatmul.mubr.f32.gmra.mrb[0].mxu0 %v1140
      %v1214 = vpop.f32.mrb[0].mxu0
      %v1215 = vadd.f32 0.0, %v1214
      %v1216 = vpop.f32.mrb[0].mxu0
      %1217 = vmatprep.mubr.f32.mxu0 0.0
      %1218 = vmatmul.mubr.f32.gmra.mrb[0].mxu0 %v1142
      %v1219 = vpop.f32.mrb[0].mxu0
      %v1220 = vadd.f32 0.0, %v1219
      %v1221 = vpop.f32.mrb[0].mxu0
      %1222 = vdwg.mxu0
      %v1223 = vsel %vm660, %v1215, -inf
      %1224 = vmax.xlane.f32.xlu0 %v1223
      %v1225 = vpop.xlane.xlu0 %1224
      %v1226 = vsel %vm660, %v1220, -inf
      %1227 = vmax.xlane.f32.xlu0 %v1226
      %v1228 = vpop.xlane.xlu0 %1227
      %v1229 = vsub.f32 %v1215, %v1225
      %v1230 = vsub.f32 %v1220, %v1228
      %v1231 = vmul.f32 %v1229, 1.442695
      %v1232 = vpow.pop %v1231
      %v1233 = vmul.f32 %v1230, 1.442695
      %v1234 = vpow.pop %v1233
      %v1235 = vsel %vm660, %v1232, 0.0
      %1236 = vadd.xlane.f32.xlu0 %v1235
      %v1237 = vpop.xlane.xlu0 %1236
      %v1238 = vsel %vm660, %v1234, 0.0
      %1239 = vadd.xlane.f32.xlu0 %v1238
      %v1240 = vpop.xlane.xlu0 %1239
      %v1241 = vrcp.pop %v1237
      %v1242 = vrcp.pop %v1240
      %v1243 = vmul.f32 %v1232, %v1241
      %v1244 = vmul.f32 %v1234, %v1242
      %1245 = vrot.lane.b32.xlu0 %v564, 48
      %v1246 = vpop.permute.xlu0 %1245
      %1247 = vrot.lane.b32.xlu0 %v567, 48
      %v1248 = vpop.permute.xlu0 %1247
      %v1252 = vsel %vm660, %v1243, 0
      %v1255 = vsel %vm660, %v1244, 0
      %1257 = vmatprep.subr.mxu0 0.0
      %1258 = vmatpush1.msra.mxu0 %v1246
      %1259 = vmatprep.subr.mxu0 0.0
      %1260 = vmatpush1.msra.mxu0 %v1248
      %1261 = vmatprep.subr.mxu0 0.0
      %1262 = vmatpush1.msra.mxu0 0.0
      %1263 = vmatprep.subr.mxu0 0.0
      %1264 = vmatpush1.msra.mxu0 0.0
      %1265 = vmatprep.subr.mxu0 0.0
      %1266 = vmatpush1.msra.mxu0 0.0
      %1267 = vmatprep.subr.mxu0 0.0
      %1268 = vmatpush1.msra.mxu0 0.0
      %1269 = vmatprep.subr.mxu0 0.0
      %1270 = vmatpush1.msra.mxu0 0.0
      %1271 = vmatprep.subr.mxu0 0.0
      %1272 = vmatpush1.msra.mxu0 0.0
      %1273 = vmatprep.subr.mxu0 0.0
      %1274 = vmatpush1.msra.mxu0 0.0
      %1275 = vmatprep.subr.mxu0 0.0
      %1276 = vmatpush1.msra.mxu0 0.0
      %1277 = vmatprep.subr.mxu0 0.0
      %1278 = vmatpush1.msra.mxu0 0.0
      %1279 = vmatprep.subr.mxu0 0.0
      %1280 = vmatpush1.msra.mxu0 0.0
      %1281 = vmatprep.subr.mxu0 0.0
      %1282 = vmatpush1.msra.mxu0 0.0
      %1283 = vmatprep.subr.mxu0 0.0
      %1284 = vmatpush1.msra.mxu0 0.0
      %1285 = vmatprep.subr.mxu0 0.0
      %1286 = vmatpush1.msra.mxu0 0.0
      %1287 = vmatprep.subr.mxu0 0.0
      %1288 = vmatpush1.msra.mxu0 0.0
      %1289 = vmatprep.subr.mxu0 0.0
      %1290 = vmatpush1.msra.mxu0 0.0
      %1291 = vmatprep.subr.mxu0 0.0
      %1292 = vmatpush1.msra.mxu0 0.0
      %1293 = vmatprep.subr.mxu0 0.0
      %1294 = vmatpush1.msra.mxu0 0.0
      %1295 = vmatprep.subr.mxu0 0.0
      %1296 = vmatpush1.msra.mxu0 0.0
      %1297 = vmatprep.subr.mxu0 0.0
      %1298 = vmatpush1.msra.mxu0 0.0
      %1299 = vmatprep.subr.mxu0 0.0
      %1300 = vmatpush1.msra.mxu0 0.0
      %1301 = vmatprep.subr.mxu0 0.0
      %1302 = vmatpush1.msra.mxu0 0.0
      %1303 = vmatprep.subr.mxu0 0.0
      %1304 = vmatpush1.msra.mxu0 0.0
      %1305 = vmatprep.subr.mxu0 0.0
      %1306 = vmatpush1.msra.mxu0 0.0
      %1307 = vmatprep.subr.mxu0 0.0
      %1308 = vmatpush1.msra.mxu0 0.0
      %1309 = vmatprep.subr.mxu0 0.0
      %1310 = vmatpush1.msra.mxu0 0.0
      %1311 = vmatprep.subr.mxu0 0.0
      %1312 = vmatpush1.msra.mxu0 0.0
      %1313 = vmatprep.subr.mxu0 0.0
      %1314 = vmatpush1.msra.mxu0 0.0
      %1315 = vmatprep.subr.mxu0 0.0
      %1316 = vmatpush1.msra.mxu0 0.0
      %1317 = vmatprep.subr.mxu0 0.0
      %1318 = vmatpush1.msra.mxu0 0.0
      %1319 = vmatprep.subr.mxu0 0.0
      %1320 = vmatpush1.msra.mxu0 0.0
      %1321 = vmatprep.mubr.f32.mxu0 0.0
      %1322 = vmatmul.mubr.f32.gmra.mrb[0].mxu0 %v1252
      %v1323 = vpop.f32.mrb[0].mxu0
      %v1324 = vadd.f32 0.0, %v1323
      %v1325 = vpop.f32.mrb[0].mxu0
      %1326 = vmatprep.mubr.f32.mxu0 0.0
      %1327 = vmatmul.mubr.f32.gmra.mrb[0].mxu0 %v1255
      %v1328 = vpop.f32.mrb[0].mxu0
      %v1329 = vadd.f32 0.0, %v1328
      %v1330 = vpop.f32.mrb[0].mxu0
      %1331 = vdwg.mxu0
      %v1333 = vsel %vm572, %v1324, 0
      %v1336 = vsel %vm572, %v1329, 0
      %1338 = vmatprep.subr.mxu0 0.0
      %1339 = vmatpush1.msra.mxu0 %v454
      %1340 = vmatprep.subr.mxu0 0.0
      %1341 = vmatpush1.msra.mxu0 0.0
      %1342 = vmatprep.subr.mxu0 0.0
      %1343 = vmatpush1.msra.mxu0 0.0
      %1344 = vmatprep.subr.mxu0 0.0
      %1345 = vmatpush1.msra.mxu0 0.0
      %1346 = vmatprep.subr.mxu0 0.0
      %1347 = vmatpush1.msra.mxu0 0.0
      %1348 = vmatprep.subr.mxu0 0.0
      %1349 = vmatpush1.msra.mxu0 0.0
      %1350 = vmatprep.subr.mxu0 0.0
      %1351 = vmatpush1.msra.mxu0 0.0
      %1352 = vmatprep.subr.mxu0 0.0
      %1353 = vmatpush1.msra.mxu0 0.0
      %1354 = vmatprep.subr.mxu0 0.0
      %1355 = vmatpush1.msra.mxu0 0.0
      %1356 = vmatprep.subr.mxu0 0.0
      %1357 = vmatpush1.msra.mxu0 0.0
      %1358 = vmatprep.subr.mxu0 0.0
      %1359 = vmatpush1.msra.mxu0 0.0
      %1360 = vmatprep.subr.mxu0 0.0
      %1361 = vmatpush1.msra.mxu0 0.0
      %1362 = vmatprep.subr.mxu0 0.0
      %1363 = vmatpush1.msra.mxu0 0.0
      %1364 = vmatprep.subr.mxu0 0.0
      %1365 = vmatpush1.msra.mxu0 0.0
      %1366 = vmatprep.subr.mxu0 0.0
      %1367 = vmatpush1.msra.mxu0 0.0
      %1368 = vmatprep.subr.mxu0 0.0
      %1369 = vmatpush1.msra.mxu0 0.0
      %1370 = vmatprep.subr.mxu0 0.0
      %1371 = vmatpush1.msra.mxu0 0.0
      %1372 = vmatprep.subr.mxu0 0.0
      %1373 = vmatpush1.msra.mxu0 0.0
      %1374 = vmatprep.subr.mxu0 0.0
      %1375 = vmatpush1.msra.mxu0 0.0
      %1376 = vmatprep.subr.mxu0 0.0
      %1377 = vmatpush1.msra.mxu0 0.0
      %1378 = vmatprep.subr.mxu0 0.0
      %1379 = vmatpush1.msra.mxu0 0.0
      %1380 = vmatprep.subr.mxu0 0.0
      %1381 = vmatpush1.msra.mxu0 0.0
      %1382 = vmatprep.subr.mxu0 0.0
      %1383 = vmatpush1.msra.mxu0 0.0
      %1384 = vmatprep.subr.mxu0 0.0
      %1385 = vmatpush1.msra.mxu0 0.0
      %1386 = vmatprep.subr.mxu0 0.0
      %1387 = vmatpush1.msra.mxu0 0.0
      %1388 = vmatprep.subr.mxu0 0.0
      %1389 = vmatpush1.msra.mxu0 0.0
      %1390 = vmatprep.subr.mxu0 0.0
      %1391 = vmatpush1.msra.mxu0 0.0
      %1392 = vmatprep.subr.mxu0 0.0
      %1393 = vmatpush1.msra.mxu0 0.0
      %1394 = vmatprep.subr.mxu0 0.0
      %1395 = vmatpush1.msra.mxu0 0.0
      %1396 = vmatprep.subr.mxu0 0.0
      %1397 = vmatpush1.msra.mxu0 0.0
      %1398 = vmatprep.subr.mxu0 0.0
      %1399 = vmatpush1.msra.mxu0 0.0
      %1400 = vmatprep.subr.mxu0 0.0
      %1401 = vmatpush1.msra.mxu0 0.0
      %1402 = vmatprep.mubr.f32.mxu0 0.0
      %1403 = vmatmul.mubr.f32.gmra.mrb[0].mxu0 %v1333
      %v1404 = vpop.f32.mrb[0].mxu0
      %v1405 = vadd.f32 0.0, %v1404
      %v1406 = vpop.f32.mrb[0].mxu0
      %1407 = vmatprep.mubr.f32.mxu0 0.0
      %1408 = vmatmul.mubr.f32.gmra.mrb[0].mxu0 %v1336
      %v1409 = vpop.f32.mrb[0].mxu0
      %v1410 = vadd.f32 0.0, %v1409
      %v1411 = vpop.f32.mrb[0].mxu0
      %1412 = vdwg.mxu0
      %v1413 = vadd.f32 %v1124, %v1405
      %v1414 = vadd.f32 %v1129, %v1410
      %1415 = vrot.lane.b32.xlu0 %v570, 104
      %v1416 = vpop.permute.xlu0 %1415
      %1417 = vrot.lane.b32.xlu0 %v571, 104
      %v1418 = vpop.permute.xlu0 %1417
      %1419 = vrot.lane.b32.xlu0 %v564, 104
      %v1420 = vpop.permute.xlu0 %1419
      %1421 = vrot.lane.b32.xlu0 %v567, 104
      %v1422 = vpop.permute.xlu0 %1421
      %v1423 = vsel %vm572, %v1416, 0
      %v1425 = vsel %vm572, %v1418, 0
      %v1427 = vsel %vm572, %v1420, 0
      %v1429 = vsel %vm572, %v1422, 0
      %1431 = vmatprep.subr.mxu0 0.0
      %1432 = vmatpush1.xpose.msra.mxu0 %v1427
      %1433 = vmatprep.subr.mxu0 0.0
      %1434 = vmatpush1.xpose.msra.mxu0 %v1429
      %1435 = vmatprep.subr.mxu0 0.0
      %1436 = vmatpush1.xpose.msra.mxu0 0.0
      %1437 = vmatprep.subr.mxu0 0.0
      %1438 = vmatpush1.xpose.msra.mxu0 0.0
      %1439 = vmatprep.subr.mxu0 0.0
      %1440 = vmatpush1.xpose.msra.mxu0 0.0
      %1441 = vmatprep.subr.mxu0 0.0
      %1442 = vmatpush1.xpose.msra.mxu0 0.0
      %1443 = vmatprep.subr.mxu0 0.0
      %1444 = vmatpush1.xpose.msra.mxu0 0.0
      %1445 = vmatprep.subr.mxu0 0.0
      %1446 = vmatpush1.xpose.msra.mxu0 0.0
      %1447 = vmatprep.subr.mxu0 0.0
      %1448 = vmatpush1.xpose.msra.mxu0 0.0
      %1449 = vmatprep.subr.mxu0 0.0
      %1450 = vmatpush1.xpose.msra.mxu0 0.0
      %1451 = vmatprep.subr.mxu0 0.0
      %1452 = vmatpush1.xpose.msra.mxu0 0.0
      %1453 = vmatprep.subr.mxu0 0.0
      %1454 = vmatpush1.xpose.msra.mxu0 0.0
      %1455 = vmatprep.subr.mxu0 0.0
      %1456 = vmatpush1.xpose.msra.mxu0 0.0
      %1457 = vmatprep.subr.mxu0 0.0
      %1458 = vmatpush1.xpose.msra.mxu0 0.0
      %1459 = vmatprep.subr.mxu0 0.0
      %1460 = vmatpush1.xpose.msra.mxu0 0.0
      %1461 = vmatprep.subr.mxu0 0.0
      %1462 = vmatpush1.xpose.msra.mxu0 0.0
      %1463 = vmatprep.subr.mxu0 0.0
      %1464 = vmatpush1.xpose.msra.mxu0 0.0
      %1465 = vmatprep.subr.mxu0 0.0
      %1466 = vmatpush1.xpose.msra.mxu0 0.0
      %1467 = vmatprep.subr.mxu0 0.0
      %1468 = vmatpush1.xpose.msra.mxu0 0.0
      %1469 = vmatprep.subr.mxu0 0.0
      %1470 = vmatpush1.xpose.msra.mxu0 0.0
      %1471 = vmatprep.subr.mxu0 0.0
      %1472 = vmatpush1.xpose.msra.mxu0 0.0
      %1473 = vmatprep.subr.mxu0 0.0
      %1474 = vmatpush1.xpose.msra.mxu0 0.0
      %1475 = vmatprep.subr.mxu0 0.0
      %1476 = vmatpush1.xpose.msra.mxu0 0.0
      %1477 = vmatprep.subr.mxu0 0.0
      %1478 = vmatpush1.xpose.msra.mxu0 0.0
      %1479 = vmatprep.subr.mxu0 0.0
      %1480 = vmatpush1.xpose.msra.mxu0 0.0
      %1481 = vmatprep.subr.mxu0 0.0
      %1482 = vmatpush1.xpose.msra.mxu0 0.0
      %1483 = vmatprep.subr.mxu0 0.0
      %1484 = vmatpush1.xpose.msra.mxu0 0.0
      %1485 = vmatprep.subr.mxu0 0.0
      %1486 = vmatpush1.xpose.msra.mxu0 0.0
      %1487 = vmatprep.subr.mxu0 0.0
      %1488 = vmatpush1.xpose.msra.mxu0 0.0
      %1489 = vmatprep.subr.mxu0 0.0
      %1490 = vmatpush1.xpose.msra.mxu0 0.0
      %1491 = vmatprep.subr.mxu0 0.0
      %1492 = vmatpush1.xpose.msra.mxu0 0.0
      %1493 = vmatprep.subr.mxu0 0.0
      %1494 = vmatpush1.xpose.msra.mxu0 0.0
      %1495 = vmatprep.mubr.f32.mxu0 0.0
      %1496 = vmatmul.mubr.f32.gmra.mrb[0].mxu0 %v1423
      %v1497 = vpop.f32.mrb[0].mxu0
      %v1498 = vadd.f32 0.0, %v1497
      %v1499 = vpop.f32.mrb[0].mxu0
      %1500 = vmatprep.mubr.f32.mxu0 0.0
      %1501 = vmatmul.mubr.f32.gmra.mrb[0].mxu0 %v1425
      %v1502 = vpop.f32.mrb[0].mxu0
      %v1503 = vadd.f32 0.0, %v1502
      %v1504 = vpop.f32.mrb[0].mxu0
      %1505 = vdwg.mxu0
      %v1506 = vsel %vm660, %v1498, -inf
      %1507 = vmax.xlane.f32.xlu0 %v1506
      %v1508 = vpop.xlane.xlu0 %1507
      %v1509 = vsel %vm660, %v1503, -inf
      %1510 = vmax.xlane.f32.xlu0 %v1509
      %v1511 = vpop.xlane.xlu0 %1510
      %v1512 = vsub.f32 %v1498, %v1508
      %v1513 = vsub.f32 %v1503, %v1511
      %v1514 = vmul.f32 %v1512, 1.442695
      %v1515 = vpow.pop %v1514
      %v1516 = vmul.f32 %v1513, 1.442695
      %v1517 = vpow.pop %v1516
      %v1518 = vsel %vm660, %v1515, 0.0
      %1519 = vadd.xlane.f32.xlu0 %v1518
      %v1520 = vpop.xlane.xlu0 %1519
      %v1521 = vsel %vm660, %v1517, 0.0
      %1522 = vadd.xlane.f32.xlu0 %v1521
      %v1523 = vpop.xlane.xlu0 %1522
      %v1524 = vrcp.pop %v1520
      %v1525 = vrcp.pop %v1523
      %v1526 = vmul.f32 %v1515, %v1524
      %v1527 = vmul.f32 %v1517, %v1525
      %1528 = vrot.lane.b32.xlu0 %v564, 40
      %v1529 = vpop.permute.xlu0 %1528
      %1530 = vrot.lane.b32.xlu0 %v567, 40
      %v1531 = vpop.permute.xlu0 %1530
      %v1535 = vsel %vm660, %v1526, 0
      %v1538 = vsel %vm660, %v1527, 0
      %1540 = vmatprep.subr.mxu0 0.0
      %1541 = vmatpush1.msra.mxu0 %v1529
      %1542 = vmatprep.subr.mxu0 0.0
      %1543 = vmatpush1.msra.mxu0 %v1531
      %1544 = vmatprep.subr.mxu0 0.0
      %1545 = vmatpush1.msra.mxu0 0.0
      %1546 = vmatprep.subr.mxu0 0.0
      %1547 = vmatpush1.msra.mxu0 0.0
      %1548 = vmatprep.subr.mxu0 0.0
      %1549 = vmatpush1.msra.mxu0 0.0
      %1550 = vmatprep.subr.mxu0 0.0
      %1551 = vmatpush1.msra.mxu0 0.0
      %1552 = vmatprep.subr.mxu0 0.0
      %1553 = vmatpush1.msra.mxu0 0.0
      %1554 = vmatprep.subr.mxu0 0.0
      %1555 = vmatpush1.msra.mxu0 0.0
      %1556 = vmatprep.subr.mxu0 0.0
      %1557 = vmatpush1.msra.mxu0 0.0
      %1558 = vmatprep.subr.mxu0 0.0
      %1559 = vmatpush1.msra.mxu0 0.0
      %1560 = vmatprep.subr.mxu0 0.0
      %1561 = vmatpush1.msra.mxu0 0.0
      %1562 = vmatprep.subr.mxu0 0.0
      %1563 = vmatpush1.msra.mxu0 0.0
      %1564 = vmatprep.subr.mxu0 0.0
      %1565 = vmatpush1.msra.mxu0 0.0
      %1566 = vmatprep.subr.mxu0 0.0
      %1567 = vmatpush1.msra.mxu0 0.0
      %1568 = vmatprep.subr.mxu0 0.0
      %1569 = vmatpush1.msra.mxu0 0.0
      %1570 = vmatprep.subr.mxu0 0.0
      %1571 = vmatpush1.msra.mxu0 0.0
      %1572 = vmatprep.subr.mxu0 0.0
      %1573 = vmatpush1.msra.mxu0 0.0
      %1574 = vmatprep.subr.mxu0 0.0
      %1575 = vmatpush1.msra.mxu0 0.0
      %1576 = vmatprep.subr.mxu0 0.0
      %1577 = vmatpush1.msra.mxu0 0.0
      %1578 = vmatprep.subr.mxu0 0.0
      %1579 = vmatpush1.msra.mxu0 0.0
      %1580 = vmatprep.subr.mxu0 0.0
      %1581 = vmatpush1.msra.mxu0 0.0
      %1582 = vmatprep.subr.mxu0 0.0
      %1583 = vmatpush1.msra.mxu0 0.0
      %1584 = vmatprep.subr.mxu0 0.0
      %1585 = vmatpush1.msra.mxu0 0.0
      %1586 = vmatprep.subr.mxu0 0.0
      %1587 = vmatpush1.msra.mxu0 0.0
      %1588 = vmatprep.subr.mxu0 0.0
      %1589 = vmatpush1.msra.mxu0 0.0
      %1590 = vmatprep.subr.mxu0 0.0
      %1591 = vmatpush1.msra.mxu0 0.0
      %1592 = vmatprep.subr.mxu0 0.0
      %1593 = vmatpush1.msra.mxu0 0.0
      %1594 = vmatprep.subr.mxu0 0.0
      %1595 = vmatpush1.msra.mxu0 0.0
      %1596 = vmatprep.subr.mxu0 0.0
      %1597 = vmatpush1.msra.mxu0 0.0
      %1598 = vmatprep.subr.mxu0 0.0
      %1599 = vmatpush1.msra.mxu0 0.0
      %1600 = vmatprep.subr.mxu0 0.0
      %1601 = vmatpush1.msra.mxu0 0.0
      %1602 = vmatprep.subr.mxu0 0.0
      %1603 = vmatpush1.msra.mxu0 0.0
      %1604 = vmatprep.mubr.f32.mxu0 0.0
      %1605 = vmatmul.mubr.f32.gmra.mrb[0].mxu0 %v1535
      %v1606 = vpop.f32.mrb[0].mxu0
      %v1607 = vadd.f32 0.0, %v1606
      %v1608 = vpop.f32.mrb[0].mxu0
      %1609 = vmatprep.mubr.f32.mxu0 0.0
      %1610 = vmatmul.mubr.f32.gmra.mrb[0].mxu0 %v1538
      %v1611 = vpop.f32.mrb[0].mxu0
      %v1612 = vadd.f32 0.0, %v1611
      %v1613 = vpop.f32.mrb[0].mxu0
      %1614 = vdwg.mxu0
      %v1616 = vsel %vm572, %v1607, 0
      %v1619 = vsel %vm572, %v1612, 0
      %1621 = vmatprep.subr.mxu0 0.0
      %1622 = vmatpush1.msra.mxu0 %v455
      %1623 = vmatprep.subr.mxu0 0.0
      %1624 = vmatpush1.msra.mxu0 0.0
      %1625 = vmatprep.subr.mxu0 0.0
      %1626 = vmatpush1.msra.mxu0 0.0
      %1627 = vmatprep.subr.mxu0 0.0
      %1628 = vmatpush1.msra.mxu0 0.0
      %1629 = vmatprep.subr.mxu0 0.0
      %1630 = vmatpush1.msra.mxu0 0.0
      %1631 = vmatprep.subr.mxu0 0.0
      %1632 = vmatpush1.msra.mxu0 0.0
      %1633 = vmatprep.subr.mxu0 0.0
      %1634 = vmatpush1.msra.mxu0 0.0
      %1635 = vmatprep.subr.mxu0 0.0
      %1636 = vmatpush1.msra.mxu0 0.0
      %1637 = vmatprep.subr.mxu0 0.0
      %1638 = vmatpush1.msra.mxu0 0.0
      %1639 = vmatprep.subr.mxu0 0.0
      %1640 = vmatpush1.msra.mxu0 0.0
      %1641 = vmatprep.subr.mxu0 0.0
      %1642 = vmatpush1.msra.mxu0 0.0
      %1643 = vmatprep.subr.mxu0 0.0
      %1644 = vmatpush1.msra.mxu0 0.0
      %1645 = vmatprep.subr.mxu0 0.0
      %1646 = vmatpush1.msra.mxu0 0.0
      %1647 = vmatprep.subr.mxu0 0.0
      %1648 = vmatpush1.msra.mxu0 0.0
      %1649 = vmatprep.subr.mxu0 0.0
      %1650 = vmatpush1.msra.mxu0 0.0
      %1651 = vmatprep.subr.mxu0 0.0
      %1652 = vmatpush1.msra.mxu0 0.0
      %1653 = vmatprep.subr.mxu0 0.0
      %1654 = vmatpush1.msra.mxu0 0.0
      %1655 = vmatprep.subr.mxu0 0.0
      %1656 = vmatpush1.msra.mxu0 0.0
      %1657 = vmatprep.subr.mxu0 0.0
      %1658 = vmatpush1.msra.mxu0 0.0
      %1659 = vmatprep.subr.mxu0 0.0
      %1660 = vmatpush1.msra.mxu0 0.0
      %1661 = vmatprep.subr.mxu0 0.0
      %1662 = vmatpush1.msra.mxu0 0.0
      %1663 = vmatprep.subr.mxu0 0.0
      %1664 = vmatpush1.msra.mxu0 0.0
      %1665 = vmatprep.subr.mxu0 0.0
      %1666 = vmatpush1.msra.mxu0 0.0
      %1667 = vmatprep.subr.mxu0 0.0
      %1668 = vmatpush1.msra.mxu0 0.0
      %1669 = vmatprep.subr.mxu0 0.0
      %1670 = vmatpush1.msra.mxu0 0.0
      %1671 = vmatprep.subr.mxu0 0.0
      %1672 = vmatpush1.msra.mxu0 0.0
      %1673 = vmatprep.subr.mxu0 0.0
      %1674 = vmatpush1.msra.mxu0 0.0
      %1675 = vmatprep.subr.mxu0 0.0
      %1676 = vmatpush1.msra.mxu0 0.0
      %1677 = vmatprep.subr.mxu0 0.0
      %1678 = vmatpush1.msra.mxu0 0.0
      %1679 = vmatprep.subr.mxu0 0.0
      %1680 = vmatpush1.msra.mxu0 0.0
      %1681 = vmatprep.subr.mxu0 0.0
      %1682 = vmatpush1.msra.mxu0 0.0
      %1683 = vmatprep.subr.mxu0 0.0
      %1684 = vmatpush1.msra.mxu0 0.0
      %1685 = vmatprep.mubr.f32.mxu0 0.0
      %1686 = vmatmul.mubr.f32.gmra.mrb[0].mxu0 %v1616
      %v1687 = vpop.f32.mrb[0].mxu0
      %v1688 = vadd.f32 0.0, %v1687
      %v1689 = vpop.f32.mrb[0].mxu0
      %1690 = vmatprep.mubr.f32.mxu0 0.0
      %1691 = vmatmul.mubr.f32.gmra.mrb[0].mxu0 %v1619
      %v1692 = vpop.f32.mrb[0].mxu0
      %v1693 = vadd.f32 0.0, %v1692
      %v1694 = vpop.f32.mrb[0].mxu0
      %1695 = vdwg.mxu0
      %v1696 = vadd.f32 %v1413, %v1688
      %v1697 = vadd.f32 %v1414, %v1693
      %1698 = vrot.lane.b32.xlu0 %v570, 96
      %v1699 = vpop.permute.xlu0 %1698
      %1700 = vrot.lane.b32.xlu0 %v571, 96
      %v1701 = vpop.permute.xlu0 %1700
      %1702 = vrot.lane.b32.xlu0 %v564, 96
      %v1703 = vpop.permute.xlu0 %1702
      %1704 = vrot.lane.b32.xlu0 %v567, 96
      %v1705 = vpop.permute.xlu0 %1704
      %v1706 = vsel %vm572, %v1699, 0
      %v1708 = vsel %vm572, %v1701, 0
      %v1710 = vsel %vm572, %v1703, 0
      %v1712 = vsel %vm572, %v1705, 0
      %1714 = vmatprep.subr.mxu0 0.0
      %1715 = vmatpush1.xpose.msra.mxu0 %v1710
      %1716 = vmatprep.subr.mxu0 0.0
      %1717 = vmatpush1.xpose.msra.mxu0 %v1712
      %1718 = vmatprep.subr.mxu0 0.0
      %1719 = vmatpush1.xpose.msra.mxu0 0.0
      %1720 = vmatprep.subr.mxu0 0.0
      %1721 = vmatpush1.xpose.msra.mxu0 0.0
      %1722 = vmatprep.subr.mxu0 0.0
      %1723 = vmatpush1.xpose.msra.mxu0 0.0
      %1724 = vmatprep.subr.mxu0 0.0
      %1725 = vmatpush1.xpose.msra.mxu0 0.0
      %1726 = vmatprep.subr.mxu0 0.0
      %1727 = vmatpush1.xpose.msra.mxu0 0.0
      %1728 = vmatprep.subr.mxu0 0.0
      %1729 = vmatpush1.xpose.msra.mxu0 0.0
      %1730 = vmatprep.subr.mxu0 0.0
      %1731 = vmatpush1.xpose.msra.mxu0 0.0
      %1732 = vmatprep.subr.mxu0 0.0
      %1733 = vmatpush1.xpose.msra.mxu0 0.0
      %1734 = vmatprep.subr.mxu0 0.0
      %1735 = vmatpush1.xpose.msra.mxu0 0.0
      %1736 = vmatprep.subr.mxu0 0.0
      %1737 = vmatpush1.xpose.msra.mxu0 0.0
      %1738 = vmatprep.subr.mxu0 0.0
      %1739 = vmatpush1.xpose.msra.mxu0 0.0
      %1740 = vmatprep.subr.mxu0 0.0
      %1741 = vmatpush1.xpose.msra.mxu0 0.0
      %1742 = vmatprep.subr.mxu0 0.0
      %1743 = vmatpush1.xpose.msra.mxu0 0.0
      %1744 = vmatprep.subr.mxu0 0.0
      %1745 = vmatpush1.xpose.msra.mxu0 0.0
      %1746 = vmatprep.subr.mxu0 0.0
      %1747 = vmatpush1.xpose.msra.mxu0 0.0
      %1748 = vmatprep.subr.mxu0 0.0
      %1749 = vmatpush1.xpose.msra.mxu0 0.0
      %1750 = vmatprep.subr.mxu0 0.0
      %1751 = vmatpush1.xpose.msra.mxu0 0.0
      %1752 = vmatprep.subr.mxu0 0.0
      %1753 = vmatpush1.xpose.msra.mxu0 0.0
      %1754 = vmatprep.subr.mxu0 0.0
      %1755 = vmatpush1.xpose.msra.mxu0 0.0
      %1756 = vmatprep.subr.mxu0 0.0
      %1757 = vmatpush1.xpose.msra.mxu0 0.0
      %1758 = vmatprep.subr.mxu0 0.0
      %1759 = vmatpush1.xpose.msra.mxu0 0.0
      %1760 = vmatprep.subr.mxu0 0.0
      %1761 = vmatpush1.xpose.msra.mxu0 0.0
      %1762 = vmatprep.subr.mxu0 0.0
      %1763 = vmatpush1.xpose.msra.mxu0 0.0
      %1764 = vmatprep.subr.mxu0 0.0
      %1765 = vmatpush1.xpose.msra.mxu0 0.0
      %1766 = vmatprep.subr.mxu0 0.0
      %1767 = vmatpush1.xpose.msra.mxu0 0.0
      %1768 = vmatprep.subr.mxu0 0.0
      %1769 = vmatpush1.xpose.msra.mxu0 0.0
      %1770 = vmatprep.subr.mxu0 0.0
      %1771 = vmatpush1.xpose.msra.mxu0 0.0
      %1772 = vmatprep.subr.mxu0 0.0
      %1773 = vmatpush1.xpose.msra.mxu0 0.0
      %1774 = vmatprep.subr.mxu0 0.0
      %1775 = vmatpush1.xpose.msra.mxu0 0.0
      %1776 = vmatprep.subr.mxu0 0.0
      %1777 = vmatpush1.xpose.msra.mxu0 0.0
      %1778 = vmatprep.mubr.f32.mxu0 0.0
      %1779 = vmatmul.mubr.f32.gmra.mrb[0].mxu0 %v1706
      %v1780 = vpop.f32.mrb[0].mxu0
      %v1781 = vadd.f32 0.0, %v1780
      %v1782 = vpop.f32.mrb[0].mxu0
      %1783 = vmatprep.mubr.f32.mxu0 0.0
      %1784 = vmatmul.mubr.f32.gmra.mrb[0].mxu0 %v1708
      %v1785 = vpop.f32.mrb[0].mxu0
      %v1786 = vadd.f32 0.0, %v1785
      %v1787 = vpop.f32.mrb[0].mxu0
      %1788 = vdwg.mxu0
      %v1789 = vsel %vm660, %v1781, -inf
      %1790 = vmax.xlane.f32.xlu0 %v1789
      %v1791 = vpop.xlane.xlu0 %1790
      %v1792 = vsel %vm660, %v1786, -inf
      %1793 = vmax.xlane.f32.xlu0 %v1792
      %v1794 = vpop.xlane.xlu0 %1793
      %v1795 = vsub.f32 %v1781, %v1791
      %v1796 = vsub.f32 %v1786, %v1794
      %v1797 = vmul.f32 %v1795, 1.442695
      %v1798 = vpow.pop %v1797
      %v1799 = vmul.f32 %v1796, 1.442695
      %v1800 = vpow.pop %v1799
      %v1801 = vsel %vm660, %v1798, 0.0
      %1802 = vadd.xlane.f32.xlu0 %v1801
      %v1803 = vpop.xlane.xlu0 %1802
      %v1804 = vsel %vm660, %v1800, 0.0
      %1805 = vadd.xlane.f32.xlu0 %v1804
      %v1806 = vpop.xlane.xlu0 %1805
      %v1807 = vrcp.pop %v1803
      %v1808 = vrcp.pop %v1806
      %v1809 = vmul.f32 %v1798, %v1807
      %v1810 = vmul.f32 %v1800, %v1808
      %1811 = vrot.lane.b32.xlu0 %v564, 32
      %v1812 = vpop.permute.xlu0 %1811
      %1813 = vrot.lane.b32.xlu0 %v567, 32
      %v1814 = vpop.permute.xlu0 %1813
      %v1818 = vsel %vm660, %v1809, 0
      %v1821 = vsel %vm660, %v1810, 0
      %1823 = vmatprep.subr.mxu0 0.0
      %1824 = vmatpush1.msra.mxu0 %v1812
      %1825 = vmatprep.subr.mxu0 0.0
      %1826 = vmatpush1.msra.mxu0 %v1814
      %1827 = vmatprep.subr.mxu0 0.0
      %1828 = vmatpush1.msra.mxu0 0.0
      %1829 = vmatprep.subr.mxu0 0.0
      %1830 = vmatpush1.msra.mxu0 0.0
      %1831 = vmatprep.subr.mxu0 0.0
      %1832 = vmatpush1.msra.mxu0 0.0
      %1833 = vmatprep.subr.mxu0 0.0
      %1834 = vmatpush1.msra.mxu0 0.0
      %1835 = vmatprep.subr.mxu0 0.0
      %1836 = vmatpush1.msra.mxu0 0.0
      %1837 = vmatprep.subr.mxu0 0.0
      %1838 = vmatpush1.msra.mxu0 0.0
      %1839 = vmatprep.subr.mxu0 0.0
      %1840 = vmatpush1.msra.mxu0 0.0
      %1841 = vmatprep.subr.mxu0 0.0
      %1842 = vmatpush1.msra.mxu0 0.0
      %1843 = vmatprep.subr.mxu0 0.0
      %1844 = vmatpush1.msra.mxu0 0.0
      %1845 = vmatprep.subr.mxu0 0.0
      %1846 = vmatpush1.msra.mxu0 0.0
      %1847 = vmatprep.subr.mxu0 0.0
      %1848 = vmatpush1.msra.mxu0 0.0
      %1849 = vmatprep.subr.mxu0 0.0
      %1850 = vmatpush1.msra.mxu0 0.0
      %1851 = vmatprep.subr.mxu0 0.0
      %1852 = vmatpush1.msra.mxu0 0.0
      %1853 = vmatprep.subr.mxu0 0.0
      %1854 = vmatpush1.msra.mxu0 0.0
      %1855 = vmatprep.subr.mxu0 0.0
      %1856 = vmatpush1.msra.mxu0 0.0
      %1857 = vmatprep.subr.mxu0 0.0
      %1858 = vmatpush1.msra.mxu0 0.0
      %1859 = vmatprep.subr.mxu0 0.0
      %1860 = vmatpush1.msra.mxu0 0.0
      %1861 = vmatprep.subr.mxu0 0.0
      %1862 = vmatpush1.msra.mxu0 0.0
      %1863 = vmatprep.subr.mxu0 0.0
      %1864 = vmatpush1.msra.mxu0 0.0
      %1865 = vmatprep.subr.mxu0 0.0
      %1866 = vmatpush1.msra.mxu0 0.0
      %1867 = vmatprep.subr.mxu0 0.0
      %1868 = vmatpush1.msra.mxu0 0.0
      %1869 = vmatprep.subr.mxu0 0.0
      %1870 = vmatpush1.msra.mxu0 0.0
      %1871 = vmatprep.subr.mxu0 0.0
      %1872 = vmatpush1.msra.mxu0 0.0
      %1873 = vmatprep.subr.mxu0 0.0
      %1874 = vmatpush1.msra.mxu0 0.0
      %1875 = vmatprep.subr.mxu0 0.0
      %1876 = vmatpush1.msra.mxu0 0.0
      %1877 = vmatprep.subr.mxu0 0.0
      %1878 = vmatpush1.msra.mxu0 0.0
      %1879 = vmatprep.subr.mxu0 0.0
      %1880 = vmatpush1.msra.mxu0 0.0
      %1881 = vmatprep.subr.mxu0 0.0
      %1882 = vmatpush1.msra.mxu0 0.0
      %1883 = vmatprep.subr.mxu0 0.0
      %1884 = vmatpush1.msra.mxu0 0.0
      %1885 = vmatprep.subr.mxu0 0.0
      %1886 = vmatpush1.msra.mxu0 0.0
      %1887 = vmatprep.mubr.f32.mxu0 0.0
      %1888 = vmatmul.mubr.f32.gmra.mrb[0].mxu0 %v1818
      %v1889 = vpop.f32.mrb[0].mxu0
      %v1890 = vadd.f32 0.0, %v1889
      %v1891 = vpop.f32.mrb[0].mxu0
      %1892 = vmatprep.mubr.f32.mxu0 0.0
      %1893 = vmatmul.mubr.f32.gmra.mrb[0].mxu0 %v1821
      %v1894 = vpop.f32.mrb[0].mxu0
      %v1895 = vadd.f32 0.0, %v1894
      %v1896 = vpop.f32.mrb[0].mxu0
      %1897 = vdwg.mxu0
      %v1899 = vsel %vm572, %v1890, 0
      %v1902 = vsel %vm572, %v1895, 0
      %1904 = vmatprep.subr.mxu0 0.0
      %1905 = vmatpush1.msra.mxu0 %v456
      %1906 = vmatprep.subr.mxu0 0.0
      %1907 = vmatpush1.msra.mxu0 0.0
      %1908 = vmatprep.subr.mxu0 0.0
      %1909 = vmatpush1.msra.mxu0 0.0
      %1910 = vmatprep.subr.mxu0 0.0
      %1911 = vmatpush1.msra.mxu0 0.0
      %1912 = vmatprep.subr.mxu0 0.0
      %1913 = vmatpush1.msra.mxu0 0.0
      %1914 = vmatprep.subr.mxu0 0.0
      %1915 = vmatpush1.msra.mxu0 0.0
      %1916 = vmatprep.subr.mxu0 0.0
      %1917 = vmatpush1.msra.mxu0 0.0
      %1918 = vmatprep.subr.mxu0 0.0
      %1919 = vmatpush1.msra.mxu0 0.0
      %1920 = vmatprep.subr.mxu0 0.0
      %1921 = vmatpush1.msra.mxu0 0.0
      %1922 = vmatprep.subr.mxu0 0.0
      %1923 = vmatpush1.msra.mxu0 0.0
      %1924 = vmatprep.subr.mxu0 0.0
      %1925 = vmatpush1.msra.mxu0 0.0
      %1926 = vmatprep.subr.mxu0 0.0
      %1927 = vmatpush1.msra.mxu0 0.0
      %1928 = vmatprep.subr.mxu0 0.0
      %1929 = vmatpush1.msra.mxu0 0.0
      %1930 = vmatprep.subr.mxu0 0.0
      %1931 = vmatpush1.msra.mxu0 0.0
      %1932 = vmatprep.subr.mxu0 0.0
      %1933 = vmatpush1.msra.mxu0 0.0
      %1934 = vmatprep.subr.mxu0 0.0
      %1935 = vmatpush1.msra.mxu0 0.0
      %1936 = vmatprep.subr.mxu0 0.0
      %1937 = vmatpush1.msra.mxu0 0.0
      %1938 = vmatprep.subr.mxu0 0.0
      %1939 = vmatpush1.msra.mxu0 0.0
      %1940 = vmatprep.subr.mxu0 0.0
      %1941 = vmatpush1.msra.mxu0 0.0
      %1942 = vmatprep.subr.mxu0 0.0
      %1943 = vmatpush1.msra.mxu0 0.0
      %1944 = vmatprep.subr.mxu0 0.0
      %1945 = vmatpush1.msra.mxu0 0.0
      %1946 = vmatprep.subr.mxu0 0.0
      %1947 = vmatpush1.msra.mxu0 0.0
      %1948 = vmatprep.subr.mxu0 0.0
      %1949 = vmatpush1.msra.mxu0 0.0
      %1950 = vmatprep.subr.mxu0 0.0
      %1951 = vmatpush1.msra.mxu0 0.0
      %1952 = vmatprep.subr.mxu0 0.0
      %1953 = vmatpush1.msra.mxu0 0.0
      %1954 = vmatprep.subr.mxu0 0.0
      %1955 = vmatpush1.msra.mxu0 0.0
      %1956 = vmatprep.subr.mxu0 0.0
      %1957 = vmatpush1.msra.mxu0 0.0
      %1958 = vmatprep.subr.mxu0 0.0
      %1959 = vmatpush1.msra.mxu0 0.0
      %1960 = vmatprep.subr.mxu0 0.0
      %1961 = vmatpush1.msra.mxu0 0.0
      %1962 = vmatprep.subr.mxu0 0.0
      %1963 = vmatpush1.msra.mxu0 0.0
      %1964 = vmatprep.subr.mxu0 0.0
      %1965 = vmatpush1.msra.mxu0 0.0
      %1966 = vmatprep.subr.mxu0 0.0
      %1967 = vmatpush1.msra.mxu0 0.0
      %1968 = vmatprep.mubr.f32.mxu0 0.0
      %1969 = vmatmul.mubr.f32.gmra.mrb[0].mxu0 %v1899
      %v1970 = vpop.f32.mrb[0].mxu0
      %v1971 = vadd.f32 0.0, %v1970
      %v1972 = vpop.f32.mrb[0].mxu0
      %1973 = vmatprep.mubr.f32.mxu0 0.0
      %1974 = vmatmul.mubr.f32.gmra.mrb[0].mxu0 %v1902
      %v1975 = vpop.f32.mrb[0].mxu0
      %v1976 = vadd.f32 0.0, %v1975
      %v1977 = vpop.f32.mrb[0].mxu0
      %1978 = vdwg.mxu0
      %v1979 = vadd.f32 %v1696, %v1971
      %v1980 = vadd.f32 %v1697, %v1976
      %1981 = vrot.lane.b32.xlu0 %v570, 88
      %v1982 = vpop.permute.xlu0 %1981
      %1983 = vrot.lane.b32.xlu0 %v571, 88
      %v1984 = vpop.permute.xlu0 %1983
      %1985 = vrot.lane.b32.xlu0 %v564, 88
      %v1986 = vpop.permute.xlu0 %1985
      %1987 = vrot.lane.b32.xlu0 %v567, 88
      %v1988 = vpop.permute.xlu0 %1987
      %v1989 = vsel %vm572, %v1982, 0
      %v1991 = vsel %vm572, %v1984, 0
      %v1993 = vsel %vm572, %v1986, 0
      %v1995 = vsel %vm572, %v1988, 0
      %1997 = vmatprep.subr.mxu0 0.0
      %1998 = vmatpush1.xpose.msra.mxu0 %v1993
      %1999 = vmatprep.subr.mxu0 0.0
      %2000 = vmatpush1.xpose.msra.mxu0 %v1995
      %2001 = vmatprep.subr.mxu0 0.0
      %2002 = vmatpush1.xpose.msra.mxu0 0.0
      %2003 = vmatprep.subr.mxu0 0.0
      %2004 = vmatpush1.xpose.msra.mxu0 0.0
      %2005 = vmatprep.subr.mxu0 0.0
      %2006 = vmatpush1.xpose.msra.mxu0 0.0
      %2007 = vmatprep.subr.mxu0 0.0
      %2008 = vmatpush1.xpose.msra.mxu0 0.0
      %2009 = vmatprep.subr.mxu0 0.0
      %2010 = vmatpush1.xpose.msra.mxu0 0.0
      %2011 = vmatprep.subr.mxu0 0.0
      %2012 = vmatpush1.xpose.msra.mxu0 0.0
      %2013 = vmatprep.subr.mxu0 0.0
      %2014 = vmatpush1.xpose.msra.mxu0 0.0
      %2015 = vmatprep.subr.mxu0 0.0
      %2016 = vmatpush1.xpose.msra.mxu0 0.0
      %2017 = vmatprep.subr.mxu0 0.0
      %2018 = vmatpush1.xpose.msra.mxu0 0.0
      %2019 = vmatprep.subr.mxu0 0.0
      %2020 = vmatpush1.xpose.msra.mxu0 0.0
      %2021 = vmatprep.subr.mxu0 0.0
      %2022 = vmatpush1.xpose.msra.mxu0 0.0
      %2023 = vmatprep.subr.mxu0 0.0
      %2024 = vmatpush1.xpose.msra.mxu0 0.0
      %2025 = vmatprep.subr.mxu0 0.0
      %2026 = vmatpush1.xpose.msra.mxu0 0.0
      %2027 = vmatprep.subr.mxu0 0.0
      %2028 = vmatpush1.xpose.msra.mxu0 0.0
      %2029 = vmatprep.subr.mxu0 0.0
      %2030 = vmatpush1.xpose.msra.mxu0 0.0
      %2031 = vmatprep.subr.mxu0 0.0
      %2032 = vmatpush1.xpose.msra.mxu0 0.0
      %2033 = vmatprep.subr.mxu0 0.0
      %2034 = vmatpush1.xpose.msra.mxu0 0.0
      %2035 = vmatprep.subr.mxu0 0.0
      %2036 = vmatpush1.xpose.msra.mxu0 0.0
      %2037 = vmatprep.subr.mxu0 0.0
      %2038 = vmatpush1.xpose.msra.mxu0 0.0
      %2039 = vmatprep.subr.mxu0 0.0
      %2040 = vmatpush1.xpose.msra.mxu0 0.0
      %2041 = vmatprep.subr.mxu0 0.0
      %2042 = vmatpush1.xpose.msra.mxu0 0.0
      %2043 = vmatprep.subr.mxu0 0.0
      %2044 = vmatpush1.xpose.msra.mxu0 0.0
      %2045 = vmatprep.subr.mxu0 0.0
      %2046 = vmatpush1.xpose.msra.mxu0 0.0
      %2047 = vmatprep.subr.mxu0 0.0
      %2048 = vmatpush1.xpose.msra.mxu0 0.0
      %2049 = vmatprep.subr.mxu0 0.0
      %2050 = vmatpush1.xpose.msra.mxu0 0.0
      %2051 = vmatprep.subr.mxu0 0.0
      %2052 = vmatpush1.xpose.msra.mxu0 0.0
      %2053 = vmatprep.subr.mxu0 0.0
      %2054 = vmatpush1.xpose.msra.mxu0 0.0
      %2055 = vmatprep.subr.mxu0 0.0
      %2056 = vmatpush1.xpose.msra.mxu0 0.0
      %2057 = vmatprep.subr.mxu0 0.0
      %2058 = vmatpush1.xpose.msra.mxu0 0.0
      %2059 = vmatprep.subr.mxu0 0.0
      %2060 = vmatpush1.xpose.msra.mxu0 0.0
      %2061 = vmatprep.mubr.f32.mxu0 0.0
      %2062 = vmatmul.mubr.f32.gmra.mrb[0].mxu0 %v1989
      %v2063 = vpop.f32.mrb[0].mxu0
      %v2064 = vadd.f32 0.0, %v2063
      %v2065 = vpop.f32.mrb[0].mxu0
      %2066 = vmatprep.mubr.f32.mxu0 0.0
      %2067 = vmatmul.mubr.f32.gmra.mrb[0].mxu0 %v1991
      %v2068 = vpop.f32.mrb[0].mxu0
      %v2069 = vadd.f32 0.0, %v2068
      %v2070 = vpop.f32.mrb[0].mxu0
      %2071 = vdwg.mxu0
      %v2072 = vsel %vm660, %v2064, -inf
      %2073 = vmax.xlane.f32.xlu0 %v2072
      %v2074 = vpop.xlane.xlu0 %2073
      %v2075 = vsel %vm660, %v2069, -inf
      %2076 = vmax.xlane.f32.xlu0 %v2075
      %v2077 = vpop.xlane.xlu0 %2076
      %v2078 = vsub.f32 %v2064, %v2074
      %v2079 = vsub.f32 %v2069, %v2077
      %v2080 = vmul.f32 %v2078, 1.442695
      %v2081 = vpow.pop %v2080
      %v2082 = vmul.f32 %v2079, 1.442695
      %v2083 = vpow.pop %v2082
      %v2084 = vsel %vm660, %v2081, 0.0
      %2085 = vadd.xlane.f32.xlu0 %v2084
      %v2086 = vpop.xlane.xlu0 %2085
      %v2087 = vsel %vm660, %v2083, 0.0
      %2088 = vadd.xlane.f32.xlu0 %v2087
      %v2089 = vpop.xlane.xlu0 %2088
      %v2090 = vrcp.pop %v2086
      %v2091 = vrcp.pop %v2089
      %v2092 = vmul.f32 %v2081, %v2090
      %v2093 = vmul.f32 %v2083, %v2091
      %2094 = vrot.lane.b32.xlu0 %v564, 24
      %v2095 = vpop.permute.xlu0 %2094
      %2096 = vrot.lane.b32.xlu0 %v567, 24
      %v2097 = vpop.permute.xlu0 %2096
      %v2101 = vsel %vm660, %v2092, 0
      %v2104 = vsel %vm660, %v2093, 0
      %2106 = vmatprep.subr.mxu0 0.0
      %2107 = vmatpush1.msra.mxu0 %v2095
      %2108 = vmatprep.subr.mxu0 0.0
      %2109 = vmatpush1.msra.mxu0 %v2097
      %2110 = vmatprep.subr.mxu0 0.0
      %2111 = vmatpush1.msra.mxu0 0.0
      %2112 = vmatprep.subr.mxu0 0.0
      %2113 = vmatpush1.msra.mxu0 0.0
      %2114 = vmatprep.subr.mxu0 0.0
      %2115 = vmatpush1.msra.mxu0 0.0
      %2116 = vmatprep.subr.mxu0 0.0
      %2117 = vmatpush1.msra.mxu0 0.0
      %2118 = vmatprep.subr.mxu0 0.0
      %2119 = vmatpush1.msra.mxu0 0.0
      %2120 = vmatprep.subr.mxu0 0.0
      %2121 = vmatpush1.msra.mxu0 0.0
      %2122 = vmatprep.subr.mxu0 0.0
      %2123 = vmatpush1.msra.mxu0 0.0
      %2124 = vmatprep.subr.mxu0 0.0
      %2125 = vmatpush1.msra.mxu0 0.0
      %2126 = vmatprep.subr.mxu0 0.0
      %2127 = vmatpush1.msra.mxu0 0.0
      %2128 = vmatprep.subr.mxu0 0.0
      %2129 = vmatpush1.msra.mxu0 0.0
      %2130 = vmatprep.subr.mxu0 0.0
      %2131 = vmatpush1.msra.mxu0 0.0
      %2132 = vmatprep.subr.mxu0 0.0
      %2133 = vmatpush1.msra.mxu0 0.0
      %2134 = vmatprep.subr.mxu0 0.0
      %2135 = vmatpush1.msra.mxu0 0.0
      %2136 = vmatprep.subr.mxu0 0.0
      %2137 = vmatpush1.msra.mxu0 0.0
      %2138 = vmatprep.subr.mxu0 0.0
      %2139 = vmatpush1.msra.mxu0 0.0
      %2140 = vmatprep.subr.mxu0 0.0
      %2141 = vmatpush1.msra.mxu0 0.0
      %2142 = vmatprep.subr.mxu0 0.0
      %2143 = vmatpush1.msra.mxu0 0.0
      %2144 = vmatprep.subr.mxu0 0.0
      %2145 = vmatpush1.msra.mxu0 0.0
      %2146 = vmatprep.subr.mxu0 0.0
      %2147 = vmatpush1.msra.mxu0 0.0
      %2148 = vmatprep.subr.mxu0 0.0
      %2149 = vmatpush1.msra.mxu0 0.0
      %2150 = vmatprep.subr.mxu0 0.0
      %2151 = vmatpush1.msra.mxu0 0.0
      %2152 = vmatprep.subr.mxu0 0.0
      %2153 = vmatpush1.msra.mxu0 0.0
      %2154 = vmatprep.subr.mxu0 0.0
      %2155 = vmatpush1.msra.mxu0 0.0
      %2156 = vmatprep.subr.mxu0 0.0
      %2157 = vmatpush1.msra.mxu0 0.0
      %2158 = vmatprep.subr.mxu0 0.0
      %2159 = vmatpush1.msra.mxu0 0.0
      %2160 = vmatprep.subr.mxu0 0.0
      %2161 = vmatpush1.msra.mxu0 0.0
      %2162 = vmatprep.subr.mxu0 0.0
      %2163 = vmatpush1.msra.mxu0 0.0
      %2164 = vmatprep.subr.mxu0 0.0
      %2165 = vmatpush1.msra.mxu0 0.0
      %2166 = vmatprep.subr.mxu0 0.0
      %2167 = vmatpush1.msra.mxu0 0.0
      %2168 = vmatprep.subr.mxu0 0.0
      %2169 = vmatpush1.msra.mxu0 0.0
      %2170 = vmatprep.mubr.f32.mxu0 0.0
      %2171 = vmatmul.mubr.f32.gmra.mrb[0].mxu0 %v2101
      %v2172 = vpop.f32.mrb[0].mxu0
      %v2173 = vadd.f32 0.0, %v2172
      %v2174 = vpop.f32.mrb[0].mxu0
      %2175 = vmatprep.mubr.f32.mxu0 0.0
      %2176 = vmatmul.mubr.f32.gmra.mrb[0].mxu0 %v2104
      %v2177 = vpop.f32.mrb[0].mxu0
      %v2178 = vadd.f32 0.0, %v2177
      %v2179 = vpop.f32.mrb[0].mxu0
      %2180 = vdwg.mxu0
      %v2182 = vsel %vm572, %v2173, 0
      %v2185 = vsel %vm572, %v2178, 0
      %2187 = vmatprep.subr.mxu0 0.0
      %2188 = vmatpush1.msra.mxu0 %v457
      %2189 = vmatprep.subr.mxu0 0.0
      %2190 = vmatpush1.msra.mxu0 0.0
      %2191 = vmatprep.subr.mxu0 0.0
      %2192 = vmatpush1.msra.mxu0 0.0
      %2193 = vmatprep.subr.mxu0 0.0
      %2194 = vmatpush1.msra.mxu0 0.0
      %2195 = vmatprep.subr.mxu0 0.0
      %2196 = vmatpush1.msra.mxu0 0.0
      %2197 = vmatprep.subr.mxu0 0.0
      %2198 = vmatpush1.msra.mxu0 0.0
      %2199 = vmatprep.subr.mxu0 0.0
      %2200 = vmatpush1.msra.mxu0 0.0
      %2201 = vmatprep.subr.mxu0 0.0
      %2202 = vmatpush1.msra.mxu0 0.0
      %2203 = vmatprep.subr.mxu0 0.0
      %2204 = vmatpush1.msra.mxu0 0.0
      %2205 = vmatprep.subr.mxu0 0.0
      %2206 = vmatpush1.msra.mxu0 0.0
      %2207 = vmatprep.subr.mxu0 0.0
      %2208 = vmatpush1.msra.mxu0 0.0
      %2209 = vmatprep.subr.mxu0 0.0
      %2210 = vmatpush1.msra.mxu0 0.0
      %2211 = vmatprep.subr.mxu0 0.0
      %2212 = vmatpush1.msra.mxu0 0.0
      %2213 = vmatprep.subr.mxu0 0.0
      %2214 = vmatpush1.msra.mxu0 0.0
      %2215 = vmatprep.subr.mxu0 0.0
      %2216 = vmatpush1.msra.mxu0 0.0
      %2217 = vmatprep.subr.mxu0 0.0
      %2218 = vmatpush1.msra.mxu0 0.0
      %2219 = vmatprep.subr.mxu0 0.0
      %2220 = vmatpush1.msra.mxu0 0.0
      %2221 = vmatprep.subr.mxu0 0.0
      %2222 = vmatpush1.msra.mxu0 0.0
      %2223 = vmatprep.subr.mxu0 0.0
      %2224 = vmatpush1.msra.mxu0 0.0
      %2225 = vmatprep.subr.mxu0 0.0
      %2226 = vmatpush1.msra.mxu0 0.0
      %2227 = vmatprep.subr.mxu0 0.0
      %2228 = vmatpush1.msra.mxu0 0.0
      %2229 = vmatprep.subr.mxu0 0.0
      %2230 = vmatpush1.msra.mxu0 0.0
      %2231 = vmatprep.subr.mxu0 0.0
      %2232 = vmatpush1.msra.mxu0 0.0
      %2233 = vmatprep.subr.mxu0 0.0
      %2234 = vmatpush1.msra.mxu0 0.0
      %2235 = vmatprep.subr.mxu0 0.0
      %2236 = vmatpush1.msra.mxu0 0.0
      %2237 = vmatprep.subr.mxu0 0.0
      %2238 = vmatpush1.msra.mxu0 0.0
      %2239 = vmatprep.subr.mxu0 0.0
      %2240 = vmatpush1.msra.mxu0 0.0
      %2241 = vmatprep.subr.mxu0 0.0
      %2242 = vmatpush1.msra.mxu0 0.0
      %2243 = vmatprep.subr.mxu0 0.0
      %2244 = vmatpush1.msra.mxu0 0.0
      %2245 = vmatprep.subr.mxu0 0.0
      %2246 = vmatpush1.msra.mxu0 0.0
      %2247 = vmatprep.subr.mxu0 0.0
      %2248 = vmatpush1.msra.mxu0 0.0
      %2249 = vmatprep.subr.mxu0 0.0
      %2250 = vmatpush1.msra.mxu0 0.0
      %2251 = vmatprep.mubr.f32.mxu0 0.0
      %2252 = vmatmul.mubr.f32.gmra.mrb[0].mxu0 %v2182
      %v2253 = vpop.f32.mrb[0].mxu0
      %v2254 = vadd.f32 0.0, %v2253
      %v2255 = vpop.f32.mrb[0].mxu0
      %2256 = vmatprep.mubr.f32.mxu0 0.0
      %2257 = vmatmul.mubr.f32.gmra.mrb[0].mxu0 %v2185
      %v2258 = vpop.f32.mrb[0].mxu0
      %v2259 = vadd.f32 0.0, %v2258
      %v2260 = vpop.f32.mrb[0].mxu0
      %2261 = vdwg.mxu0
      %v2262 = vadd.f32 %v1979, %v2254
      %v2263 = vadd.f32 %v1980, %v2259
      %2264 = vrot.lane.b32.xlu0 %v570, 80
      %v2265 = vpop.permute.xlu0 %2264
      %2266 = vrot.lane.b32.xlu0 %v571, 80
      %v2267 = vpop.permute.xlu0 %2266
      %2268 = vrot.lane.b32.xlu0 %v564, 80
      %v2269 = vpop.permute.xlu0 %2268
      %2270 = vrot.lane.b32.xlu0 %v567, 80
      %v2271 = vpop.permute.xlu0 %2270
      %v2272 = vsel %vm572, %v2265, 0
      %v2274 = vsel %vm572, %v2267, 0
      %v2276 = vsel %vm572, %v2269, 0
      %v2278 = vsel %vm572, %v2271, 0
      %2280 = vmatprep.subr.mxu0 0.0
      %2281 = vmatpush1.xpose.msra.mxu0 %v2276
      %2282 = vmatprep.subr.mxu0 0.0
      %2283 = vmatpush1.xpose.msra.mxu0 %v2278
      %2284 = vmatprep.subr.mxu0 0.0
      %2285 = vmatpush1.xpose.msra.mxu0 0.0
      %2286 = vmatprep.subr.mxu0 0.0
      %2287 = vmatpush1.xpose.msra.mxu0 0.0
      %2288 = vmatprep.subr.mxu0 0.0
      %2289 = vmatpush1.xpose.msra.mxu0 0.0
      %2290 = vmatprep.subr.mxu0 0.0
      %2291 = vmatpush1.xpose.msra.mxu0 0.0
      %2292 = vmatprep.subr.mxu0 0.0
      %2293 = vmatpush1.xpose.msra.mxu0 0.0
      %2294 = vmatprep.subr.mxu0 0.0
      %2295 = vmatpush1.xpose.msra.mxu0 0.0
      %2296 = vmatprep.subr.mxu0 0.0
      %2297 = vmatpush1.xpose.msra.mxu0 0.0
      %2298 = vmatprep.subr.mxu0 0.0
      %2299 = vmatpush1.xpose.msra.mxu0 0.0
      %2300 = vmatprep.subr.mxu0 0.0
      %2301 = vmatpush1.xpose.msra.mxu0 0.0
      %2302 = vmatprep.subr.mxu0 0.0
      %2303 = vmatpush1.xpose.msra.mxu0 0.0
      %2304 = vmatprep.subr.mxu0 0.0
      %2305 = vmatpush1.xpose.msra.mxu0 0.0
      %2306 = vmatprep.subr.mxu0 0.0
      %2307 = vmatpush1.xpose.msra.mxu0 0.0
      %2308 = vmatprep.subr.mxu0 0.0
      %2309 = vmatpush1.xpose.msra.mxu0 0.0
      %2310 = vmatprep.subr.mxu0 0.0
      %2311 = vmatpush1.xpose.msra.mxu0 0.0
      %2312 = vmatprep.subr.mxu0 0.0
      %2313 = vmatpush1.xpose.msra.mxu0 0.0
      %2314 = vmatprep.subr.mxu0 0.0
      %2315 = vmatpush1.xpose.msra.mxu0 0.0
      %2316 = vmatprep.subr.mxu0 0.0
      %2317 = vmatpush1.xpose.msra.mxu0 0.0
      %2318 = vmatprep.subr.mxu0 0.0
      %2319 = vmatpush1.xpose.msra.mxu0 0.0
      %2320 = vmatprep.subr.mxu0 0.0
      %2321 = vmatpush1.xpose.msra.mxu0 0.0
      %2322 = vmatprep.subr.mxu0 0.0
      %2323 = vmatpush1.xpose.msra.mxu0 0.0
      %2324 = vmatprep.subr.mxu0 0.0
      %2325 = vmatpush1.xpose.msra.mxu0 0.0
      %2326 = vmatprep.subr.mxu0 0.0
      %2327 = vmatpush1.xpose.msra.mxu0 0.0
      %2328 = vmatprep.subr.mxu0 0.0
      %2329 = vmatpush1.xpose.msra.mxu0 0.0
      %2330 = vmatprep.subr.mxu0 0.0
      %2331 = vmatpush1.xpose.msra.mxu0 0.0
      %2332 = vmatprep.subr.mxu0 0.0
      %2333 = vmatpush1.xpose.msra.mxu0 0.0
      %2334 = vmatprep.subr.mxu0 0.0
      %2335 = vmatpush1.xpose.msra.mxu0 0.0
      %2336 = vmatprep.subr.mxu0 0.0
      %2337 = vmatpush1.xpose.msra.mxu0 0.0
      %2338 = vmatprep.subr.mxu0 0.0
      %2339 = vmatpush1.xpose.msra.mxu0 0.0
      %2340 = vmatprep.subr.mxu0 0.0
      %2341 = vmatpush1.xpose.msra.mxu0 0.0
      %2342 = vmatprep.subr.mxu0 0.0
      %2343 = vmatpush1.xpose.msra.mxu0 0.0
      %2344 = vmatprep.mubr.f32.mxu0 0.0
      %2345 = vmatmul.mubr.f32.gmra.mrb[0].mxu0 %v2272
      %v2346 = vpop.f32.mrb[0].mxu0
      %v2347 = vadd.f32 0.0, %v2346
      %v2348 = vpop.f32.mrb[0].mxu0
      %2349 = vmatprep.mubr.f32.mxu0 0.0
      %2350 = vmatmul.mubr.f32.gmra.mrb[0].mxu0 %v2274
      %v2351 = vpop.f32.mrb[0].mxu0
      %v2352 = vadd.f32 0.0, %v2351
      %v2353 = vpop.f32.mrb[0].mxu0
      %2354 = vdwg.mxu0
      %v2355 = vsel %vm660, %v2347, -inf
      %2356 = vmax.xlane.f32.xlu0 %v2355
      %v2357 = vpop.xlane.xlu0 %2356
      %v2358 = vsel %vm660, %v2352, -inf
      %2359 = vmax.xlane.f32.xlu0 %v2358
      %v2360 = vpop.xlane.xlu0 %2359
      %v2361 = vsub.f32 %v2347, %v2357
      %v2362 = vsub.f32 %v2352, %v2360
      %v2363 = vmul.f32 %v2361, 1.442695
      %v2364 = vpow.pop %v2363
      %v2365 = vmul.f32 %v2362, 1.442695
      %v2366 = vpow.pop %v2365
      %v2367 = vsel %vm660, %v2364, 0.0
      %2368 = vadd.xlane.f32.xlu0 %v2367
      %v2369 = vpop.xlane.xlu0 %2368
      %v2370 = vsel %vm660, %v2366, 0.0
      %2371 = vadd.xlane.f32.xlu0 %v2370
      %v2372 = vpop.xlane.xlu0 %2371
      %v2373 = vrcp.pop %v2369
      %v2374 = vrcp.pop %v2372
      %v2375 = vmul.f32 %v2364, %v2373
      %v2376 = vmul.f32 %v2366, %v2374
      %2377 = vrot.lane.b32.xlu0 %v564, 16
      %v2378 = vpop.permute.xlu0 %2377
      %2379 = vrot.lane.b32.xlu0 %v567, 16
      %v2380 = vpop.permute.xlu0 %2379
      %v2384 = vsel %vm660, %v2375, 0
      %v2387 = vsel %vm660, %v2376, 0
      %2389 = vmatprep.subr.mxu0 0.0
      %2390 = vmatpush1.msra.mxu0 %v2378
      %2391 = vmatprep.subr.mxu0 0.0
      %2392 = vmatpush1.msra.mxu0 %v2380
      %2393 = vmatprep.subr.mxu0 0.0
      %2394 = vmatpush1.msra.mxu0 0.0
      %2395 = vmatprep.subr.mxu0 0.0
      %2396 = vmatpush1.msra.mxu0 0.0
      %2397 = vmatprep.subr.mxu0 0.0
      %2398 = vmatpush1.msra.mxu0 0.0
      %2399 = vmatprep.subr.mxu0 0.0
      %2400 = vmatpush1.msra.mxu0 0.0
      %2401 = vmatprep.subr.mxu0 0.0
      %2402 = vmatpush1.msra.mxu0 0.0
      %2403 = vmatprep.subr.mxu0 0.0
      %2404 = vmatpush1.msra.mxu0 0.0
      %2405 = vmatprep.subr.mxu0 0.0
      %2406 = vmatpush1.msra.mxu0 0.0
      %2407 = vmatprep.subr.mxu0 0.0
      %2408 = vmatpush1.msra.mxu0 0.0
      %2409 = vmatprep.subr.mxu0 0.0
      %2410 = vmatpush1.msra.mxu0 0.0
      %2411 = vmatprep.subr.mxu0 0.0
      %2412 = vmatpush1.msra.mxu0 0.0
      %2413 = vmatprep.subr.mxu0 0.0
      %2414 = vmatpush1.msra.mxu0 0.0
      %2415 = vmatprep.subr.mxu0 0.0
      %2416 = vmatpush1.msra.mxu0 0.0
      %2417 = vmatprep.subr.mxu0 0.0
      %2418 = vmatpush1.msra.mxu0 0.0
      %2419 = vmatprep.subr.mxu0 0.0
      %2420 = vmatpush1.msra.mxu0 0.0
      %2421 = vmatprep.subr.mxu0 0.0
      %2422 = vmatpush1.msra.mxu0 0.0
      %2423 = vmatprep.subr.mxu0 0.0
      %2424 = vmatpush1.msra.mxu0 0.0
      %2425 = vmatprep.subr.mxu0 0.0
      %2426 = vmatpush1.msra.mxu0 0.0
      %2427 = vmatprep.subr.mxu0 0.0
      %2428 = vmatpush1.msra.mxu0 0.0
      %2429 = vmatprep.subr.mxu0 0.0
      %2430 = vmatpush1.msra.mxu0 0.0
      %2431 = vmatprep.subr.mxu0 0.0
      %2432 = vmatpush1.msra.mxu0 0.0
      %2433 = vmatprep.subr.mxu0 0.0
      %2434 = vmatpush1.msra.mxu0 0.0
      %2435 = vmatprep.subr.mxu0 0.0
      %2436 = vmatpush1.msra.mxu0 0.0
      %2437 = vmatprep.subr.mxu0 0.0
      %2438 = vmatpush1.msra.mxu0 0.0
      %2439 = vmatprep.subr.mxu0 0.0
      %2440 = vmatpush1.msra.mxu0 0.0
      %2441 = vmatprep.subr.mxu0 0.0
      %2442 = vmatpush1.msra.mxu0 0.0
      %2443 = vmatprep.subr.mxu0 0.0
      %2444 = vmatpush1.msra.mxu0 0.0
      %2445 = vmatprep.subr.mxu0 0.0
      %2446 = vmatpush1.msra.mxu0 0.0
      %2447 = vmatprep.subr.mxu0 0.0
      %2448 = vmatpush1.msra.mxu0 0.0
      %2449 = vmatprep.subr.mxu0 0.0
      %2450 = vmatpush1.msra.mxu0 0.0
      %2451 = vmatprep.subr.mxu0 0.0
      %2452 = vmatpush1.msra.mxu0 0.0
      %2453 = vmatprep.mubr.f32.mxu0 0.0
      %2454 = vmatmul.mubr.f32.gmra.mrb[0].mxu0 %v2384
      %v2455 = vpop.f32.mrb[0].mxu0
      %v2456 = vadd.f32 0.0, %v2455
      %v2457 = vpop.f32.mrb[0].mxu0
      %2458 = vmatprep.mubr.f32.mxu0 0.0
      %2459 = vmatmul.mubr.f32.gmra.mrb[0].mxu0 %v2387
      %v2460 = vpop.f32.mrb[0].mxu0
      %v2461 = vadd.f32 0.0, %v2460
      %v2462 = vpop.f32.mrb[0].mxu0
      %2463 = vdwg.mxu0
      %v2465 = vsel %vm572, %v2456, 0
      %v2468 = vsel %vm572, %v2461, 0
      %2470 = vmatprep.subr.mxu0 0.0
      %2471 = vmatpush1.msra.mxu0 %v458
      %2472 = vmatprep.subr.mxu0 0.0
      %2473 = vmatpush1.msra.mxu0 0.0
      %2474 = vmatprep.subr.mxu0 0.0
      %2475 = vmatpush1.msra.mxu0 0.0
      %2476 = vmatprep.subr.mxu0 0.0
      %2477 = vmatpush1.msra.mxu0 0.0
      %2478 = vmatprep.subr.mxu0 0.0
      %2479 = vmatpush1.msra.mxu0 0.0
      %2480 = vmatprep.subr.mxu0 0.0
      %2481 = vmatpush1.msra.mxu0 0.0
      %2482 = vmatprep.subr.mxu0 0.0
      %2483 = vmatpush1.msra.mxu0 0.0
      %2484 = vmatprep.subr.mxu0 0.0
      %2485 = vmatpush1.msra.mxu0 0.0
      %2486 = vmatprep.subr.mxu0 0.0
      %2487 = vmatpush1.msra.mxu0 0.0
      %2488 = vmatprep.subr.mxu0 0.0
      %2489 = vmatpush1.msra.mxu0 0.0
      %2490 = vmatprep.subr.mxu0 0.0
      %2491 = vmatpush1.msra.mxu0 0.0
      %2492 = vmatprep.subr.mxu0 0.0
      %2493 = vmatpush1.msra.mxu0 0.0
      %2494 = vmatprep.subr.mxu0 0.0
      %2495 = vmatpush1.msra.mxu0 0.0
      %2496 = vmatprep.subr.mxu0 0.0
      %2497 = vmatpush1.msra.mxu0 0.0
      %2498 = vmatprep.subr.mxu0 0.0
      %2499 = vmatpush1.msra.mxu0 0.0
      %2500 = vmatprep.subr.mxu0 0.0
      %2501 = vmatpush1.msra.mxu0 0.0
      %2502 = vmatprep.subr.mxu0 0.0
      %2503 = vmatpush1.msra.mxu0 0.0
      %2504 = vmatprep.subr.mxu0 0.0
      %2505 = vmatpush1.msra.mxu0 0.0
      %2506 = vmatprep.subr.mxu0 0.0
      %2507 = vmatpush1.msra.mxu0 0.0
      %2508 = vmatprep.subr.mxu0 0.0
      %2509 = vmatpush1.msra.mxu0 0.0
      %2510 = vmatprep.subr.mxu0 0.0
      %2511 = vmatpush1.msra.mxu0 0.0
      %2512 = vmatprep.subr.mxu0 0.0
      %2513 = vmatpush1.msra.mxu0 0.0
      %2514 = vmatprep.subr.mxu0 0.0
      %2515 = vmatpush1.msra.mxu0 0.0
      %2516 = vmatprep.subr.mxu0 0.0
      %2517 = vmatpush1.msra.mxu0 0.0
      %2518 = vmatprep.subr.mxu0 0.0
      %2519 = vmatpush1.msra.mxu0 0.0
      %2520 = vmatprep.subr.mxu0 0.0
      %2521 = vmatpush1.msra.mxu0 0.0
      %2522 = vmatprep.subr.mxu0 0.0
      %2523 = vmatpush1.msra.mxu0 0.0
      %2524 = vmatprep.subr.mxu0 0.0
      %2525 = vmatpush1.msra.mxu0 0.0
      %2526 = vmatprep.subr.mxu0 0.0
      %2527 = vmatpush1.msra.mxu0 0.0
      %2528 = vmatprep.subr.mxu0 0.0
      %2529 = vmatpush1.msra.mxu0 0.0
      %2530 = vmatprep.subr.mxu0 0.0
      %2531 = vmatpush1.msra.mxu0 0.0
      %2532 = vmatprep.subr.mxu0 0.0
      %2533 = vmatpush1.msra.mxu0 0.0
      %2534 = vmatprep.mubr.f32.mxu0 0.0
      %2535 = vmatmul.mubr.f32.gmra.mrb[0].mxu0 %v2465
      %v2536 = vpop.f32.mrb[0].mxu0
      %v2537 = vadd.f32 0.0, %v2536
      %v2538 = vpop.f32.mrb[0].mxu0
      %2539 = vmatprep.mubr.f32.mxu0 0.0
      %2540 = vmatmul.mubr.f32.gmra.mrb[0].mxu0 %v2468
      %v2541 = vpop.f32.mrb[0].mxu0
      %v2542 = vadd.f32 0.0, %v2541
      %v2543 = vpop.f32.mrb[0].mxu0
      %2544 = vdwg.mxu0
      %v2545 = vadd.f32 %v2262, %v2537
      %v2546 = vadd.f32 %v2263, %v2542
      %2547 = vrot.lane.b32.xlu0 %v570, 72
      %v2548 = vpop.permute.xlu0 %2547
      %2549 = vrot.lane.b32.xlu0 %v571, 72
      %v2550 = vpop.permute.xlu0 %2549
      %2551 = vrot.lane.b32.xlu0 %v564, 72
      %v2552 = vpop.permute.xlu0 %2551
      %2553 = vrot.lane.b32.xlu0 %v567, 72
      %v2554 = vpop.permute.xlu0 %2553
      %v2555 = vsel %vm572, %v2548, 0
      %v2557 = vsel %vm572, %v2550, 0
      %v2559 = vsel %vm572, %v2552, 0
      %v2561 = vsel %vm572, %v2554, 0
      %2563 = vmatprep.subr.mxu0 0.0
      %2564 = vmatpush1.xpose.msra.mxu0 %v2559
      %2565 = vmatprep.subr.mxu0 0.0
      %2566 = vmatpush1.xpose.msra.mxu0 %v2561
      %2567 = vmatprep.subr.mxu0 0.0
      %2568 = vmatpush1.xpose.msra.mxu0 0.0
      %2569 = vmatprep.subr.mxu0 0.0
      %2570 = vmatpush1.xpose.msra.mxu0 0.0
      %2571 = vmatprep.subr.mxu0 0.0
      %2572 = vmatpush1.xpose.msra.mxu0 0.0
      %2573 = vmatprep.subr.mxu0 0.0
      %2574 = vmatpush1.xpose.msra.mxu0 0.0
      %2575 = vmatprep.subr.mxu0 0.0
      %2576 = vmatpush1.xpose.msra.mxu0 0.0
      %2577 = vmatprep.subr.mxu0 0.0
      %2578 = vmatpush1.xpose.msra.mxu0 0.0
      %2579 = vmatprep.subr.mxu0 0.0
      %2580 = vmatpush1.xpose.msra.mxu0 0.0
      %2581 = vmatprep.subr.mxu0 0.0
      %2582 = vmatpush1.xpose.msra.mxu0 0.0
      %2583 = vmatprep.subr.mxu0 0.0
      %2584 = vmatpush1.xpose.msra.mxu0 0.0
      %2585 = vmatprep.subr.mxu0 0.0
      %2586 = vmatpush1.xpose.msra.mxu0 0.0
      %2587 = vmatprep.subr.mxu0 0.0
      %2588 = vmatpush1.xpose.msra.mxu0 0.0
      %2589 = vmatprep.subr.mxu0 0.0
      %2590 = vmatpush1.xpose.msra.mxu0 0.0
      %2591 = vmatprep.subr.mxu0 0.0
      %2592 = vmatpush1.xpose.msra.mxu0 0.0
      %2593 = vmatprep.subr.mxu0 0.0
      %2594 = vmatpush1.xpose.msra.mxu0 0.0
      %2595 = vmatprep.subr.mxu0 0.0
      %2596 = vmatpush1.xpose.msra.mxu0 0.0
      %2597 = vmatprep.subr.mxu0 0.0
      %2598 = vmatpush1.xpose.msra.mxu0 0.0
      %2599 = vmatprep.subr.mxu0 0.0
      %2600 = vmatpush1.xpose.msra.mxu0 0.0
      %2601 = vmatprep.subr.mxu0 0.0
      %2602 = vmatpush1.xpose.msra.mxu0 0.0
      %2603 = vmatprep.subr.mxu0 0.0
      %2604 = vmatpush1.xpose.msra.mxu0 0.0
      %2605 = vmatprep.subr.mxu0 0.0
      %2606 = vmatpush1.xpose.msra.mxu0 0.0
      %2607 = vmatprep.subr.mxu0 0.0
      %2608 = vmatpush1.xpose.msra.mxu0 0.0
      %2609 = vmatprep.subr.mxu0 0.0
      %2610 = vmatpush1.xpose.msra.mxu0 0.0
      %2611 = vmatprep.subr.mxu0 0.0
      %2612 = vmatpush1.xpose.msra.mxu0 0.0
      %2613 = vmatprep.subr.mxu0 0.0
      %2614 = vmatpush1.xpose.msra.mxu0 0.0
      %2615 = vmatprep.subr.mxu0 0.0
      %2616 = vmatpush1.xpose.msra.mxu0 0.0
      %2617 = vmatprep.subr.mxu0 0.0
      %2618 = vmatpush1.xpose.msra.mxu0 0.0
      %2619 = vmatprep.subr.mxu0 0.0
      %2620 = vmatpush1.xpose.msra.mxu0 0.0
      %2621 = vmatprep.subr.mxu0 0.0
      %2622 = vmatpush1.xpose.msra.mxu0 0.0
      %2623 = vmatprep.subr.mxu0 0.0
      %2624 = vmatpush1.xpose.msra.mxu0 0.0
      %2625 = vmatprep.subr.mxu0 0.0
      %2626 = vmatpush1.xpose.msra.mxu0 0.0
      %2627 = vmatprep.mubr.f32.mxu0 0.0
      %2628 = vmatmul.mubr.f32.gmra.mrb[0].mxu0 %v2555
      %v2629 = vpop.f32.mrb[0].mxu0
      %v2630 = vadd.f32 0.0, %v2629
      %v2631 = vpop.f32.mrb[0].mxu0
      %2632 = vmatprep.mubr.f32.mxu0 0.0
      %2633 = vmatmul.mubr.f32.gmra.mrb[0].mxu0 %v2557
      %v2634 = vpop.f32.mrb[0].mxu0
      %v2635 = vadd.f32 0.0, %v2634
      %v2636 = vpop.f32.mrb[0].mxu0
      %2637 = vdwg.mxu0
      %v2638 = vsel %vm660, %v2630, -inf
      %2639 = vmax.xlane.f32.xlu0 %v2638
      %v2640 = vpop.xlane.xlu0 %2639
      %v2641 = vsel %vm660, %v2635, -inf
      %2642 = vmax.xlane.f32.xlu0 %v2641
      %v2643 = vpop.xlane.xlu0 %2642
      %v2644 = vsub.f32 %v2630, %v2640
      %v2645 = vsub.f32 %v2635, %v2643
      %v2646 = vmul.f32 %v2644, 1.442695
      %v2647 = vpow.pop %v2646
      %v2648 = vmul.f32 %v2645, 1.442695
      %v2649 = vpow.pop %v2648
      %v2650 = vsel %vm660, %v2647, 0.0
      %2651 = vadd.xlane.f32.xlu0 %v2650
      %v2652 = vpop.xlane.xlu0 %2651
      %v2653 = vsel %vm660, %v2649, 0.0
      %2654 = vadd.xlane.f32.xlu0 %v2653
      %v2655 = vpop.xlane.xlu0 %2654
      %v2656 = vrcp.pop %v2652
      %v2657 = vrcp.pop %v2655
      %v2658 = vmul.f32 %v2647, %v2656
      %v2659 = vmul.f32 %v2649, %v2657
      %2660 = vrot.lane.b32.xlu0 %v564, 8
      %v2661 = vpop.permute.xlu0 %2660
      %2662 = vrot.lane.b32.xlu0 %v567, 8
      %v2663 = vpop.permute.xlu0 %2662
      %v2667 = vsel %vm660, %v2658, 0
      %v2670 = vsel %vm660, %v2659, 0
      %2672 = vmatprep.subr.mxu0 0.0
      %2673 = vmatpush1.msra.mxu0 %v2661
      %2674 = vmatprep.subr.mxu0 0.0
      %2675 = vmatpush1.msra.mxu0 %v2663
      %2676 = vmatprep.subr.mxu0 0.0
      %2677 = vmatpush1.msra.mxu0 0.0
      %2678 = vmatprep.subr.mxu0 0.0
      %2679 = vmatpush1.msra.mxu0 0.0
      %2680 = vmatprep.subr.mxu0 0.0
      %2681 = vmatpush1.msra.mxu0 0.0
      %2682 = vmatprep.subr.mxu0 0.0
      %2683 = vmatpush1.msra.mxu0 0.0
      %2684 = vmatprep.subr.mxu0 0.0
      %2685 = vmatpush1.msra.mxu0 0.0
      %2686 = vmatprep.subr.mxu0 0.0
      %2687 = vmatpush1.msra.mxu0 0.0
      %2688 = vmatprep.subr.mxu0 0.0
      %2689 = vmatpush1.msra.mxu0 0.0
      %2690 = vmatprep.subr.mxu0 0.0
      %2691 = vmatpush1.msra.mxu0 0.0
      %2692 = vmatprep.subr.mxu0 0.0
      %2693 = vmatpush1.msra.mxu0 0.0
      %2694 = vmatprep.subr.mxu0 0.0
      %2695 = vmatpush1.msra.mxu0 0.0
      %2696 = vmatprep.subr.mxu0 0.0
      %2697 = vmatpush1.msra.mxu0 0.0
      %2698 = vmatprep.subr.mxu0 0.0
      %2699 = vmatpush1.msra.mxu0 0.0
      %2700 = vmatprep.subr.mxu0 0.0
      %2701 = vmatpush1.msra.mxu0 0.0
      %2702 = vmatprep.subr.mxu0 0.0
      %2703 = vmatpush1.msra.mxu0 0.0
      %2704 = vmatprep.subr.mxu0 0.0
      %2705 = vmatpush1.msra.mxu0 0.0
      %2706 = vmatprep.subr.mxu0 0.0
      %2707 = vmatpush1.msra.mxu0 0.0
      %2708 = vmatprep.subr.mxu0 0.0
      %2709 = vmatpush1.msra.mxu0 0.0
      %2710 = vmatprep.subr.mxu0 0.0
      %2711 = vmatpush1.msra.mxu0 0.0
      %2712 = vmatprep.subr.mxu0 0.0
      %2713 = vmatpush1.msra.mxu0 0.0
      %2714 = vmatprep.subr.mxu0 0.0
      %2715 = vmatpush1.msra.mxu0 0.0
      %2716 = vmatprep.subr.mxu0 0.0
      %2717 = vmatpush1.msra.mxu0 0.0
      %2718 = vmatprep.subr.mxu0 0.0
      %2719 = vmatpush1.msra.mxu0 0.0
      %2720 = vmatprep.subr.mxu0 0.0
      %2721 = vmatpush1.msra.mxu0 0.0
      %2722 = vmatprep.subr.mxu0 0.0
      %2723 = vmatpush1.msra.mxu0 0.0
      %2724 = vmatprep.subr.mxu0 0.0
      %2725 = vmatpush1.msra.mxu0 0.0
      %2726 = vmatprep.subr.mxu0 0.0
      %2727 = vmatpush1.msra.mxu0 0.0
      %2728 = vmatprep.subr.mxu0 0.0
      %2729 = vmatpush1.msra.mxu0 0.0
      %2730 = vmatprep.subr.mxu0 0.0
      %2731 = vmatpush1.msra.mxu0 0.0
      %2732 = vmatprep.subr.mxu0 0.0
      %2733 = vmatpush1.msra.mxu0 0.0
      %2734 = vmatprep.subr.mxu0 0.0
      %2735 = vmatpush1.msra.mxu0 0.0
      %2736 = vmatprep.mubr.f32.mxu0 0.0
      %2737 = vmatmul.mubr.f32.gmra.mrb[0].mxu0 %v2667
      %v2738 = vpop.f32.mrb[0].mxu0
      %v2739 = vadd.f32 0.0, %v2738
      %v2740 = vpop.f32.mrb[0].mxu0
      %2741 = vmatprep.mubr.f32.mxu0 0.0
      %2742 = vmatmul.mubr.f32.gmra.mrb[0].mxu0 %v2670
      %v2743 = vpop.f32.mrb[0].mxu0
      %v2744 = vadd.f32 0.0, %v2743
      %v2745 = vpop.f32.mrb[0].mxu0
      %2746 = vdwg.mxu0
      %v2748 = vsel %vm572, %v2739, 0
      %v2751 = vsel %vm572, %v2744, 0
      %2753 = vmatprep.subr.mxu0 0.0
      %2754 = vmatpush1.msra.mxu0 %v459
      %2755 = vmatprep.subr.mxu0 0.0
      %2756 = vmatpush1.msra.mxu0 0.0
      %2757 = vmatprep.subr.mxu0 0.0
      %2758 = vmatpush1.msra.mxu0 0.0
      %2759 = vmatprep.subr.mxu0 0.0
      %2760 = vmatpush1.msra.mxu0 0.0
      %2761 = vmatprep.subr.mxu0 0.0
      %2762 = vmatpush1.msra.mxu0 0.0
      %2763 = vmatprep.subr.mxu0 0.0
      %2764 = vmatpush1.msra.mxu0 0.0
      %2765 = vmatprep.subr.mxu0 0.0
      %2766 = vmatpush1.msra.mxu0 0.0
      %2767 = vmatprep.subr.mxu0 0.0
      %2768 = vmatpush1.msra.mxu0 0.0
      %2769 = vmatprep.subr.mxu0 0.0
      %2770 = vmatpush1.msra.mxu0 0.0
      %2771 = vmatprep.subr.mxu0 0.0
      %2772 = vmatpush1.msra.mxu0 0.0
      %2773 = vmatprep.subr.mxu0 0.0
      %2774 = vmatpush1.msra.mxu0 0.0
      %2775 = vmatprep.subr.mxu0 0.0
      %2776 = vmatpush1.msra.mxu0 0.0
      %2777 = vmatprep.subr.mxu0 0.0
      %2778 = vmatpush1.msra.mxu0 0.0
      %2779 = vmatprep.subr.mxu0 0.0
      %2780 = vmatpush1.msra.mxu0 0.0
      %2781 = vmatprep.subr.mxu0 0.0
      %2782 = vmatpush1.msra.mxu0 0.0
      %2783 = vmatprep.subr.mxu0 0.0
      %2784 = vmatpush1.msra.mxu0 0.0
      %2785 = vmatprep.subr.mxu0 0.0
      %2786 = vmatpush1.msra.mxu0 0.0
      %2787 = vmatprep.subr.mxu0 0.0
      %2788 = vmatpush1.msra.mxu0 0.0
      %2789 = vmatprep.subr.mxu0 0.0
      %2790 = vmatpush1.msra.mxu0 0.0
      %2791 = vmatprep.subr.mxu0 0.0
      %2792 = vmatpush1.msra.mxu0 0.0
      %2793 = vmatprep.subr.mxu0 0.0
      %2794 = vmatpush1.msra.mxu0 0.0
      %2795 = vmatprep.subr.mxu0 0.0
      %2796 = vmatpush1.msra.mxu0 0.0
      %2797 = vmatprep.subr.mxu0 0.0
      %2798 = vmatpush1.msra.mxu0 0.0
      %2799 = vmatprep.subr.mxu0 0.0
      %2800 = vmatpush1.msra.mxu0 0.0
      %2801 = vmatprep.subr.mxu0 0.0
      %2802 = vmatpush1.msra.mxu0 0.0
      %2803 = vmatprep.subr.mxu0 0.0
      %2804 = vmatpush1.msra.mxu0 0.0
      %2805 = vmatprep.subr.mxu0 0.0
      %2806 = vmatpush1.msra.mxu0 0.0
      %2807 = vmatprep.subr.mxu0 0.0
      %2808 = vmatpush1.msra.mxu0 0.0
      %2809 = vmatprep.subr.mxu0 0.0
      %2810 = vmatpush1.msra.mxu0 0.0
      %2811 = vmatprep.subr.mxu0 0.0
      %2812 = vmatpush1.msra.mxu0 0.0
      %2813 = vmatprep.subr.mxu0 0.0
      %2814 = vmatpush1.msra.mxu0 0.0
      %2815 = vmatprep.subr.mxu0 0.0
      %2816 = vmatpush1.msra.mxu0 0.0
      %2817 = vmatprep.mubr.f32.mxu0 0.0
      %2818 = vmatmul.mubr.f32.gmra.mrb[0].mxu0 %v2748
      %v2819 = vpop.f32.mrb[0].mxu0
      %v2820 = vadd.f32 0.0, %v2819
      %v2821 = vpop.f32.mrb[0].mxu0
      %2822 = vmatprep.mubr.f32.mxu0 0.0
      %2823 = vmatmul.mubr.f32.gmra.mrb[0].mxu0 %v2751
      %v2824 = vpop.f32.mrb[0].mxu0
      %v2825 = vadd.f32 0.0, %v2824
      %v2826 = vpop.f32.mrb[0].mxu0
      %2827 = vdwg.mxu0
      %v2828 = vadd.f32 %v2545, %v2820
      %v2829 = vadd.f32 %v2546, %v2825
      %v2831 = vlaneseq
      %v2832 = vshrl.u32 %v2831, 7
      %v2833 = vsub.s32 0, %v2832
      %v2834 = vrot.slane %v460, %v2833
      %v2836 = vadd.f32 %v2828, %v2834
      %v2837 = vadd.f32 %v2829, %v2834
      %v2838 = vadd.f32 %v432, %v2836
      %v2839 = vadd.f32 %v433, %v2837
      %v2840 = vsel %vm474, %v2838, 0.0
      %2841 = vadd.xlane.f32.xlu0 %v2840
      %v2842 = vpop.xlane.xlu0 %2841
      %v2843 = vsel %vm474, %v2839, 0.0
      %2844 = vadd.xlane.f32.xlu0 %v2843
      %v2845 = vpop.xlane.xlu0 %2844
      %v2846 = vrcp.pop 64.0
      %v2847 = vmul.f32 %v2842, %v2846
      %v2848 = vmul.f32 %v2845, %v2846
      %v2849 = vsub.f32 %v2838, %v2847
      %v2850 = vsub.f32 %v2839, %v2848
      %v2851 = vmul.f32 %v2849, %v2849
      %v2852 = vmul.f32 %v2850, %v2850
      %v2853 = vsel %vm474, %v2851, 0.0
      %2854 = vadd.xlane.f32.xlu0 %v2853
      %v2855 = vpop.xlane.xlu0 %2854
      %v2856 = vsel %vm474, %v2852, 0.0
      %2857 = vadd.xlane.f32.xlu0 %v2856
      %v2858 = vpop.xlane.xlu0 %2857
      %v2859 = vmul.f32 %v2855, %v2846
      %v2860 = vmul.f32 %v2858, %v2846
      %v2861 = vadd.f32 %v2859, 1e-05
      %v2862 = vadd.f32 %v2860, 1e-05
      %v2863 = vrsqrt.pop %v2861
      %v2864 = vrsqrt.pop %v2862
      %v2865 = vmul.f32 %v2849, %v2863
      %v2866 = vmul.f32 %v2850, %v2864
      %v2868 = vlaneseq
      %v2869 = vshrl.u32 %v2868, 7
      %v2870 = vsub.s32 0, %v2869
      %v2871 = vrot.slane %v461, %v2870
      %v2873 = vmul.f32 %v2865, %v2871
      %v2874 = vmul.f32 %v2866, %v2871
      %v2876 = vlaneseq
      %v2877 = vshrl.u32 %v2876, 7
      %v2878 = vsub.s32 0, %v2877
      %v2879 = vrot.slane %v462, %v2878
      %v2881 = vadd.f32 %v2873, %v2879
      %v2882 = vadd.f32 %v2874, %v2879
      %v2883 = vld [vmem:[%s421] sm:$0xff]
      %v2884 = vld [vmem:[%s421 + $0x8] sm:$0xff]
      %v2885 = vadd.f32 %v2881, %v2883
      %v2886 = vadd.f32 %v2882, %v2884
      %2887 = vst.msk [vmem:[%s426] sm:$0xff] %vm474, %v2885
      %2888 = vst.msk [vmem:[%s426 + $0x8] sm:$0xff] %vm474, %v2886
      %p2889 = scmp.lt.s32.totalorder %s22, 1
      %s2890 = scalar_select %p2889, %s22, 1
      %s2891 = smul.addr %s2890, 2
      %s2892 = smul.addr %s2891, 8
      %s2893 = scalar_lea.vmem %s11, %s2892
      // Predicated region
      $region65: #{diff_encoder_fwd.12} parent=63 // pred_check
        %p2894 = pneg %p286
      $region66: #{diff_encoder_fwd.12} parent=63 // pred_check_branch
        %2896 = sbr.rel (%p2894) target = $region68
      $region67: #{diff_encoder_fwd.12} parent=63 // pred_region
        _
      $region68: #{diff_encoder_fwd.12} parent=63 // pred_fallthru
        _
    $region64: #{diff_encoder_fwd.12} parent=5 // pred_fallthru
      _
    %p2897 = scmp.le.s32.totalorder 2, %s17
    // Predicated region
    $region69: #{diff_encoder_fwd.12} parent=5 // pred_check
      %p2898 = pneg %p2897
    $region70: #{diff_encoder_fwd.12} parent=5 // pred_check_branch
      %2900 = sbr.rel (%p2898) target = $region72
    $region71: #{diff_encoder_fwd.12} parent=5 // pred_region
      %s2901 = ssub.s32 %s17, 2
      // Predicated region
      $region73: #{diff_encoder_fwd.12} parent=71 // pred_check
        %p2902 = pneg %p292
      $region74: #{diff_encoder_fwd.12} parent=71 // pred_check_branch
        %2904 = sbr.rel (%p2902) target = $region76
      $region75: #{diff_encoder_fwd.12} parent=71 // pred_region
        %p2905 = scmp.lt.s32.totalorder %s23, 1
        %s2906 = scalar_select %p2905, %s23, 1
        %s2907 = smul.addr %s2906, 2
        %s2908 = smul.addr %s2907, 8
        %s2909 = scalar_lea.vmem %s11, %s2908
      $region76: #{diff_encoder_fwd.12} parent=71 // pred_fallthru
        _
    $region72: #{diff_encoder_fwd.12} parent=5 // pred_fallthru
      _
  $region6: #{diff_encoder_fwd.12} parent=0 // loop_footer
    %s21 = sadd.s32 1, %s17
  $region7: #{diff_encoder_fwd.12} parent=0 // loop_footer_branch
    %16 = sbr.rel target = $region3
  $region8: #{diff_encoder_fwd.12} parent=0 // loop_exit
    _

</llo_original>
